<compile_context>
chip_gen: v6e
topology: v6e:2x2x1
jax: 0.10.0
libtpu: 0.0.40
codegen_flags: <defaults>
</compile_context>

<pallas_src>
import jax
import jax.numpy as jnp
import numpy as np
from jax import lax
from jax.experimental import pallas as pl
from jax.experimental.pallas import tpu as pltpu

# ----------------------------------------------------------------------------
# Hyper-parameters implied by the PyTorch module
# ----------------------------------------------------------------------------
K = 3              # kernel_size
PAD = K // 2       # = 1
S_CONV1 = 5
S_POOL = 3
S_CONV2 = 3
C1 = 4             # conv1 out channels
C2 = 16            # conv2 out channels
FC1_IN = 2144      # hard-coded in the module -> conv2 output length must be 134
FC1_OUT = 200
L_IN = 6000        # input length that yields 16 * 134 = 2144 flattened features
L1 = (L_IN + 2 * PAD - K) // S_CONV1 + 1    # 1200
L2 = (L1 + 2 * PAD - K) // S_POOL + 1       # 400
L3 = (L2 + 2 * PAD - K) // S_CONV2 + 1      # 134
assert C2 * L3 == FC1_IN

WIN = S_CONV1 * S_POOL * S_CONV2   # 45 = x-stride between adjacent conv2 outputs
LPAD = 21                          # left extension of x needed per conv2 output
# For conv2 output t the kernel reads p[m, t] = x_ext[45*t + m], m in [0, 43),
# where x_ext[i] = x[i - 21] (zeros outside).  conv1 position q = 9t + r - 4
# (r = 0..8) uses taps m = 5r + k, k = 0..2.  WIN = 45 > 43-tap window => exact.


def _round_up(n, m):
    return ((n + m - 1) // m) * m


# ----------------------------------------------------------------------------
# Single fused kernel: TB samples per grid step, batch in sublanes, t=134 in lanes.
# ----------------------------------------------------------------------------
def fused_cnn_kernel(p_ref, w1s, b1s, w2s, b2s, wf1_ref, bf1_ref, wf2_ref,
                     bf2s, o_ref, a_scr):
    # p_ref:  (45, TB, 134) f32    p[m, b, t] = x_ext[b, 45 t + m]
    # w1s:    (12,)  SMEM [c1*3+k]          b1s: (4,)  SMEM
    # w2s:    (192,) SMEM [c2*12 + k*4+c1]  b2s: (16,) SMEM
    # wf1_ref:(16, 134, 200) VMEM (bf16)    bf1_ref/wf2_ref: (1, 200) f32 VMEM
    # bf2s:   (1,) SMEM                     o_ref: (TB, 1) f32
    # a_scr:  (12, TB, 134) f32 VMEM scratch (pooled conv1 per (conv2 tap, channel))
    tb = p_ref.shape[1]
    col = lax.broadcasted_iota(jnp.int32, (tb, L3), 1)
    left_edge = col == 0
    right_edge = col == (L3 - 1)

    # w1 / b1 scalars are each reused 9x -> load once from SMEM at kernel entry.
    w1v = [w1s[i] for i in range(C1 * K)]
    b1v = [b1s[i] for i in range(C1)]

    def conv1_relu(r, c1):
        # conv1 (post-ReLU) at positions q = 9t + r - 4 for all t, one channel.
        acc = p_ref[5 * r] * w1v[c1 * K]
        acc = acc + p_ref[5 * r + 1] * w1v[c1 * K + 1]
        acc = acc + p_ref[5 * r + 2] * w1v[c1 * K + 2]
        return jnp.maximum(acc + b1v[c1], 0.0)                 # (TB, 134)

    # ---- conv1 + ReLU + MaxPool1d(k=3, s=3, pad=1), grouped by conv2 tap k ----
    # a_scr[k*4 + c1][b, t] = pooled[b, c1, 3t + k - 1] (0 where conv2 reads zero pad)
    for k in range(K):
        for c1 in range(C1):
            v0 = conv1_relu(3 * k, c1)
            if k == 1:
                # pooled[0] window contains conv position -1 (pool -inf pad);
                # post-ReLU window elements are >= 0, so forcing 0 keeps max exact.
                v0 = jnp.where(left_edge, 0.0, v0)
            m = jnp.maximum(v0, conv1_relu(3 * k + 1, c1))
            m = jnp.maximum(m, conv1_relu(3 * k + 2, c1))
            if k == 0:
                m = jnp.where(left_edge, 0.0, m)    # pooled[-1]  -> conv2 zero pad
            if k == 2:
                m = jnp.where(right_edge, 0.0, m)   # pooled[400] -> conv2 zero pad
            a_scr[k * C1 + c1] = m

    # ---- conv2 + ReLU (dropout = inference identity), fused with fc1 MXU dots ----
    # PyTorch flatten order is channel-major (c2*134 + t); wf1 was repacked
    # host-side to (16, 134, 200), so each conv2 channel contracts directly
    # against its own (134, 200) slab with M = TB.
    hacc = jnp.zeros((tb, FC1_OUT), jnp.float32)
    for c2 in range(C2):
        v = a_scr[0] * w2s[c2 * (K * C1)]
        for idx in range(1, K * C1):
            v = v + a_scr[idx] * w2s[c2 * (K * C1) + idx]
        v = jnp.maximum(v + b2s[c2], 0.0)                      # (TB, 134)
        hacc = hacc + jnp.dot(v.astype(wf1_ref.dtype), wf1_ref[c2],
                              preferred_element_type=jnp.float32)

    h = jnp.maximum(hacc + bf1_ref[...], 0.0)                  # (TB, 200)
    # fc2 (N=1): VPU multiply + lane reduction instead of an MXU matmul.
    y = jnp.sum(h * wf2_ref[...], axis=-1, keepdims=True) + bf2s[0]
    o_ref[...] = jnp.tanh(y)                                   # (TB, 1)


# ----------------------------------------------------------------------------
# Forward pass
# ----------------------------------------------------------------------------
def cnn_forward(x, params, *, block_b=128, wf1_dtype=jnp.bfloat16):
    """x: (B, 6000) float32. Returns (B, 1) float32."""
    B, L = x.shape
    assert L == L_IN, "fc1 expects 2144 features -> input length must be 6000"

    TB = _round_up(min(int(block_b), _round_up(B, 8)), 8)
    Bp = _round_up(B, TB)
    nb = Bp // TB

    # ---- parameter repacking into kernel-friendly layouts ----
    w1f = params["w1"].reshape(-1)                                     # (12,)  [c1*3+k]
    b1f = params["b1"].reshape(-1)                                     # (4,)
    w2f = jnp.transpose(params["w2"], (0, 2, 1)).reshape(-1)           # (192,) [c2*12+k*4+c1]
    b2f = params["b2"].reshape(-1)                                     # (16,)
    wf1 = jnp.transpose(params["wf1"].reshape(FC1_OUT, C2, L3), (1, 2, 0))
    wf1 = wf1.astype(wf1_dtype)                                        # (16, 134, 200)
    bf1 = params["bf1"].reshape(1, FC1_OUT)
    wf2 = params["wf2"].reshape(1, FC1_OUT)
    bf2f = params["bf2"].reshape(-1)                                   # (1,)

    # ---- glue: pad + reshape + transpose -> tap-major patches (45, Bp, 134) ----
    # patches[m, b, t] = x_ext[b, 45 t + m] with x_ext[i] = x[i - 21] (zeros outside).
    x_ext = jnp.pad(x, ((0, Bp - B), (LPAD, WIN * L3 - LPAD - L_IN)))  # (Bp, 6030)
    patches = jnp.transpose(x_ext.reshape(Bp, L3, WIN), (2, 0, 1))     # (45, Bp, 134)

    flops = Bp * (2 * C1 * K * 9 * L3 + 2 * C2 * C1 * K * L3
                  + 2 * FC1_IN * FC1_OUT + 2 * FC1_OUT)
    bytes_accessed = int(patches.size * 4 + wf1.size * wf1.dtype.itemsize
                         + Bp * 4
                         + (w1f.size + b1f.size + w2f.size + b2f.size
                            + bf1.size + wf2.size + bf2f.size) * 4)

    smem = pl.BlockSpec(memory_space=pltpu.MemorySpace.SMEM)
    out = pl.pallas_call(
        fused_cnn_kernel,
        out_shape=jax.ShapeDtypeStruct((Bp, 1), jnp.float32),
        grid=(nb,),
        in_specs=[
            pl.BlockSpec((WIN, TB, L3), lambda b: (0, b, 0)),          # patches
            smem, smem, smem, smem,                                    # w1, b1, w2, b2
            pl.BlockSpec((C2, L3, FC1_OUT), lambda b: (0, 0, 0)),      # wf1
            pl.BlockSpec((1, FC1_OUT), lambda b: (0, 0)),              # bf1
            pl.BlockSpec((1, FC1_OUT), lambda b: (0, 0)),              # wf2
            smem,                                                      # bf2
        ],
        out_specs=pl.BlockSpec((TB, 1), lambda b: (b, 0)),
        scratch_shapes=[pltpu.VMEM((K * C1, TB, L3), jnp.float32)],
        compiler_params=pltpu.CompilerParams(
            dimension_semantics=("parallel",),
            vmem_limit_bytes=48 * 1024 * 1024),
        cost_estimate=pl.CostEstimate(
            flops=int(flops), transcendentals=int(Bp),
            bytes_accessed=bytes_accessed),
    )(patches, w1f, b1f, w2f, b2f, wf1, bf1, wf2, bf2f)
    return out[:B]


# ----------------------------------------------------------------------------
# Deterministic parameter init (torch-like uniform fan-in scaling, torch layouts)
# ----------------------------------------------------------------------------
def init_params(key):
    ks = jax.random.split(key, 8)

    def u(kk, shape, fan_in):
        bound = 1.0 / np.sqrt(fan_in)
        return jax.random.uniform(kk, shape, jnp.float32, -bound, bound)

    return {
        "w1": u(ks[0], (C1, 1, K), 1 * K),            # Conv1d weight (O, I, K)
        "b1": u(ks[1], (C1,), 1 * K),
        "w2": u(ks[2], (C2, C1, K), C1 * K),
        "b2": u(ks[3], (C2,), C1 * K),
        "wf1": u(ks[4], (FC1_OUT, FC1_IN), FC1_IN),   # Linear weight (out, in)
        "bf1": u(ks[5], (FC1_OUT,), FC1_IN),
        "wf2": u(ks[6], (1, FC1_OUT), FC1_OUT),
        "bf2": u(ks[7], (1,), FC1_OUT),
    }


# ----------------------------------------------------------------------------
# Pure-JAX reference (independent implementation) for a sanity check
# ----------------------------------------------------------------------------
def cnn_reference(x, params):
    hp = lax.Precision.HIGHEST
    xx = x[:, None, :]
    y = lax.conv_general_dilated(xx, params["w1"], window_strides=(S_CONV1,),
                                 padding=[(PAD, PAD)],
                                 dimension_numbers=("NCH", "OIH", "NCH"),
                                 precision=hp)
    y = jnp.maximum(y + params["b1"][None, :, None], 0.0)
    y = lax.reduce_window(y, -jnp.inf, lax.max, (1, 1, K), (1, 1, S_POOL),
                          [(0, 0), (0, 0), (PAD, PAD)])
    y = lax.conv_general_dilated(y, params["w2"], window_strides=(S_CONV2,),
                                 padding=[(PAD, PAD)],
                                 dimension_numbers=("NCH", "OIH", "NCH"),
                                 precision=hp)
    y = jnp.maximum(y + params["b2"][None, :, None], 0.0)
    flat = y.reshape(y.shape[0], -1)
    h = jnp.maximum(jnp.dot(flat, params["wf1"].T, precision=hp) + params["bf1"], 0.0)
    return jnp.tanh(jnp.dot(h, params["wf2"].T, precision=hp) + params["bf2"])


if __name__ == "__main__":
    key = jax.random.PRNGKey(0)
    pkey, xkey = jax.random.split(key)
    params = init_params(pkey)

    B = 12   # small demo batch; block_b=8 exercises batch padding + 2 grid steps
    x = jax.random.normal(xkey, (B, L_IN), dtype=jnp.float32)

    fwd = jax.jit(lambda xx, pp: cnn_forward(xx, pp, block_b=8))
    out = jax.block_until_ready(fwd(x, params))
    assert out.shape == (B, 1)

    ref = cnn_reference(x, params)
    # Tolerance loosened slightly for the bf16 fc1 weight slab (f32 accumulation).
    np.testing.assert_allclose(np.asarray(out), np.asarray(ref), rtol=1e-2, atol=2e-3)

    print("KERNEL_OK")
</pallas_src>

<mosaic_0001>
module attributes {stable_mosaic.version = 11 : i64} {
  func.func @fused_cnn_kernel(%arg0: i32, %arg1: memref<45x8x134xf32, #tpu.memory_space<vmem>>, %arg2: memref<12xf32, #tpu.memory_space<smem>>, %arg3: memref<4xf32, #tpu.memory_space<smem>>, %arg4: memref<192xf32, #tpu.memory_space<smem>>, %arg5: memref<16xf32, #tpu.memory_space<smem>>, %arg6: memref<16x134x200xbf16, #tpu.memory_space<vmem>>, %arg7: memref<1x200xf32, #tpu.memory_space<vmem>>, %arg8: memref<1x200xf32, #tpu.memory_space<vmem>>, %arg9: memref<1xf32, #tpu.memory_space<smem>>, %arg10: memref<8x1xf32, #tpu.memory_space<vmem>>, %arg11: memref<12x8x134xf32, #tpu.memory_space<vmem>>) attributes {dimension_semantics = [#tpu.dimension_semantics<parallel>], iteration_bounds = array<i64: 2>, scalar_prefetch = 0 : i64, scratch_operands = 1 : i64, tpu.core_type = #tpu.core_type<tc>, window_params = [{transform_indices = @transform_0, window_bounds = array<i64: 45, 8, 134>}, {transform_indices = @transform_1, window_bounds = array<i64: 12>}, {transform_indices = @transform_2, window_bounds = array<i64: 4>}, {transform_indices = @transform_3, window_bounds = array<i64: 192>}, {transform_indices = @transform_4, window_bounds = array<i64: 16>}, {pipeline_mode = #tpu.pipeline_mode<synchronous>, transform_indices = @transform_5, window_bounds = array<i64: 16, 134, 200>}, {pipeline_mode = #tpu.pipeline_mode<synchronous>, transform_indices = @transform_6, window_bounds = array<i64: 1, 200>}, {pipeline_mode = #tpu.pipeline_mode<synchronous>, transform_indices = @transform_7, window_bounds = array<i64: 1, 200>}, {transform_indices = @transform_8, window_bounds = array<i64: 1>}, {transform_indices = @transform_9, window_bounds = array<i64: 8, 1>}]} {
    %0 = tpu.iota {dimensions = array<i32: 1>} : vector<8x134xi32>
    %c0_i32 = arith.constant 0 : i32
    %1 = vector.broadcast %c0_i32 : i32 to vector<8x134xi32>
    %2 = arith.cmpi eq, %0, %1 : vector<8x134xi32>
    %c133_i32 = arith.constant 133 : i32
    %3 = vector.broadcast %c133_i32 : i32 to vector<8x134xi32>
    %4 = arith.cmpi eq, %0, %3 : vector<8x134xi32>
    %c0 = arith.constant 0 : index
    %5 = memref.load %arg2[%c0] : memref<12xf32, #tpu.memory_space<smem>>
    %c1 = arith.constant 1 : index
    %6 = memref.load %arg2[%c1] : memref<12xf32, #tpu.memory_space<smem>>
    %c2 = arith.constant 2 : index
    %7 = memref.load %arg2[%c2] : memref<12xf32, #tpu.memory_space<smem>>
    %c3 = arith.constant 3 : index
    %8 = memref.load %arg2[%c3] : memref<12xf32, #tpu.memory_space<smem>>
    %c4 = arith.constant 4 : index
    %9 = memref.load %arg2[%c4] : memref<12xf32, #tpu.memory_space<smem>>
    %c5 = arith.constant 5 : index
    %10 = memref.load %arg2[%c5] : memref<12xf32, #tpu.memory_space<smem>>
    %c6 = arith.constant 6 : index
    %11 = memref.load %arg2[%c6] : memref<12xf32, #tpu.memory_space<smem>>
    %c7 = arith.constant 7 : index
    %12 = memref.load %arg2[%c7] : memref<12xf32, #tpu.memory_space<smem>>
    %c8 = arith.constant 8 : index
    %13 = memref.load %arg2[%c8] : memref<12xf32, #tpu.memory_space<smem>>
    %c9 = arith.constant 9 : index
    %14 = memref.load %arg2[%c9] : memref<12xf32, #tpu.memory_space<smem>>
    %c10 = arith.constant 10 : index
    %15 = memref.load %arg2[%c10] : memref<12xf32, #tpu.memory_space<smem>>
    %c11 = arith.constant 11 : index
    %16 = memref.load %arg2[%c11] : memref<12xf32, #tpu.memory_space<smem>>
    %c0_0 = arith.constant 0 : index
    %17 = memref.load %arg3[%c0_0] : memref<4xf32, #tpu.memory_space<smem>>
    %c1_1 = arith.constant 1 : index
    %18 = memref.load %arg3[%c1_1] : memref<4xf32, #tpu.memory_space<smem>>
    %c2_2 = arith.constant 2 : index
    %19 = memref.load %arg3[%c2_2] : memref<4xf32, #tpu.memory_space<smem>>
    %c3_3 = arith.constant 3 : index
    %20 = memref.load %arg3[%c3_3] : memref<4xf32, #tpu.memory_space<smem>>
    %c0_4 = arith.constant 0 : index
    %c0_5 = arith.constant 0 : index
    %c0_6 = arith.constant 0 : index
    %21 = vector.load %arg1[%c0_4, %c0_5, %c0_6] : memref<45x8x134xf32, #tpu.memory_space<vmem>>, vector<1x8x134xf32>
    %22 = vector.shape_cast %21 : vector<1x8x134xf32> to vector<8x134xf32>
    %23 = vector.broadcast %5 : f32 to vector<8x134xf32>
    %24 = arith.mulf %22, %23 : vector<8x134xf32>
    %c1_7 = arith.constant 1 : index
    %c0_8 = arith.constant 0 : index
    %c0_9 = arith.constant 0 : index
    %25 = vector.load %arg1[%c1_7, %c0_8, %c0_9] : memref<45x8x134xf32, #tpu.memory_space<vmem>>, vector<1x8x134xf32>
    %26 = vector.shape_cast %25 : vector<1x8x134xf32> to vector<8x134xf32>
    %27 = vector.broadcast %6 : f32 to vector<8x134xf32>
    %28 = arith.mulf %26, %27 : vector<8x134xf32>
    %29 = arith.addf %24, %28 : vector<8x134xf32>
    %c2_10 = arith.constant 2 : index
    %c0_11 = arith.constant 0 : index
    %c0_12 = arith.constant 0 : index
    %30 = vector.load %arg1[%c2_10, %c0_11, %c0_12] : memref<45x8x134xf32, #tpu.memory_space<vmem>>, vector<1x8x134xf32>
    %31 = vector.shape_cast %30 : vector<1x8x134xf32> to vector<8x134xf32>
    %32 = vector.broadcast %7 : f32 to vector<8x134xf32>
    %33 = arith.mulf %31, %32 : vector<8x134xf32>
    %34 = arith.addf %29, %33 : vector<8x134xf32>
    %35 = vector.broadcast %17 : f32 to vector<8x134xf32>
    %36 = arith.addf %34, %35 : vector<8x134xf32>
    %cst = arith.constant 0.000000e+00 : f32
    %37 = vector.broadcast %cst : f32 to vector<8x134xf32>
    %38 = arith.maximumf %36, %37 : vector<8x134xf32>
    %c5_13 = arith.constant 5 : index
    %c0_14 = arith.constant 0 : index
    %c0_15 = arith.constant 0 : index
    %39 = vector.load %arg1[%c5_13, %c0_14, %c0_15] : memref<45x8x134xf32, #tpu.memory_space<vmem>>, vector<1x8x134xf32>
    %40 = vector.shape_cast %39 : vector<1x8x134xf32> to vector<8x134xf32>
    %41 = vector.broadcast %5 : f32 to vector<8x134xf32>
    %42 = arith.mulf %40, %41 : vector<8x134xf32>
    %c6_16 = arith.constant 6 : index
    %c0_17 = arith.constant 0 : index
    %c0_18 = arith.constant 0 : index
    %43 = vector.load %arg1[%c6_16, %c0_17, %c0_18] : memref<45x8x134xf32, #tpu.memory_space<vmem>>, vector<1x8x134xf32>
    %44 = vector.shape_cast %43 : vector<1x8x134xf32> to vector<8x134xf32>
    %45 = vector.broadcast %6 : f32 to vector<8x134xf32>
    %46 = arith.mulf %44, %45 : vector<8x134xf32>
    %47 = arith.addf %42, %46 : vector<8x134xf32>
    %c7_19 = arith.constant 7 : index
    %c0_20 = arith.constant 0 : index
    %c0_21 = arith.constant 0 : index
    %48 = vector.load %arg1[%c7_19, %c0_20, %c0_21] : memref<45x8x134xf32, #tpu.memory_space<vmem>>, vector<1x8x134xf32>
    %49 = vector.shape_cast %48 : vector<1x8x134xf32> to vector<8x134xf32>
    %50 = vector.broadcast %7 : f32 to vector<8x134xf32>
    %51 = arith.mulf %49, %50 : vector<8x134xf32>
    %52 = arith.addf %47, %51 : vector<8x134xf32>
    %53 = vector.broadcast %17 : f32 to vector<8x134xf32>
    %54 = arith.addf %52, %53 : vector<8x134xf32>
    %cst_22 = arith.constant 0.000000e+00 : f32
    %55 = vector.broadcast %cst_22 : f32 to vector<8x134xf32>
    %56 = arith.maximumf %54, %55 : vector<8x134xf32>
    %57 = arith.maximumf %38, %56 : vector<8x134xf32>
    %c10_23 = arith.constant 10 : index
    %c0_24 = arith.constant 0 : index
    %c0_25 = arith.constant 0 : index
    %58 = vector.load %arg1[%c10_23, %c0_24, %c0_25] : memref<45x8x134xf32, #tpu.memory_space<vmem>>, vector<1x8x134xf32>
    %59 = vector.shape_cast %58 : vector<1x8x134xf32> to vector<8x134xf32>
    %60 = vector.broadcast %5 : f32 to vector<8x134xf32>
    %61 = arith.mulf %59, %60 : vector<8x134xf32>
    %c11_26 = arith.constant 11 : index
    %c0_27 = arith.constant 0 : index
    %c0_28 = arith.constant 0 : index
    %62 = vector.load %arg1[%c11_26, %c0_27, %c0_28] : memref<45x8x134xf32, #tpu.memory_space<vmem>>, vector<1x8x134xf32>
    %63 = vector.shape_cast %62 : vector<1x8x134xf32> to vector<8x134xf32>
    %64 = vector.broadcast %6 : f32 to vector<8x134xf32>
    %65 = arith.mulf %63, %64 : vector<8x134xf32>
    %66 = arith.addf %61, %65 : vector<8x134xf32>
    %c12 = arith.constant 12 : index
    %c0_29 = arith.constant 0 : index
    %c0_30 = arith.constant 0 : index
    %67 = vector.load %arg1[%c12, %c0_29, %c0_30] : memref<45x8x134xf32, #tpu.memory_space<vmem>>, vector<1x8x134xf32>
    %68 = vector.shape_cast %67 : vector<1x8x134xf32> to vector<8x134xf32>
    %69 = vector.broadcast %7 : f32 to vector<8x134xf32>
    %70 = arith.mulf %68, %69 : vector<8x134xf32>
    %71 = arith.addf %66, %70 : vector<8x134xf32>
    %72 = vector.broadcast %17 : f32 to vector<8x134xf32>
    %73 = arith.addf %71, %72 : vector<8x134xf32>
    %cst_31 = arith.constant 0.000000e+00 : f32
    %74 = vector.broadcast %cst_31 : f32 to vector<8x134xf32>
    %75 = arith.maximumf %73, %74 : vector<8x134xf32>
    %76 = arith.maximumf %57, %75 : vector<8x134xf32>
    %cst_32 = arith.constant 0.000000e+00 : f32
    %77 = vector.broadcast %cst_32 : f32 to vector<8x134xf32>
    %78 = arith.select %2, %77, %76 : vector<8x134xi1>, vector<8x134xf32>
    %c0_33 = arith.constant 0 : index
    %c0_34 = arith.constant 0 : index
    %c0_35 = arith.constant 0 : index
    %79 = vector.load %arg11[%c0_33, %c0_34, %c0_35] : memref<12x8x134xf32, #tpu.memory_space<vmem>>, vector<1x8x134xf32>
    %80 = vector.shape_cast %79 : vector<1x8x134xf32> to vector<8x134xf32>
    %81 = vector.shape_cast %78 : vector<8x134xf32> to vector<1x8x134xf32>
    tpu.vector_store %arg11[%c0_33, %c0_34, %c0_35], %81 {strides = array<i32>} : memref<12x8x134xf32, #tpu.memory_space<vmem>>, vector<1x8x134xf32>,
    %c0_36 = arith.constant 0 : index
    %c0_37 = arith.constant 0 : index
    %c0_38 = arith.constant 0 : index
    %82 = vector.load %arg1[%c0_36, %c0_37, %c0_38] : memref<45x8x134xf32, #tpu.memory_space<vmem>>, vector<1x8x134xf32>
    %83 = vector.shape_cast %82 : vector<1x8x134xf32> to vector<8x134xf32>
    %84 = vector.broadcast %8 : f32 to vector<8x134xf32>
    %85 = arith.mulf %83, %84 : vector<8x134xf32>
    %c1_39 = arith.constant 1 : index
    %c0_40 = arith.constant 0 : index
    %c0_41 = arith.constant 0 : index
    %86 = vector.load %arg1[%c1_39, %c0_40, %c0_41] : memref<45x8x134xf32, #tpu.memory_space<vmem>>, vector<1x8x134xf32>
    %87 = vector.shape_cast %86 : vector<1x8x134xf32> to vector<8x134xf32>
    %88 = vector.broadcast %9 : f32 to vector<8x134xf32>
    %89 = arith.mulf %87, %88 : vector<8x134xf32>
    %90 = arith.addf %85, %89 : vector<8x134xf32>
    %c2_42 = arith.constant 2 : index
    %c0_43 = arith.constant 0 : index
    %c0_44 = arith.constant 0 : index
    %91 = vector.load %arg1[%c2_42, %c0_43, %c0_44] : memref<45x8x134xf32, #tpu.memory_space<vmem>>, vector<1x8x134xf32>
    %92 = vector.shape_cast %91 : vector<1x8x134xf32> to vector<8x134xf32>
    %93 = vector.broadcast %10 : f32 to vector<8x134xf32>
    %94 = arith.mulf %92, %93 : vector<8x134xf32>
    %95 = arith.addf %90, %94 : vector<8x134xf32>
    %96 = vector.broadcast %18 : f32 to vector<8x134xf32>
    %97 = arith.addf %95, %96 : vector<8x134xf32>
    %cst_45 = arith.constant 0.000000e+00 : f32
    %98 = vector.broadcast %cst_45 : f32 to vector<8x134xf32>
    %99 = arith.maximumf %97, %98 : vector<8x134xf32>
    %c5_46 = arith.constant 5 : index
    %c0_47 = arith.constant 0 : index
    %c0_48 = arith.constant 0 : index
    %100 = vector.load %arg1[%c5_46, %c0_47, %c0_48] : memref<45x8x134xf32, #tpu.memory_space<vmem>>, vector<1x8x134xf32>
    %101 = vector.shape_cast %100 : vector<1x8x134xf32> to vector<8x134xf32>
    %102 = vector.broadcast %8 : f32 to vector<8x134xf32>
    %103 = arith.mulf %101, %102 : vector<8x134xf32>
    %c6_49 = arith.constant 6 : index
    %c0_50 = arith.constant 0 : index
    %c0_51 = arith.constant 0 : index
    %104 = vector.load %arg1[%c6_49, %c0_50, %c0_51] : memref<45x8x134xf32, #tpu.memory_space<vmem>>, vector<1x8x134xf32>
    %105 = vector.shape_cast %104 : vector<1x8x134xf32> to vector<8x134xf32>
    %106 = vector.broadcast %9 : f32 to vector<8x134xf32>
    %107 = arith.mulf %105, %106 : vector<8x134xf32>
    %108 = arith.addf %103, %107 : vector<8x134xf32>
    %c7_52 = arith.constant 7 : index
    %c0_53 = arith.constant 0 : index
    %c0_54 = arith.constant 0 : index
    %109 = vector.load %arg1[%c7_52, %c0_53, %c0_54] : memref<45x8x134xf32, #tpu.memory_space<vmem>>, vector<1x8x134xf32>
    %110 = vector.shape_cast %109 : vector<1x8x134xf32> to vector<8x134xf32>
    %111 = vector.broadcast %10 : f32 to vector<8x134xf32>
    %112 = arith.mulf %110, %111 : vector<8x134xf32>
    %113 = arith.addf %108, %112 : vector<8x134xf32>
    %114 = vector.broadcast %18 : f32 to vector<8x134xf32>
    %115 = arith.addf %113, %114 : vector<8x134xf32>
    %cst_55 = arith.constant 0.000000e+00 : f32
    %116 = vector.broadcast %cst_55 : f32 to vector<8x134xf32>
    %117 = arith.maximumf %115, %116 : vector<8x134xf32>
    %118 = arith.maximumf %99, %117 : vector<8x134xf32>
    %c10_56 = arith.constant 10 : index
    %c0_57 = arith.constant 0 : index
    %c0_58 = arith.constant 0 : index
    %119 = vector.load %arg1[%c10_56, %c0_57, %c0_58] : memref<45x8x134xf32, #tpu.memory_space<vmem>>, vector<1x8x134xf32>
    %120 = vector.shape_cast %119 : vector<1x8x134xf32> to vector<8x134xf32>
    %121 = vector.broadcast %8 : f32 to vector<8x134xf32>
    %122 = arith.mulf %120, %121 : vector<8x134xf32>
    %c11_59 = arith.constant 11 : index
    %c0_60 = arith.constant 0 : index
    %c0_61 = arith.constant 0 : index
    %123 = vector.load %arg1[%c11_59, %c0_60, %c0_61] : memref<45x8x134xf32, #tpu.memory_space<vmem>>, vector<1x8x134xf32>
    %124 = vector.shape_cast %123 : vector<1x8x134xf32> to vector<8x134xf32>
    %125 = vector.broadcast %9 : f32 to vector<8x134xf32>
    %126 = arith.mulf %124, %125 : vector<8x134xf32>
    %127 = arith.addf %122, %126 : vector<8x134xf32>
    %c12_62 = arith.constant 12 : index
    %c0_63 = arith.constant 0 : index
    %c0_64 = arith.constant 0 : index
    %128 = vector.load %arg1[%c12_62, %c0_63, %c0_64] : memref<45x8x134xf32, #tpu.memory_space<vmem>>, vector<1x8x134xf32>
    %129 = vector.shape_cast %128 : vector<1x8x134xf32> to vector<8x134xf32>
    %130 = vector.broadcast %10 : f32 to vector<8x134xf32>
    %131 = arith.mulf %129, %130 : vector<8x134xf32>
    %132 = arith.addf %127, %131 : vector<8x134xf32>
    %133 = vector.broadcast %18 : f32 to vector<8x134xf32>
    %134 = arith.addf %132, %133 : vector<8x134xf32>
    %cst_65 = arith.constant 0.000000e+00 : f32
    %135 = vector.broadcast %cst_65 : f32 to vector<8x134xf32>
    %136 = arith.maximumf %134, %135 : vector<8x134xf32>
    %137 = arith.maximumf %118, %136 : vector<8x134xf32>
    %cst_66 = arith.constant 0.000000e+00 : f32
    %138 = vector.broadcast %cst_66 : f32 to vector<8x134xf32>
    %139 = arith.select %2, %138, %137 : vector<8x134xi1>, vector<8x134xf32>
    %c1_67 = arith.constant 1 : index
    %c0_68 = arith.constant 0 : index
    %c0_69 = arith.constant 0 : index
    %140 = vector.load %arg11[%c1_67, %c0_68, %c0_69] : memref<12x8x134xf32, #tpu.memory_space<vmem>>, vector<1x8x134xf32>
    %141 = vector.shape_cast %140 : vector<1x8x134xf32> to vector<8x134xf32>
    %142 = vector.shape_cast %139 : vector<8x134xf32> to vector<1x8x134xf32>
    tpu.vector_store %arg11[%c1_67, %c0_68, %c0_69], %142 {strides = array<i32>} : memref<12x8x134xf32, #tpu.memory_space<vmem>>, vector<1x8x134xf32>,
    %c0_70 = arith.constant 0 : index
    %c0_71 = arith.constant 0 : index
    %c0_72 = arith.constant 0 : index
    %143 = vector.load %arg1[%c0_70, %c0_71, %c0_72] : memref<45x8x134xf32, #tpu.memory_space<vmem>>, vector<1x8x134xf32>
    %144 = vector.shape_cast %143 : vector<1x8x134xf32> to vector<8x134xf32>
    %145 = vector.broadcast %11 : f32 to vector<8x134xf32>
    %146 = arith.mulf %144, %145 : vector<8x134xf32>
    %c1_73 = arith.constant 1 : index
    %c0_74 = arith.constant 0 : index
    %c0_75 = arith.constant 0 : index
    %147 = vector.load %arg1[%c1_73, %c0_74, %c0_75] : memref<45x8x134xf32, #tpu.memory_space<vmem>>, vector<1x8x134xf32>
    %148 = vector.shape_cast %147 : vector<1x8x134xf32> to vector<8x134xf32>
    %149 = vector.broadcast %12 : f32 to vector<8x134xf32>
    %150 = arith.mulf %148, %149 : vector<8x134xf32>
    %151 = arith.addf %146, %150 : vector<8x134xf32>
    %c2_76 = arith.constant 2 : index
    %c0_77 = arith.constant 0 : index
    %c0_78 = arith.constant 0 : index
    %152 = vector.load %arg1[%c2_76, %c0_77, %c0_78] : memref<45x8x134xf32, #tpu.memory_space<vmem>>, vector<1x8x134xf32>
    %153 = vector.shape_cast %152 : vector<1x8x134xf32> to vector<8x134xf32>
    %154 = vector.broadcast %13 : f32 to vector<8x134xf32>
    %155 = arith.mulf %153, %154 : vector<8x134xf32>
    %156 = arith.addf %151, %155 : vector<8x134xf32>
    %157 = vector.broadcast %19 : f32 to vector<8x134xf32>
    %158 = arith.addf %156, %157 : vector<8x134xf32>
    %cst_79 = arith.constant 0.000000e+00 : f32
    %159 = vector.broadcast %cst_79 : f32 to vector<8x134xf32>
    %160 = arith.maximumf %158, %159 : vector<8x134xf32>
    %c5_80 = arith.constant 5 : index
    %c0_81 = arith.constant 0 : index
    %c0_82 = arith.constant 0 : index
    %161 = vector.load %arg1[%c5_80, %c0_81, %c0_82] : memref<45x8x134xf32, #tpu.memory_space<vmem>>, vector<1x8x134xf32>
    %162 = vector.shape_cast %161 : vector<1x8x134xf32> to vector<8x134xf32>
    %163 = vector.broadcast %11 : f32 to vector<8x134xf32>
    %164 = arith.mulf %162, %163 : vector<8x134xf32>
    %c6_83 = arith.constant 6 : index
    %c0_84 = arith.constant 0 : index
    %c0_85 = arith.constant 0 : index
    %165 = vector.load %arg1[%c6_83, %c0_84, %c0_85] : memref<45x8x134xf32, #tpu.memory_space<vmem>>, vector<1x8x134xf32>
    %166 = vector.shape_cast %165 : vector<1x8x134xf32> to vector<8x134xf32>
    %167 = vector.broadcast %12 : f32 to vector<8x134xf32>
    %168 = arith.mulf %166, %167 : vector<8x134xf32>
    %169 = arith.addf %164, %168 : vector<8x134xf32>
    %c7_86 = arith.constant 7 : index
    %c0_87 = arith.constant 0 : index
    %c0_88 = arith.constant 0 : index
    %170 = vector.load %arg1[%c7_86, %c0_87, %c0_88] : memref<45x8x134xf32, #tpu.memory_space<vmem>>, vector<1x8x134xf32>
    %171 = vector.shape_cast %170 : vector<1x8x134xf32> to vector<8x134xf32>
    %172 = vector.broadcast %13 : f32 to vector<8x134xf32>
    %173 = arith.mulf %171, %172 : vector<8x134xf32>
    %174 = arith.addf %169, %173 : vector<8x134xf32>
    %175 = vector.broadcast %19 : f32 to vector<8x134xf32>
    %176 = arith.addf %174, %175 : vector<8x134xf32>
    %cst_89 = arith.constant 0.000000e+00 : f32
    %177 = vector.broadcast %cst_89 : f32 to vector<8x134xf32>
    %178 = arith.maximumf %176, %177 : vector<8x134xf32>
    %179 = arith.maximumf %160, %178 : vector<8x134xf32>
    %c10_90 = arith.constant 10 : index
    %c0_91 = arith.constant 0 : index
    %c0_92 = arith.constant 0 : index
    %180 = vector.load %arg1[%c10_90, %c0_91, %c0_92] : memref<45x8x134xf32, #tpu.memory_space<vmem>>, vector<1x8x134xf32>
    %181 = vector.shape_cast %180 : vector<1x8x134xf32> to vector<8x134xf32>
    %182 = vector.broadcast %11 : f32 to vector<8x134xf32>
    %183 = arith.mulf %181, %182 : vector<8x134xf32>
    %c11_93 = arith.constant 11 : index
    %c0_94 = arith.constant 0 : index
    %c0_95 = arith.constant 0 : index
    %184 = vector.load %arg1[%c11_93, %c0_94, %c0_95] : memref<45x8x134xf32, #tpu.memory_space<vmem>>, vector<1x8x134xf32>
    %185 = vector.shape_cast %184 : vector<1x8x134xf32> to vector<8x134xf32>
    %186 = vector.broadcast %12 : f32 to vector<8x134xf32>
    %187 = arith.mulf %185, %186 : vector<8x134xf32>
    %188 = arith.addf %183, %187 : vector<8x134xf32>
    %c12_96 = arith.constant 12 : index
    %c0_97 = arith.constant 0 : index
    %c0_98 = arith.constant 0 : index
    %189 = vector.load %arg1[%c12_96, %c0_97, %c0_98] : memref<45x8x134xf32, #tpu.memory_space<vmem>>, vector<1x8x134xf32>
    %190 = vector.shape_cast %189 : vector<1x8x134xf32> to vector<8x134xf32>
    %191 = vector.broadcast %13 : f32 to vector<8x134xf32>
    %192 = arith.mulf %190, %191 : vector<8x134xf32>
    %193 = arith.addf %188, %192 : vector<8x134xf32>
    %194 = vector.broadcast %19 : f32 to vector<8x134xf32>
    %195 = arith.addf %193, %194 : vector<8x134xf32>
    %cst_99 = arith.constant 0.000000e+00 : f32
    %196 = vector.broadcast %cst_99 : f32 to vector<8x134xf32>
    %197 = arith.maximumf %195, %196 : vector<8x134xf32>
    %198 = arith.maximumf %179, %197 : vector<8x134xf32>
    %cst_100 = arith.constant 0.000000e+00 : f32
    %199 = vector.broadcast %cst_100 : f32 to vector<8x134xf32>
    %200 = arith.select %2, %199, %198 : vector<8x134xi1>, vector<8x134xf32>
    %c2_101 = arith.constant 2 : index
    %c0_102 = arith.constant 0 : index
    %c0_103 = arith.constant 0 : index
    %201 = vector.load %arg11[%c2_101, %c0_102, %c0_103] : memref<12x8x134xf32, #tpu.memory_space<vmem>>, vector<1x8x134xf32>
    %202 = vector.shape_cast %201 : vector<1x8x134xf32> to vector<8x134xf32>
    %203 = vector.shape_cast %200 : vector<8x134xf32> to vector<1x8x134xf32>
    tpu.vector_store %arg11[%c2_101, %c0_102, %c0_103], %203 {strides = array<i32>} : memref<12x8x134xf32, #tpu.memory_space<vmem>>, vector<1x8x134xf32>,
    %c0_104 = arith.constant 0 : index
    %c0_105 = arith.constant 0 : index
    %c0_106 = arith.constant 0 : index
    %204 = vector.load %arg1[%c0_104, %c0_105, %c0_106] : memref<45x8x134xf32, #tpu.memory_space<vmem>>, vector<1x8x134xf32>
    %205 = vector.shape_cast %204 : vector<1x8x134xf32> to vector<8x134xf32>
    %206 = vector.broadcast %14 : f32 to vector<8x134xf32>
    %207 = arith.mulf %205, %206 : vector<8x134xf32>
    %c1_107 = arith.constant 1 : index
    %c0_108 = arith.constant 0 : index
    %c0_109 = arith.constant 0 : index
    %208 = vector.load %arg1[%c1_107, %c0_108, %c0_109] : memref<45x8x134xf32, #tpu.memory_space<vmem>>, vector<1x8x134xf32>
    %209 = vector.shape_cast %208 : vector<1x8x134xf32> to vector<8x134xf32>
    %210 = vector.broadcast %15 : f32 to vector<8x134xf32>
    %211 = arith.mulf %209, %210 : vector<8x134xf32>
    %212 = arith.addf %207, %211 : vector<8x134xf32>
    %c2_110 = arith.constant 2 : index
    %c0_111 = arith.constant 0 : index
    %c0_112 = arith.constant 0 : index
    %213 = vector.load %arg1[%c2_110, %c0_111, %c0_112] : memref<45x8x134xf32, #tpu.memory_space<vmem>>, vector<1x8x134xf32>
    %214 = vector.shape_cast %213 : vector<1x8x134xf32> to vector<8x134xf32>
    %215 = vector.broadcast %16 : f32 to vector<8x134xf32>
    %216 = arith.mulf %214, %215 : vector<8x134xf32>
    %217 = arith.addf %212, %216 : vector<8x134xf32>
    %218 = vector.broadcast %20 : f32 to vector<8x134xf32>
    %219 = arith.addf %217, %218 : vector<8x134xf32>
    %cst_113 = arith.constant 0.000000e+00 : f32
    %220 = vector.broadcast %cst_113 : f32 to vector<8x134xf32>
    %221 = arith.maximumf %219, %220 : vector<8x134xf32>
    %c5_114 = arith.constant 5 : index
    %c0_115 = arith.constant 0 : index
    %c0_116 = arith.constant 0 : index
    %222 = vector.load %arg1[%c5_114, %c0_115, %c0_116] : memref<45x8x134xf32, #tpu.memory_space<vmem>>, vector<1x8x134xf32>
    %223 = vector.shape_cast %222 : vector<1x8x134xf32> to vector<8x134xf32>
    %224 = vector.broadcast %14 : f32 to vector<8x134xf32>
    %225 = arith.mulf %223, %224 : vector<8x134xf32>
    %c6_117 = arith.constant 6 : index
    %c0_118 = arith.constant 0 : index
    %c0_119 = arith.constant 0 : index
    %226 = vector.load %arg1[%c6_117, %c0_118, %c0_119] : memref<45x8x134xf32, #tpu.memory_space<vmem>>, vector<1x8x134xf32>
    %227 = vector.shape_cast %226 : vector<1x8x134xf32> to vector<8x134xf32>
    %228 = vector.broadcast %15 : f32 to vector<8x134xf32>
    %229 = arith.mulf %227, %228 : vector<8x134xf32>
    %230 = arith.addf %225, %229 : vector<8x134xf32>
    %c7_120 = arith.constant 7 : index
    %c0_121 = arith.constant 0 : index
    %c0_122 = arith.constant 0 : index
    %231 = vector.load %arg1[%c7_120, %c0_121, %c0_122] : memref<45x8x134xf32, #tpu.memory_space<vmem>>, vector<1x8x134xf32>
    %232 = vector.shape_cast %231 : vector<1x8x134xf32> to vector<8x134xf32>
    %233 = vector.broadcast %16 : f32 to vector<8x134xf32>
    %234 = arith.mulf %232, %233 : vector<8x134xf32>
    %235 = arith.addf %230, %234 : vector<8x134xf32>
    %236 = vector.broadcast %20 : f32 to vector<8x134xf32>
    %237 = arith.addf %235, %236 : vector<8x134xf32>
    %cst_123 = arith.constant 0.000000e+00 : f32
    %238 = vector.broadcast %cst_123 : f32 to vector<8x134xf32>
    %239 = arith.maximumf %237, %238 : vector<8x134xf32>
    %240 = arith.maximumf %221, %239 : vector<8x134xf32>
    %c10_124 = arith.constant 10 : index
    %c0_125 = arith.constant 0 : index
    %c0_126 = arith.constant 0 : index
    %241 = vector.load %arg1[%c10_124, %c0_125, %c0_126] : memref<45x8x134xf32, #tpu.memory_space<vmem>>, vector<1x8x134xf32>
    %242 = vector.shape_cast %241 : vector<1x8x134xf32> to vector<8x134xf32>
    %243 = vector.broadcast %14 : f32 to vector<8x134xf32>
    %244 = arith.mulf %242, %243 : vector<8x134xf32>
    %c11_127 = arith.constant 11 : index
    %c0_128 = arith.constant 0 : index
    %c0_129 = arith.constant 0 : index
    %245 = vector.load %arg1[%c11_127, %c0_128, %c0_129] : memref<45x8x134xf32, #tpu.memory_space<vmem>>, vector<1x8x134xf32>
    %246 = vector.shape_cast %245 : vector<1x8x134xf32> to vector<8x134xf32>
    %247 = vector.broadcast %15 : f32 to vector<8x134xf32>
    %248 = arith.mulf %246, %247 : vector<8x134xf32>
    %249 = arith.addf %244, %248 : vector<8x134xf32>
    %c12_130 = arith.constant 12 : index
    %c0_131 = arith.constant 0 : index
    %c0_132 = arith.constant 0 : index
    %250 = vector.load %arg1[%c12_130, %c0_131, %c0_132] : memref<45x8x134xf32, #tpu.memory_space<vmem>>, vector<1x8x134xf32>
    %251 = vector.shape_cast %250 : vector<1x8x134xf32> to vector<8x134xf32>
    %252 = vector.broadcast %16 : f32 to vector<8x134xf32>
    %253 = arith.mulf %251, %252 : vector<8x134xf32>
    %254 = arith.addf %249, %253 : vector<8x134xf32>
    %255 = vector.broadcast %20 : f32 to vector<8x134xf32>
    %256 = arith.addf %254, %255 : vector<8x134xf32>
    %cst_133 = arith.constant 0.000000e+00 : f32
    %257 = vector.broadcast %cst_133 : f32 to vector<8x134xf32>
    %258 = arith.maximumf %256, %257 : vector<8x134xf32>
    %259 = arith.maximumf %240, %258 : vector<8x134xf32>
    %cst_134 = arith.constant 0.000000e+00 : f32
    %260 = vector.broadcast %cst_134 : f32 to vector<8x134xf32>
    %261 = arith.select %2, %260, %259 : vector<8x134xi1>, vector<8x134xf32>
    %c3_135 = arith.constant 3 : index
    %c0_136 = arith.constant 0 : index
    %c0_137 = arith.constant 0 : index
    %262 = vector.load %arg11[%c3_135, %c0_136, %c0_137] : memref<12x8x134xf32, #tpu.memory_space<vmem>>, vector<1x8x134xf32>
    %263 = vector.shape_cast %262 : vector<1x8x134xf32> to vector<8x134xf32>
    %264 = vector.shape_cast %261 : vector<8x134xf32> to vector<1x8x134xf32>
    tpu.vector_store %arg11[%c3_135, %c0_136, %c0_137], %264 {strides = array<i32>} : memref<12x8x134xf32, #tpu.memory_space<vmem>>, vector<1x8x134xf32>,
    %c15 = arith.constant 15 : index
    %c0_138 = arith.constant 0 : index
    %c0_139 = arith.constant 0 : index
    %265 = vector.load %arg1[%c15, %c0_138, %c0_139] : memref<45x8x134xf32, #tpu.memory_space<vmem>>, vector<1x8x134xf32>
    %266 = vector.shape_cast %265 : vector<1x8x134xf32> to vector<8x134xf32>
    %267 = vector.broadcast %5 : f32 to vector<8x134xf32>
    %268 = arith.mulf %266, %267 : vector<8x134xf32>
    %c16 = arith.constant 16 : index
    %c0_140 = arith.constant 0 : index
    %c0_141 = arith.constant 0 : index
    %269 = vector.load %arg1[%c16, %c0_140, %c0_141] : memref<45x8x134xf32, #tpu.memory_space<vmem>>, vector<1x8x134xf32>
    %270 = vector.shape_cast %269 : vector<1x8x134xf32> to vector<8x134xf32>
    %271 = vector.broadcast %6 : f32 to vector<8x134xf32>
    %272 = arith.mulf %270, %271 : vector<8x134xf32>
    %273 = arith.addf %268, %272 : vector<8x134xf32>
    %c17 = arith.constant 17 : index
    %c0_142 = arith.constant 0 : index
    %c0_143 = arith.constant 0 : index
    %274 = vector.load %arg1[%c17, %c0_142, %c0_143] : memref<45x8x134xf32, #tpu.memory_space<vmem>>, vector<1x8x134xf32>
    %275 = vector.shape_cast %274 : vector<1x8x134xf32> to vector<8x134xf32>
    %276 = vector.broadcast %7 : f32 to vector<8x134xf32>
    %277 = arith.mulf %275, %276 : vector<8x134xf32>
    %278 = arith.addf %273, %277 : vector<8x134xf32>
    %279 = vector.broadcast %17 : f32 to vector<8x134xf32>
    %280 = arith.addf %278, %279 : vector<8x134xf32>
    %cst_144 = arith.constant 0.000000e+00 : f32
    %281 = vector.broadcast %cst_144 : f32 to vector<8x134xf32>
    %282 = arith.maximumf %280, %281 : vector<8x134xf32>
    %cst_145 = arith.constant 0.000000e+00 : f32
    %283 = vector.broadcast %cst_145 : f32 to vector<8x134xf32>
    %284 = arith.select %2, %283, %282 : vector<8x134xi1>, vector<8x134xf32>
    %c20 = arith.constant 20 : index
    %c0_146 = arith.constant 0 : index
    %c0_147 = arith.constant 0 : index
    %285 = vector.load %arg1[%c20, %c0_146, %c0_147] : memref<45x8x134xf32, #tpu.memory_space<vmem>>, vector<1x8x134xf32>
    %286 = vector.shape_cast %285 : vector<1x8x134xf32> to vector<8x134xf32>
    %287 = vector.broadcast %5 : f32 to vector<8x134xf32>
    %288 = arith.mulf %286, %287 : vector<8x134xf32>
    %c21 = arith.constant 21 : index
    %c0_148 = arith.constant 0 : index
    %c0_149 = arith.constant 0 : index
    %289 = vector.load %arg1[%c21, %c0_148, %c0_149] : memref<45x8x134xf32, #tpu.memory_space<vmem>>, vector<1x8x134xf32>
    %290 = vector.shape_cast %289 : vector<1x8x134xf32> to vector<8x134xf32>
    %291 = vector.broadcast %6 : f32 to vector<8x134xf32>
    %292 = arith.mulf %290, %291 : vector<8x134xf32>
    %293 = arith.addf %288, %292 : vector<8x134xf32>
    %c22 = arith.constant 22 : index
    %c0_150 = arith.constant 0 : index
    %c0_151 = arith.constant 0 : index
    %294 = vector.load %arg1[%c22, %c0_150, %c0_151] : memref<45x8x134xf32, #tpu.memory_space<vmem>>, vector<1x8x134xf32>
    %295 = vector.shape_cast %294 : vector<1x8x134xf32> to vector<8x134xf32>
    %296 = vector.broadcast %7 : f32 to vector<8x134xf32>
    %297 = arith.mulf %295, %296 : vector<8x134xf32>
    %298 = arith.addf %293, %297 : vector<8x134xf32>
    %299 = vector.broadcast %17 : f32 to vector<8x134xf32>
    %300 = arith.addf %298, %299 : vector<8x134xf32>
    %cst_152 = arith.constant 0.000000e+00 : f32
    %301 = vector.broadcast %cst_152 : f32 to vector<8x134xf32>
    %302 = arith.maximumf %300, %301 : vector<8x134xf32>
    %303 = arith.maximumf %284, %302 : vector<8x134xf32>
    %c25 = arith.constant 25 : index
    %c0_153 = arith.constant 0 : index
    %c0_154 = arith.constant 0 : index
    %304 = vector.load %arg1[%c25, %c0_153, %c0_154] : memref<45x8x134xf32, #tpu.memory_space<vmem>>, vector<1x8x134xf32>
    %305 = vector.shape_cast %304 : vector<1x8x134xf32> to vector<8x134xf32>
    %306 = vector.broadcast %5 : f32 to vector<8x134xf32>
    %307 = arith.mulf %305, %306 : vector<8x134xf32>
    %c26 = arith.constant 26 : index
    %c0_155 = arith.constant 0 : index
    %c0_156 = arith.constant 0 : index
    %308 = vector.load %arg1[%c26, %c0_155, %c0_156] : memref<45x8x134xf32, #tpu.memory_space<vmem>>, vector<1x8x134xf32>
    %309 = vector.shape_cast %308 : vector<1x8x134xf32> to vector<8x134xf32>
    %310 = vector.broadcast %6 : f32 to vector<8x134xf32>
    %311 = arith.mulf %309, %310 : vector<8x134xf32>
    %312 = arith.addf %307, %311 : vector<8x134xf32>
    %c27 = arith.constant 27 : index
    %c0_157 = arith.constant 0 : index
    %c0_158 = arith.constant 0 : index
    %313 = vector.load %arg1[%c27, %c0_157, %c0_158] : memref<45x8x134xf32, #tpu.memory_space<vmem>>, vector<1x8x134xf32>
    %314 = vector.shape_cast %313 : vector<1x8x134xf32> to vector<8x134xf32>
    %315 = vector.broadcast %7 : f32 to vector<8x134xf32>
    %316 = arith.mulf %314, %315 : vector<8x134xf32>
    %317 = arith.addf %312, %316 : vector<8x134xf32>
    %318 = vector.broadcast %17 : f32 to vector<8x134xf32>
    %319 = arith.addf %317, %318 : vector<8x134xf32>
    %cst_159 = arith.constant 0.000000e+00 : f32
    %320 = vector.broadcast %cst_159 : f32 to vector<8x134xf32>
    %321 = arith.maximumf %319, %320 : vector<8x134xf32>
    %322 = arith.maximumf %303, %321 : vector<8x134xf32>
    %c4_160 = arith.constant 4 : index
    %c0_161 = arith.constant 0 : index
    %c0_162 = arith.constant 0 : index
    %323 = vector.load %arg11[%c4_160, %c0_161, %c0_162] : memref<12x8x134xf32, #tpu.memory_space<vmem>>, vector<1x8x134xf32>
    %324 = vector.shape_cast %323 : vector<1x8x134xf32> to vector<8x134xf32>
    %325 = vector.shape_cast %322 : vector<8x134xf32> to vector<1x8x134xf32>
    tpu.vector_store %arg11[%c4_160, %c0_161, %c0_162], %325 {strides = array<i32>} : memref<12x8x134xf32, #tpu.memory_space<vmem>>, vector<1x8x134xf32>,
    %c15_163 = arith.constant 15 : index
    %c0_164 = arith.constant 0 : index
    %c0_165 = arith.constant 0 : index
    %326 = vector.load %arg1[%c15_163, %c0_164, %c0_165] : memref<45x8x134xf32, #tpu.memory_space<vmem>>, vector<1x8x134xf32>
    %327 = vector.shape_cast %326 : vector<1x8x134xf32> to vector<8x134xf32>
    %328 = vector.broadcast %8 : f32 to vector<8x134xf32>
    %329 = arith.mulf %327, %328 : vector<8x134xf32>
    %c16_166 = arith.constant 16 : index
    %c0_167 = arith.constant 0 : index
    %c0_168 = arith.constant 0 : index
    %330 = vector.load %arg1[%c16_166, %c0_167, %c0_168] : memref<45x8x134xf32, #tpu.memory_space<vmem>>, vector<1x8x134xf32>
    %331 = vector.shape_cast %330 : vector<1x8x134xf32> to vector<8x134xf32>
    %332 = vector.broadcast %9 : f32 to vector<8x134xf32>
    %333 = arith.mulf %331, %332 : vector<8x134xf32>
    %334 = arith.addf %329, %333 : vector<8x134xf32>
    %c17_169 = arith.constant 17 : index
    %c0_170 = arith.constant 0 : index
    %c0_171 = arith.constant 0 : index
    %335 = vector.load %arg1[%c17_169, %c0_170, %c0_171] : memref<45x8x134xf32, #tpu.memory_space<vmem>>, vector<1x8x134xf32>
    %336 = vector.shape_cast %335 : vector<1x8x134xf32> to vector<8x134xf32>
    %337 = vector.broadcast %10 : f32 to vector<8x134xf32>
    %338 = arith.mulf %336, %337 : vector<8x134xf32>
    %339 = arith.addf %334, %338 : vector<8x134xf32>
    %340 = vector.broadcast %18 : f32 to vector<8x134xf32>
    %341 = arith.addf %339, %340 : vector<8x134xf32>
    %cst_172 = arith.constant 0.000000e+00 : f32
    %342 = vector.broadcast %cst_172 : f32 to vector<8x134xf32>
    %343 = arith.maximumf %341, %342 : vector<8x134xf32>
    %cst_173 = arith.constant 0.000000e+00 : f32
    %344 = vector.broadcast %cst_173 : f32 to vector<8x134xf32>
    %345 = arith.select %2, %344, %343 : vector<8x134xi1>, vector<8x134xf32>
    %c20_174 = arith.constant 20 : index
    %c0_175 = arith.constant 0 : index
    %c0_176 = arith.constant 0 : index
    %346 = vector.load %arg1[%c20_174, %c0_175, %c0_176] : memref<45x8x134xf32, #tpu.memory_space<vmem>>, vector<1x8x134xf32>
    %347 = vector.shape_cast %346 : vector<1x8x134xf32> to vector<8x134xf32>
    %348 = vector.broadcast %8 : f32 to vector<8x134xf32>
    %349 = arith.mulf %347, %348 : vector<8x134xf32>
    %c21_177 = arith.constant 21 : index
    %c0_178 = arith.constant 0 : index
    %c0_179 = arith.constant 0 : index
    %350 = vector.load %arg1[%c21_177, %c0_178, %c0_179] : memref<45x8x134xf32, #tpu.memory_space<vmem>>, vector<1x8x134xf32>
    %351 = vector.shape_cast %350 : vector<1x8x134xf32> to vector<8x134xf32>
    %352 = vector.broadcast %9 : f32 to vector<8x134xf32>
    %353 = arith.mulf %351, %352 : vector<8x134xf32>
    %354 = arith.addf %349, %353 : vector<8x134xf32>
    %c22_180 = arith.constant 22 : index
    %c0_181 = arith.constant 0 : index
    %c0_182 = arith.constant 0 : index
    %355 = vector.load %arg1[%c22_180, %c0_181, %c0_182] : memref<45x8x134xf32, #tpu.memory_space<vmem>>, vector<1x8x134xf32>
    %356 = vector.shape_cast %355 : vector<1x8x134xf32> to vector<8x134xf32>
    %357 = vector.broadcast %10 : f32 to vector<8x134xf32>
    %358 = arith.mulf %356, %357 : vector<8x134xf32>
    %359 = arith.addf %354, %358 : vector<8x134xf32>
    %360 = vector.broadcast %18 : f32 to vector<8x134xf32>
    %361 = arith.addf %359, %360 : vector<8x134xf32>
    %cst_183 = arith.constant 0.000000e+00 : f32
    %362 = vector.broadcast %cst_183 : f32 to vector<8x134xf32>
    %363 = arith.maximumf %361, %362 : vector<8x134xf32>
    %364 = arith.maximumf %345, %363 : vector<8x134xf32>
    %c25_184 = arith.constant 25 : index
    %c0_185 = arith.constant 0 : index
    %c0_186 = arith.constant 0 : index
    %365 = vector.load %arg1[%c25_184, %c0_185, %c0_186] : memref<45x8x134xf32, #tpu.memory_space<vmem>>, vector<1x8x134xf32>
    %366 = vector.shape_cast %365 : vector<1x8x134xf32> to vector<8x134xf32>
    %367 = vector.broadcast %8 : f32 to vector<8x134xf32>
    %368 = arith.mulf %366, %367 : vector<8x134xf32>
    %c26_187 = arith.constant 26 : index
    %c0_188 = arith.constant 0 : index
    %c0_189 = arith.constant 0 : index
    %369 = vector.load %arg1[%c26_187, %c0_188, %c0_189] : memref<45x8x134xf32, #tpu.memory_space<vmem>>, vector<1x8x134xf32>
    %370 = vector.shape_cast %369 : vector<1x8x134xf32> to vector<8x134xf32>
    %371 = vector.broadcast %9 : f32 to vector<8x134xf32>
    %372 = arith.mulf %370, %371 : vector<8x134xf32>
    %373 = arith.addf %368, %372 : vector<8x134xf32>
    %c27_190 = arith.constant 27 : index
    %c0_191 = arith.constant 0 : index
    %c0_192 = arith.constant 0 : index
    %374 = vector.load %arg1[%c27_190, %c0_191, %c0_192] : memref<45x8x134xf32, #tpu.memory_space<vmem>>, vector<1x8x134xf32>
    %375 = vector.shape_cast %374 : vector<1x8x134xf32> to vector<8x134xf32>
    %376 = vector.broadcast %10 : f32 to vector<8x134xf32>
    %377 = arith.mulf %375, %376 : vector<8x134xf32>
    %378 = arith.addf %373, %377 : vector<8x134xf32>
    %379 = vector.broadcast %18 : f32 to vector<8x134xf32>
    %380 = arith.addf %378, %379 : vector<8x134xf32>
    %cst_193 = arith.constant 0.000000e+00 : f32
    %381 = vector.broadcast %cst_193 : f32 to vector<8x134xf32>
    %382 = arith.maximumf %380, %381 : vector<8x134xf32>
    %383 = arith.maximumf %364, %382 : vector<8x134xf32>
    %c5_194 = arith.constant 5 : index
    %c0_195 = arith.constant 0 : index
    %c0_196 = arith.constant 0 : index
    %384 = vector.load %arg11[%c5_194, %c0_195, %c0_196] : memref<12x8x134xf32, #tpu.memory_space<vmem>>, vector<1x8x134xf32>
    %385 = vector.shape_cast %384 : vector<1x8x134xf32> to vector<8x134xf32>
    %386 = vector.shape_cast %383 : vector<8x134xf32> to vector<1x8x134xf32>
    tpu.vector_store %arg11[%c5_194, %c0_195, %c0_196], %386 {strides = array<i32>} : memref<12x8x134xf32, #tpu.memory_space<vmem>>, vector<1x8x134xf32>,
    %c15_197 = arith.constant 15 : index
    %c0_198 = arith.constant 0 : index
    %c0_199 = arith.constant 0 : index
    %387 = vector.load %arg1[%c15_197, %c0_198, %c0_199] : memref<45x8x134xf32, #tpu.memory_space<vmem>>, vector<1x8x134xf32>
    %388 = vector.shape_cast %387 : vector<1x8x134xf32> to vector<8x134xf32>
    %389 = vector.broadcast %11 : f32 to vector<8x134xf32>
    %390 = arith.mulf %388, %389 : vector<8x134xf32>
    %c16_200 = arith.constant 16 : index
    %c0_201 = arith.constant 0 : index
    %c0_202 = arith.constant 0 : index
    %391 = vector.load %arg1[%c16_200, %c0_201, %c0_202] : memref<45x8x134xf32, #tpu.memory_space<vmem>>, vector<1x8x134xf32>
    %392 = vector.shape_cast %391 : vector<1x8x134xf32> to vector<8x134xf32>
    %393 = vector.broadcast %12 : f32 to vector<8x134xf32>
    %394 = arith.mulf %392, %393 : vector<8x134xf32>
    %395 = arith.addf %390, %394 : vector<8x134xf32>
    %c17_203 = arith.constant 17 : index
    %c0_204 = arith.constant 0 : index
    %c0_205 = arith.constant 0 : index
    %396 = vector.load %arg1[%c17_203, %c0_204, %c0_205] : memref<45x8x134xf32, #tpu.memory_space<vmem>>, vector<1x8x134xf32>
    %397 = vector.shape_cast %396 : vector<1x8x134xf32> to vector<8x134xf32>
    %398 = vector.broadcast %13 : f32 to vector<8x134xf32>
    %399 = arith.mulf %397, %398 : vector<8x134xf32>
    %400 = arith.addf %395, %399 : vector<8x134xf32>
    %401 = vector.broadcast %19 : f32 to vector<8x134xf32>
    %402 = arith.addf %400, %401 : vector<8x134xf32>
    %cst_206 = arith.constant 0.000000e+00 : f32
    %403 = vector.broadcast %cst_206 : f32 to vector<8x134xf32>
    %404 = arith.maximumf %402, %403 : vector<8x134xf32>
    %cst_207 = arith.constant 0.000000e+00 : f32
    %405 = vector.broadcast %cst_207 : f32 to vector<8x134xf32>
    %406 = arith.select %2, %405, %404 : vector<8x134xi1>, vector<8x134xf32>
    %c20_208 = arith.constant 20 : index
    %c0_209 = arith.constant 0 : index
    %c0_210 = arith.constant 0 : index
    %407 = vector.load %arg1[%c20_208, %c0_209, %c0_210] : memref<45x8x134xf32, #tpu.memory_space<vmem>>, vector<1x8x134xf32>
    %408 = vector.shape_cast %407 : vector<1x8x134xf32> to vector<8x134xf32>
    %409 = vector.broadcast %11 : f32 to vector<8x134xf32>
    %410 = arith.mulf %408, %409 : vector<8x134xf32>
    %c21_211 = arith.constant 21 : index
    %c0_212 = arith.constant 0 : index
    %c0_213 = arith.constant 0 : index
    %411 = vector.load %arg1[%c21_211, %c0_212, %c0_213] : memref<45x8x134xf32, #tpu.memory_space<vmem>>, vector<1x8x134xf32>
    %412 = vector.shape_cast %411 : vector<1x8x134xf32> to vector<8x134xf32>
    %413 = vector.broadcast %12 : f32 to vector<8x134xf32>
    %414 = arith.mulf %412, %413 : vector<8x134xf32>
    %415 = arith.addf %410, %414 : vector<8x134xf32>
    %c22_214 = arith.constant 22 : index
    %c0_215 = arith.constant 0 : index
    %c0_216 = arith.constant 0 : index
    %416 = vector.load %arg1[%c22_214, %c0_215, %c0_216] : memref<45x8x134xf32, #tpu.memory_space<vmem>>, vector<1x8x134xf32>
    %417 = vector.shape_cast %416 : vector<1x8x134xf32> to vector<8x134xf32>
    %418 = vector.broadcast %13 : f32 to vector<8x134xf32>
    %419 = arith.mulf %417, %418 : vector<8x134xf32>
    %420 = arith.addf %415, %419 : vector<8x134xf32>
    %421 = vector.broadcast %19 : f32 to vector<8x134xf32>
    %422 = arith.addf %420, %421 : vector<8x134xf32>
    %cst_217 = arith.constant 0.000000e+00 : f32
    %423 = vector.broadcast %cst_217 : f32 to vector<8x134xf32>
    %424 = arith.maximumf %422, %423 : vector<8x134xf32>
    %425 = arith.maximumf %406, %424 : vector<8x134xf32>
    %c25_218 = arith.constant 25 : index
    %c0_219 = arith.constant 0 : index
    %c0_220 = arith.constant 0 : index
    %426 = vector.load %arg1[%c25_218, %c0_219, %c0_220] : memref<45x8x134xf32, #tpu.memory_space<vmem>>, vector<1x8x134xf32>
    %427 = vector.shape_cast %426 : vector<1x8x134xf32> to vector<8x134xf32>
    %428 = vector.broadcast %11 : f32 to vector<8x134xf32>
    %429 = arith.mulf %427, %428 : vector<8x134xf32>
    %c26_221 = arith.constant 26 : index
    %c0_222 = arith.constant 0 : index
    %c0_223 = arith.constant 0 : index
    %430 = vector.load %arg1[%c26_221, %c0_222, %c0_223] : memref<45x8x134xf32, #tpu.memory_space<vmem>>, vector<1x8x134xf32>
    %431 = vector.shape_cast %430 : vector<1x8x134xf32> to vector<8x134xf32>
    %432 = vector.broadcast %12 : f32 to vector<8x134xf32>
    %433 = arith.mulf %431, %432 : vector<8x134xf32>
    %434 = arith.addf %429, %433 : vector<8x134xf32>
    %c27_224 = arith.constant 27 : index
    %c0_225 = arith.constant 0 : index
    %c0_226 = arith.constant 0 : index
    %435 = vector.load %arg1[%c27_224, %c0_225, %c0_226] : memref<45x8x134xf32, #tpu.memory_space<vmem>>, vector<1x8x134xf32>
    %436 = vector.shape_cast %435 : vector<1x8x134xf32> to vector<8x134xf32>
    %437 = vector.broadcast %13 : f32 to vector<8x134xf32>
    %438 = arith.mulf %436, %437 : vector<8x134xf32>
    %439 = arith.addf %434, %438 : vector<8x134xf32>
    %440 = vector.broadcast %19 : f32 to vector<8x134xf32>
    %441 = arith.addf %439, %440 : vector<8x134xf32>
    %cst_227 = arith.constant 0.000000e+00 : f32
    %442 = vector.broadcast %cst_227 : f32 to vector<8x134xf32>
    %443 = arith.maximumf %441, %442 : vector<8x134xf32>
    %444 = arith.maximumf %425, %443 : vector<8x134xf32>
    %c6_228 = arith.constant 6 : index
    %c0_229 = arith.constant 0 : index
    %c0_230 = arith.constant 0 : index
    %445 = vector.load %arg11[%c6_228, %c0_229, %c0_230] : memref<12x8x134xf32, #tpu.memory_space<vmem>>, vector<1x8x134xf32>
    %446 = vector.shape_cast %445 : vector<1x8x134xf32> to vector<8x134xf32>
    %447 = vector.shape_cast %444 : vector<8x134xf32> to vector<1x8x134xf32>
    tpu.vector_store %arg11[%c6_228, %c0_229, %c0_230], %447 {strides = array<i32>} : memref<12x8x134xf32, #tpu.memory_space<vmem>>, vector<1x8x134xf32>,
    %c15_231 = arith.constant 15 : index
    %c0_232 = arith.constant 0 : index
    %c0_233 = arith.constant 0 : index
    %448 = vector.load %arg1[%c15_231, %c0_232, %c0_233] : memref<45x8x134xf32, #tpu.memory_space<vmem>>, vector<1x8x134xf32>
    %449 = vector.shape_cast %448 : vector<1x8x134xf32> to vector<8x134xf32>
    %450 = vector.broadcast %14 : f32 to vector<8x134xf32>
    %451 = arith.mulf %449, %450 : vector<8x134xf32>
    %c16_234 = arith.constant 16 : index
    %c0_235 = arith.constant 0 : index
    %c0_236 = arith.constant 0 : index
    %452 = vector.load %arg1[%c16_234, %c0_235, %c0_236] : memref<45x8x134xf32, #tpu.memory_space<vmem>>, vector<1x8x134xf32>
    %453 = vector.shape_cast %452 : vector<1x8x134xf32> to vector<8x134xf32>
    %454 = vector.broadcast %15 : f32 to vector<8x134xf32>
    %455 = arith.mulf %453, %454 : vector<8x134xf32>
    %456 = arith.addf %451, %455 : vector<8x134xf32>
    %c17_237 = arith.constant 17 : index
    %c0_238 = arith.constant 0 : index
    %c0_239 = arith.constant 0 : index
    %457 = vector.load %arg1[%c17_237, %c0_238, %c0_239] : memref<45x8x134xf32, #tpu.memory_space<vmem>>, vector<1x8x134xf32>
    %458 = vector.shape_cast %457 : vector<1x8x134xf32> to vector<8x134xf32>
    %459 = vector.broadcast %16 : f32 to vector<8x134xf32>
    %460 = arith.mulf %458, %459 : vector<8x134xf32>
    %461 = arith.addf %456, %460 : vector<8x134xf32>
    %462 = vector.broadcast %20 : f32 to vector<8x134xf32>
    %463 = arith.addf %461, %462 : vector<8x134xf32>
    %cst_240 = arith.constant 0.000000e+00 : f32
    %464 = vector.broadcast %cst_240 : f32 to vector<8x134xf32>
    %465 = arith.maximumf %463, %464 : vector<8x134xf32>
    %cst_241 = arith.constant 0.000000e+00 : f32
    %466 = vector.broadcast %cst_241 : f32 to vector<8x134xf32>
    %467 = arith.select %2, %466, %465 : vector<8x134xi1>, vector<8x134xf32>
    %c20_242 = arith.constant 20 : index
    %c0_243 = arith.constant 0 : index
    %c0_244 = arith.constant 0 : index
    %468 = vector.load %arg1[%c20_242, %c0_243, %c0_244] : memref<45x8x134xf32, #tpu.memory_space<vmem>>, vector<1x8x134xf32>
    %469 = vector.shape_cast %468 : vector<1x8x134xf32> to vector<8x134xf32>
    %470 = vector.broadcast %14 : f32 to vector<8x134xf32>
    %471 = arith.mulf %469, %470 : vector<8x134xf32>
    %c21_245 = arith.constant 21 : index
    %c0_246 = arith.constant 0 : index
    %c0_247 = arith.constant 0 : index
    %472 = vector.load %arg1[%c21_245, %c0_246, %c0_247] : memref<45x8x134xf32, #tpu.memory_space<vmem>>, vector<1x8x134xf32>
    %473 = vector.shape_cast %472 : vector<1x8x134xf32> to vector<8x134xf32>
    %474 = vector.broadcast %15 : f32 to vector<8x134xf32>
    %475 = arith.mulf %473, %474 : vector<8x134xf32>
    %476 = arith.addf %471, %475 : vector<8x134xf32>
    %c22_248 = arith.constant 22 : index
    %c0_249 = arith.constant 0 : index
    %c0_250 = arith.constant 0 : index
    %477 = vector.load %arg1[%c22_248, %c0_249, %c0_250] : memref<45x8x134xf32, #tpu.memory_space<vmem>>, vector<1x8x134xf32>
    %478 = vector.shape_cast %477 : vector<1x8x134xf32> to vector<8x134xf32>
    %479 = vector.broadcast %16 : f32 to vector<8x134xf32>
    %480 = arith.mulf %478, %479 : vector<8x134xf32>
    %481 = arith.addf %476, %480 : vector<8x134xf32>
    %482 = vector.broadcast %20 : f32 to vector<8x134xf32>
    %483 = arith.addf %481, %482 : vector<8x134xf32>
    %cst_251 = arith.constant 0.000000e+00 : f32
    %484 = vector.broadcast %cst_251 : f32 to vector<8x134xf32>
    %485 = arith.maximumf %483, %484 : vector<8x134xf32>
    %486 = arith.maximumf %467, %485 : vector<8x134xf32>
    %c25_252 = arith.constant 25 : index
    %c0_253 = arith.constant 0 : index
    %c0_254 = arith.constant 0 : index
    %487 = vector.load %arg1[%c25_252, %c0_253, %c0_254] : memref<45x8x134xf32, #tpu.memory_space<vmem>>, vector<1x8x134xf32>
    %488 = vector.shape_cast %487 : vector<1x8x134xf32> to vector<8x134xf32>
    %489 = vector.broadcast %14 : f32 to vector<8x134xf32>
    %490 = arith.mulf %488, %489 : vector<8x134xf32>
    %c26_255 = arith.constant 26 : index
    %c0_256 = arith.constant 0 : index
    %c0_257 = arith.constant 0 : index
    %491 = vector.load %arg1[%c26_255, %c0_256, %c0_257] : memref<45x8x134xf32, #tpu.memory_space<vmem>>, vector<1x8x134xf32>
    %492 = vector.shape_cast %491 : vector<1x8x134xf32> to vector<8x134xf32>
    %493 = vector.broadcast %15 : f32 to vector<8x134xf32>
    %494 = arith.mulf %492, %493 : vector<8x134xf32>
    %495 = arith.addf %490, %494 : vector<8x134xf32>
    %c27_258 = arith.constant 27 : index
    %c0_259 = arith.constant 0 : index
    %c0_260 = arith.constant 0 : index
    %496 = vector.load %arg1[%c27_258, %c0_259, %c0_260] : memref<45x8x134xf32, #tpu.memory_space<vmem>>, vector<1x8x134xf32>
    %497 = vector.shape_cast %496 : vector<1x8x134xf32> to vector<8x134xf32>
    %498 = vector.broadcast %16 : f32 to vector<8x134xf32>
    %499 = arith.mulf %497, %498 : vector<8x134xf32>
    %500 = arith.addf %495, %499 : vector<8x134xf32>
    %501 = vector.broadcast %20 : f32 to vector<8x134xf32>
    %502 = arith.addf %500, %501 : vector<8x134xf32>
    %cst_261 = arith.constant 0.000000e+00 : f32
    %503 = vector.broadcast %cst_261 : f32 to vector<8x134xf32>
    %504 = arith.maximumf %502, %503 : vector<8x134xf32>
    %505 = arith.maximumf %486, %504 : vector<8x134xf32>
    %c7_262 = arith.constant 7 : index
    %c0_263 = arith.constant 0 : index
    %c0_264 = arith.constant 0 : index
    %506 = vector.load %arg11[%c7_262, %c0_263, %c0_264] : memref<12x8x134xf32, #tpu.memory_space<vmem>>, vector<1x8x134xf32>
    %507 = vector.shape_cast %506 : vector<1x8x134xf32> to vector<8x134xf32>
    %508 = vector.shape_cast %505 : vector<8x134xf32> to vector<1x8x134xf32>
    tpu.vector_store %arg11[%c7_262, %c0_263, %c0_264], %508 {strides = array<i32>} : memref<12x8x134xf32, #tpu.memory_space<vmem>>, vector<1x8x134xf32>,
    %c30 = arith.constant 30 : index
    %c0_265 = arith.constant 0 : index
    %c0_266 = arith.constant 0 : index
    %509 = vector.load %arg1[%c30, %c0_265, %c0_266] : memref<45x8x134xf32, #tpu.memory_space<vmem>>, vector<1x8x134xf32>
    %510 = vector.shape_cast %509 : vector<1x8x134xf32> to vector<8x134xf32>
    %511 = vector.broadcast %5 : f32 to vector<8x134xf32>
    %512 = arith.mulf %510, %511 : vector<8x134xf32>
    %c31 = arith.constant 31 : index
    %c0_267 = arith.constant 0 : index
    %c0_268 = arith.constant 0 : index
    %513 = vector.load %arg1[%c31, %c0_267, %c0_268] : memref<45x8x134xf32, #tpu.memory_space<vmem>>, vector<1x8x134xf32>
    %514 = vector.shape_cast %513 : vector<1x8x134xf32> to vector<8x134xf32>
    %515 = vector.broadcast %6 : f32 to vector<8x134xf32>
    %516 = arith.mulf %514, %515 : vector<8x134xf32>
    %517 = arith.addf %512, %516 : vector<8x134xf32>
    %c32 = arith.constant 32 : index
    %c0_269 = arith.constant 0 : index
    %c0_270 = arith.constant 0 : index
    %518 = vector.load %arg1[%c32, %c0_269, %c0_270] : memref<45x8x134xf32, #tpu.memory_space<vmem>>, vector<1x8x134xf32>
    %519 = vector.shape_cast %518 : vector<1x8x134xf32> to vector<8x134xf32>
    %520 = vector.broadcast %7 : f32 to vector<8x134xf32>
    %521 = arith.mulf %519, %520 : vector<8x134xf32>
    %522 = arith.addf %517, %521 : vector<8x134xf32>
    %523 = vector.broadcast %17 : f32 to vector<8x134xf32>
    %524 = arith.addf %522, %523 : vector<8x134xf32>
    %cst_271 = arith.constant 0.000000e+00 : f32
    %525 = vector.broadcast %cst_271 : f32 to vector<8x134xf32>
    %526 = arith.maximumf %524, %525 : vector<8x134xf32>
    %c35 = arith.constant 35 : index
    %c0_272 = arith.constant 0 : index
    %c0_273 = arith.constant 0 : index
    %527 = vector.load %arg1[%c35, %c0_272, %c0_273] : memref<45x8x134xf32, #tpu.memory_space<vmem>>, vector<1x8x134xf32>
    %528 = vector.shape_cast %527 : vector<1x8x134xf32> to vector<8x134xf32>
    %529 = vector.broadcast %5 : f32 to vector<8x134xf32>
    %530 = arith.mulf %528, %529 : vector<8x134xf32>
    %c36 = arith.constant 36 : index
    %c0_274 = arith.constant 0 : index
    %c0_275 = arith.constant 0 : index
    %531 = vector.load %arg1[%c36, %c0_274, %c0_275] : memref<45x8x134xf32, #tpu.memory_space<vmem>>, vector<1x8x134xf32>
    %532 = vector.shape_cast %531 : vector<1x8x134xf32> to vector<8x134xf32>
    %533 = vector.broadcast %6 : f32 to vector<8x134xf32>
    %534 = arith.mulf %532, %533 : vector<8x134xf32>
    %535 = arith.addf %530, %534 : vector<8x134xf32>
    %c37 = arith.constant 37 : index
    %c0_276 = arith.constant 0 : index
    %c0_277 = arith.constant 0 : index
    %536 = vector.load %arg1[%c37, %c0_276, %c0_277] : memref<45x8x134xf32, #tpu.memory_space<vmem>>, vector<1x8x134xf32>
    %537 = vector.shape_cast %536 : vector<1x8x134xf32> to vector<8x134xf32>
    %538 = vector.broadcast %7 : f32 to vector<8x134xf32>
    %539 = arith.mulf %537, %538 : vector<8x134xf32>
    %540 = arith.addf %535, %539 : vector<8x134xf32>
    %541 = vector.broadcast %17 : f32 to vector<8x134xf32>
    %542 = arith.addf %540, %541 : vector<8x134xf32>
    %cst_278 = arith.constant 0.000000e+00 : f32
    %543 = vector.broadcast %cst_278 : f32 to vector<8x134xf32>
    %544 = arith.maximumf %542, %543 : vector<8x134xf32>
    %545 = arith.maximumf %526, %544 : vector<8x134xf32>
    %c40 = arith.constant 40 : index
    %c0_279 = arith.constant 0 : index
    %c0_280 = arith.constant 0 : index
    %546 = vector.load %arg1[%c40, %c0_279, %c0_280] : memref<45x8x134xf32, #tpu.memory_space<vmem>>, vector<1x8x134xf32>
    %547 = vector.shape_cast %546 : vector<1x8x134xf32> to vector<8x134xf32>
    %548 = vector.broadcast %5 : f32 to vector<8x134xf32>
    %549 = arith.mulf %547, %548 : vector<8x134xf32>
    %c41 = arith.constant 41 : index
    %c0_281 = arith.constant 0 : index
    %c0_282 = arith.constant 0 : index
    %550 = vector.load %arg1[%c41, %c0_281, %c0_282] : memref<45x8x134xf32, #tpu.memory_space<vmem>>, vector<1x8x134xf32>
    %551 = vector.shape_cast %550 : vector<1x8x134xf32> to vector<8x134xf32>
    %552 = vector.broadcast %6 : f32 to vector<8x134xf32>
    %553 = arith.mulf %551, %552 : vector<8x134xf32>
    %554 = arith.addf %549, %553 : vector<8x134xf32>
    %c42 = arith.constant 42 : index
    %c0_283 = arith.constant 0 : index
    %c0_284 = arith.constant 0 : index
    %555 = vector.load %arg1[%c42, %c0_283, %c0_284] : memref<45x8x134xf32, #tpu.memory_space<vmem>>, vector<1x8x134xf32>
    %556 = vector.shape_cast %555 : vector<1x8x134xf32> to vector<8x134xf32>
    %557 = vector.broadcast %7 : f32 to vector<8x134xf32>
    %558 = arith.mulf %556, %557 : vector<8x134xf32>
    %559 = arith.addf %554, %558 : vector<8x134xf32>
    %560 = vector.broadcast %17 : f32 to vector<8x134xf32>
    %561 = arith.addf %559, %560 : vector<8x134xf32>
    %cst_285 = arith.constant 0.000000e+00 : f32
    %562 = vector.broadcast %cst_285 : f32 to vector<8x134xf32>
    %563 = arith.maximumf %561, %562 : vector<8x134xf32>
    %564 = arith.maximumf %545, %563 : vector<8x134xf32>
    %cst_286 = arith.constant 0.000000e+00 : f32
    %565 = vector.broadcast %cst_286 : f32 to vector<8x134xf32>
    %566 = arith.select %4, %565, %564 : vector<8x134xi1>, vector<8x134xf32>
    %c8_287 = arith.constant 8 : index
    %c0_288 = arith.constant 0 : index
    %c0_289 = arith.constant 0 : index
    %567 = vector.load %arg11[%c8_287, %c0_288, %c0_289] : memref<12x8x134xf32, #tpu.memory_space<vmem>>, vector<1x8x134xf32>
    %568 = vector.shape_cast %567 : vector<1x8x134xf32> to vector<8x134xf32>
    %569 = vector.shape_cast %566 : vector<8x134xf32> to vector<1x8x134xf32>
    tpu.vector_store %arg11[%c8_287, %c0_288, %c0_289], %569 {strides = array<i32>} : memref<12x8x134xf32, #tpu.memory_space<vmem>>, vector<1x8x134xf32>,
    %c30_290 = arith.constant 30 : index
    %c0_291 = arith.constant 0 : index
    %c0_292 = arith.constant 0 : index
    %570 = vector.load %arg1[%c30_290, %c0_291, %c0_292] : memref<45x8x134xf32, #tpu.memory_space<vmem>>, vector<1x8x134xf32>
    %571 = vector.shape_cast %570 : vector<1x8x134xf32> to vector<8x134xf32>
    %572 = vector.broadcast %8 : f32 to vector<8x134xf32>
    %573 = arith.mulf %571, %572 : vector<8x134xf32>
    %c31_293 = arith.constant 31 : index
    %c0_294 = arith.constant 0 : index
    %c0_295 = arith.constant 0 : index
    %574 = vector.load %arg1[%c31_293, %c0_294, %c0_295] : memref<45x8x134xf32, #tpu.memory_space<vmem>>, vector<1x8x134xf32>
    %575 = vector.shape_cast %574 : vector<1x8x134xf32> to vector<8x134xf32>
    %576 = vector.broadcast %9 : f32 to vector<8x134xf32>
    %577 = arith.mulf %575, %576 : vector<8x134xf32>
    %578 = arith.addf %573, %577 : vector<8x134xf32>
    %c32_296 = arith.constant 32 : index
    %c0_297 = arith.constant 0 : index
    %c0_298 = arith.constant 0 : index
    %579 = vector.load %arg1[%c32_296, %c0_297, %c0_298] : memref<45x8x134xf32, #tpu.memory_space<vmem>>, vector<1x8x134xf32>
    %580 = vector.shape_cast %579 : vector<1x8x134xf32> to vector<8x134xf32>
    %581 = vector.broadcast %10 : f32 to vector<8x134xf32>
    %582 = arith.mulf %580, %581 : vector<8x134xf32>
    %583 = arith.addf %578, %582 : vector<8x134xf32>
    %584 = vector.broadcast %18 : f32 to vector<8x134xf32>
    %585 = arith.addf %583, %584 : vector<8x134xf32>
    %cst_299 = arith.constant 0.000000e+00 : f32
    %586 = vector.broadcast %cst_299 : f32 to vector<8x134xf32>
    %587 = arith.maximumf %585, %586 : vector<8x134xf32>
    %c35_300 = arith.constant 35 : index
    %c0_301 = arith.constant 0 : index
    %c0_302 = arith.constant 0 : index
    %588 = vector.load %arg1[%c35_300, %c0_301, %c0_302] : memref<45x8x134xf32, #tpu.memory_space<vmem>>, vector<1x8x134xf32>
    %589 = vector.shape_cast %588 : vector<1x8x134xf32> to vector<8x134xf32>
    %590 = vector.broadcast %8 : f32 to vector<8x134xf32>
    %591 = arith.mulf %589, %590 : vector<8x134xf32>
    %c36_303 = arith.constant 36 : index
    %c0_304 = arith.constant 0 : index
    %c0_305 = arith.constant 0 : index
    %592 = vector.load %arg1[%c36_303, %c0_304, %c0_305] : memref<45x8x134xf32, #tpu.memory_space<vmem>>, vector<1x8x134xf32>
    %593 = vector.shape_cast %592 : vector<1x8x134xf32> to vector<8x134xf32>
    %594 = vector.broadcast %9 : f32 to vector<8x134xf32>
    %595 = arith.mulf %593, %594 : vector<8x134xf32>
    %596 = arith.addf %591, %595 : vector<8x134xf32>
    %c37_306 = arith.constant 37 : index
    %c0_307 = arith.constant 0 : index
    %c0_308 = arith.constant 0 : index
    %597 = vector.load %arg1[%c37_306, %c0_307, %c0_308] : memref<45x8x134xf32, #tpu.memory_space<vmem>>, vector<1x8x134xf32>
    %598 = vector.shape_cast %597 : vector<1x8x134xf32> to vector<8x134xf32>
    %599 = vector.broadcast %10 : f32 to vector<8x134xf32>
    %600 = arith.mulf %598, %599 : vector<8x134xf32>
    %601 = arith.addf %596, %600 : vector<8x134xf32>
    %602 = vector.broadcast %18 : f32 to vector<8x134xf32>
    %603 = arith.addf %601, %602 : vector<8x134xf32>
    %cst_309 = arith.constant 0.000000e+00 : f32
    %604 = vector.broadcast %cst_309 : f32 to vector<8x134xf32>
    %605 = arith.maximumf %603, %604 : vector<8x134xf32>
    %606 = arith.maximumf %587, %605 : vector<8x134xf32>
    %c40_310 = arith.constant 40 : index
    %c0_311 = arith.constant 0 : index
    %c0_312 = arith.constant 0 : index
    %607 = vector.load %arg1[%c40_310, %c0_311, %c0_312] : memref<45x8x134xf32, #tpu.memory_space<vmem>>, vector<1x8x134xf32>
    %608 = vector.shape_cast %607 : vector<1x8x134xf32> to vector<8x134xf32>
    %609 = vector.broadcast %8 : f32 to vector<8x134xf32>
    %610 = arith.mulf %608, %609 : vector<8x134xf32>
    %c41_313 = arith.constant 41 : index
    %c0_314 = arith.constant 0 : index
    %c0_315 = arith.constant 0 : index
    %611 = vector.load %arg1[%c41_313, %c0_314, %c0_315] : memref<45x8x134xf32, #tpu.memory_space<vmem>>, vector<1x8x134xf32>
    %612 = vector.shape_cast %611 : vector<1x8x134xf32> to vector<8x134xf32>
    %613 = vector.broadcast %9 : f32 to vector<8x134xf32>
    %614 = arith.mulf %612, %613 : vector<8x134xf32>
    %615 = arith.addf %610, %614 : vector<8x134xf32>
    %c42_316 = arith.constant 42 : index
    %c0_317 = arith.constant 0 : index
    %c0_318 = arith.constant 0 : index
    %616 = vector.load %arg1[%c42_316, %c0_317, %c0_318] : memref<45x8x134xf32, #tpu.memory_space<vmem>>, vector<1x8x134xf32>
    %617 = vector.shape_cast %616 : vector<1x8x134xf32> to vector<8x134xf32>
    %618 = vector.broadcast %10 : f32 to vector<8x134xf32>
    %619 = arith.mulf %617, %618 : vector<8x134xf32>
    %620 = arith.addf %615, %619 : vector<8x134xf32>
    %621 = vector.broadcast %18 : f32 to vector<8x134xf32>
    %622 = arith.addf %620, %621 : vector<8x134xf32>
    %cst_319 = arith.constant 0.000000e+00 : f32
    %623 = vector.broadcast %cst_319 : f32 to vector<8x134xf32>
    %624 = arith.maximumf %622, %623 : vector<8x134xf32>
    %625 = arith.maximumf %606, %624 : vector<8x134xf32>
    %cst_320 = arith.constant 0.000000e+00 : f32
    %626 = vector.broadcast %cst_320 : f32 to vector<8x134xf32>
    %627 = arith.select %4, %626, %625 : vector<8x134xi1>, vector<8x134xf32>
    %c9_321 = arith.constant 9 : index
    %c0_322 = arith.constant 0 : index
    %c0_323 = arith.constant 0 : index
    %628 = vector.load %arg11[%c9_321, %c0_322, %c0_323] : memref<12x8x134xf32, #tpu.memory_space<vmem>>, vector<1x8x134xf32>
    %629 = vector.shape_cast %628 : vector<1x8x134xf32> to vector<8x134xf32>
    %630 = vector.shape_cast %627 : vector<8x134xf32> to vector<1x8x134xf32>
    tpu.vector_store %arg11[%c9_321, %c0_322, %c0_323], %630 {strides = array<i32>} : memref<12x8x134xf32, #tpu.memory_space<vmem>>, vector<1x8x134xf32>,
    %c30_324 = arith.constant 30 : index
    %c0_325 = arith.constant 0 : index
    %c0_326 = arith.constant 0 : index
    %631 = vector.load %arg1[%c30_324, %c0_325, %c0_326] : memref<45x8x134xf32, #tpu.memory_space<vmem>>, vector<1x8x134xf32>
    %632 = vector.shape_cast %631 : vector<1x8x134xf32> to vector<8x134xf32>
    %633 = vector.broadcast %11 : f32 to vector<8x134xf32>
    %634 = arith.mulf %632, %633 : vector<8x134xf32>
    %c31_327 = arith.constant 31 : index
    %c0_328 = arith.constant 0 : index
    %c0_329 = arith.constant 0 : index
    %635 = vector.load %arg1[%c31_327, %c0_328, %c0_329] : memref<45x8x134xf32, #tpu.memory_space<vmem>>, vector<1x8x134xf32>
    %636 = vector.shape_cast %635 : vector<1x8x134xf32> to vector<8x134xf32>
    %637 = vector.broadcast %12 : f32 to vector<8x134xf32>
    %638 = arith.mulf %636, %637 : vector<8x134xf32>
    %639 = arith.addf %634, %638 : vector<8x134xf32>
    %c32_330 = arith.constant 32 : index
    %c0_331 = arith.constant 0 : index
    %c0_332 = arith.constant 0 : index
    %640 = vector.load %arg1[%c32_330, %c0_331, %c0_332] : memref<45x8x134xf32, #tpu.memory_space<vmem>>, vector<1x8x134xf32>
    %641 = vector.shape_cast %640 : vector<1x8x134xf32> to vector<8x134xf32>
    %642 = vector.broadcast %13 : f32 to vector<8x134xf32>
    %643 = arith.mulf %641, %642 : vector<8x134xf32>
    %644 = arith.addf %639, %643 : vector<8x134xf32>
    %645 = vector.broadcast %19 : f32 to vector<8x134xf32>
    %646 = arith.addf %644, %645 : vector<8x134xf32>
    %cst_333 = arith.constant 0.000000e+00 : f32
    %647 = vector.broadcast %cst_333 : f32 to vector<8x134xf32>
    %648 = arith.maximumf %646, %647 : vector<8x134xf32>
    %c35_334 = arith.constant 35 : index
    %c0_335 = arith.constant 0 : index
    %c0_336 = arith.constant 0 : index
    %649 = vector.load %arg1[%c35_334, %c0_335, %c0_336] : memref<45x8x134xf32, #tpu.memory_space<vmem>>, vector<1x8x134xf32>
    %650 = vector.shape_cast %649 : vector<1x8x134xf32> to vector<8x134xf32>
    %651 = vector.broadcast %11 : f32 to vector<8x134xf32>
    %652 = arith.mulf %650, %651 : vector<8x134xf32>
    %c36_337 = arith.constant 36 : index
    %c0_338 = arith.constant 0 : index
    %c0_339 = arith.constant 0 : index
    %653 = vector.load %arg1[%c36_337, %c0_338, %c0_339] : memref<45x8x134xf32, #tpu.memory_space<vmem>>, vector<1x8x134xf32>
    %654 = vector.shape_cast %653 : vector<1x8x134xf32> to vector<8x134xf32>
    %655 = vector.broadcast %12 : f32 to vector<8x134xf32>
    %656 = arith.mulf %654, %655 : vector<8x134xf32>
    %657 = arith.addf %652, %656 : vector<8x134xf32>
    %c37_340 = arith.constant 37 : index
    %c0_341 = arith.constant 0 : index
    %c0_342 = arith.constant 0 : index
    %658 = vector.load %arg1[%c37_340, %c0_341, %c0_342] : memref<45x8x134xf32, #tpu.memory_space<vmem>>, vector<1x8x134xf32>
    %659 = vector.shape_cast %658 : vector<1x8x134xf32> to vector<8x134xf32>
    %660 = vector.broadcast %13 : f32 to vector<8x134xf32>
    %661 = arith.mulf %659, %660 : vector<8x134xf32>
    %662 = arith.addf %657, %661 : vector<8x134xf32>
    %663 = vector.broadcast %19 : f32 to vector<8x134xf32>
    %664 = arith.addf %662, %663 : vector<8x134xf32>
    %cst_343 = arith.constant 0.000000e+00 : f32
    %665 = vector.broadcast %cst_343 : f32 to vector<8x134xf32>
    %666 = arith.maximumf %664, %665 : vector<8x134xf32>
    %667 = arith.maximumf %648, %666 : vector<8x134xf32>
    %c40_344 = arith.constant 40 : index
    %c0_345 = arith.constant 0 : index
    %c0_346 = arith.constant 0 : index
    %668 = vector.load %arg1[%c40_344, %c0_345, %c0_346] : memref<45x8x134xf32, #tpu.memory_space<vmem>>, vector<1x8x134xf32>
    %669 = vector.shape_cast %668 : vector<1x8x134xf32> to vector<8x134xf32>
    %670 = vector.broadcast %11 : f32 to vector<8x134xf32>
    %671 = arith.mulf %669, %670 : vector<8x134xf32>
    %c41_347 = arith.constant 41 : index
    %c0_348 = arith.constant 0 : index
    %c0_349 = arith.constant 0 : index
    %672 = vector.load %arg1[%c41_347, %c0_348, %c0_349] : memref<45x8x134xf32, #tpu.memory_space<vmem>>, vector<1x8x134xf32>
    %673 = vector.shape_cast %672 : vector<1x8x134xf32> to vector<8x134xf32>
    %674 = vector.broadcast %12 : f32 to vector<8x134xf32>
    %675 = arith.mulf %673, %674 : vector<8x134xf32>
    %676 = arith.addf %671, %675 : vector<8x134xf32>
    %c42_350 = arith.constant 42 : index
    %c0_351 = arith.constant 0 : index
    %c0_352 = arith.constant 0 : index
    %677 = vector.load %arg1[%c42_350, %c0_351, %c0_352] : memref<45x8x134xf32, #tpu.memory_space<vmem>>, vector<1x8x134xf32>
    %678 = vector.shape_cast %677 : vector<1x8x134xf32> to vector<8x134xf32>
    %679 = vector.broadcast %13 : f32 to vector<8x134xf32>
    %680 = arith.mulf %678, %679 : vector<8x134xf32>
    %681 = arith.addf %676, %680 : vector<8x134xf32>
    %682 = vector.broadcast %19 : f32 to vector<8x134xf32>
    %683 = arith.addf %681, %682 : vector<8x134xf32>
    %cst_353 = arith.constant 0.000000e+00 : f32
    %684 = vector.broadcast %cst_353 : f32 to vector<8x134xf32>
    %685 = arith.maximumf %683, %684 : vector<8x134xf32>
    %686 = arith.maximumf %667, %685 : vector<8x134xf32>
    %cst_354 = arith.constant 0.000000e+00 : f32
    %687 = vector.broadcast %cst_354 : f32 to vector<8x134xf32>
    %688 = arith.select %4, %687, %686 : vector<8x134xi1>, vector<8x134xf32>
    %c10_355 = arith.constant 10 : index
    %c0_356 = arith.constant 0 : index
    %c0_357 = arith.constant 0 : index
    %689 = vector.load %arg11[%c10_355, %c0_356, %c0_357] : memref<12x8x134xf32, #tpu.memory_space<vmem>>, vector<1x8x134xf32>
    %690 = vector.shape_cast %689 : vector<1x8x134xf32> to vector<8x134xf32>
    %691 = vector.shape_cast %688 : vector<8x134xf32> to vector<1x8x134xf32>
    tpu.vector_store %arg11[%c10_355, %c0_356, %c0_357], %691 {strides = array<i32>} : memref<12x8x134xf32, #tpu.memory_space<vmem>>, vector<1x8x134xf32>,
    %c30_358 = arith.constant 30 : index
    %c0_359 = arith.constant 0 : index
    %c0_360 = arith.constant 0 : index
    %692 = vector.load %arg1[%c30_358, %c0_359, %c0_360] : memref<45x8x134xf32, #tpu.memory_space<vmem>>, vector<1x8x134xf32>
    %693 = vector.shape_cast %692 : vector<1x8x134xf32> to vector<8x134xf32>
    %694 = vector.broadcast %14 : f32 to vector<8x134xf32>
    %695 = arith.mulf %693, %694 : vector<8x134xf32>
    %c31_361 = arith.constant 31 : index
    %c0_362 = arith.constant 0 : index
    %c0_363 = arith.constant 0 : index
    %696 = vector.load %arg1[%c31_361, %c0_362, %c0_363] : memref<45x8x134xf32, #tpu.memory_space<vmem>>, vector<1x8x134xf32>
    %697 = vector.shape_cast %696 : vector<1x8x134xf32> to vector<8x134xf32>
    %698 = vector.broadcast %15 : f32 to vector<8x134xf32>
    %699 = arith.mulf %697, %698 : vector<8x134xf32>
    %700 = arith.addf %695, %699 : vector<8x134xf32>
    %c32_364 = arith.constant 32 : index
    %c0_365 = arith.constant 0 : index
    %c0_366 = arith.constant 0 : index
    %701 = vector.load %arg1[%c32_364, %c0_365, %c0_366] : memref<45x8x134xf32, #tpu.memory_space<vmem>>, vector<1x8x134xf32>
    %702 = vector.shape_cast %701 : vector<1x8x134xf32> to vector<8x134xf32>
    %703 = vector.broadcast %16 : f32 to vector<8x134xf32>
    %704 = arith.mulf %702, %703 : vector<8x134xf32>
    %705 = arith.addf %700, %704 : vector<8x134xf32>
    %706 = vector.broadcast %20 : f32 to vector<8x134xf32>
    %707 = arith.addf %705, %706 : vector<8x134xf32>
    %cst_367 = arith.constant 0.000000e+00 : f32
    %708 = vector.broadcast %cst_367 : f32 to vector<8x134xf32>
    %709 = arith.maximumf %707, %708 : vector<8x134xf32>
    %c35_368 = arith.constant 35 : index
    %c0_369 = arith.constant 0 : index
    %c0_370 = arith.constant 0 : index
    %710 = vector.load %arg1[%c35_368, %c0_369, %c0_370] : memref<45x8x134xf32, #tpu.memory_space<vmem>>, vector<1x8x134xf32>
    %711 = vector.shape_cast %710 : vector<1x8x134xf32> to vector<8x134xf32>
    %712 = vector.broadcast %14 : f32 to vector<8x134xf32>
    %713 = arith.mulf %711, %712 : vector<8x134xf32>
    %c36_371 = arith.constant 36 : index
    %c0_372 = arith.constant 0 : index
    %c0_373 = arith.constant 0 : index
    %714 = vector.load %arg1[%c36_371, %c0_372, %c0_373] : memref<45x8x134xf32, #tpu.memory_space<vmem>>, vector<1x8x134xf32>
    %715 = vector.shape_cast %714 : vector<1x8x134xf32> to vector<8x134xf32>
    %716 = vector.broadcast %15 : f32 to vector<8x134xf32>
    %717 = arith.mulf %715, %716 : vector<8x134xf32>
    %718 = arith.addf %713, %717 : vector<8x134xf32>
    %c37_374 = arith.constant 37 : index
    %c0_375 = arith.constant 0 : index
    %c0_376 = arith.constant 0 : index
    %719 = vector.load %arg1[%c37_374, %c0_375, %c0_376] : memref<45x8x134xf32, #tpu.memory_space<vmem>>, vector<1x8x134xf32>
    %720 = vector.shape_cast %719 : vector<1x8x134xf32> to vector<8x134xf32>
    %721 = vector.broadcast %16 : f32 to vector<8x134xf32>
    %722 = arith.mulf %720, %721 : vector<8x134xf32>
    %723 = arith.addf %718, %722 : vector<8x134xf32>
    %724 = vector.broadcast %20 : f32 to vector<8x134xf32>
    %725 = arith.addf %723, %724 : vector<8x134xf32>
    %cst_377 = arith.constant 0.000000e+00 : f32
    %726 = vector.broadcast %cst_377 : f32 to vector<8x134xf32>
    %727 = arith.maximumf %725, %726 : vector<8x134xf32>
    %728 = arith.maximumf %709, %727 : vector<8x134xf32>
    %c40_378 = arith.constant 40 : index
    %c0_379 = arith.constant 0 : index
    %c0_380 = arith.constant 0 : index
    %729 = vector.load %arg1[%c40_378, %c0_379, %c0_380] : memref<45x8x134xf32, #tpu.memory_space<vmem>>, vector<1x8x134xf32>
    %730 = vector.shape_cast %729 : vector<1x8x134xf32> to vector<8x134xf32>
    %731 = vector.broadcast %14 : f32 to vector<8x134xf32>
    %732 = arith.mulf %730, %731 : vector<8x134xf32>
    %c41_381 = arith.constant 41 : index
    %c0_382 = arith.constant 0 : index
    %c0_383 = arith.constant 0 : index
    %733 = vector.load %arg1[%c41_381, %c0_382, %c0_383] : memref<45x8x134xf32, #tpu.memory_space<vmem>>, vector<1x8x134xf32>
    %734 = vector.shape_cast %733 : vector<1x8x134xf32> to vector<8x134xf32>
    %735 = vector.broadcast %15 : f32 to vector<8x134xf32>
    %736 = arith.mulf %734, %735 : vector<8x134xf32>
    %737 = arith.addf %732, %736 : vector<8x134xf32>
    %c42_384 = arith.constant 42 : index
    %c0_385 = arith.constant 0 : index
    %c0_386 = arith.constant 0 : index
    %738 = vector.load %arg1[%c42_384, %c0_385, %c0_386] : memref<45x8x134xf32, #tpu.memory_space<vmem>>, vector<1x8x134xf32>
    %739 = vector.shape_cast %738 : vector<1x8x134xf32> to vector<8x134xf32>
    %740 = vector.broadcast %16 : f32 to vector<8x134xf32>
    %741 = arith.mulf %739, %740 : vector<8x134xf32>
    %742 = arith.addf %737, %741 : vector<8x134xf32>
    %743 = vector.broadcast %20 : f32 to vector<8x134xf32>
    %744 = arith.addf %742, %743 : vector<8x134xf32>
    %cst_387 = arith.constant 0.000000e+00 : f32
    %745 = vector.broadcast %cst_387 : f32 to vector<8x134xf32>
    %746 = arith.maximumf %744, %745 : vector<8x134xf32>
    %747 = arith.maximumf %728, %746 : vector<8x134xf32>
    %cst_388 = arith.constant 0.000000e+00 : f32
    %748 = vector.broadcast %cst_388 : f32 to vector<8x134xf32>
    %749 = arith.select %4, %748, %747 : vector<8x134xi1>, vector<8x134xf32>
    %c11_389 = arith.constant 11 : index
    %c0_390 = arith.constant 0 : index
    %c0_391 = arith.constant 0 : index
    %750 = vector.load %arg11[%c11_389, %c0_390, %c0_391] : memref<12x8x134xf32, #tpu.memory_space<vmem>>, vector<1x8x134xf32>
    %751 = vector.shape_cast %750 : vector<1x8x134xf32> to vector<8x134xf32>
    %752 = vector.shape_cast %749 : vector<8x134xf32> to vector<1x8x134xf32>
    tpu.vector_store %arg11[%c11_389, %c0_390, %c0_391], %752 {strides = array<i32>} : memref<12x8x134xf32, #tpu.memory_space<vmem>>, vector<1x8x134xf32>,
    %cst_392 = arith.constant 0.000000e+00 : f32
    %753 = vector.broadcast %cst_392 : f32 to vector<8x200xf32>
    %c0_393 = arith.constant 0 : index
    %c0_394 = arith.constant 0 : index
    %c0_395 = arith.constant 0 : index
    %754 = vector.load %arg11[%c0_393, %c0_394, %c0_395] : memref<12x8x134xf32, #tpu.memory_space<vmem>>, vector<1x8x134xf32>
    %755 = vector.shape_cast %754 : vector<1x8x134xf32> to vector<8x134xf32>
    %c0_396 = arith.constant 0 : index
    %756 = memref.load %arg4[%c0_396] : memref<192xf32, #tpu.memory_space<smem>>
    %757 = vector.broadcast %756 : f32 to vector<8x134xf32>
    %758 = arith.mulf %755, %757 : vector<8x134xf32>
    %c1_397 = arith.constant 1 : index
    %c0_398 = arith.constant 0 : index
    %c0_399 = arith.constant 0 : index
    %759 = vector.load %arg11[%c1_397, %c0_398, %c0_399] : memref<12x8x134xf32, #tpu.memory_space<vmem>>, vector<1x8x134xf32>
    %760 = vector.shape_cast %759 : vector<1x8x134xf32> to vector<8x134xf32>
    %c1_400 = arith.constant 1 : index
    %761 = memref.load %arg4[%c1_400] : memref<192xf32, #tpu.memory_space<smem>>
    %762 = vector.broadcast %761 : f32 to vector<8x134xf32>
    %763 = arith.mulf %760, %762 : vector<8x134xf32>
    %764 = arith.addf %758, %763 : vector<8x134xf32>
    %c2_401 = arith.constant 2 : index
    %c0_402 = arith.constant 0 : index
    %c0_403 = arith.constant 0 : index
    %765 = vector.load %arg11[%c2_401, %c0_402, %c0_403] : memref<12x8x134xf32, #tpu.memory_space<vmem>>, vector<1x8x134xf32>
    %766 = vector.shape_cast %765 : vector<1x8x134xf32> to vector<8x134xf32>
    %c2_404 = arith.constant 2 : index
    %767 = memref.load %arg4[%c2_404] : memref<192xf32, #tpu.memory_space<smem>>
    %768 = vector.broadcast %767 : f32 to vector<8x134xf32>
    %769 = arith.mulf %766, %768 : vector<8x134xf32>
    %770 = arith.addf %764, %769 : vector<8x134xf32>
    %c3_405 = arith.constant 3 : index
    %c0_406 = arith.constant 0 : index
    %c0_407 = arith.constant 0 : index
    %771 = vector.load %arg11[%c3_405, %c0_406, %c0_407] : memref<12x8x134xf32, #tpu.memory_space<vmem>>, vector<1x8x134xf32>
    %772 = vector.shape_cast %771 : vector<1x8x134xf32> to vector<8x134xf32>
    %c3_408 = arith.constant 3 : index
    %773 = memref.load %arg4[%c3_408] : memref<192xf32, #tpu.memory_space<smem>>
    %774 = vector.broadcast %773 : f32 to vector<8x134xf32>
    %775 = arith.mulf %772, %774 : vector<8x134xf32>
    %776 = arith.addf %770, %775 : vector<8x134xf32>
    %c4_409 = arith.constant 4 : index
    %c0_410 = arith.constant 0 : index
    %c0_411 = arith.constant 0 : index
    %777 = vector.load %arg11[%c4_409, %c0_410, %c0_411] : memref<12x8x134xf32, #tpu.memory_space<vmem>>, vector<1x8x134xf32>
    %778 = vector.shape_cast %777 : vector<1x8x134xf32> to vector<8x134xf32>
    %c4_412 = arith.constant 4 : index
    %779 = memref.load %arg4[%c4_412] : memref<192xf32, #tpu.memory_space<smem>>
    %780 = vector.broadcast %779 : f32 to vector<8x134xf32>
    %781 = arith.mulf %778, %780 : vector<8x134xf32>
    %782 = arith.addf %776, %781 : vector<8x134xf32>
    %c5_413 = arith.constant 5 : index
    %c0_414 = arith.constant 0 : index
    %c0_415 = arith.constant 0 : index
    %783 = vector.load %arg11[%c5_413, %c0_414, %c0_415] : memref<12x8x134xf32, #tpu.memory_space<vmem>>, vector<1x8x134xf32>
    %784 = vector.shape_cast %783 : vector<1x8x134xf32> to vector<8x134xf32>
    %c5_416 = arith.constant 5 : index
    %785 = memref.load %arg4[%c5_416] : memref<192xf32, #tpu.memory_space<smem>>
    %786 = vector.broadcast %785 : f32 to vector<8x134xf32>
    %787 = arith.mulf %784, %786 : vector<8x134xf32>
    %788 = arith.addf %782, %787 : vector<8x134xf32>
    %c6_417 = arith.constant 6 : index
    %c0_418 = arith.constant 0 : index
    %c0_419 = arith.constant 0 : index
    %789 = vector.load %arg11[%c6_417, %c0_418, %c0_419] : memref<12x8x134xf32, #tpu.memory_space<vmem>>, vector<1x8x134xf32>
    %790 = vector.shape_cast %789 : vector<1x8x134xf32> to vector<8x134xf32>
    %c6_420 = arith.constant 6 : index
    %791 = memref.load %arg4[%c6_420] : memref<192xf32, #tpu.memory_space<smem>>
    %792 = vector.broadcast %791 : f32 to vector<8x134xf32>
    %793 = arith.mulf %790, %792 : vector<8x134xf32>
    %794 = arith.addf %788, %793 : vector<8x134xf32>
    %c7_421 = arith.constant 7 : index
    %c0_422 = arith.constant 0 : index
    %c0_423 = arith.constant 0 : index
    %795 = vector.load %arg11[%c7_421, %c0_422, %c0_423] : memref<12x8x134xf32, #tpu.memory_space<vmem>>, vector<1x8x134xf32>
    %796 = vector.shape_cast %795 : vector<1x8x134xf32> to vector<8x134xf32>
    %c7_424 = arith.constant 7 : index
    %797 = memref.load %arg4[%c7_424] : memref<192xf32, #tpu.memory_space<smem>>
    %798 = vector.broadcast %797 : f32 to vector<8x134xf32>
    %799 = arith.mulf %796, %798 : vector<8x134xf32>
    %800 = arith.addf %794, %799 : vector<8x134xf32>
    %c8_425 = arith.constant 8 : index
    %c0_426 = arith.constant 0 : index
    %c0_427 = arith.constant 0 : index
    %801 = vector.load %arg11[%c8_425, %c0_426, %c0_427] : memref<12x8x134xf32, #tpu.memory_space<vmem>>, vector<1x8x134xf32>
    %802 = vector.shape_cast %801 : vector<1x8x134xf32> to vector<8x134xf32>
    %c8_428 = arith.constant 8 : index
    %803 = memref.load %arg4[%c8_428] : memref<192xf32, #tpu.memory_space<smem>>
    %804 = vector.broadcast %803 : f32 to vector<8x134xf32>
    %805 = arith.mulf %802, %804 : vector<8x134xf32>
    %806 = arith.addf %800, %805 : vector<8x134xf32>
    %c9_429 = arith.constant 9 : index
    %c0_430 = arith.constant 0 : index
    %c0_431 = arith.constant 0 : index
    %807 = vector.load %arg11[%c9_429, %c0_430, %c0_431] : memref<12x8x134xf32, #tpu.memory_space<vmem>>, vector<1x8x134xf32>
    %808 = vector.shape_cast %807 : vector<1x8x134xf32> to vector<8x134xf32>
    %c9_432 = arith.constant 9 : index
    %809 = memref.load %arg4[%c9_432] : memref<192xf32, #tpu.memory_space<smem>>
    %810 = vector.broadcast %809 : f32 to vector<8x134xf32>
    %811 = arith.mulf %808, %810 : vector<8x134xf32>
    %812 = arith.addf %806, %811 : vector<8x134xf32>
    %c10_433 = arith.constant 10 : index
    %c0_434 = arith.constant 0 : index
    %c0_435 = arith.constant 0 : index
    %813 = vector.load %arg11[%c10_433, %c0_434, %c0_435] : memref<12x8x134xf32, #tpu.memory_space<vmem>>, vector<1x8x134xf32>
    %814 = vector.shape_cast %813 : vector<1x8x134xf32> to vector<8x134xf32>
    %c10_436 = arith.constant 10 : index
    %815 = memref.load %arg4[%c10_436] : memref<192xf32, #tpu.memory_space<smem>>
    %816 = vector.broadcast %815 : f32 to vector<8x134xf32>
    %817 = arith.mulf %814, %816 : vector<8x134xf32>
    %818 = arith.addf %812, %817 : vector<8x134xf32>
    %c11_437 = arith.constant 11 : index
    %c0_438 = arith.constant 0 : index
    %c0_439 = arith.constant 0 : index
    %819 = vector.load %arg11[%c11_437, %c0_438, %c0_439] : memref<12x8x134xf32, #tpu.memory_space<vmem>>, vector<1x8x134xf32>
    %820 = vector.shape_cast %819 : vector<1x8x134xf32> to vector<8x134xf32>
    %c11_440 = arith.constant 11 : index
    %821 = memref.load %arg4[%c11_440] : memref<192xf32, #tpu.memory_space<smem>>
    %822 = vector.broadcast %821 : f32 to vector<8x134xf32>
    %823 = arith.mulf %820, %822 : vector<8x134xf32>
    %824 = arith.addf %818, %823 : vector<8x134xf32>
    %c0_441 = arith.constant 0 : index
    %825 = memref.load %arg5[%c0_441] : memref<16xf32, #tpu.memory_space<smem>>
    %826 = vector.broadcast %825 : f32 to vector<8x134xf32>
    %827 = arith.addf %824, %826 : vector<8x134xf32>
    %cst_442 = arith.constant 0.000000e+00 : f32
    %828 = vector.broadcast %cst_442 : f32 to vector<8x134xf32>
    %829 = arith.maximumf %827, %828 : vector<8x134xf32>
    %830 = arith.truncf %829 : vector<8x134xf32> to vector<8x134xbf16>
    %c0_443 = arith.constant 0 : index
    %c0_444 = arith.constant 0 : index
    %c0_445 = arith.constant 0 : index
    %831 = vector.load %arg6[%c0_443, %c0_444, %c0_445] : memref<16x134x200xbf16, #tpu.memory_space<vmem>>, vector<1x134x200xbf16>
    %832 = vector.shape_cast %831 : vector<1x134x200xbf16> to vector<134x200xbf16>
    %cst_446 = arith.constant dense<0.000000e+00> : vector<8x200xf32>
    %833 = tpu.matmul %830, %832, %cst_446 {dimension_numbers = #tpu.dot_dimension_numbers<[1], [0], [0], [1], [0, 0, 1, 1], [], []>} : vector<8x134xbf16>, vector<134x200xbf16>, vector<8x200xf32> -> vector<8x200xf32>
    %834 = arith.addf %753, %833 : vector<8x200xf32>
    %c0_447 = arith.constant 0 : index
    %c0_448 = arith.constant 0 : index
    %c0_449 = arith.constant 0 : index
    %835 = vector.load %arg11[%c0_447, %c0_448, %c0_449] : memref<12x8x134xf32, #tpu.memory_space<vmem>>, vector<1x8x134xf32>
    %836 = vector.shape_cast %835 : vector<1x8x134xf32> to vector<8x134xf32>
    %c12_450 = arith.constant 12 : index
    %837 = memref.load %arg4[%c12_450] : memref<192xf32, #tpu.memory_space<smem>>
    %838 = vector.broadcast %837 : f32 to vector<8x134xf32>
    %839 = arith.mulf %836, %838 : vector<8x134xf32>
    %c1_451 = arith.constant 1 : index
    %c0_452 = arith.constant 0 : index
    %c0_453 = arith.constant 0 : index
    %840 = vector.load %arg11[%c1_451, %c0_452, %c0_453] : memref<12x8x134xf32, #tpu.memory_space<vmem>>, vector<1x8x134xf32>
    %841 = vector.shape_cast %840 : vector<1x8x134xf32> to vector<8x134xf32>
    %c13 = arith.constant 13 : index
    %842 = memref.load %arg4[%c13] : memref<192xf32, #tpu.memory_space<smem>>
    %843 = vector.broadcast %842 : f32 to vector<8x134xf32>
    %844 = arith.mulf %841, %843 : vector<8x134xf32>
    %845 = arith.addf %839, %844 : vector<8x134xf32>
    %c2_454 = arith.constant 2 : index
    %c0_455 = arith.constant 0 : index
    %c0_456 = arith.constant 0 : index
    %846 = vector.load %arg11[%c2_454, %c0_455, %c0_456] : memref<12x8x134xf32, #tpu.memory_space<vmem>>, vector<1x8x134xf32>
    %847 = vector.shape_cast %846 : vector<1x8x134xf32> to vector<8x134xf32>
    %c14 = arith.constant 14 : index
    %848 = memref.load %arg4[%c14] : memref<192xf32, #tpu.memory_space<smem>>
    %849 = vector.broadcast %848 : f32 to vector<8x134xf32>
    %850 = arith.mulf %847, %849 : vector<8x134xf32>
    %851 = arith.addf %845, %850 : vector<8x134xf32>
    %c3_457 = arith.constant 3 : index
    %c0_458 = arith.constant 0 : index
    %c0_459 = arith.constant 0 : index
    %852 = vector.load %arg11[%c3_457, %c0_458, %c0_459] : memref<12x8x134xf32, #tpu.memory_space<vmem>>, vector<1x8x134xf32>
    %853 = vector.shape_cast %852 : vector<1x8x134xf32> to vector<8x134xf32>
    %c15_460 = arith.constant 15 : index
    %854 = memref.load %arg4[%c15_460] : memref<192xf32, #tpu.memory_space<smem>>
    %855 = vector.broadcast %854 : f32 to vector<8x134xf32>
    %856 = arith.mulf %853, %855 : vector<8x134xf32>
    %857 = arith.addf %851, %856 : vector<8x134xf32>
    %c4_461 = arith.constant 4 : index
    %c0_462 = arith.constant 0 : index
    %c0_463 = arith.constant 0 : index
    %858 = vector.load %arg11[%c4_461, %c0_462, %c0_463] : memref<12x8x134xf32, #tpu.memory_space<vmem>>, vector<1x8x134xf32>
    %859 = vector.shape_cast %858 : vector<1x8x134xf32> to vector<8x134xf32>
    %c16_464 = arith.constant 16 : index
    %860 = memref.load %arg4[%c16_464] : memref<192xf32, #tpu.memory_space<smem>>
    %861 = vector.broadcast %860 : f32 to vector<8x134xf32>
    %862 = arith.mulf %859, %861 : vector<8x134xf32>
    %863 = arith.addf %857, %862 : vector<8x134xf32>
    %c5_465 = arith.constant 5 : index
    %c0_466 = arith.constant 0 : index
    %c0_467 = arith.constant 0 : index
    %864 = vector.load %arg11[%c5_465, %c0_466, %c0_467] : memref<12x8x134xf32, #tpu.memory_space<vmem>>, vector<1x8x134xf32>
    %865 = vector.shape_cast %864 : vector<1x8x134xf32> to vector<8x134xf32>
    %c17_468 = arith.constant 17 : index
    %866 = memref.load %arg4[%c17_468] : memref<192xf32, #tpu.memory_space<smem>>
    %867 = vector.broadcast %866 : f32 to vector<8x134xf32>
    %868 = arith.mulf %865, %867 : vector<8x134xf32>
    %869 = arith.addf %863, %868 : vector<8x134xf32>
    %c6_469 = arith.constant 6 : index
    %c0_470 = arith.constant 0 : index
    %c0_471 = arith.constant 0 : index
    %870 = vector.load %arg11[%c6_469, %c0_470, %c0_471] : memref<12x8x134xf32, #tpu.memory_space<vmem>>, vector<1x8x134xf32>
    %871 = vector.shape_cast %870 : vector<1x8x134xf32> to vector<8x134xf32>
    %c18 = arith.constant 18 : index
    %872 = memref.load %arg4[%c18] : memref<192xf32, #tpu.memory_space<smem>>
    %873 = vector.broadcast %872 : f32 to vector<8x134xf32>
    %874 = arith.mulf %871, %873 : vector<8x134xf32>
    %875 = arith.addf %869, %874 : vector<8x134xf32>
    %c7_472 = arith.constant 7 : index
    %c0_473 = arith.constant 0 : index
    %c0_474 = arith.constant 0 : index
    %876 = vector.load %arg11[%c7_472, %c0_473, %c0_474] : memref<12x8x134xf32, #tpu.memory_space<vmem>>, vector<1x8x134xf32>
    %877 = vector.shape_cast %876 : vector<1x8x134xf32> to vector<8x134xf32>
    %c19 = arith.constant 19 : index
    %878 = memref.load %arg4[%c19] : memref<192xf32, #tpu.memory_space<smem>>
    %879 = vector.broadcast %878 : f32 to vector<8x134xf32>
    %880 = arith.mulf %877, %879 : vector<8x134xf32>
    %881 = arith.addf %875, %880 : vector<8x134xf32>
    %c8_475 = arith.constant 8 : index
    %c0_476 = arith.constant 0 : index
    %c0_477 = arith.constant 0 : index
    %882 = vector.load %arg11[%c8_475, %c0_476, %c0_477] : memref<12x8x134xf32, #tpu.memory_space<vmem>>, vector<1x8x134xf32>
    %883 = vector.shape_cast %882 : vector<1x8x134xf32> to vector<8x134xf32>
    %c20_478 = arith.constant 20 : index
    %884 = memref.load %arg4[%c20_478] : memref<192xf32, #tpu.memory_space<smem>>
    %885 = vector.broadcast %884 : f32 to vector<8x134xf32>
    %886 = arith.mulf %883, %885 : vector<8x134xf32>
    %887 = arith.addf %881, %886 : vector<8x134xf32>
    %c9_479 = arith.constant 9 : index
    %c0_480 = arith.constant 0 : index
    %c0_481 = arith.constant 0 : index
    %888 = vector.load %arg11[%c9_479, %c0_480, %c0_481] : memref<12x8x134xf32, #tpu.memory_space<vmem>>, vector<1x8x134xf32>
    %889 = vector.shape_cast %888 : vector<1x8x134xf32> to vector<8x134xf32>
    %c21_482 = arith.constant 21 : index
    %890 = memref.load %arg4[%c21_482] : memref<192xf32, #tpu.memory_space<smem>>
    %891 = vector.broadcast %890 : f32 to vector<8x134xf32>
    %892 = arith.mulf %889, %891 : vector<8x134xf32>
    %893 = arith.addf %887, %892 : vector<8x134xf32>
    %c10_483 = arith.constant 10 : index
    %c0_484 = arith.constant 0 : index
    %c0_485 = arith.constant 0 : index
    %894 = vector.load %arg11[%c10_483, %c0_484, %c0_485] : memref<12x8x134xf32, #tpu.memory_space<vmem>>, vector<1x8x134xf32>
    %895 = vector.shape_cast %894 : vector<1x8x134xf32> to vector<8x134xf32>
    %c22_486 = arith.constant 22 : index
    %896 = memref.load %arg4[%c22_486] : memref<192xf32, #tpu.memory_space<smem>>
    %897 = vector.broadcast %896 : f32 to vector<8x134xf32>
    %898 = arith.mulf %895, %897 : vector<8x134xf32>
    %899 = arith.addf %893, %898 : vector<8x134xf32>
    %c11_487 = arith.constant 11 : index
    %c0_488 = arith.constant 0 : index
    %c0_489 = arith.constant 0 : index
    %900 = vector.load %arg11[%c11_487, %c0_488, %c0_489] : memref<12x8x134xf32, #tpu.memory_space<vmem>>, vector<1x8x134xf32>
    %901 = vector.shape_cast %900 : vector<1x8x134xf32> to vector<8x134xf32>
    %c23 = arith.constant 23 : index
    %902 = memref.load %arg4[%c23] : memref<192xf32, #tpu.memory_space<smem>>
    %903 = vector.broadcast %902 : f32 to vector<8x134xf32>
    %904 = arith.mulf %901, %903 : vector<8x134xf32>
    %905 = arith.addf %899, %904 : vector<8x134xf32>
    %c1_490 = arith.constant 1 : index
    %906 = memref.load %arg5[%c1_490] : memref<16xf32, #tpu.memory_space<smem>>
    %907 = vector.broadcast %906 : f32 to vector<8x134xf32>
    %908 = arith.addf %905, %907 : vector<8x134xf32>
    %cst_491 = arith.constant 0.000000e+00 : f32
    %909 = vector.broadcast %cst_491 : f32 to vector<8x134xf32>
    %910 = arith.maximumf %908, %909 : vector<8x134xf32>
    %911 = arith.truncf %910 : vector<8x134xf32> to vector<8x134xbf16>
    %c1_492 = arith.constant 1 : index
    %c0_493 = arith.constant 0 : index
    %c0_494 = arith.constant 0 : index
    %912 = vector.load %arg6[%c1_492, %c0_493, %c0_494] : memref<16x134x200xbf16, #tpu.memory_space<vmem>>, vector<1x134x200xbf16>
    %913 = vector.shape_cast %912 : vector<1x134x200xbf16> to vector<134x200xbf16>
    %cst_495 = arith.constant dense<0.000000e+00> : vector<8x200xf32>
    %914 = tpu.matmul %911, %913, %cst_495 {dimension_numbers = #tpu.dot_dimension_numbers<[1], [0], [0], [1], [0, 0, 1, 1], [], []>} : vector<8x134xbf16>, vector<134x200xbf16>, vector<8x200xf32> -> vector<8x200xf32>
    %915 = arith.addf %834, %914 : vector<8x200xf32>
    %c0_496 = arith.constant 0 : index
    %c0_497 = arith.constant 0 : index
    %c0_498 = arith.constant 0 : index
    %916 = vector.load %arg11[%c0_496, %c0_497, %c0_498] : memref<12x8x134xf32, #tpu.memory_space<vmem>>, vector<1x8x134xf32>
    %917 = vector.shape_cast %916 : vector<1x8x134xf32> to vector<8x134xf32>
    %c24 = arith.constant 24 : index
    %918 = memref.load %arg4[%c24] : memref<192xf32, #tpu.memory_space<smem>>
    %919 = vector.broadcast %918 : f32 to vector<8x134xf32>
    %920 = arith.mulf %917, %919 : vector<8x134xf32>
    %c1_499 = arith.constant 1 : index
    %c0_500 = arith.constant 0 : index
    %c0_501 = arith.constant 0 : index
    %921 = vector.load %arg11[%c1_499, %c0_500, %c0_501] : memref<12x8x134xf32, #tpu.memory_space<vmem>>, vector<1x8x134xf32>
    %922 = vector.shape_cast %921 : vector<1x8x134xf32> to vector<8x134xf32>
    %c25_502 = arith.constant 25 : index
    %923 = memref.load %arg4[%c25_502] : memref<192xf32, #tpu.memory_space<smem>>
    %924 = vector.broadcast %923 : f32 to vector<8x134xf32>
    %925 = arith.mulf %922, %924 : vector<8x134xf32>
    %926 = arith.addf %920, %925 : vector<8x134xf32>
    %c2_503 = arith.constant 2 : index
    %c0_504 = arith.constant 0 : index
    %c0_505 = arith.constant 0 : index
    %927 = vector.load %arg11[%c2_503, %c0_504, %c0_505] : memref<12x8x134xf32, #tpu.memory_space<vmem>>, vector<1x8x134xf32>
    %928 = vector.shape_cast %927 : vector<1x8x134xf32> to vector<8x134xf32>
    %c26_506 = arith.constant 26 : index
    %929 = memref.load %arg4[%c26_506] : memref<192xf32, #tpu.memory_space<smem>>
    %930 = vector.broadcast %929 : f32 to vector<8x134xf32>
    %931 = arith.mulf %928, %930 : vector<8x134xf32>
    %932 = arith.addf %926, %931 : vector<8x134xf32>
    %c3_507 = arith.constant 3 : index
    %c0_508 = arith.constant 0 : index
    %c0_509 = arith.constant 0 : index
    %933 = vector.load %arg11[%c3_507, %c0_508, %c0_509] : memref<12x8x134xf32, #tpu.memory_space<vmem>>, vector<1x8x134xf32>
    %934 = vector.shape_cast %933 : vector<1x8x134xf32> to vector<8x134xf32>
    %c27_510 = arith.constant 27 : index
    %935 = memref.load %arg4[%c27_510] : memref<192xf32, #tpu.memory_space<smem>>
    %936 = vector.broadcast %935 : f32 to vector<8x134xf32>
    %937 = arith.mulf %934, %936 : vector<8x134xf32>
    %938 = arith.addf %932, %937 : vector<8x134xf32>
    %c4_511 = arith.constant 4 : index
    %c0_512 = arith.constant 0 : index
    %c0_513 = arith.constant 0 : index
    %939 = vector.load %arg11[%c4_511, %c0_512, %c0_513] : memref<12x8x134xf32, #tpu.memory_space<vmem>>, vector<1x8x134xf32>
    %940 = vector.shape_cast %939 : vector<1x8x134xf32> to vector<8x134xf32>
    %c28 = arith.constant 28 : index
    %941 = memref.load %arg4[%c28] : memref<192xf32, #tpu.memory_space<smem>>
    %942 = vector.broadcast %941 : f32 to vector<8x134xf32>
    %943 = arith.mulf %940, %942 : vector<8x134xf32>
    %944 = arith.addf %938, %943 : vector<8x134xf32>
    %c5_514 = arith.constant 5 : index
    %c0_515 = arith.constant 0 : index
    %c0_516 = arith.constant 0 : index
    %945 = vector.load %arg11[%c5_514, %c0_515, %c0_516] : memref<12x8x134xf32, #tpu.memory_space<vmem>>, vector<1x8x134xf32>
    %946 = vector.shape_cast %945 : vector<1x8x134xf32> to vector<8x134xf32>
    %c29 = arith.constant 29 : index
    %947 = memref.load %arg4[%c29] : memref<192xf32, #tpu.memory_space<smem>>
    %948 = vector.broadcast %947 : f32 to vector<8x134xf32>
    %949 = arith.mulf %946, %948 : vector<8x134xf32>
    %950 = arith.addf %944, %949 : vector<8x134xf32>
    %c6_517 = arith.constant 6 : index
    %c0_518 = arith.constant 0 : index
    %c0_519 = arith.constant 0 : index
    %951 = vector.load %arg11[%c6_517, %c0_518, %c0_519] : memref<12x8x134xf32, #tpu.memory_space<vmem>>, vector<1x8x134xf32>
    %952 = vector.shape_cast %951 : vector<1x8x134xf32> to vector<8x134xf32>
    %c30_520 = arith.constant 30 : index
    %953 = memref.load %arg4[%c30_520] : memref<192xf32, #tpu.memory_space<smem>>
    %954 = vector.broadcast %953 : f32 to vector<8x134xf32>
    %955 = arith.mulf %952, %954 : vector<8x134xf32>
    %956 = arith.addf %950, %955 : vector<8x134xf32>
    %c7_521 = arith.constant 7 : index
    %c0_522 = arith.constant 0 : index
    %c0_523 = arith.constant 0 : index
    %957 = vector.load %arg11[%c7_521, %c0_522, %c0_523] : memref<12x8x134xf32, #tpu.memory_space<vmem>>, vector<1x8x134xf32>
    %958 = vector.shape_cast %957 : vector<1x8x134xf32> to vector<8x134xf32>
    %c31_524 = arith.constant 31 : index
    %959 = memref.load %arg4[%c31_524] : memref<192xf32, #tpu.memory_space<smem>>
    %960 = vector.broadcast %959 : f32 to vector<8x134xf32>
    %961 = arith.mulf %958, %960 : vector<8x134xf32>
    %962 = arith.addf %956, %961 : vector<8x134xf32>
    %c8_525 = arith.constant 8 : index
    %c0_526 = arith.constant 0 : index
    %c0_527 = arith.constant 0 : index
    %963 = vector.load %arg11[%c8_525, %c0_526, %c0_527] : memref<12x8x134xf32, #tpu.memory_space<vmem>>, vector<1x8x134xf32>
    %964 = vector.shape_cast %963 : vector<1x8x134xf32> to vector<8x134xf32>
    %c32_528 = arith.constant 32 : index
    %965 = memref.load %arg4[%c32_528] : memref<192xf32, #tpu.memory_space<smem>>
    %966 = vector.broadcast %965 : f32 to vector<8x134xf32>
    %967 = arith.mulf %964, %966 : vector<8x134xf32>
    %968 = arith.addf %962, %967 : vector<8x134xf32>
    %c9_529 = arith.constant 9 : index
    %c0_530 = arith.constant 0 : index
    %c0_531 = arith.constant 0 : index
    %969 = vector.load %arg11[%c9_529, %c0_530, %c0_531] : memref<12x8x134xf32, #tpu.memory_space<vmem>>, vector<1x8x134xf32>
    %970 = vector.shape_cast %969 : vector<1x8x134xf32> to vector<8x134xf32>
    %c33 = arith.constant 33 : index
    %971 = memref.load %arg4[%c33] : memref<192xf32, #tpu.memory_space<smem>>
    %972 = vector.broadcast %971 : f32 to vector<8x134xf32>
    %973 = arith.mulf %970, %972 : vector<8x134xf32>
    %974 = arith.addf %968, %973 : vector<8x134xf32>
    %c10_532 = arith.constant 10 : index
    %c0_533 = arith.constant 0 : index
    %c0_534 = arith.constant 0 : index
    %975 = vector.load %arg11[%c10_532, %c0_533, %c0_534] : memref<12x8x134xf32, #tpu.memory_space<vmem>>, vector<1x8x134xf32>
    %976 = vector.shape_cast %975 : vector<1x8x134xf32> to vector<8x134xf32>
    %c34 = arith.constant 34 : index
    %977 = memref.load %arg4[%c34] : memref<192xf32, #tpu.memory_space<smem>>
    %978 = vector.broadcast %977 : f32 to vector<8x134xf32>
    %979 = arith.mulf %976, %978 : vector<8x134xf32>
    %980 = arith.addf %974, %979 : vector<8x134xf32>
    %c11_535 = arith.constant 11 : index
    %c0_536 = arith.constant 0 : index
    %c0_537 = arith.constant 0 : index
    %981 = vector.load %arg11[%c11_535, %c0_536, %c0_537] : memref<12x8x134xf32, #tpu.memory_space<vmem>>, vector<1x8x134xf32>
    %982 = vector.shape_cast %981 : vector<1x8x134xf32> to vector<8x134xf32>
    %c35_538 = arith.constant 35 : index
    %983 = memref.load %arg4[%c35_538] : memref<192xf32, #tpu.memory_space<smem>>
    %984 = vector.broadcast %983 : f32 to vector<8x134xf32>
    %985 = arith.mulf %982, %984 : vector<8x134xf32>
    %986 = arith.addf %980, %985 : vector<8x134xf32>
    %c2_539 = arith.constant 2 : index
    %987 = memref.load %arg5[%c2_539] : memref<16xf32, #tpu.memory_space<smem>>
    %988 = vector.broadcast %987 : f32 to vector<8x134xf32>
    %989 = arith.addf %986, %988 : vector<8x134xf32>
    %cst_540 = arith.constant 0.000000e+00 : f32
    %990 = vector.broadcast %cst_540 : f32 to vector<8x134xf32>
    %991 = arith.maximumf %989, %990 : vector<8x134xf32>
    %992 = arith.truncf %991 : vector<8x134xf32> to vector<8x134xbf16>
    %c2_541 = arith.constant 2 : index
    %c0_542 = arith.constant 0 : index
    %c0_543 = arith.constant 0 : index
    %993 = vector.load %arg6[%c2_541, %c0_542, %c0_543] : memref<16x134x200xbf16, #tpu.memory_space<vmem>>, vector<1x134x200xbf16>
    %994 = vector.shape_cast %993 : vector<1x134x200xbf16> to vector<134x200xbf16>
    %cst_544 = arith.constant dense<0.000000e+00> : vector<8x200xf32>
    %995 = tpu.matmul %992, %994, %cst_544 {dimension_numbers = #tpu.dot_dimension_numbers<[1], [0], [0], [1], [0, 0, 1, 1], [], []>} : vector<8x134xbf16>, vector<134x200xbf16>, vector<8x200xf32> -> vector<8x200xf32>
    %996 = arith.addf %915, %995 : vector<8x200xf32>
    %c0_545 = arith.constant 0 : index
    %c0_546 = arith.constant 0 : index
    %c0_547 = arith.constant 0 : index
    %997 = vector.load %arg11[%c0_545, %c0_546, %c0_547] : memref<12x8x134xf32, #tpu.memory_space<vmem>>, vector<1x8x134xf32>
    %998 = vector.shape_cast %997 : vector<1x8x134xf32> to vector<8x134xf32>
    %c36_548 = arith.constant 36 : index
    %999 = memref.load %arg4[%c36_548] : memref<192xf32, #tpu.memory_space<smem>>
    %1000 = vector.broadcast %999 : f32 to vector<8x134xf32>
    %1001 = arith.mulf %998, %1000 : vector<8x134xf32>
    %c1_549 = arith.constant 1 : index
    %c0_550 = arith.constant 0 : index
    %c0_551 = arith.constant 0 : index
    %1002 = vector.load %arg11[%c1_549, %c0_550, %c0_551] : memref<12x8x134xf32, #tpu.memory_space<vmem>>, vector<1x8x134xf32>
    %1003 = vector.shape_cast %1002 : vector<1x8x134xf32> to vector<8x134xf32>
    %c37_552 = arith.constant 37 : index
    %1004 = memref.load %arg4[%c37_552] : memref<192xf32, #tpu.memory_space<smem>>
    %1005 = vector.broadcast %1004 : f32 to vector<8x134xf32>
    %1006 = arith.mulf %1003, %1005 : vector<8x134xf32>
    %1007 = arith.addf %1001, %1006 : vector<8x134xf32>
    %c2_553 = arith.constant 2 : index
    %c0_554 = arith.constant 0 : index
    %c0_555 = arith.constant 0 : index
    %1008 = vector.load %arg11[%c2_553, %c0_554, %c0_555] : memref<12x8x134xf32, #tpu.memory_space<vmem>>, vector<1x8x134xf32>
    %1009 = vector.shape_cast %1008 : vector<1x8x134xf32> to vector<8x134xf32>
    %c38 = arith.constant 38 : index
    %1010 = memref.load %arg4[%c38] : memref<192xf32, #tpu.memory_space<smem>>
    %1011 = vector.broadcast %1010 : f32 to vector<8x134xf32>
    %1012 = arith.mulf %1009, %1011 : vector<8x134xf32>
    %1013 = arith.addf %1007, %1012 : vector<8x134xf32>
    %c3_556 = arith.constant 3 : index
    %c0_557 = arith.constant 0 : index
    %c0_558 = arith.constant 0 : index
    %1014 = vector.load %arg11[%c3_556, %c0_557, %c0_558] : memref<12x8x134xf32, #tpu.memory_space<vmem>>, vector<1x8x134xf32>
    %1015 = vector.shape_cast %1014 : vector<1x8x134xf32> to vector<8x134xf32>
    %c39 = arith.constant 39 : index
    %1016 = memref.load %arg4[%c39] : memref<192xf32, #tpu.memory_space<smem>>
    %1017 = vector.broadcast %1016 : f32 to vector<8x134xf32>
    %1018 = arith.mulf %1015, %1017 : vector<8x134xf32>
    %1019 = arith.addf %1013, %1018 : vector<8x134xf32>
    %c4_559 = arith.constant 4 : index
    %c0_560 = arith.constant 0 : index
    %c0_561 = arith.constant 0 : index
    %1020 = vector.load %arg11[%c4_559, %c0_560, %c0_561] : memref<12x8x134xf32, #tpu.memory_space<vmem>>, vector<1x8x134xf32>
    %1021 = vector.shape_cast %1020 : vector<1x8x134xf32> to vector<8x134xf32>
    %c40_562 = arith.constant 40 : index
    %1022 = memref.load %arg4[%c40_562] : memref<192xf32, #tpu.memory_space<smem>>
    %1023 = vector.broadcast %1022 : f32 to vector<8x134xf32>
    %1024 = arith.mulf %1021, %1023 : vector<8x134xf32>
    %1025 = arith.addf %1019, %1024 : vector<8x134xf32>
    %c5_563 = arith.constant 5 : index
    %c0_564 = arith.constant 0 : index
    %c0_565 = arith.constant 0 : index
    %1026 = vector.load %arg11[%c5_563, %c0_564, %c0_565] : memref<12x8x134xf32, #tpu.memory_space<vmem>>, vector<1x8x134xf32>
    %1027 = vector.shape_cast %1026 : vector<1x8x134xf32> to vector<8x134xf32>
    %c41_566 = arith.constant 41 : index
    %1028 = memref.load %arg4[%c41_566] : memref<192xf32, #tpu.memory_space<smem>>
    %1029 = vector.broadcast %1028 : f32 to vector<8x134xf32>
    %1030 = arith.mulf %1027, %1029 : vector<8x134xf32>
    %1031 = arith.addf %1025, %1030 : vector<8x134xf32>
    %c6_567 = arith.constant 6 : index
    %c0_568 = arith.constant 0 : index
    %c0_569 = arith.constant 0 : index
    %1032 = vector.load %arg11[%c6_567, %c0_568, %c0_569] : memref<12x8x134xf32, #tpu.memory_space<vmem>>, vector<1x8x134xf32>
    %1033 = vector.shape_cast %1032 : vector<1x8x134xf32> to vector<8x134xf32>
    %c42_570 = arith.constant 42 : index
    %1034 = memref.load %arg4[%c42_570] : memref<192xf32, #tpu.memory_space<smem>>
    %1035 = vector.broadcast %1034 : f32 to vector<8x134xf32>
    %1036 = arith.mulf %1033, %1035 : vector<8x134xf32>
    %1037 = arith.addf %1031, %1036 : vector<8x134xf32>
    %c7_571 = arith.constant 7 : index
    %c0_572 = arith.constant 0 : index
    %c0_573 = arith.constant 0 : index
    %1038 = vector.load %arg11[%c7_571, %c0_572, %c0_573] : memref<12x8x134xf32, #tpu.memory_space<vmem>>, vector<1x8x134xf32>
    %1039 = vector.shape_cast %1038 : vector<1x8x134xf32> to vector<8x134xf32>
    %c43 = arith.constant 43 : index
    %1040 = memref.load %arg4[%c43] : memref<192xf32, #tpu.memory_space<smem>>
    %1041 = vector.broadcast %1040 : f32 to vector<8x134xf32>
    %1042 = arith.mulf %1039, %1041 : vector<8x134xf32>
    %1043 = arith.addf %1037, %1042 : vector<8x134xf32>
    %c8_574 = arith.constant 8 : index
    %c0_575 = arith.constant 0 : index
    %c0_576 = arith.constant 0 : index
    %1044 = vector.load %arg11[%c8_574, %c0_575, %c0_576] : memref<12x8x134xf32, #tpu.memory_space<vmem>>, vector<1x8x134xf32>
    %1045 = vector.shape_cast %1044 : vector<1x8x134xf32> to vector<8x134xf32>
    %c44 = arith.constant 44 : index
    %1046 = memref.load %arg4[%c44] : memref<192xf32, #tpu.memory_space<smem>>
    %1047 = vector.broadcast %1046 : f32 to vector<8x134xf32>
    %1048 = arith.mulf %1045, %1047 : vector<8x134xf32>
    %1049 = arith.addf %1043, %1048 : vector<8x134xf32>
    %c9_577 = arith.constant 9 : index
    %c0_578 = arith.constant 0 : index
    %c0_579 = arith.constant 0 : index
    %1050 = vector.load %arg11[%c9_577, %c0_578, %c0_579] : memref<12x8x134xf32, #tpu.memory_space<vmem>>, vector<1x8x134xf32>
    %1051 = vector.shape_cast %1050 : vector<1x8x134xf32> to vector<8x134xf32>
    %c45 = arith.constant 45 : index
    %1052 = memref.load %arg4[%c45] : memref<192xf32, #tpu.memory_space<smem>>
    %1053 = vector.broadcast %1052 : f32 to vector<8x134xf32>
    %1054 = arith.mulf %1051, %1053 : vector<8x134xf32>
    %1055 = arith.addf %1049, %1054 : vector<8x134xf32>
    %c10_580 = arith.constant 10 : index
    %c0_581 = arith.constant 0 : index
    %c0_582 = arith.constant 0 : index
    %1056 = vector.load %arg11[%c10_580, %c0_581, %c0_582] : memref<12x8x134xf32, #tpu.memory_space<vmem>>, vector<1x8x134xf32>
    %1057 = vector.shape_cast %1056 : vector<1x8x134xf32> to vector<8x134xf32>
    %c46 = arith.constant 46 : index
    %1058 = memref.load %arg4[%c46] : memref<192xf32, #tpu.memory_space<smem>>
    %1059 = vector.broadcast %1058 : f32 to vector<8x134xf32>
    %1060 = arith.mulf %1057, %1059 : vector<8x134xf32>
    %1061 = arith.addf %1055, %1060 : vector<8x134xf32>
    %c11_583 = arith.constant 11 : index
    %c0_584 = arith.constant 0 : index
    %c0_585 = arith.constant 0 : index
    %1062 = vector.load %arg11[%c11_583, %c0_584, %c0_585] : memref<12x8x134xf32, #tpu.memory_space<vmem>>, vector<1x8x134xf32>
    %1063 = vector.shape_cast %1062 : vector<1x8x134xf32> to vector<8x134xf32>
    %c47 = arith.constant 47 : index
    %1064 = memref.load %arg4[%c47] : memref<192xf32, #tpu.memory_space<smem>>
    %1065 = vector.broadcast %1064 : f32 to vector<8x134xf32>
    %1066 = arith.mulf %1063, %1065 : vector<8x134xf32>
    %1067 = arith.addf %1061, %1066 : vector<8x134xf32>
    %c3_586 = arith.constant 3 : index
    %1068 = memref.load %arg5[%c3_586] : memref<16xf32, #tpu.memory_space<smem>>
    %1069 = vector.broadcast %1068 : f32 to vector<8x134xf32>
    %1070 = arith.addf %1067, %1069 : vector<8x134xf32>
    %cst_587 = arith.constant 0.000000e+00 : f32
    %1071 = vector.broadcast %cst_587 : f32 to vector<8x134xf32>
    %1072 = arith.maximumf %1070, %1071 : vector<8x134xf32>
    %1073 = arith.truncf %1072 : vector<8x134xf32> to vector<8x134xbf16>
    %c3_588 = arith.constant 3 : index
    %c0_589 = arith.constant 0 : index
    %c0_590 = arith.constant 0 : index
    %1074 = vector.load %arg6[%c3_588, %c0_589, %c0_590] : memref<16x134x200xbf16, #tpu.memory_space<vmem>>, vector<1x134x200xbf16>
    %1075 = vector.shape_cast %1074 : vector<1x134x200xbf16> to vector<134x200xbf16>
    %cst_591 = arith.constant dense<0.000000e+00> : vector<8x200xf32>
    %1076 = tpu.matmul %1073, %1075, %cst_591 {dimension_numbers = #tpu.dot_dimension_numbers<[1], [0], [0], [1], [0, 0, 1, 1], [], []>} : vector<8x134xbf16>, vector<134x200xbf16>, vector<8x200xf32> -> vector<8x200xf32>
    %1077 = arith.addf %996, %1076 : vector<8x200xf32>
    %c0_592 = arith.constant 0 : index
    %c0_593 = arith.constant 0 : index
    %c0_594 = arith.constant 0 : index
    %1078 = vector.load %arg11[%c0_592, %c0_593, %c0_594] : memref<12x8x134xf32, #tpu.memory_space<vmem>>, vector<1x8x134xf32>
    %1079 = vector.shape_cast %1078 : vector<1x8x134xf32> to vector<8x134xf32>
    %c48 = arith.constant 48 : index
    %1080 = memref.load %arg4[%c48] : memref<192xf32, #tpu.memory_space<smem>>
    %1081 = vector.broadcast %1080 : f32 to vector<8x134xf32>
    %1082 = arith.mulf %1079, %1081 : vector<8x134xf32>
    %c1_595 = arith.constant 1 : index
    %c0_596 = arith.constant 0 : index
    %c0_597 = arith.constant 0 : index
    %1083 = vector.load %arg11[%c1_595, %c0_596, %c0_597] : memref<12x8x134xf32, #tpu.memory_space<vmem>>, vector<1x8x134xf32>
    %1084 = vector.shape_cast %1083 : vector<1x8x134xf32> to vector<8x134xf32>
    %c49 = arith.constant 49 : index
    %1085 = memref.load %arg4[%c49] : memref<192xf32, #tpu.memory_space<smem>>
    %1086 = vector.broadcast %1085 : f32 to vector<8x134xf32>
    %1087 = arith.mulf %1084, %1086 : vector<8x134xf32>
    %1088 = arith.addf %1082, %1087 : vector<8x134xf32>
    %c2_598 = arith.constant 2 : index
    %c0_599 = arith.constant 0 : index
    %c0_600 = arith.constant 0 : index
    %1089 = vector.load %arg11[%c2_598, %c0_599, %c0_600] : memref<12x8x134xf32, #tpu.memory_space<vmem>>, vector<1x8x134xf32>
    %1090 = vector.shape_cast %1089 : vector<1x8x134xf32> to vector<8x134xf32>
    %c50 = arith.constant 50 : index
    %1091 = memref.load %arg4[%c50] : memref<192xf32, #tpu.memory_space<smem>>
    %1092 = vector.broadcast %1091 : f32 to vector<8x134xf32>
    %1093 = arith.mulf %1090, %1092 : vector<8x134xf32>
    %1094 = arith.addf %1088, %1093 : vector<8x134xf32>
    %c3_601 = arith.constant 3 : index
    %c0_602 = arith.constant 0 : index
    %c0_603 = arith.constant 0 : index
    %1095 = vector.load %arg11[%c3_601, %c0_602, %c0_603] : memref<12x8x134xf32, #tpu.memory_space<vmem>>, vector<1x8x134xf32>
    %1096 = vector.shape_cast %1095 : vector<1x8x134xf32> to vector<8x134xf32>
    %c51 = arith.constant 51 : index
    %1097 = memref.load %arg4[%c51] : memref<192xf32, #tpu.memory_space<smem>>
    %1098 = vector.broadcast %1097 : f32 to vector<8x134xf32>
    %1099 = arith.mulf %1096, %1098 : vector<8x134xf32>
    %1100 = arith.addf %1094, %1099 : vector<8x134xf32>
    %c4_604 = arith.constant 4 : index
    %c0_605 = arith.constant 0 : index
    %c0_606 = arith.constant 0 : index
    %1101 = vector.load %arg11[%c4_604, %c0_605, %c0_606] : memref<12x8x134xf32, #tpu.memory_space<vmem>>, vector<1x8x134xf32>
    %1102 = vector.shape_cast %1101 : vector<1x8x134xf32> to vector<8x134xf32>
    %c52 = arith.constant 52 : index
    %1103 = memref.load %arg4[%c52] : memref<192xf32, #tpu.memory_space<smem>>
    %1104 = vector.broadcast %1103 : f32 to vector<8x134xf32>
    %1105 = arith.mulf %1102, %1104 : vector<8x134xf32>
    %1106 = arith.addf %1100, %1105 : vector<8x134xf32>
    %c5_607 = arith.constant 5 : index
    %c0_608 = arith.constant 0 : index
    %c0_609 = arith.constant 0 : index
    %1107 = vector.load %arg11[%c5_607, %c0_608, %c0_609] : memref<12x8x134xf32, #tpu.memory_space<vmem>>, vector<1x8x134xf32>
    %1108 = vector.shape_cast %1107 : vector<1x8x134xf32> to vector<8x134xf32>
    %c53 = arith.constant 53 : index
    %1109 = memref.load %arg4[%c53] : memref<192xf32, #tpu.memory_space<smem>>
    %1110 = vector.broadcast %1109 : f32 to vector<8x134xf32>
    %1111 = arith.mulf %1108, %1110 : vector<8x134xf32>
    %1112 = arith.addf %1106, %1111 : vector<8x134xf32>
    %c6_610 = arith.constant 6 : index
    %c0_611 = arith.constant 0 : index
    %c0_612 = arith.constant 0 : index
    %1113 = vector.load %arg11[%c6_610, %c0_611, %c0_612] : memref<12x8x134xf32, #tpu.memory_space<vmem>>, vector<1x8x134xf32>
    %1114 = vector.shape_cast %1113 : vector<1x8x134xf32> to vector<8x134xf32>
    %c54 = arith.constant 54 : index
    %1115 = memref.load %arg4[%c54] : memref<192xf32, #tpu.memory_space<smem>>
    %1116 = vector.broadcast %1115 : f32 to vector<8x134xf32>
    %1117 = arith.mulf %1114, %1116 : vector<8x134xf32>
    %1118 = arith.addf %1112, %1117 : vector<8x134xf32>
    %c7_613 = arith.constant 7 : index
    %c0_614 = arith.constant 0 : index
    %c0_615 = arith.constant 0 : index
    %1119 = vector.load %arg11[%c7_613, %c0_614, %c0_615] : memref<12x8x134xf32, #tpu.memory_space<vmem>>, vector<1x8x134xf32>
    %1120 = vector.shape_cast %1119 : vector<1x8x134xf32> to vector<8x134xf32>
    %c55 = arith.constant 55 : index
    %1121 = memref.load %arg4[%c55] : memref<192xf32, #tpu.memory_space<smem>>
    %1122 = vector.broadcast %1121 : f32 to vector<8x134xf32>
    %1123 = arith.mulf %1120, %1122 : vector<8x134xf32>
    %1124 = arith.addf %1118, %1123 : vector<8x134xf32>
    %c8_616 = arith.constant 8 : index
    %c0_617 = arith.constant 0 : index
    %c0_618 = arith.constant 0 : index
    %1125 = vector.load %arg11[%c8_616, %c0_617, %c0_618] : memref<12x8x134xf32, #tpu.memory_space<vmem>>, vector<1x8x134xf32>
    %1126 = vector.shape_cast %1125 : vector<1x8x134xf32> to vector<8x134xf32>
    %c56 = arith.constant 56 : index
    %1127 = memref.load %arg4[%c56] : memref<192xf32, #tpu.memory_space<smem>>
    %1128 = vector.broadcast %1127 : f32 to vector<8x134xf32>
    %1129 = arith.mulf %1126, %1128 : vector<8x134xf32>
    %1130 = arith.addf %1124, %1129 : vector<8x134xf32>
    %c9_619 = arith.constant 9 : index
    %c0_620 = arith.constant 0 : index
    %c0_621 = arith.constant 0 : index
    %1131 = vector.load %arg11[%c9_619, %c0_620, %c0_621] : memref<12x8x134xf32, #tpu.memory_space<vmem>>, vector<1x8x134xf32>
    %1132 = vector.shape_cast %1131 : vector<1x8x134xf32> to vector<8x134xf32>
    %c57 = arith.constant 57 : index
    %1133 = memref.load %arg4[%c57] : memref<192xf32, #tpu.memory_space<smem>>
    %1134 = vector.broadcast %1133 : f32 to vector<8x134xf32>
    %1135 = arith.mulf %1132, %1134 : vector<8x134xf32>
    %1136 = arith.addf %1130, %1135 : vector<8x134xf32>
    %c10_622 = arith.constant 10 : index
    %c0_623 = arith.constant 0 : index
    %c0_624 = arith.constant 0 : index
    %1137 = vector.load %arg11[%c10_622, %c0_623, %c0_624] : memref<12x8x134xf32, #tpu.memory_space<vmem>>, vector<1x8x134xf32>
    %1138 = vector.shape_cast %1137 : vector<1x8x134xf32> to vector<8x134xf32>
    %c58 = arith.constant 58 : index
    %1139 = memref.load %arg4[%c58] : memref<192xf32, #tpu.memory_space<smem>>
    %1140 = vector.broadcast %1139 : f32 to vector<8x134xf32>
    %1141 = arith.mulf %1138, %1140 : vector<8x134xf32>
    %1142 = arith.addf %1136, %1141 : vector<8x134xf32>
    %c11_625 = arith.constant 11 : index
    %c0_626 = arith.constant 0 : index
    %c0_627 = arith.constant 0 : index
    %1143 = vector.load %arg11[%c11_625, %c0_626, %c0_627] : memref<12x8x134xf32, #tpu.memory_space<vmem>>, vector<1x8x134xf32>
    %1144 = vector.shape_cast %1143 : vector<1x8x134xf32> to vector<8x134xf32>
    %c59 = arith.constant 59 : index
    %1145 = memref.load %arg4[%c59] : memref<192xf32, #tpu.memory_space<smem>>
    %1146 = vector.broadcast %1145 : f32 to vector<8x134xf32>
    %1147 = arith.mulf %1144, %1146 : vector<8x134xf32>
    %1148 = arith.addf %1142, %1147 : vector<8x134xf32>
    %c4_628 = arith.constant 4 : index
    %1149 = memref.load %arg5[%c4_628] : memref<16xf32, #tpu.memory_space<smem>>
    %1150 = vector.broadcast %1149 : f32 to vector<8x134xf32>
    %1151 = arith.addf %1148, %1150 : vector<8x134xf32>
    %cst_629 = arith.constant 0.000000e+00 : f32
    %1152 = vector.broadcast %cst_629 : f32 to vector<8x134xf32>
    %1153 = arith.maximumf %1151, %1152 : vector<8x134xf32>
    %1154 = arith.truncf %1153 : vector<8x134xf32> to vector<8x134xbf16>
    %c4_630 = arith.constant 4 : index
    %c0_631 = arith.constant 0 : index
    %c0_632 = arith.constant 0 : index
    %1155 = vector.load %arg6[%c4_630, %c0_631, %c0_632] : memref<16x134x200xbf16, #tpu.memory_space<vmem>>, vector<1x134x200xbf16>
    %1156 = vector.shape_cast %1155 : vector<1x134x200xbf16> to vector<134x200xbf16>
    %cst_633 = arith.constant dense<0.000000e+00> : vector<8x200xf32>
    %1157 = tpu.matmul %1154, %1156, %cst_633 {dimension_numbers = #tpu.dot_dimension_numbers<[1], [0], [0], [1], [0, 0, 1, 1], [], []>} : vector<8x134xbf16>, vector<134x200xbf16>, vector<8x200xf32> -> vector<8x200xf32>
    %1158 = arith.addf %1077, %1157 : vector<8x200xf32>
    %c0_634 = arith.constant 0 : index
    %c0_635 = arith.constant 0 : index
    %c0_636 = arith.constant 0 : index
    %1159 = vector.load %arg11[%c0_634, %c0_635, %c0_636] : memref<12x8x134xf32, #tpu.memory_space<vmem>>, vector<1x8x134xf32>
    %1160 = vector.shape_cast %1159 : vector<1x8x134xf32> to vector<8x134xf32>
    %c60 = arith.constant 60 : index
    %1161 = memref.load %arg4[%c60] : memref<192xf32, #tpu.memory_space<smem>>
    %1162 = vector.broadcast %1161 : f32 to vector<8x134xf32>
    %1163 = arith.mulf %1160, %1162 : vector<8x134xf32>
    %c1_637 = arith.constant 1 : index
    %c0_638 = arith.constant 0 : index
    %c0_639 = arith.constant 0 : index
    %1164 = vector.load %arg11[%c1_637, %c0_638, %c0_639] : memref<12x8x134xf32, #tpu.memory_space<vmem>>, vector<1x8x134xf32>
    %1165 = vector.shape_cast %1164 : vector<1x8x134xf32> to vector<8x134xf32>
    %c61 = arith.constant 61 : index
    %1166 = memref.load %arg4[%c61] : memref<192xf32, #tpu.memory_space<smem>>
    %1167 = vector.broadcast %1166 : f32 to vector<8x134xf32>
    %1168 = arith.mulf %1165, %1167 : vector<8x134xf32>
    %1169 = arith.addf %1163, %1168 : vector<8x134xf32>
    %c2_640 = arith.constant 2 : index
    %c0_641 = arith.constant 0 : index
    %c0_642 = arith.constant 0 : index
    %1170 = vector.load %arg11[%c2_640, %c0_641, %c0_642] : memref<12x8x134xf32, #tpu.memory_space<vmem>>, vector<1x8x134xf32>
    %1171 = vector.shape_cast %1170 : vector<1x8x134xf32> to vector<8x134xf32>
    %c62 = arith.constant 62 : index
    %1172 = memref.load %arg4[%c62] : memref<192xf32, #tpu.memory_space<smem>>
    %1173 = vector.broadcast %1172 : f32 to vector<8x134xf32>
    %1174 = arith.mulf %1171, %1173 : vector<8x134xf32>
    %1175 = arith.addf %1169, %1174 : vector<8x134xf32>
    %c3_643 = arith.constant 3 : index
    %c0_644 = arith.constant 0 : index
    %c0_645 = arith.constant 0 : index
    %1176 = vector.load %arg11[%c3_643, %c0_644, %c0_645] : memref<12x8x134xf32, #tpu.memory_space<vmem>>, vector<1x8x134xf32>
    %1177 = vector.shape_cast %1176 : vector<1x8x134xf32> to vector<8x134xf32>
    %c63 = arith.constant 63 : index
    %1178 = memref.load %arg4[%c63] : memref<192xf32, #tpu.memory_space<smem>>
    %1179 = vector.broadcast %1178 : f32 to vector<8x134xf32>
    %1180 = arith.mulf %1177, %1179 : vector<8x134xf32>
    %1181 = arith.addf %1175, %1180 : vector<8x134xf32>
    %c4_646 = arith.constant 4 : index
    %c0_647 = arith.constant 0 : index
    %c0_648 = arith.constant 0 : index
    %1182 = vector.load %arg11[%c4_646, %c0_647, %c0_648] : memref<12x8x134xf32, #tpu.memory_space<vmem>>, vector<1x8x134xf32>
    %1183 = vector.shape_cast %1182 : vector<1x8x134xf32> to vector<8x134xf32>
    %c64 = arith.constant 64 : index
    %1184 = memref.load %arg4[%c64] : memref<192xf32, #tpu.memory_space<smem>>
    %1185 = vector.broadcast %1184 : f32 to vector<8x134xf32>
    %1186 = arith.mulf %1183, %1185 : vector<8x134xf32>
    %1187 = arith.addf %1181, %1186 : vector<8x134xf32>
    %c5_649 = arith.constant 5 : index
    %c0_650 = arith.constant 0 : index
    %c0_651 = arith.constant 0 : index
    %1188 = vector.load %arg11[%c5_649, %c0_650, %c0_651] : memref<12x8x134xf32, #tpu.memory_space<vmem>>, vector<1x8x134xf32>
    %1189 = vector.shape_cast %1188 : vector<1x8x134xf32> to vector<8x134xf32>
    %c65 = arith.constant 65 : index
    %1190 = memref.load %arg4[%c65] : memref<192xf32, #tpu.memory_space<smem>>
    %1191 = vector.broadcast %1190 : f32 to vector<8x134xf32>
    %1192 = arith.mulf %1189, %1191 : vector<8x134xf32>
    %1193 = arith.addf %1187, %1192 : vector<8x134xf32>
    %c6_652 = arith.constant 6 : index
    %c0_653 = arith.constant 0 : index
    %c0_654 = arith.constant 0 : index
    %1194 = vector.load %arg11[%c6_652, %c0_653, %c0_654] : memref<12x8x134xf32, #tpu.memory_space<vmem>>, vector<1x8x134xf32>
    %1195 = vector.shape_cast %1194 : vector<1x8x134xf32> to vector<8x134xf32>
    %c66 = arith.constant 66 : index
    %1196 = memref.load %arg4[%c66] : memref<192xf32, #tpu.memory_space<smem>>
    %1197 = vector.broadcast %1196 : f32 to vector<8x134xf32>
    %1198 = arith.mulf %1195, %1197 : vector<8x134xf32>
    %1199 = arith.addf %1193, %1198 : vector<8x134xf32>
    %c7_655 = arith.constant 7 : index
    %c0_656 = arith.constant 0 : index
    %c0_657 = arith.constant 0 : index
    %1200 = vector.load %arg11[%c7_655, %c0_656, %c0_657] : memref<12x8x134xf32, #tpu.memory_space<vmem>>, vector<1x8x134xf32>
    %1201 = vector.shape_cast %1200 : vector<1x8x134xf32> to vector<8x134xf32>
    %c67 = arith.constant 67 : index
    %1202 = memref.load %arg4[%c67] : memref<192xf32, #tpu.memory_space<smem>>
    %1203 = vector.broadcast %1202 : f32 to vector<8x134xf32>
    %1204 = arith.mulf %1201, %1203 : vector<8x134xf32>
    %1205 = arith.addf %1199, %1204 : vector<8x134xf32>
    %c8_658 = arith.constant 8 : index
    %c0_659 = arith.constant 0 : index
    %c0_660 = arith.constant 0 : index
    %1206 = vector.load %arg11[%c8_658, %c0_659, %c0_660] : memref<12x8x134xf32, #tpu.memory_space<vmem>>, vector<1x8x134xf32>
    %1207 = vector.shape_cast %1206 : vector<1x8x134xf32> to vector<8x134xf32>
    %c68 = arith.constant 68 : index
    %1208 = memref.load %arg4[%c68] : memref<192xf32, #tpu.memory_space<smem>>
    %1209 = vector.broadcast %1208 : f32 to vector<8x134xf32>
    %1210 = arith.mulf %1207, %1209 : vector<8x134xf32>
    %1211 = arith.addf %1205, %1210 : vector<8x134xf32>
    %c9_661 = arith.constant 9 : index
    %c0_662 = arith.constant 0 : index
    %c0_663 = arith.constant 0 : index
    %1212 = vector.load %arg11[%c9_661, %c0_662, %c0_663] : memref<12x8x134xf32, #tpu.memory_space<vmem>>, vector<1x8x134xf32>
    %1213 = vector.shape_cast %1212 : vector<1x8x134xf32> to vector<8x134xf32>
    %c69 = arith.constant 69 : index
    %1214 = memref.load %arg4[%c69] : memref<192xf32, #tpu.memory_space<smem>>
    %1215 = vector.broadcast %1214 : f32 to vector<8x134xf32>
    %1216 = arith.mulf %1213, %1215 : vector<8x134xf32>
    %1217 = arith.addf %1211, %1216 : vector<8x134xf32>
    %c10_664 = arith.constant 10 : index
    %c0_665 = arith.constant 0 : index
    %c0_666 = arith.constant 0 : index
    %1218 = vector.load %arg11[%c10_664, %c0_665, %c0_666] : memref<12x8x134xf32, #tpu.memory_space<vmem>>, vector<1x8x134xf32>
    %1219 = vector.shape_cast %1218 : vector<1x8x134xf32> to vector<8x134xf32>
    %c70 = arith.constant 70 : index
    %1220 = memref.load %arg4[%c70] : memref<192xf32, #tpu.memory_space<smem>>
    %1221 = vector.broadcast %1220 : f32 to vector<8x134xf32>
    %1222 = arith.mulf %1219, %1221 : vector<8x134xf32>
    %1223 = arith.addf %1217, %1222 : vector<8x134xf32>
    %c11_667 = arith.constant 11 : index
    %c0_668 = arith.constant 0 : index
    %c0_669 = arith.constant 0 : index
    %1224 = vector.load %arg11[%c11_667, %c0_668, %c0_669] : memref<12x8x134xf32, #tpu.memory_space<vmem>>, vector<1x8x134xf32>
    %1225 = vector.shape_cast %1224 : vector<1x8x134xf32> to vector<8x134xf32>
    %c71 = arith.constant 71 : index
    %1226 = memref.load %arg4[%c71] : memref<192xf32, #tpu.memory_space<smem>>
    %1227 = vector.broadcast %1226 : f32 to vector<8x134xf32>
    %1228 = arith.mulf %1225, %1227 : vector<8x134xf32>
    %1229 = arith.addf %1223, %1228 : vector<8x134xf32>
    %c5_670 = arith.constant 5 : index
    %1230 = memref.load %arg5[%c5_670] : memref<16xf32, #tpu.memory_space<smem>>
    %1231 = vector.broadcast %1230 : f32 to vector<8x134xf32>
    %1232 = arith.addf %1229, %1231 : vector<8x134xf32>
    %cst_671 = arith.constant 0.000000e+00 : f32
    %1233 = vector.broadcast %cst_671 : f32 to vector<8x134xf32>
    %1234 = arith.maximumf %1232, %1233 : vector<8x134xf32>
    %1235 = arith.truncf %1234 : vector<8x134xf32> to vector<8x134xbf16>
    %c5_672 = arith.constant 5 : index
    %c0_673 = arith.constant 0 : index
    %c0_674 = arith.constant 0 : index
    %1236 = vector.load %arg6[%c5_672, %c0_673, %c0_674] : memref<16x134x200xbf16, #tpu.memory_space<vmem>>, vector<1x134x200xbf16>
    %1237 = vector.shape_cast %1236 : vector<1x134x200xbf16> to vector<134x200xbf16>
    %cst_675 = arith.constant dense<0.000000e+00> : vector<8x200xf32>
    %1238 = tpu.matmul %1235, %1237, %cst_675 {dimension_numbers = #tpu.dot_dimension_numbers<[1], [0], [0], [1], [0, 0, 1, 1], [], []>} : vector<8x134xbf16>, vector<134x200xbf16>, vector<8x200xf32> -> vector<8x200xf32>
    %1239 = arith.addf %1158, %1238 : vector<8x200xf32>
    %c0_676 = arith.constant 0 : index
    %c0_677 = arith.constant 0 : index
    %c0_678 = arith.constant 0 : index
    %1240 = vector.load %arg11[%c0_676, %c0_677, %c0_678] : memref<12x8x134xf32, #tpu.memory_space<vmem>>, vector<1x8x134xf32>
    %1241 = vector.shape_cast %1240 : vector<1x8x134xf32> to vector<8x134xf32>
    %c72 = arith.constant 72 : index
    %1242 = memref.load %arg4[%c72] : memref<192xf32, #tpu.memory_space<smem>>
    %1243 = vector.broadcast %1242 : f32 to vector<8x134xf32>
    %1244 = arith.mulf %1241, %1243 : vector<8x134xf32>
    %c1_679 = arith.constant 1 : index
    %c0_680 = arith.constant 0 : index
    %c0_681 = arith.constant 0 : index
    %1245 = vector.load %arg11[%c1_679, %c0_680, %c0_681] : memref<12x8x134xf32, #tpu.memory_space<vmem>>, vector<1x8x134xf32>
    %1246 = vector.shape_cast %1245 : vector<1x8x134xf32> to vector<8x134xf32>
    %c73 = arith.constant 73 : index
    %1247 = memref.load %arg4[%c73] : memref<192xf32, #tpu.memory_space<smem>>
    %1248 = vector.broadcast %1247 : f32 to vector<8x134xf32>
    %1249 = arith.mulf %1246, %1248 : vector<8x134xf32>
    %1250 = arith.addf %1244, %1249 : vector<8x134xf32>
    %c2_682 = arith.constant 2 : index
    %c0_683 = arith.constant 0 : index
    %c0_684 = arith.constant 0 : index
    %1251 = vector.load %arg11[%c2_682, %c0_683, %c0_684] : memref<12x8x134xf32, #tpu.memory_space<vmem>>, vector<1x8x134xf32>
    %1252 = vector.shape_cast %1251 : vector<1x8x134xf32> to vector<8x134xf32>
    %c74 = arith.constant 74 : index
    %1253 = memref.load %arg4[%c74] : memref<192xf32, #tpu.memory_space<smem>>
    %1254 = vector.broadcast %1253 : f32 to vector<8x134xf32>
    %1255 = arith.mulf %1252, %1254 : vector<8x134xf32>
    %1256 = arith.addf %1250, %1255 : vector<8x134xf32>
    %c3_685 = arith.constant 3 : index
    %c0_686 = arith.constant 0 : index
    %c0_687 = arith.constant 0 : index
    %1257 = vector.load %arg11[%c3_685, %c0_686, %c0_687] : memref<12x8x134xf32, #tpu.memory_space<vmem>>, vector<1x8x134xf32>
    %1258 = vector.shape_cast %1257 : vector<1x8x134xf32> to vector<8x134xf32>
    %c75 = arith.constant 75 : index
    %1259 = memref.load %arg4[%c75] : memref<192xf32, #tpu.memory_space<smem>>
    %1260 = vector.broadcast %1259 : f32 to vector<8x134xf32>
    %1261 = arith.mulf %1258, %1260 : vector<8x134xf32>
    %1262 = arith.addf %1256, %1261 : vector<8x134xf32>
    %c4_688 = arith.constant 4 : index
    %c0_689 = arith.constant 0 : index
    %c0_690 = arith.constant 0 : index
    %1263 = vector.load %arg11[%c4_688, %c0_689, %c0_690] : memref<12x8x134xf32, #tpu.memory_space<vmem>>, vector<1x8x134xf32>
    %1264 = vector.shape_cast %1263 : vector<1x8x134xf32> to vector<8x134xf32>
    %c76 = arith.constant 76 : index
    %1265 = memref.load %arg4[%c76] : memref<192xf32, #tpu.memory_space<smem>>
    %1266 = vector.broadcast %1265 : f32 to vector<8x134xf32>
    %1267 = arith.mulf %1264, %1266 : vector<8x134xf32>
    %1268 = arith.addf %1262, %1267 : vector<8x134xf32>
    %c5_691 = arith.constant 5 : index
    %c0_692 = arith.constant 0 : index
    %c0_693 = arith.constant 0 : index
    %1269 = vector.load %arg11[%c5_691, %c0_692, %c0_693] : memref<12x8x134xf32, #tpu.memory_space<vmem>>, vector<1x8x134xf32>
    %1270 = vector.shape_cast %1269 : vector<1x8x134xf32> to vector<8x134xf32>
    %c77 = arith.constant 77 : index
    %1271 = memref.load %arg4[%c77] : memref<192xf32, #tpu.memory_space<smem>>
    %1272 = vector.broadcast %1271 : f32 to vector<8x134xf32>
    %1273 = arith.mulf %1270, %1272 : vector<8x134xf32>
    %1274 = arith.addf %1268, %1273 : vector<8x134xf32>
    %c6_694 = arith.constant 6 : index
    %c0_695 = arith.constant 0 : index
    %c0_696 = arith.constant 0 : index
    %1275 = vector.load %arg11[%c6_694, %c0_695, %c0_696] : memref<12x8x134xf32, #tpu.memory_space<vmem>>, vector<1x8x134xf32>
    %1276 = vector.shape_cast %1275 : vector<1x8x134xf32> to vector<8x134xf32>
    %c78 = arith.constant 78 : index
    %1277 = memref.load %arg4[%c78] : memref<192xf32, #tpu.memory_space<smem>>
    %1278 = vector.broadcast %1277 : f32 to vector<8x134xf32>
    %1279 = arith.mulf %1276, %1278 : vector<8x134xf32>
    %1280 = arith.addf %1274, %1279 : vector<8x134xf32>
    %c7_697 = arith.constant 7 : index
    %c0_698 = arith.constant 0 : index
    %c0_699 = arith.constant 0 : index
    %1281 = vector.load %arg11[%c7_697, %c0_698, %c0_699] : memref<12x8x134xf32, #tpu.memory_space<vmem>>, vector<1x8x134xf32>
    %1282 = vector.shape_cast %1281 : vector<1x8x134xf32> to vector<8x134xf32>
    %c79 = arith.constant 79 : index
    %1283 = memref.load %arg4[%c79] : memref<192xf32, #tpu.memory_space<smem>>
    %1284 = vector.broadcast %1283 : f32 to vector<8x134xf32>
    %1285 = arith.mulf %1282, %1284 : vector<8x134xf32>
    %1286 = arith.addf %1280, %1285 : vector<8x134xf32>
    %c8_700 = arith.constant 8 : index
    %c0_701 = arith.constant 0 : index
    %c0_702 = arith.constant 0 : index
    %1287 = vector.load %arg11[%c8_700, %c0_701, %c0_702] : memref<12x8x134xf32, #tpu.memory_space<vmem>>, vector<1x8x134xf32>
    %1288 = vector.shape_cast %1287 : vector<1x8x134xf32> to vector<8x134xf32>
    %c80 = arith.constant 80 : index
    %1289 = memref.load %arg4[%c80] : memref<192xf32, #tpu.memory_space<smem>>
    %1290 = vector.broadcast %1289 : f32 to vector<8x134xf32>
    %1291 = arith.mulf %1288, %1290 : vector<8x134xf32>
    %1292 = arith.addf %1286, %1291 : vector<8x134xf32>
    %c9_703 = arith.constant 9 : index
    %c0_704 = arith.constant 0 : index
    %c0_705 = arith.constant 0 : index
    %1293 = vector.load %arg11[%c9_703, %c0_704, %c0_705] : memref<12x8x134xf32, #tpu.memory_space<vmem>>, vector<1x8x134xf32>
    %1294 = vector.shape_cast %1293 : vector<1x8x134xf32> to vector<8x134xf32>
    %c81 = arith.constant 81 : index
    %1295 = memref.load %arg4[%c81] : memref<192xf32, #tpu.memory_space<smem>>
    %1296 = vector.broadcast %1295 : f32 to vector<8x134xf32>
    %1297 = arith.mulf %1294, %1296 : vector<8x134xf32>
    %1298 = arith.addf %1292, %1297 : vector<8x134xf32>
    %c10_706 = arith.constant 10 : index
    %c0_707 = arith.constant 0 : index
    %c0_708 = arith.constant 0 : index
    %1299 = vector.load %arg11[%c10_706, %c0_707, %c0_708] : memref<12x8x134xf32, #tpu.memory_space<vmem>>, vector<1x8x134xf32>
    %1300 = vector.shape_cast %1299 : vector<1x8x134xf32> to vector<8x134xf32>
    %c82 = arith.constant 82 : index
    %1301 = memref.load %arg4[%c82] : memref<192xf32, #tpu.memory_space<smem>>
    %1302 = vector.broadcast %1301 : f32 to vector<8x134xf32>
    %1303 = arith.mulf %1300, %1302 : vector<8x134xf32>
    %1304 = arith.addf %1298, %1303 : vector<8x134xf32>
    %c11_709 = arith.constant 11 : index
    %c0_710 = arith.constant 0 : index
    %c0_711 = arith.constant 0 : index
    %1305 = vector.load %arg11[%c11_709, %c0_710, %c0_711] : memref<12x8x134xf32, #tpu.memory_space<vmem>>, vector<1x8x134xf32>
    %1306 = vector.shape_cast %1305 : vector<1x8x134xf32> to vector<8x134xf32>
    %c83 = arith.constant 83 : index
    %1307 = memref.load %arg4[%c83] : memref<192xf32, #tpu.memory_space<smem>>
    %1308 = vector.broadcast %1307 : f32 to vector<8x134xf32>
    %1309 = arith.mulf %1306, %1308 : vector<8x134xf32>
    %1310 = arith.addf %1304, %1309 : vector<8x134xf32>
    %c6_712 = arith.constant 6 : index
    %1311 = memref.load %arg5[%c6_712] : memref<16xf32, #tpu.memory_space<smem>>
    %1312 = vector.broadcast %1311 : f32 to vector<8x134xf32>
    %1313 = arith.addf %1310, %1312 : vector<8x134xf32>
    %cst_713 = arith.constant 0.000000e+00 : f32
    %1314 = vector.broadcast %cst_713 : f32 to vector<8x134xf32>
    %1315 = arith.maximumf %1313, %1314 : vector<8x134xf32>
    %1316 = arith.truncf %1315 : vector<8x134xf32> to vector<8x134xbf16>
    %c6_714 = arith.constant 6 : index
    %c0_715 = arith.constant 0 : index
    %c0_716 = arith.constant 0 : index
    %1317 = vector.load %arg6[%c6_714, %c0_715, %c0_716] : memref<16x134x200xbf16, #tpu.memory_space<vmem>>, vector<1x134x200xbf16>
    %1318 = vector.shape_cast %1317 : vector<1x134x200xbf16> to vector<134x200xbf16>
    %cst_717 = arith.constant dense<0.000000e+00> : vector<8x200xf32>
    %1319 = tpu.matmul %1316, %1318, %cst_717 {dimension_numbers = #tpu.dot_dimension_numbers<[1], [0], [0], [1], [0, 0, 1, 1], [], []>} : vector<8x134xbf16>, vector<134x200xbf16>, vector<8x200xf32> -> vector<8x200xf32>
    %1320 = arith.addf %1239, %1319 : vector<8x200xf32>
    %c0_718 = arith.constant 0 : index
    %c0_719 = arith.constant 0 : index
    %c0_720 = arith.constant 0 : index
    %1321 = vector.load %arg11[%c0_718, %c0_719, %c0_720] : memref<12x8x134xf32, #tpu.memory_space<vmem>>, vector<1x8x134xf32>
    %1322 = vector.shape_cast %1321 : vector<1x8x134xf32> to vector<8x134xf32>
    %c84 = arith.constant 84 : index
    %1323 = memref.load %arg4[%c84] : memref<192xf32, #tpu.memory_space<smem>>
    %1324 = vector.broadcast %1323 : f32 to vector<8x134xf32>
    %1325 = arith.mulf %1322, %1324 : vector<8x134xf32>
    %c1_721 = arith.constant 1 : index
    %c0_722 = arith.constant 0 : index
    %c0_723 = arith.constant 0 : index
    %1326 = vector.load %arg11[%c1_721, %c0_722, %c0_723] : memref<12x8x134xf32, #tpu.memory_space<vmem>>, vector<1x8x134xf32>
    %1327 = vector.shape_cast %1326 : vector<1x8x134xf32> to vector<8x134xf32>
    %c85 = arith.constant 85 : index
    %1328 = memref.load %arg4[%c85] : memref<192xf32, #tpu.memory_space<smem>>
    %1329 = vector.broadcast %1328 : f32 to vector<8x134xf32>
    %1330 = arith.mulf %1327, %1329 : vector<8x134xf32>
    %1331 = arith.addf %1325, %1330 : vector<8x134xf32>
    %c2_724 = arith.constant 2 : index
    %c0_725 = arith.constant 0 : index
    %c0_726 = arith.constant 0 : index
    %1332 = vector.load %arg11[%c2_724, %c0_725, %c0_726] : memref<12x8x134xf32, #tpu.memory_space<vmem>>, vector<1x8x134xf32>
    %1333 = vector.shape_cast %1332 : vector<1x8x134xf32> to vector<8x134xf32>
    %c86 = arith.constant 86 : index
    %1334 = memref.load %arg4[%c86] : memref<192xf32, #tpu.memory_space<smem>>
    %1335 = vector.broadcast %1334 : f32 to vector<8x134xf32>
    %1336 = arith.mulf %1333, %1335 : vector<8x134xf32>
    %1337 = arith.addf %1331, %1336 : vector<8x134xf32>
    %c3_727 = arith.constant 3 : index
    %c0_728 = arith.constant 0 : index
    %c0_729 = arith.constant 0 : index
    %1338 = vector.load %arg11[%c3_727, %c0_728, %c0_729] : memref<12x8x134xf32, #tpu.memory_space<vmem>>, vector<1x8x134xf32>
    %1339 = vector.shape_cast %1338 : vector<1x8x134xf32> to vector<8x134xf32>
    %c87 = arith.constant 87 : index
    %1340 = memref.load %arg4[%c87] : memref<192xf32, #tpu.memory_space<smem>>
    %1341 = vector.broadcast %1340 : f32 to vector<8x134xf32>
    %1342 = arith.mulf %1339, %1341 : vector<8x134xf32>
    %1343 = arith.addf %1337, %1342 : vector<8x134xf32>
    %c4_730 = arith.constant 4 : index
    %c0_731 = arith.constant 0 : index
    %c0_732 = arith.constant 0 : index
    %1344 = vector.load %arg11[%c4_730, %c0_731, %c0_732] : memref<12x8x134xf32, #tpu.memory_space<vmem>>, vector<1x8x134xf32>
    %1345 = vector.shape_cast %1344 : vector<1x8x134xf32> to vector<8x134xf32>
    %c88 = arith.constant 88 : index
    %1346 = memref.load %arg4[%c88] : memref<192xf32, #tpu.memory_space<smem>>
    %1347 = vector.broadcast %1346 : f32 to vector<8x134xf32>
    %1348 = arith.mulf %1345, %1347 : vector<8x134xf32>
    %1349 = arith.addf %1343, %1348 : vector<8x134xf32>
    %c5_733 = arith.constant 5 : index
    %c0_734 = arith.constant 0 : index
    %c0_735 = arith.constant 0 : index
    %1350 = vector.load %arg11[%c5_733, %c0_734, %c0_735] : memref<12x8x134xf32, #tpu.memory_space<vmem>>, vector<1x8x134xf32>
    %1351 = vector.shape_cast %1350 : vector<1x8x134xf32> to vector<8x134xf32>
    %c89 = arith.constant 89 : index
    %1352 = memref.load %arg4[%c89] : memref<192xf32, #tpu.memory_space<smem>>
    %1353 = vector.broadcast %1352 : f32 to vector<8x134xf32>
    %1354 = arith.mulf %1351, %1353 : vector<8x134xf32>
    %1355 = arith.addf %1349, %1354 : vector<8x134xf32>
    %c6_736 = arith.constant 6 : index
    %c0_737 = arith.constant 0 : index
    %c0_738 = arith.constant 0 : index
    %1356 = vector.load %arg11[%c6_736, %c0_737, %c0_738] : memref<12x8x134xf32, #tpu.memory_space<vmem>>, vector<1x8x134xf32>
    %1357 = vector.shape_cast %1356 : vector<1x8x134xf32> to vector<8x134xf32>
    %c90 = arith.constant 90 : index
    %1358 = memref.load %arg4[%c90] : memref<192xf32, #tpu.memory_space<smem>>
    %1359 = vector.broadcast %1358 : f32 to vector<8x134xf32>
    %1360 = arith.mulf %1357, %1359 : vector<8x134xf32>
    %1361 = arith.addf %1355, %1360 : vector<8x134xf32>
    %c7_739 = arith.constant 7 : index
    %c0_740 = arith.constant 0 : index
    %c0_741 = arith.constant 0 : index
    %1362 = vector.load %arg11[%c7_739, %c0_740, %c0_741] : memref<12x8x134xf32, #tpu.memory_space<vmem>>, vector<1x8x134xf32>
    %1363 = vector.shape_cast %1362 : vector<1x8x134xf32> to vector<8x134xf32>
    %c91 = arith.constant 91 : index
    %1364 = memref.load %arg4[%c91] : memref<192xf32, #tpu.memory_space<smem>>
    %1365 = vector.broadcast %1364 : f32 to vector<8x134xf32>
    %1366 = arith.mulf %1363, %1365 : vector<8x134xf32>
    %1367 = arith.addf %1361, %1366 : vector<8x134xf32>
    %c8_742 = arith.constant 8 : index
    %c0_743 = arith.constant 0 : index
    %c0_744 = arith.constant 0 : index
    %1368 = vector.load %arg11[%c8_742, %c0_743, %c0_744] : memref<12x8x134xf32, #tpu.memory_space<vmem>>, vector<1x8x134xf32>
    %1369 = vector.shape_cast %1368 : vector<1x8x134xf32> to vector<8x134xf32>
    %c92 = arith.constant 92 : index
    %1370 = memref.load %arg4[%c92] : memref<192xf32, #tpu.memory_space<smem>>
    %1371 = vector.broadcast %1370 : f32 to vector<8x134xf32>
    %1372 = arith.mulf %1369, %1371 : vector<8x134xf32>
    %1373 = arith.addf %1367, %1372 : vector<8x134xf32>
    %c9_745 = arith.constant 9 : index
    %c0_746 = arith.constant 0 : index
    %c0_747 = arith.constant 0 : index
    %1374 = vector.load %arg11[%c9_745, %c0_746, %c0_747] : memref<12x8x134xf32, #tpu.memory_space<vmem>>, vector<1x8x134xf32>
    %1375 = vector.shape_cast %1374 : vector<1x8x134xf32> to vector<8x134xf32>
    %c93 = arith.constant 93 : index
    %1376 = memref.load %arg4[%c93] : memref<192xf32, #tpu.memory_space<smem>>
    %1377 = vector.broadcast %1376 : f32 to vector<8x134xf32>
    %1378 = arith.mulf %1375, %1377 : vector<8x134xf32>
    %1379 = arith.addf %1373, %1378 : vector<8x134xf32>
    %c10_748 = arith.constant 10 : index
    %c0_749 = arith.constant 0 : index
    %c0_750 = arith.constant 0 : index
    %1380 = vector.load %arg11[%c10_748, %c0_749, %c0_750] : memref<12x8x134xf32, #tpu.memory_space<vmem>>, vector<1x8x134xf32>
    %1381 = vector.shape_cast %1380 : vector<1x8x134xf32> to vector<8x134xf32>
    %c94 = arith.constant 94 : index
    %1382 = memref.load %arg4[%c94] : memref<192xf32, #tpu.memory_space<smem>>
    %1383 = vector.broadcast %1382 : f32 to vector<8x134xf32>
    %1384 = arith.mulf %1381, %1383 : vector<8x134xf32>
    %1385 = arith.addf %1379, %1384 : vector<8x134xf32>
    %c11_751 = arith.constant 11 : index
    %c0_752 = arith.constant 0 : index
    %c0_753 = arith.constant 0 : index
    %1386 = vector.load %arg11[%c11_751, %c0_752, %c0_753] : memref<12x8x134xf32, #tpu.memory_space<vmem>>, vector<1x8x134xf32>
    %1387 = vector.shape_cast %1386 : vector<1x8x134xf32> to vector<8x134xf32>
    %c95 = arith.constant 95 : index
    %1388 = memref.load %arg4[%c95] : memref<192xf32, #tpu.memory_space<smem>>
    %1389 = vector.broadcast %1388 : f32 to vector<8x134xf32>
    %1390 = arith.mulf %1387, %1389 : vector<8x134xf32>
    %1391 = arith.addf %1385, %1390 : vector<8x134xf32>
    %c7_754 = arith.constant 7 : index
    %1392 = memref.load %arg5[%c7_754] : memref<16xf32, #tpu.memory_space<smem>>
    %1393 = vector.broadcast %1392 : f32 to vector<8x134xf32>
    %1394 = arith.addf %1391, %1393 : vector<8x134xf32>
    %cst_755 = arith.constant 0.000000e+00 : f32
    %1395 = vector.broadcast %cst_755 : f32 to vector<8x134xf32>
    %1396 = arith.maximumf %1394, %1395 : vector<8x134xf32>
    %1397 = arith.truncf %1396 : vector<8x134xf32> to vector<8x134xbf16>
    %c7_756 = arith.constant 7 : index
    %c0_757 = arith.constant 0 : index
    %c0_758 = arith.constant 0 : index
    %1398 = vector.load %arg6[%c7_756, %c0_757, %c0_758] : memref<16x134x200xbf16, #tpu.memory_space<vmem>>, vector<1x134x200xbf16>
    %1399 = vector.shape_cast %1398 : vector<1x134x200xbf16> to vector<134x200xbf16>
    %cst_759 = arith.constant dense<0.000000e+00> : vector<8x200xf32>
    %1400 = tpu.matmul %1397, %1399, %cst_759 {dimension_numbers = #tpu.dot_dimension_numbers<[1], [0], [0], [1], [0, 0, 1, 1], [], []>} : vector<8x134xbf16>, vector<134x200xbf16>, vector<8x200xf32> -> vector<8x200xf32>
    %1401 = arith.addf %1320, %1400 : vector<8x200xf32>
    %c0_760 = arith.constant 0 : index
    %c0_761 = arith.constant 0 : index
    %c0_762 = arith.constant 0 : index
    %1402 = vector.load %arg11[%c0_760, %c0_761, %c0_762] : memref<12x8x134xf32, #tpu.memory_space<vmem>>, vector<1x8x134xf32>
    %1403 = vector.shape_cast %1402 : vector<1x8x134xf32> to vector<8x134xf32>
    %c96 = arith.constant 96 : index
    %1404 = memref.load %arg4[%c96] : memref<192xf32, #tpu.memory_space<smem>>
    %1405 = vector.broadcast %1404 : f32 to vector<8x134xf32>
    %1406 = arith.mulf %1403, %1405 : vector<8x134xf32>
    %c1_763 = arith.constant 1 : index
    %c0_764 = arith.constant 0 : index
    %c0_765 = arith.constant 0 : index
    %1407 = vector.load %arg11[%c1_763, %c0_764, %c0_765] : memref<12x8x134xf32, #tpu.memory_space<vmem>>, vector<1x8x134xf32>
    %1408 = vector.shape_cast %1407 : vector<1x8x134xf32> to vector<8x134xf32>
    %c97 = arith.constant 97 : index
    %1409 = memref.load %arg4[%c97] : memref<192xf32, #tpu.memory_space<smem>>
    %1410 = vector.broadcast %1409 : f32 to vector<8x134xf32>
    %1411 = arith.mulf %1408, %1410 : vector<8x134xf32>
    %1412 = arith.addf %1406, %1411 : vector<8x134xf32>
    %c2_766 = arith.constant 2 : index
    %c0_767 = arith.constant 0 : index
    %c0_768 = arith.constant 0 : index
    %1413 = vector.load %arg11[%c2_766, %c0_767, %c0_768] : memref<12x8x134xf32, #tpu.memory_space<vmem>>, vector<1x8x134xf32>
    %1414 = vector.shape_cast %1413 : vector<1x8x134xf32> to vector<8x134xf32>
    %c98 = arith.constant 98 : index
    %1415 = memref.load %arg4[%c98] : memref<192xf32, #tpu.memory_space<smem>>
    %1416 = vector.broadcast %1415 : f32 to vector<8x134xf32>
    %1417 = arith.mulf %1414, %1416 : vector<8x134xf32>
    %1418 = arith.addf %1412, %1417 : vector<8x134xf32>
    %c3_769 = arith.constant 3 : index
    %c0_770 = arith.constant 0 : index
    %c0_771 = arith.constant 0 : index
    %1419 = vector.load %arg11[%c3_769, %c0_770, %c0_771] : memref<12x8x134xf32, #tpu.memory_space<vmem>>, vector<1x8x134xf32>
    %1420 = vector.shape_cast %1419 : vector<1x8x134xf32> to vector<8x134xf32>
    %c99 = arith.constant 99 : index
    %1421 = memref.load %arg4[%c99] : memref<192xf32, #tpu.memory_space<smem>>
    %1422 = vector.broadcast %1421 : f32 to vector<8x134xf32>
    %1423 = arith.mulf %1420, %1422 : vector<8x134xf32>
    %1424 = arith.addf %1418, %1423 : vector<8x134xf32>
    %c4_772 = arith.constant 4 : index
    %c0_773 = arith.constant 0 : index
    %c0_774 = arith.constant 0 : index
    %1425 = vector.load %arg11[%c4_772, %c0_773, %c0_774] : memref<12x8x134xf32, #tpu.memory_space<vmem>>, vector<1x8x134xf32>
    %1426 = vector.shape_cast %1425 : vector<1x8x134xf32> to vector<8x134xf32>
    %c100 = arith.constant 100 : index
    %1427 = memref.load %arg4[%c100] : memref<192xf32, #tpu.memory_space<smem>>
    %1428 = vector.broadcast %1427 : f32 to vector<8x134xf32>
    %1429 = arith.mulf %1426, %1428 : vector<8x134xf32>
    %1430 = arith.addf %1424, %1429 : vector<8x134xf32>
    %c5_775 = arith.constant 5 : index
    %c0_776 = arith.constant 0 : index
    %c0_777 = arith.constant 0 : index
    %1431 = vector.load %arg11[%c5_775, %c0_776, %c0_777] : memref<12x8x134xf32, #tpu.memory_space<vmem>>, vector<1x8x134xf32>
    %1432 = vector.shape_cast %1431 : vector<1x8x134xf32> to vector<8x134xf32>
    %c101 = arith.constant 101 : index
    %1433 = memref.load %arg4[%c101] : memref<192xf32, #tpu.memory_space<smem>>
    %1434 = vector.broadcast %1433 : f32 to vector<8x134xf32>
    %1435 = arith.mulf %1432, %1434 : vector<8x134xf32>
    %1436 = arith.addf %1430, %1435 : vector<8x134xf32>
    %c6_778 = arith.constant 6 : index
    %c0_779 = arith.constant 0 : index
    %c0_780 = arith.constant 0 : index
    %1437 = vector.load %arg11[%c6_778, %c0_779, %c0_780] : memref<12x8x134xf32, #tpu.memory_space<vmem>>, vector<1x8x134xf32>
    %1438 = vector.shape_cast %1437 : vector<1x8x134xf32> to vector<8x134xf32>
    %c102 = arith.constant 102 : index
    %1439 = memref.load %arg4[%c102] : memref<192xf32, #tpu.memory_space<smem>>
    %1440 = vector.broadcast %1439 : f32 to vector<8x134xf32>
    %1441 = arith.mulf %1438, %1440 : vector<8x134xf32>
    %1442 = arith.addf %1436, %1441 : vector<8x134xf32>
    %c7_781 = arith.constant 7 : index
    %c0_782 = arith.constant 0 : index
    %c0_783 = arith.constant 0 : index
    %1443 = vector.load %arg11[%c7_781, %c0_782, %c0_783] : memref<12x8x134xf32, #tpu.memory_space<vmem>>, vector<1x8x134xf32>
    %1444 = vector.shape_cast %1443 : vector<1x8x134xf32> to vector<8x134xf32>
    %c103 = arith.constant 103 : index
    %1445 = memref.load %arg4[%c103] : memref<192xf32, #tpu.memory_space<smem>>
    %1446 = vector.broadcast %1445 : f32 to vector<8x134xf32>
    %1447 = arith.mulf %1444, %1446 : vector<8x134xf32>
    %1448 = arith.addf %1442, %1447 : vector<8x134xf32>
    %c8_784 = arith.constant 8 : index
    %c0_785 = arith.constant 0 : index
    %c0_786 = arith.constant 0 : index
    %1449 = vector.load %arg11[%c8_784, %c0_785, %c0_786] : memref<12x8x134xf32, #tpu.memory_space<vmem>>, vector<1x8x134xf32>
    %1450 = vector.shape_cast %1449 : vector<1x8x134xf32> to vector<8x134xf32>
    %c104 = arith.constant 104 : index
    %1451 = memref.load %arg4[%c104] : memref<192xf32, #tpu.memory_space<smem>>
    %1452 = vector.broadcast %1451 : f32 to vector<8x134xf32>
    %1453 = arith.mulf %1450, %1452 : vector<8x134xf32>
    %1454 = arith.addf %1448, %1453 : vector<8x134xf32>
    %c9_787 = arith.constant 9 : index
    %c0_788 = arith.constant 0 : index
    %c0_789 = arith.constant 0 : index
    %1455 = vector.load %arg11[%c9_787, %c0_788, %c0_789] : memref<12x8x134xf32, #tpu.memory_space<vmem>>, vector<1x8x134xf32>
    %1456 = vector.shape_cast %1455 : vector<1x8x134xf32> to vector<8x134xf32>
    %c105 = arith.constant 105 : index
    %1457 = memref.load %arg4[%c105] : memref<192xf32, #tpu.memory_space<smem>>
    %1458 = vector.broadcast %1457 : f32 to vector<8x134xf32>
    %1459 = arith.mulf %1456, %1458 : vector<8x134xf32>
    %1460 = arith.addf %1454, %1459 : vector<8x134xf32>
    %c10_790 = arith.constant 10 : index
    %c0_791 = arith.constant 0 : index
    %c0_792 = arith.constant 0 : index
    %1461 = vector.load %arg11[%c10_790, %c0_791, %c0_792] : memref<12x8x134xf32, #tpu.memory_space<vmem>>, vector<1x8x134xf32>
    %1462 = vector.shape_cast %1461 : vector<1x8x134xf32> to vector<8x134xf32>
    %c106 = arith.constant 106 : index
    %1463 = memref.load %arg4[%c106] : memref<192xf32, #tpu.memory_space<smem>>
    %1464 = vector.broadcast %1463 : f32 to vector<8x134xf32>
    %1465 = arith.mulf %1462, %1464 : vector<8x134xf32>
    %1466 = arith.addf %1460, %1465 : vector<8x134xf32>
    %c11_793 = arith.constant 11 : index
    %c0_794 = arith.constant 0 : index
    %c0_795 = arith.constant 0 : index
    %1467 = vector.load %arg11[%c11_793, %c0_794, %c0_795] : memref<12x8x134xf32, #tpu.memory_space<vmem>>, vector<1x8x134xf32>
    %1468 = vector.shape_cast %1467 : vector<1x8x134xf32> to vector<8x134xf32>
    %c107 = arith.constant 107 : index
    %1469 = memref.load %arg4[%c107] : memref<192xf32, #tpu.memory_space<smem>>
    %1470 = vector.broadcast %1469 : f32 to vector<8x134xf32>
    %1471 = arith.mulf %1468, %1470 : vector<8x134xf32>
    %1472 = arith.addf %1466, %1471 : vector<8x134xf32>
    %c8_796 = arith.constant 8 : index
    %1473 = memref.load %arg5[%c8_796] : memref<16xf32, #tpu.memory_space<smem>>
    %1474 = vector.broadcast %1473 : f32 to vector<8x134xf32>
    %1475 = arith.addf %1472, %1474 : vector<8x134xf32>
    %cst_797 = arith.constant 0.000000e+00 : f32
    %1476 = vector.broadcast %cst_797 : f32 to vector<8x134xf32>
    %1477 = arith.maximumf %1475, %1476 : vector<8x134xf32>
    %1478 = arith.truncf %1477 : vector<8x134xf32> to vector<8x134xbf16>
    %c8_798 = arith.constant 8 : index
    %c0_799 = arith.constant 0 : index
    %c0_800 = arith.constant 0 : index
    %1479 = vector.load %arg6[%c8_798, %c0_799, %c0_800] : memref<16x134x200xbf16, #tpu.memory_space<vmem>>, vector<1x134x200xbf16>
    %1480 = vector.shape_cast %1479 : vector<1x134x200xbf16> to vector<134x200xbf16>
    %cst_801 = arith.constant dense<0.000000e+00> : vector<8x200xf32>
    %1481 = tpu.matmul %1478, %1480, %cst_801 {dimension_numbers = #tpu.dot_dimension_numbers<[1], [0], [0], [1], [0, 0, 1, 1], [], []>} : vector<8x134xbf16>, vector<134x200xbf16>, vector<8x200xf32> -> vector<8x200xf32>
    %1482 = arith.addf %1401, %1481 : vector<8x200xf32>
    %c0_802 = arith.constant 0 : index
    %c0_803 = arith.constant 0 : index
    %c0_804 = arith.constant 0 : index
    %1483 = vector.load %arg11[%c0_802, %c0_803, %c0_804] : memref<12x8x134xf32, #tpu.memory_space<vmem>>, vector<1x8x134xf32>
    %1484 = vector.shape_cast %1483 : vector<1x8x134xf32> to vector<8x134xf32>
    %c108 = arith.constant 108 : index
    %1485 = memref.load %arg4[%c108] : memref<192xf32, #tpu.memory_space<smem>>
    %1486 = vector.broadcast %1485 : f32 to vector<8x134xf32>
    %1487 = arith.mulf %1484, %1486 : vector<8x134xf32>
    %c1_805 = arith.constant 1 : index
    %c0_806 = arith.constant 0 : index
    %c0_807 = arith.constant 0 : index
    %1488 = vector.load %arg11[%c1_805, %c0_806, %c0_807] : memref<12x8x134xf32, #tpu.memory_space<vmem>>, vector<1x8x134xf32>
    %1489 = vector.shape_cast %1488 : vector<1x8x134xf32> to vector<8x134xf32>
    %c109 = arith.constant 109 : index
    %1490 = memref.load %arg4[%c109] : memref<192xf32, #tpu.memory_space<smem>>
    %1491 = vector.broadcast %1490 : f32 to vector<8x134xf32>
    %1492 = arith.mulf %1489, %1491 : vector<8x134xf32>
    %1493 = arith.addf %1487, %1492 : vector<8x134xf32>
    %c2_808 = arith.constant 2 : index
    %c0_809 = arith.constant 0 : index
    %c0_810 = arith.constant 0 : index
    %1494 = vector.load %arg11[%c2_808, %c0_809, %c0_810] : memref<12x8x134xf32, #tpu.memory_space<vmem>>, vector<1x8x134xf32>
    %1495 = vector.shape_cast %1494 : vector<1x8x134xf32> to vector<8x134xf32>
    %c110 = arith.constant 110 : index
    %1496 = memref.load %arg4[%c110] : memref<192xf32, #tpu.memory_space<smem>>
    %1497 = vector.broadcast %1496 : f32 to vector<8x134xf32>
    %1498 = arith.mulf %1495, %1497 : vector<8x134xf32>
    %1499 = arith.addf %1493, %1498 : vector<8x134xf32>
    %c3_811 = arith.constant 3 : index
    %c0_812 = arith.constant 0 : index
    %c0_813 = arith.constant 0 : index
    %1500 = vector.load %arg11[%c3_811, %c0_812, %c0_813] : memref<12x8x134xf32, #tpu.memory_space<vmem>>, vector<1x8x134xf32>
    %1501 = vector.shape_cast %1500 : vector<1x8x134xf32> to vector<8x134xf32>
    %c111 = arith.constant 111 : index
    %1502 = memref.load %arg4[%c111] : memref<192xf32, #tpu.memory_space<smem>>
    %1503 = vector.broadcast %1502 : f32 to vector<8x134xf32>
    %1504 = arith.mulf %1501, %1503 : vector<8x134xf32>
    %1505 = arith.addf %1499, %1504 : vector<8x134xf32>
    %c4_814 = arith.constant 4 : index
    %c0_815 = arith.constant 0 : index
    %c0_816 = arith.constant 0 : index
    %1506 = vector.load %arg11[%c4_814, %c0_815, %c0_816] : memref<12x8x134xf32, #tpu.memory_space<vmem>>, vector<1x8x134xf32>
    %1507 = vector.shape_cast %1506 : vector<1x8x134xf32> to vector<8x134xf32>
    %c112 = arith.constant 112 : index
    %1508 = memref.load %arg4[%c112] : memref<192xf32, #tpu.memory_space<smem>>
    %1509 = vector.broadcast %1508 : f32 to vector<8x134xf32>
    %1510 = arith.mulf %1507, %1509 : vector<8x134xf32>
    %1511 = arith.addf %1505, %1510 : vector<8x134xf32>
    %c5_817 = arith.constant 5 : index
    %c0_818 = arith.constant 0 : index
    %c0_819 = arith.constant 0 : index
    %1512 = vector.load %arg11[%c5_817, %c0_818, %c0_819] : memref<12x8x134xf32, #tpu.memory_space<vmem>>, vector<1x8x134xf32>
    %1513 = vector.shape_cast %1512 : vector<1x8x134xf32> to vector<8x134xf32>
    %c113 = arith.constant 113 : index
    %1514 = memref.load %arg4[%c113] : memref<192xf32, #tpu.memory_space<smem>>
    %1515 = vector.broadcast %1514 : f32 to vector<8x134xf32>
    %1516 = arith.mulf %1513, %1515 : vector<8x134xf32>
    %1517 = arith.addf %1511, %1516 : vector<8x134xf32>
    %c6_820 = arith.constant 6 : index
    %c0_821 = arith.constant 0 : index
    %c0_822 = arith.constant 0 : index
    %1518 = vector.load %arg11[%c6_820, %c0_821, %c0_822] : memref<12x8x134xf32, #tpu.memory_space<vmem>>, vector<1x8x134xf32>
    %1519 = vector.shape_cast %1518 : vector<1x8x134xf32> to vector<8x134xf32>
    %c114 = arith.constant 114 : index
    %1520 = memref.load %arg4[%c114] : memref<192xf32, #tpu.memory_space<smem>>
    %1521 = vector.broadcast %1520 : f32 to vector<8x134xf32>
    %1522 = arith.mulf %1519, %1521 : vector<8x134xf32>
    %1523 = arith.addf %1517, %1522 : vector<8x134xf32>
    %c7_823 = arith.constant 7 : index
    %c0_824 = arith.constant 0 : index
    %c0_825 = arith.constant 0 : index
    %1524 = vector.load %arg11[%c7_823, %c0_824, %c0_825] : memref<12x8x134xf32, #tpu.memory_space<vmem>>, vector<1x8x134xf32>
    %1525 = vector.shape_cast %1524 : vector<1x8x134xf32> to vector<8x134xf32>
    %c115 = arith.constant 115 : index
    %1526 = memref.load %arg4[%c115] : memref<192xf32, #tpu.memory_space<smem>>
    %1527 = vector.broadcast %1526 : f32 to vector<8x134xf32>
    %1528 = arith.mulf %1525, %1527 : vector<8x134xf32>
    %1529 = arith.addf %1523, %1528 : vector<8x134xf32>
    %c8_826 = arith.constant 8 : index
    %c0_827 = arith.constant 0 : index
    %c0_828 = arith.constant 0 : index
    %1530 = vector.load %arg11[%c8_826, %c0_827, %c0_828] : memref<12x8x134xf32, #tpu.memory_space<vmem>>, vector<1x8x134xf32>
    %1531 = vector.shape_cast %1530 : vector<1x8x134xf32> to vector<8x134xf32>
    %c116 = arith.constant 116 : index
    %1532 = memref.load %arg4[%c116] : memref<192xf32, #tpu.memory_space<smem>>
    %1533 = vector.broadcast %1532 : f32 to vector<8x134xf32>
    %1534 = arith.mulf %1531, %1533 : vector<8x134xf32>
    %1535 = arith.addf %1529, %1534 : vector<8x134xf32>
    %c9_829 = arith.constant 9 : index
    %c0_830 = arith.constant 0 : index
    %c0_831 = arith.constant 0 : index
    %1536 = vector.load %arg11[%c9_829, %c0_830, %c0_831] : memref<12x8x134xf32, #tpu.memory_space<vmem>>, vector<1x8x134xf32>
    %1537 = vector.shape_cast %1536 : vector<1x8x134xf32> to vector<8x134xf32>
    %c117 = arith.constant 117 : index
    %1538 = memref.load %arg4[%c117] : memref<192xf32, #tpu.memory_space<smem>>
    %1539 = vector.broadcast %1538 : f32 to vector<8x134xf32>
    %1540 = arith.mulf %1537, %1539 : vector<8x134xf32>
    %1541 = arith.addf %1535, %1540 : vector<8x134xf32>
    %c10_832 = arith.constant 10 : index
    %c0_833 = arith.constant 0 : index
    %c0_834 = arith.constant 0 : index
    %1542 = vector.load %arg11[%c10_832, %c0_833, %c0_834] : memref<12x8x134xf32, #tpu.memory_space<vmem>>, vector<1x8x134xf32>
    %1543 = vector.shape_cast %1542 : vector<1x8x134xf32> to vector<8x134xf32>
    %c118 = arith.constant 118 : index
    %1544 = memref.load %arg4[%c118] : memref<192xf32, #tpu.memory_space<smem>>
    %1545 = vector.broadcast %1544 : f32 to vector<8x134xf32>
    %1546 = arith.mulf %1543, %1545 : vector<8x134xf32>
    %1547 = arith.addf %1541, %1546 : vector<8x134xf32>
    %c11_835 = arith.constant 11 : index
    %c0_836 = arith.constant 0 : index
    %c0_837 = arith.constant 0 : index
    %1548 = vector.load %arg11[%c11_835, %c0_836, %c0_837] : memref<12x8x134xf32, #tpu.memory_space<vmem>>, vector<1x8x134xf32>
    %1549 = vector.shape_cast %1548 : vector<1x8x134xf32> to vector<8x134xf32>
    %c119 = arith.constant 119 : index
    %1550 = memref.load %arg4[%c119] : memref<192xf32, #tpu.memory_space<smem>>
    %1551 = vector.broadcast %1550 : f32 to vector<8x134xf32>
    %1552 = arith.mulf %1549, %1551 : vector<8x134xf32>
    %1553 = arith.addf %1547, %1552 : vector<8x134xf32>
    %c9_838 = arith.constant 9 : index
    %1554 = memref.load %arg5[%c9_838] : memref<16xf32, #tpu.memory_space<smem>>
    %1555 = vector.broadcast %1554 : f32 to vector<8x134xf32>
    %1556 = arith.addf %1553, %1555 : vector<8x134xf32>
    %cst_839 = arith.constant 0.000000e+00 : f32
    %1557 = vector.broadcast %cst_839 : f32 to vector<8x134xf32>
    %1558 = arith.maximumf %1556, %1557 : vector<8x134xf32>
    %1559 = arith.truncf %1558 : vector<8x134xf32> to vector<8x134xbf16>
    %c9_840 = arith.constant 9 : index
    %c0_841 = arith.constant 0 : index
    %c0_842 = arith.constant 0 : index
    %1560 = vector.load %arg6[%c9_840, %c0_841, %c0_842] : memref<16x134x200xbf16, #tpu.memory_space<vmem>>, vector<1x134x200xbf16>
    %1561 = vector.shape_cast %1560 : vector<1x134x200xbf16> to vector<134x200xbf16>
    %cst_843 = arith.constant dense<0.000000e+00> : vector<8x200xf32>
    %1562 = tpu.matmul %1559, %1561, %cst_843 {dimension_numbers = #tpu.dot_dimension_numbers<[1], [0], [0], [1], [0, 0, 1, 1], [], []>} : vector<8x134xbf16>, vector<134x200xbf16>, vector<8x200xf32> -> vector<8x200xf32>
    %1563 = arith.addf %1482, %1562 : vector<8x200xf32>
    %c0_844 = arith.constant 0 : index
    %c0_845 = arith.constant 0 : index
    %c0_846 = arith.constant 0 : index
    %1564 = vector.load %arg11[%c0_844, %c0_845, %c0_846] : memref<12x8x134xf32, #tpu.memory_space<vmem>>, vector<1x8x134xf32>
    %1565 = vector.shape_cast %1564 : vector<1x8x134xf32> to vector<8x134xf32>
    %c120 = arith.constant 120 : index
    %1566 = memref.load %arg4[%c120] : memref<192xf32, #tpu.memory_space<smem>>
    %1567 = vector.broadcast %1566 : f32 to vector<8x134xf32>
    %1568 = arith.mulf %1565, %1567 : vector<8x134xf32>
    %c1_847 = arith.constant 1 : index
    %c0_848 = arith.constant 0 : index
    %c0_849 = arith.constant 0 : index
    %1569 = vector.load %arg11[%c1_847, %c0_848, %c0_849] : memref<12x8x134xf32, #tpu.memory_space<vmem>>, vector<1x8x134xf32>
    %1570 = vector.shape_cast %1569 : vector<1x8x134xf32> to vector<8x134xf32>
    %c121 = arith.constant 121 : index
    %1571 = memref.load %arg4[%c121] : memref<192xf32, #tpu.memory_space<smem>>
    %1572 = vector.broadcast %1571 : f32 to vector<8x134xf32>
    %1573 = arith.mulf %1570, %1572 : vector<8x134xf32>
    %1574 = arith.addf %1568, %1573 : vector<8x134xf32>
    %c2_850 = arith.constant 2 : index
    %c0_851 = arith.constant 0 : index
    %c0_852 = arith.constant 0 : index
    %1575 = vector.load %arg11[%c2_850, %c0_851, %c0_852] : memref<12x8x134xf32, #tpu.memory_space<vmem>>, vector<1x8x134xf32>
    %1576 = vector.shape_cast %1575 : vector<1x8x134xf32> to vector<8x134xf32>
    %c122 = arith.constant 122 : index
    %1577 = memref.load %arg4[%c122] : memref<192xf32, #tpu.memory_space<smem>>
    %1578 = vector.broadcast %1577 : f32 to vector<8x134xf32>
    %1579 = arith.mulf %1576, %1578 : vector<8x134xf32>
    %1580 = arith.addf %1574, %1579 : vector<8x134xf32>
    %c3_853 = arith.constant 3 : index
    %c0_854 = arith.constant 0 : index
    %c0_855 = arith.constant 0 : index
    %1581 = vector.load %arg11[%c3_853, %c0_854, %c0_855] : memref<12x8x134xf32, #tpu.memory_space<vmem>>, vector<1x8x134xf32>
    %1582 = vector.shape_cast %1581 : vector<1x8x134xf32> to vector<8x134xf32>
    %c123 = arith.constant 123 : index
    %1583 = memref.load %arg4[%c123] : memref<192xf32, #tpu.memory_space<smem>>
    %1584 = vector.broadcast %1583 : f32 to vector<8x134xf32>
    %1585 = arith.mulf %1582, %1584 : vector<8x134xf32>
    %1586 = arith.addf %1580, %1585 : vector<8x134xf32>
    %c4_856 = arith.constant 4 : index
    %c0_857 = arith.constant 0 : index
    %c0_858 = arith.constant 0 : index
    %1587 = vector.load %arg11[%c4_856, %c0_857, %c0_858] : memref<12x8x134xf32, #tpu.memory_space<vmem>>, vector<1x8x134xf32>
    %1588 = vector.shape_cast %1587 : vector<1x8x134xf32> to vector<8x134xf32>
    %c124 = arith.constant 124 : index
    %1589 = memref.load %arg4[%c124] : memref<192xf32, #tpu.memory_space<smem>>
    %1590 = vector.broadcast %1589 : f32 to vector<8x134xf32>
    %1591 = arith.mulf %1588, %1590 : vector<8x134xf32>
    %1592 = arith.addf %1586, %1591 : vector<8x134xf32>
    %c5_859 = arith.constant 5 : index
    %c0_860 = arith.constant 0 : index
    %c0_861 = arith.constant 0 : index
    %1593 = vector.load %arg11[%c5_859, %c0_860, %c0_861] : memref<12x8x134xf32, #tpu.memory_space<vmem>>, vector<1x8x134xf32>
    %1594 = vector.shape_cast %1593 : vector<1x8x134xf32> to vector<8x134xf32>
    %c125 = arith.constant 125 : index
    %1595 = memref.load %arg4[%c125] : memref<192xf32, #tpu.memory_space<smem>>
    %1596 = vector.broadcast %1595 : f32 to vector<8x134xf32>
    %1597 = arith.mulf %1594, %1596 : vector<8x134xf32>
    %1598 = arith.addf %1592, %1597 : vector<8x134xf32>
    %c6_862 = arith.constant 6 : index
    %c0_863 = arith.constant 0 : index
    %c0_864 = arith.constant 0 : index
    %1599 = vector.load %arg11[%c6_862, %c0_863, %c0_864] : memref<12x8x134xf32, #tpu.memory_space<vmem>>, vector<1x8x134xf32>
    %1600 = vector.shape_cast %1599 : vector<1x8x134xf32> to vector<8x134xf32>
    %c126 = arith.constant 126 : index
    %1601 = memref.load %arg4[%c126] : memref<192xf32, #tpu.memory_space<smem>>
    %1602 = vector.broadcast %1601 : f32 to vector<8x134xf32>
    %1603 = arith.mulf %1600, %1602 : vector<8x134xf32>
    %1604 = arith.addf %1598, %1603 : vector<8x134xf32>
    %c7_865 = arith.constant 7 : index
    %c0_866 = arith.constant 0 : index
    %c0_867 = arith.constant 0 : index
    %1605 = vector.load %arg11[%c7_865, %c0_866, %c0_867] : memref<12x8x134xf32, #tpu.memory_space<vmem>>, vector<1x8x134xf32>
    %1606 = vector.shape_cast %1605 : vector<1x8x134xf32> to vector<8x134xf32>
    %c127 = arith.constant 127 : index
    %1607 = memref.load %arg4[%c127] : memref<192xf32, #tpu.memory_space<smem>>
    %1608 = vector.broadcast %1607 : f32 to vector<8x134xf32>
    %1609 = arith.mulf %1606, %1608 : vector<8x134xf32>
    %1610 = arith.addf %1604, %1609 : vector<8x134xf32>
    %c8_868 = arith.constant 8 : index
    %c0_869 = arith.constant 0 : index
    %c0_870 = arith.constant 0 : index
    %1611 = vector.load %arg11[%c8_868, %c0_869, %c0_870] : memref<12x8x134xf32, #tpu.memory_space<vmem>>, vector<1x8x134xf32>
    %1612 = vector.shape_cast %1611 : vector<1x8x134xf32> to vector<8x134xf32>
    %c128 = arith.constant 128 : index
    %1613 = memref.load %arg4[%c128] : memref<192xf32, #tpu.memory_space<smem>>
    %1614 = vector.broadcast %1613 : f32 to vector<8x134xf32>
    %1615 = arith.mulf %1612, %1614 : vector<8x134xf32>
    %1616 = arith.addf %1610, %1615 : vector<8x134xf32>
    %c9_871 = arith.constant 9 : index
    %c0_872 = arith.constant 0 : index
    %c0_873 = arith.constant 0 : index
    %1617 = vector.load %arg11[%c9_871, %c0_872, %c0_873] : memref<12x8x134xf32, #tpu.memory_space<vmem>>, vector<1x8x134xf32>
    %1618 = vector.shape_cast %1617 : vector<1x8x134xf32> to vector<8x134xf32>
    %c129 = arith.constant 129 : index
    %1619 = memref.load %arg4[%c129] : memref<192xf32, #tpu.memory_space<smem>>
    %1620 = vector.broadcast %1619 : f32 to vector<8x134xf32>
    %1621 = arith.mulf %1618, %1620 : vector<8x134xf32>
    %1622 = arith.addf %1616, %1621 : vector<8x134xf32>
    %c10_874 = arith.constant 10 : index
    %c0_875 = arith.constant 0 : index
    %c0_876 = arith.constant 0 : index
    %1623 = vector.load %arg11[%c10_874, %c0_875, %c0_876] : memref<12x8x134xf32, #tpu.memory_space<vmem>>, vector<1x8x134xf32>
    %1624 = vector.shape_cast %1623 : vector<1x8x134xf32> to vector<8x134xf32>
    %c130 = arith.constant 130 : index
    %1625 = memref.load %arg4[%c130] : memref<192xf32, #tpu.memory_space<smem>>
    %1626 = vector.broadcast %1625 : f32 to vector<8x134xf32>
    %1627 = arith.mulf %1624, %1626 : vector<8x134xf32>
    %1628 = arith.addf %1622, %1627 : vector<8x134xf32>
    %c11_877 = arith.constant 11 : index
    %c0_878 = arith.constant 0 : index
    %c0_879 = arith.constant 0 : index
    %1629 = vector.load %arg11[%c11_877, %c0_878, %c0_879] : memref<12x8x134xf32, #tpu.memory_space<vmem>>, vector<1x8x134xf32>
    %1630 = vector.shape_cast %1629 : vector<1x8x134xf32> to vector<8x134xf32>
    %c131 = arith.constant 131 : index
    %1631 = memref.load %arg4[%c131] : memref<192xf32, #tpu.memory_space<smem>>
    %1632 = vector.broadcast %1631 : f32 to vector<8x134xf32>
    %1633 = arith.mulf %1630, %1632 : vector<8x134xf32>
    %1634 = arith.addf %1628, %1633 : vector<8x134xf32>
    %c10_880 = arith.constant 10 : index
    %1635 = memref.load %arg5[%c10_880] : memref<16xf32, #tpu.memory_space<smem>>
    %1636 = vector.broadcast %1635 : f32 to vector<8x134xf32>
    %1637 = arith.addf %1634, %1636 : vector<8x134xf32>
    %cst_881 = arith.constant 0.000000e+00 : f32
    %1638 = vector.broadcast %cst_881 : f32 to vector<8x134xf32>
    %1639 = arith.maximumf %1637, %1638 : vector<8x134xf32>
    %1640 = arith.truncf %1639 : vector<8x134xf32> to vector<8x134xbf16>
    %c10_882 = arith.constant 10 : index
    %c0_883 = arith.constant 0 : index
    %c0_884 = arith.constant 0 : index
    %1641 = vector.load %arg6[%c10_882, %c0_883, %c0_884] : memref<16x134x200xbf16, #tpu.memory_space<vmem>>, vector<1x134x200xbf16>
    %1642 = vector.shape_cast %1641 : vector<1x134x200xbf16> to vector<134x200xbf16>
    %cst_885 = arith.constant dense<0.000000e+00> : vector<8x200xf32>
    %1643 = tpu.matmul %1640, %1642, %cst_885 {dimension_numbers = #tpu.dot_dimension_numbers<[1], [0], [0], [1], [0, 0, 1, 1], [], []>} : vector<8x134xbf16>, vector<134x200xbf16>, vector<8x200xf32> -> vector<8x200xf32>
    %1644 = arith.addf %1563, %1643 : vector<8x200xf32>
    %c0_886 = arith.constant 0 : index
    %c0_887 = arith.constant 0 : index
    %c0_888 = arith.constant 0 : index
    %1645 = vector.load %arg11[%c0_886, %c0_887, %c0_888] : memref<12x8x134xf32, #tpu.memory_space<vmem>>, vector<1x8x134xf32>
    %1646 = vector.shape_cast %1645 : vector<1x8x134xf32> to vector<8x134xf32>
    %c132 = arith.constant 132 : index
    %1647 = memref.load %arg4[%c132] : memref<192xf32, #tpu.memory_space<smem>>
    %1648 = vector.broadcast %1647 : f32 to vector<8x134xf32>
    %1649 = arith.mulf %1646, %1648 : vector<8x134xf32>
    %c1_889 = arith.constant 1 : index
    %c0_890 = arith.constant 0 : index
    %c0_891 = arith.constant 0 : index
    %1650 = vector.load %arg11[%c1_889, %c0_890, %c0_891] : memref<12x8x134xf32, #tpu.memory_space<vmem>>, vector<1x8x134xf32>
    %1651 = vector.shape_cast %1650 : vector<1x8x134xf32> to vector<8x134xf32>
    %c133 = arith.constant 133 : index
    %1652 = memref.load %arg4[%c133] : memref<192xf32, #tpu.memory_space<smem>>
    %1653 = vector.broadcast %1652 : f32 to vector<8x134xf32>
    %1654 = arith.mulf %1651, %1653 : vector<8x134xf32>
    %1655 = arith.addf %1649, %1654 : vector<8x134xf32>
    %c2_892 = arith.constant 2 : index
    %c0_893 = arith.constant 0 : index
    %c0_894 = arith.constant 0 : index
    %1656 = vector.load %arg11[%c2_892, %c0_893, %c0_894] : memref<12x8x134xf32, #tpu.memory_space<vmem>>, vector<1x8x134xf32>
    %1657 = vector.shape_cast %1656 : vector<1x8x134xf32> to vector<8x134xf32>
    %c134 = arith.constant 134 : index
    %1658 = memref.load %arg4[%c134] : memref<192xf32, #tpu.memory_space<smem>>
    %1659 = vector.broadcast %1658 : f32 to vector<8x134xf32>
    %1660 = arith.mulf %1657, %1659 : vector<8x134xf32>
    %1661 = arith.addf %1655, %1660 : vector<8x134xf32>
    %c3_895 = arith.constant 3 : index
    %c0_896 = arith.constant 0 : index
    %c0_897 = arith.constant 0 : index
    %1662 = vector.load %arg11[%c3_895, %c0_896, %c0_897] : memref<12x8x134xf32, #tpu.memory_space<vmem>>, vector<1x8x134xf32>
    %1663 = vector.shape_cast %1662 : vector<1x8x134xf32> to vector<8x134xf32>
    %c135 = arith.constant 135 : index
    %1664 = memref.load %arg4[%c135] : memref<192xf32, #tpu.memory_space<smem>>
    %1665 = vector.broadcast %1664 : f32 to vector<8x134xf32>
    %1666 = arith.mulf %1663, %1665 : vector<8x134xf32>
    %1667 = arith.addf %1661, %1666 : vector<8x134xf32>
    %c4_898 = arith.constant 4 : index
    %c0_899 = arith.constant 0 : index
    %c0_900 = arith.constant 0 : index
    %1668 = vector.load %arg11[%c4_898, %c0_899, %c0_900] : memref<12x8x134xf32, #tpu.memory_space<vmem>>, vector<1x8x134xf32>
    %1669 = vector.shape_cast %1668 : vector<1x8x134xf32> to vector<8x134xf32>
    %c136 = arith.constant 136 : index
    %1670 = memref.load %arg4[%c136] : memref<192xf32, #tpu.memory_space<smem>>
    %1671 = vector.broadcast %1670 : f32 to vector<8x134xf32>
    %1672 = arith.mulf %1669, %1671 : vector<8x134xf32>
    %1673 = arith.addf %1667, %1672 : vector<8x134xf32>
    %c5_901 = arith.constant 5 : index
    %c0_902 = arith.constant 0 : index
    %c0_903 = arith.constant 0 : index
    %1674 = vector.load %arg11[%c5_901, %c0_902, %c0_903] : memref<12x8x134xf32, #tpu.memory_space<vmem>>, vector<1x8x134xf32>
    %1675 = vector.shape_cast %1674 : vector<1x8x134xf32> to vector<8x134xf32>
    %c137 = arith.constant 137 : index
    %1676 = memref.load %arg4[%c137] : memref<192xf32, #tpu.memory_space<smem>>
    %1677 = vector.broadcast %1676 : f32 to vector<8x134xf32>
    %1678 = arith.mulf %1675, %1677 : vector<8x134xf32>
    %1679 = arith.addf %1673, %1678 : vector<8x134xf32>
    %c6_904 = arith.constant 6 : index
    %c0_905 = arith.constant 0 : index
    %c0_906 = arith.constant 0 : index
    %1680 = vector.load %arg11[%c6_904, %c0_905, %c0_906] : memref<12x8x134xf32, #tpu.memory_space<vmem>>, vector<1x8x134xf32>
    %1681 = vector.shape_cast %1680 : vector<1x8x134xf32> to vector<8x134xf32>
    %c138 = arith.constant 138 : index
    %1682 = memref.load %arg4[%c138] : memref<192xf32, #tpu.memory_space<smem>>
    %1683 = vector.broadcast %1682 : f32 to vector<8x134xf32>
    %1684 = arith.mulf %1681, %1683 : vector<8x134xf32>
    %1685 = arith.addf %1679, %1684 : vector<8x134xf32>
    %c7_907 = arith.constant 7 : index
    %c0_908 = arith.constant 0 : index
    %c0_909 = arith.constant 0 : index
    %1686 = vector.load %arg11[%c7_907, %c0_908, %c0_909] : memref<12x8x134xf32, #tpu.memory_space<vmem>>, vector<1x8x134xf32>
    %1687 = vector.shape_cast %1686 : vector<1x8x134xf32> to vector<8x134xf32>
    %c139 = arith.constant 139 : index
    %1688 = memref.load %arg4[%c139] : memref<192xf32, #tpu.memory_space<smem>>
    %1689 = vector.broadcast %1688 : f32 to vector<8x134xf32>
    %1690 = arith.mulf %1687, %1689 : vector<8x134xf32>
    %1691 = arith.addf %1685, %1690 : vector<8x134xf32>
    %c8_910 = arith.constant 8 : index
    %c0_911 = arith.constant 0 : index
    %c0_912 = arith.constant 0 : index
    %1692 = vector.load %arg11[%c8_910, %c0_911, %c0_912] : memref<12x8x134xf32, #tpu.memory_space<vmem>>, vector<1x8x134xf32>
    %1693 = vector.shape_cast %1692 : vector<1x8x134xf32> to vector<8x134xf32>
    %c140 = arith.constant 140 : index
    %1694 = memref.load %arg4[%c140] : memref<192xf32, #tpu.memory_space<smem>>
    %1695 = vector.broadcast %1694 : f32 to vector<8x134xf32>
    %1696 = arith.mulf %1693, %1695 : vector<8x134xf32>
    %1697 = arith.addf %1691, %1696 : vector<8x134xf32>
    %c9_913 = arith.constant 9 : index
    %c0_914 = arith.constant 0 : index
    %c0_915 = arith.constant 0 : index
    %1698 = vector.load %arg11[%c9_913, %c0_914, %c0_915] : memref<12x8x134xf32, #tpu.memory_space<vmem>>, vector<1x8x134xf32>
    %1699 = vector.shape_cast %1698 : vector<1x8x134xf32> to vector<8x134xf32>
    %c141 = arith.constant 141 : index
    %1700 = memref.load %arg4[%c141] : memref<192xf32, #tpu.memory_space<smem>>
    %1701 = vector.broadcast %1700 : f32 to vector<8x134xf32>
    %1702 = arith.mulf %1699, %1701 : vector<8x134xf32>
    %1703 = arith.addf %1697, %1702 : vector<8x134xf32>
    %c10_916 = arith.constant 10 : index
    %c0_917 = arith.constant 0 : index
    %c0_918 = arith.constant 0 : index
    %1704 = vector.load %arg11[%c10_916, %c0_917, %c0_918] : memref<12x8x134xf32, #tpu.memory_space<vmem>>, vector<1x8x134xf32>
    %1705 = vector.shape_cast %1704 : vector<1x8x134xf32> to vector<8x134xf32>
    %c142 = arith.constant 142 : index
    %1706 = memref.load %arg4[%c142] : memref<192xf32, #tpu.memory_space<smem>>
    %1707 = vector.broadcast %1706 : f32 to vector<8x134xf32>
    %1708 = arith.mulf %1705, %1707 : vector<8x134xf32>
    %1709 = arith.addf %1703, %1708 : vector<8x134xf32>
    %c11_919 = arith.constant 11 : index
    %c0_920 = arith.constant 0 : index
    %c0_921 = arith.constant 0 : index
    %1710 = vector.load %arg11[%c11_919, %c0_920, %c0_921] : memref<12x8x134xf32, #tpu.memory_space<vmem>>, vector<1x8x134xf32>
    %1711 = vector.shape_cast %1710 : vector<1x8x134xf32> to vector<8x134xf32>
    %c143 = arith.constant 143 : index
    %1712 = memref.load %arg4[%c143] : memref<192xf32, #tpu.memory_space<smem>>
    %1713 = vector.broadcast %1712 : f32 to vector<8x134xf32>
    %1714 = arith.mulf %1711, %1713 : vector<8x134xf32>
    %1715 = arith.addf %1709, %1714 : vector<8x134xf32>
    %c11_922 = arith.constant 11 : index
    %1716 = memref.load %arg5[%c11_922] : memref<16xf32, #tpu.memory_space<smem>>
    %1717 = vector.broadcast %1716 : f32 to vector<8x134xf32>
    %1718 = arith.addf %1715, %1717 : vector<8x134xf32>
    %cst_923 = arith.constant 0.000000e+00 : f32
    %1719 = vector.broadcast %cst_923 : f32 to vector<8x134xf32>
    %1720 = arith.maximumf %1718, %1719 : vector<8x134xf32>
    %1721 = arith.truncf %1720 : vector<8x134xf32> to vector<8x134xbf16>
    %c11_924 = arith.constant 11 : index
    %c0_925 = arith.constant 0 : index
    %c0_926 = arith.constant 0 : index
    %1722 = vector.load %arg6[%c11_924, %c0_925, %c0_926] : memref<16x134x200xbf16, #tpu.memory_space<vmem>>, vector<1x134x200xbf16>
    %1723 = vector.shape_cast %1722 : vector<1x134x200xbf16> to vector<134x200xbf16>
    %cst_927 = arith.constant dense<0.000000e+00> : vector<8x200xf32>
    %1724 = tpu.matmul %1721, %1723, %cst_927 {dimension_numbers = #tpu.dot_dimension_numbers<[1], [0], [0], [1], [0, 0, 1, 1], [], []>} : vector<8x134xbf16>, vector<134x200xbf16>, vector<8x200xf32> -> vector<8x200xf32>
    %1725 = arith.addf %1644, %1724 : vector<8x200xf32>
    %c0_928 = arith.constant 0 : index
    %c0_929 = arith.constant 0 : index
    %c0_930 = arith.constant 0 : index
    %1726 = vector.load %arg11[%c0_928, %c0_929, %c0_930] : memref<12x8x134xf32, #tpu.memory_space<vmem>>, vector<1x8x134xf32>
    %1727 = vector.shape_cast %1726 : vector<1x8x134xf32> to vector<8x134xf32>
    %c144 = arith.constant 144 : index
    %1728 = memref.load %arg4[%c144] : memref<192xf32, #tpu.memory_space<smem>>
    %1729 = vector.broadcast %1728 : f32 to vector<8x134xf32>
    %1730 = arith.mulf %1727, %1729 : vector<8x134xf32>
    %c1_931 = arith.constant 1 : index
    %c0_932 = arith.constant 0 : index
    %c0_933 = arith.constant 0 : index
    %1731 = vector.load %arg11[%c1_931, %c0_932, %c0_933] : memref<12x8x134xf32, #tpu.memory_space<vmem>>, vector<1x8x134xf32>
    %1732 = vector.shape_cast %1731 : vector<1x8x134xf32> to vector<8x134xf32>
    %c145 = arith.constant 145 : index
    %1733 = memref.load %arg4[%c145] : memref<192xf32, #tpu.memory_space<smem>>
    %1734 = vector.broadcast %1733 : f32 to vector<8x134xf32>
    %1735 = arith.mulf %1732, %1734 : vector<8x134xf32>
    %1736 = arith.addf %1730, %1735 : vector<8x134xf32>
    %c2_934 = arith.constant 2 : index
    %c0_935 = arith.constant 0 : index
    %c0_936 = arith.constant 0 : index
    %1737 = vector.load %arg11[%c2_934, %c0_935, %c0_936] : memref<12x8x134xf32, #tpu.memory_space<vmem>>, vector<1x8x134xf32>
    %1738 = vector.shape_cast %1737 : vector<1x8x134xf32> to vector<8x134xf32>
    %c146 = arith.constant 146 : index
    %1739 = memref.load %arg4[%c146] : memref<192xf32, #tpu.memory_space<smem>>
    %1740 = vector.broadcast %1739 : f32 to vector<8x134xf32>
    %1741 = arith.mulf %1738, %1740 : vector<8x134xf32>
    %1742 = arith.addf %1736, %1741 : vector<8x134xf32>
    %c3_937 = arith.constant 3 : index
    %c0_938 = arith.constant 0 : index
    %c0_939 = arith.constant 0 : index
    %1743 = vector.load %arg11[%c3_937, %c0_938, %c0_939] : memref<12x8x134xf32, #tpu.memory_space<vmem>>, vector<1x8x134xf32>
    %1744 = vector.shape_cast %1743 : vector<1x8x134xf32> to vector<8x134xf32>
    %c147 = arith.constant 147 : index
    %1745 = memref.load %arg4[%c147] : memref<192xf32, #tpu.memory_space<smem>>
    %1746 = vector.broadcast %1745 : f32 to vector<8x134xf32>
    %1747 = arith.mulf %1744, %1746 : vector<8x134xf32>
    %1748 = arith.addf %1742, %1747 : vector<8x134xf32>
    %c4_940 = arith.constant 4 : index
    %c0_941 = arith.constant 0 : index
    %c0_942 = arith.constant 0 : index
    %1749 = vector.load %arg11[%c4_940, %c0_941, %c0_942] : memref<12x8x134xf32, #tpu.memory_space<vmem>>, vector<1x8x134xf32>
    %1750 = vector.shape_cast %1749 : vector<1x8x134xf32> to vector<8x134xf32>
    %c148 = arith.constant 148 : index
    %1751 = memref.load %arg4[%c148] : memref<192xf32, #tpu.memory_space<smem>>
    %1752 = vector.broadcast %1751 : f32 to vector<8x134xf32>
    %1753 = arith.mulf %1750, %1752 : vector<8x134xf32>
    %1754 = arith.addf %1748, %1753 : vector<8x134xf32>
    %c5_943 = arith.constant 5 : index
    %c0_944 = arith.constant 0 : index
    %c0_945 = arith.constant 0 : index
    %1755 = vector.load %arg11[%c5_943, %c0_944, %c0_945] : memref<12x8x134xf32, #tpu.memory_space<vmem>>, vector<1x8x134xf32>
    %1756 = vector.shape_cast %1755 : vector<1x8x134xf32> to vector<8x134xf32>
    %c149 = arith.constant 149 : index
    %1757 = memref.load %arg4[%c149] : memref<192xf32, #tpu.memory_space<smem>>
    %1758 = vector.broadcast %1757 : f32 to vector<8x134xf32>
    %1759 = arith.mulf %1756, %1758 : vector<8x134xf32>
    %1760 = arith.addf %1754, %1759 : vector<8x134xf32>
    %c6_946 = arith.constant 6 : index
    %c0_947 = arith.constant 0 : index
    %c0_948 = arith.constant 0 : index
    %1761 = vector.load %arg11[%c6_946, %c0_947, %c0_948] : memref<12x8x134xf32, #tpu.memory_space<vmem>>, vector<1x8x134xf32>
    %1762 = vector.shape_cast %1761 : vector<1x8x134xf32> to vector<8x134xf32>
    %c150 = arith.constant 150 : index
    %1763 = memref.load %arg4[%c150] : memref<192xf32, #tpu.memory_space<smem>>
    %1764 = vector.broadcast %1763 : f32 to vector<8x134xf32>
    %1765 = arith.mulf %1762, %1764 : vector<8x134xf32>
    %1766 = arith.addf %1760, %1765 : vector<8x134xf32>
    %c7_949 = arith.constant 7 : index
    %c0_950 = arith.constant 0 : index
    %c0_951 = arith.constant 0 : index
    %1767 = vector.load %arg11[%c7_949, %c0_950, %c0_951] : memref<12x8x134xf32, #tpu.memory_space<vmem>>, vector<1x8x134xf32>
    %1768 = vector.shape_cast %1767 : vector<1x8x134xf32> to vector<8x134xf32>
    %c151 = arith.constant 151 : index
    %1769 = memref.load %arg4[%c151] : memref<192xf32, #tpu.memory_space<smem>>
    %1770 = vector.broadcast %1769 : f32 to vector<8x134xf32>
    %1771 = arith.mulf %1768, %1770 : vector<8x134xf32>
    %1772 = arith.addf %1766, %1771 : vector<8x134xf32>
    %c8_952 = arith.constant 8 : index
    %c0_953 = arith.constant 0 : index
    %c0_954 = arith.constant 0 : index
    %1773 = vector.load %arg11[%c8_952, %c0_953, %c0_954] : memref<12x8x134xf32, #tpu.memory_space<vmem>>, vector<1x8x134xf32>
    %1774 = vector.shape_cast %1773 : vector<1x8x134xf32> to vector<8x134xf32>
    %c152 = arith.constant 152 : index
    %1775 = memref.load %arg4[%c152] : memref<192xf32, #tpu.memory_space<smem>>
    %1776 = vector.broadcast %1775 : f32 to vector<8x134xf32>
    %1777 = arith.mulf %1774, %1776 : vector<8x134xf32>
    %1778 = arith.addf %1772, %1777 : vector<8x134xf32>
    %c9_955 = arith.constant 9 : index
    %c0_956 = arith.constant 0 : index
    %c0_957 = arith.constant 0 : index
    %1779 = vector.load %arg11[%c9_955, %c0_956, %c0_957] : memref<12x8x134xf32, #tpu.memory_space<vmem>>, vector<1x8x134xf32>
    %1780 = vector.shape_cast %1779 : vector<1x8x134xf32> to vector<8x134xf32>
    %c153 = arith.constant 153 : index
    %1781 = memref.load %arg4[%c153] : memref<192xf32, #tpu.memory_space<smem>>
    %1782 = vector.broadcast %1781 : f32 to vector<8x134xf32>
    %1783 = arith.mulf %1780, %1782 : vector<8x134xf32>
    %1784 = arith.addf %1778, %1783 : vector<8x134xf32>
    %c10_958 = arith.constant 10 : index
    %c0_959 = arith.constant 0 : index
    %c0_960 = arith.constant 0 : index
    %1785 = vector.load %arg11[%c10_958, %c0_959, %c0_960] : memref<12x8x134xf32, #tpu.memory_space<vmem>>, vector<1x8x134xf32>
    %1786 = vector.shape_cast %1785 : vector<1x8x134xf32> to vector<8x134xf32>
    %c154 = arith.constant 154 : index
    %1787 = memref.load %arg4[%c154] : memref<192xf32, #tpu.memory_space<smem>>
    %1788 = vector.broadcast %1787 : f32 to vector<8x134xf32>
    %1789 = arith.mulf %1786, %1788 : vector<8x134xf32>
    %1790 = arith.addf %1784, %1789 : vector<8x134xf32>
    %c11_961 = arith.constant 11 : index
    %c0_962 = arith.constant 0 : index
    %c0_963 = arith.constant 0 : index
    %1791 = vector.load %arg11[%c11_961, %c0_962, %c0_963] : memref<12x8x134xf32, #tpu.memory_space<vmem>>, vector<1x8x134xf32>
    %1792 = vector.shape_cast %1791 : vector<1x8x134xf32> to vector<8x134xf32>
    %c155 = arith.constant 155 : index
    %1793 = memref.load %arg4[%c155] : memref<192xf32, #tpu.memory_space<smem>>
    %1794 = vector.broadcast %1793 : f32 to vector<8x134xf32>
    %1795 = arith.mulf %1792, %1794 : vector<8x134xf32>
    %1796 = arith.addf %1790, %1795 : vector<8x134xf32>
    %c12_964 = arith.constant 12 : index
    %1797 = memref.load %arg5[%c12_964] : memref<16xf32, #tpu.memory_space<smem>>
    %1798 = vector.broadcast %1797 : f32 to vector<8x134xf32>
    %1799 = arith.addf %1796, %1798 : vector<8x134xf32>
    %cst_965 = arith.constant 0.000000e+00 : f32
    %1800 = vector.broadcast %cst_965 : f32 to vector<8x134xf32>
    %1801 = arith.maximumf %1799, %1800 : vector<8x134xf32>
    %1802 = arith.truncf %1801 : vector<8x134xf32> to vector<8x134xbf16>
    %c12_966 = arith.constant 12 : index
    %c0_967 = arith.constant 0 : index
    %c0_968 = arith.constant 0 : index
    %1803 = vector.load %arg6[%c12_966, %c0_967, %c0_968] : memref<16x134x200xbf16, #tpu.memory_space<vmem>>, vector<1x134x200xbf16>
    %1804 = vector.shape_cast %1803 : vector<1x134x200xbf16> to vector<134x200xbf16>
    %cst_969 = arith.constant dense<0.000000e+00> : vector<8x200xf32>
    %1805 = tpu.matmul %1802, %1804, %cst_969 {dimension_numbers = #tpu.dot_dimension_numbers<[1], [0], [0], [1], [0, 0, 1, 1], [], []>} : vector<8x134xbf16>, vector<134x200xbf16>, vector<8x200xf32> -> vector<8x200xf32>
    %1806 = arith.addf %1725, %1805 : vector<8x200xf32>
    %c0_970 = arith.constant 0 : index
    %c0_971 = arith.constant 0 : index
    %c0_972 = arith.constant 0 : index
    %1807 = vector.load %arg11[%c0_970, %c0_971, %c0_972] : memref<12x8x134xf32, #tpu.memory_space<vmem>>, vector<1x8x134xf32>
    %1808 = vector.shape_cast %1807 : vector<1x8x134xf32> to vector<8x134xf32>
    %c156 = arith.constant 156 : index
    %1809 = memref.load %arg4[%c156] : memref<192xf32, #tpu.memory_space<smem>>
    %1810 = vector.broadcast %1809 : f32 to vector<8x134xf32>
    %1811 = arith.mulf %1808, %1810 : vector<8x134xf32>
    %c1_973 = arith.constant 1 : index
    %c0_974 = arith.constant 0 : index
    %c0_975 = arith.constant 0 : index
    %1812 = vector.load %arg11[%c1_973, %c0_974, %c0_975] : memref<12x8x134xf32, #tpu.memory_space<vmem>>, vector<1x8x134xf32>
    %1813 = vector.shape_cast %1812 : vector<1x8x134xf32> to vector<8x134xf32>
    %c157 = arith.constant 157 : index
    %1814 = memref.load %arg4[%c157] : memref<192xf32, #tpu.memory_space<smem>>
    %1815 = vector.broadcast %1814 : f32 to vector<8x134xf32>
    %1816 = arith.mulf %1813, %1815 : vector<8x134xf32>
    %1817 = arith.addf %1811, %1816 : vector<8x134xf32>
    %c2_976 = arith.constant 2 : index
    %c0_977 = arith.constant 0 : index
    %c0_978 = arith.constant 0 : index
    %1818 = vector.load %arg11[%c2_976, %c0_977, %c0_978] : memref<12x8x134xf32, #tpu.memory_space<vmem>>, vector<1x8x134xf32>
    %1819 = vector.shape_cast %1818 : vector<1x8x134xf32> to vector<8x134xf32>
    %c158 = arith.constant 158 : index
    %1820 = memref.load %arg4[%c158] : memref<192xf32, #tpu.memory_space<smem>>
    %1821 = vector.broadcast %1820 : f32 to vector<8x134xf32>
    %1822 = arith.mulf %1819, %1821 : vector<8x134xf32>
    %1823 = arith.addf %1817, %1822 : vector<8x134xf32>
    %c3_979 = arith.constant 3 : index
    %c0_980 = arith.constant 0 : index
    %c0_981 = arith.constant 0 : index
    %1824 = vector.load %arg11[%c3_979, %c0_980, %c0_981] : memref<12x8x134xf32, #tpu.memory_space<vmem>>, vector<1x8x134xf32>
    %1825 = vector.shape_cast %1824 : vector<1x8x134xf32> to vector<8x134xf32>
    %c159 = arith.constant 159 : index
    %1826 = memref.load %arg4[%c159] : memref<192xf32, #tpu.memory_space<smem>>
    %1827 = vector.broadcast %1826 : f32 to vector<8x134xf32>
    %1828 = arith.mulf %1825, %1827 : vector<8x134xf32>
    %1829 = arith.addf %1823, %1828 : vector<8x134xf32>
    %c4_982 = arith.constant 4 : index
    %c0_983 = arith.constant 0 : index
    %c0_984 = arith.constant 0 : index
    %1830 = vector.load %arg11[%c4_982, %c0_983, %c0_984] : memref<12x8x134xf32, #tpu.memory_space<vmem>>, vector<1x8x134xf32>
    %1831 = vector.shape_cast %1830 : vector<1x8x134xf32> to vector<8x134xf32>
    %c160 = arith.constant 160 : index
    %1832 = memref.load %arg4[%c160] : memref<192xf32, #tpu.memory_space<smem>>
    %1833 = vector.broadcast %1832 : f32 to vector<8x134xf32>
    %1834 = arith.mulf %1831, %1833 : vector<8x134xf32>
    %1835 = arith.addf %1829, %1834 : vector<8x134xf32>
    %c5_985 = arith.constant 5 : index
    %c0_986 = arith.constant 0 : index
    %c0_987 = arith.constant 0 : index
    %1836 = vector.load %arg11[%c5_985, %c0_986, %c0_987] : memref<12x8x134xf32, #tpu.memory_space<vmem>>, vector<1x8x134xf32>
    %1837 = vector.shape_cast %1836 : vector<1x8x134xf32> to vector<8x134xf32>
    %c161 = arith.constant 161 : index
    %1838 = memref.load %arg4[%c161] : memref<192xf32, #tpu.memory_space<smem>>
    %1839 = vector.broadcast %1838 : f32 to vector<8x134xf32>
    %1840 = arith.mulf %1837, %1839 : vector<8x134xf32>
    %1841 = arith.addf %1835, %1840 : vector<8x134xf32>
    %c6_988 = arith.constant 6 : index
    %c0_989 = arith.constant 0 : index
    %c0_990 = arith.constant 0 : index
    %1842 = vector.load %arg11[%c6_988, %c0_989, %c0_990] : memref<12x8x134xf32, #tpu.memory_space<vmem>>, vector<1x8x134xf32>
    %1843 = vector.shape_cast %1842 : vector<1x8x134xf32> to vector<8x134xf32>
    %c162 = arith.constant 162 : index
    %1844 = memref.load %arg4[%c162] : memref<192xf32, #tpu.memory_space<smem>>
    %1845 = vector.broadcast %1844 : f32 to vector<8x134xf32>
    %1846 = arith.mulf %1843, %1845 : vector<8x134xf32>
    %1847 = arith.addf %1841, %1846 : vector<8x134xf32>
    %c7_991 = arith.constant 7 : index
    %c0_992 = arith.constant 0 : index
    %c0_993 = arith.constant 0 : index
    %1848 = vector.load %arg11[%c7_991, %c0_992, %c0_993] : memref<12x8x134xf32, #tpu.memory_space<vmem>>, vector<1x8x134xf32>
    %1849 = vector.shape_cast %1848 : vector<1x8x134xf32> to vector<8x134xf32>
    %c163 = arith.constant 163 : index
    %1850 = memref.load %arg4[%c163] : memref<192xf32, #tpu.memory_space<smem>>
    %1851 = vector.broadcast %1850 : f32 to vector<8x134xf32>
    %1852 = arith.mulf %1849, %1851 : vector<8x134xf32>
    %1853 = arith.addf %1847, %1852 : vector<8x134xf32>
    %c8_994 = arith.constant 8 : index
    %c0_995 = arith.constant 0 : index
    %c0_996 = arith.constant 0 : index
    %1854 = vector.load %arg11[%c8_994, %c0_995, %c0_996] : memref<12x8x134xf32, #tpu.memory_space<vmem>>, vector<1x8x134xf32>
    %1855 = vector.shape_cast %1854 : vector<1x8x134xf32> to vector<8x134xf32>
    %c164 = arith.constant 164 : index
    %1856 = memref.load %arg4[%c164] : memref<192xf32, #tpu.memory_space<smem>>
    %1857 = vector.broadcast %1856 : f32 to vector<8x134xf32>
    %1858 = arith.mulf %1855, %1857 : vector<8x134xf32>
    %1859 = arith.addf %1853, %1858 : vector<8x134xf32>
    %c9_997 = arith.constant 9 : index
    %c0_998 = arith.constant 0 : index
    %c0_999 = arith.constant 0 : index
    %1860 = vector.load %arg11[%c9_997, %c0_998, %c0_999] : memref<12x8x134xf32, #tpu.memory_space<vmem>>, vector<1x8x134xf32>
    %1861 = vector.shape_cast %1860 : vector<1x8x134xf32> to vector<8x134xf32>
    %c165 = arith.constant 165 : index
    %1862 = memref.load %arg4[%c165] : memref<192xf32, #tpu.memory_space<smem>>
    %1863 = vector.broadcast %1862 : f32 to vector<8x134xf32>
    %1864 = arith.mulf %1861, %1863 : vector<8x134xf32>
    %1865 = arith.addf %1859, %1864 : vector<8x134xf32>
    %c10_1000 = arith.constant 10 : index
    %c0_1001 = arith.constant 0 : index
    %c0_1002 = arith.constant 0 : index
    %1866 = vector.load %arg11[%c10_1000, %c0_1001, %c0_1002] : memref<12x8x134xf32, #tpu.memory_space<vmem>>, vector<1x8x134xf32>
    %1867 = vector.shape_cast %1866 : vector<1x8x134xf32> to vector<8x134xf32>
    %c166 = arith.constant 166 : index
    %1868 = memref.load %arg4[%c166] : memref<192xf32, #tpu.memory_space<smem>>
    %1869 = vector.broadcast %1868 : f32 to vector<8x134xf32>
    %1870 = arith.mulf %1867, %1869 : vector<8x134xf32>
    %1871 = arith.addf %1865, %1870 : vector<8x134xf32>
    %c11_1003 = arith.constant 11 : index
    %c0_1004 = arith.constant 0 : index
    %c0_1005 = arith.constant 0 : index
    %1872 = vector.load %arg11[%c11_1003, %c0_1004, %c0_1005] : memref<12x8x134xf32, #tpu.memory_space<vmem>>, vector<1x8x134xf32>
    %1873 = vector.shape_cast %1872 : vector<1x8x134xf32> to vector<8x134xf32>
    %c167 = arith.constant 167 : index
    %1874 = memref.load %arg4[%c167] : memref<192xf32, #tpu.memory_space<smem>>
    %1875 = vector.broadcast %1874 : f32 to vector<8x134xf32>
    %1876 = arith.mulf %1873, %1875 : vector<8x134xf32>
    %1877 = arith.addf %1871, %1876 : vector<8x134xf32>
    %c13_1006 = arith.constant 13 : index
    %1878 = memref.load %arg5[%c13_1006] : memref<16xf32, #tpu.memory_space<smem>>
    %1879 = vector.broadcast %1878 : f32 to vector<8x134xf32>
    %1880 = arith.addf %1877, %1879 : vector<8x134xf32>
    %cst_1007 = arith.constant 0.000000e+00 : f32
    %1881 = vector.broadcast %cst_1007 : f32 to vector<8x134xf32>
    %1882 = arith.maximumf %1880, %1881 : vector<8x134xf32>
    %1883 = arith.truncf %1882 : vector<8x134xf32> to vector<8x134xbf16>
    %c13_1008 = arith.constant 13 : index
    %c0_1009 = arith.constant 0 : index
    %c0_1010 = arith.constant 0 : index
    %1884 = vector.load %arg6[%c13_1008, %c0_1009, %c0_1010] : memref<16x134x200xbf16, #tpu.memory_space<vmem>>, vector<1x134x200xbf16>
    %1885 = vector.shape_cast %1884 : vector<1x134x200xbf16> to vector<134x200xbf16>
    %cst_1011 = arith.constant dense<0.000000e+00> : vector<8x200xf32>
    %1886 = tpu.matmul %1883, %1885, %cst_1011 {dimension_numbers = #tpu.dot_dimension_numbers<[1], [0], [0], [1], [0, 0, 1, 1], [], []>} : vector<8x134xbf16>, vector<134x200xbf16>, vector<8x200xf32> -> vector<8x200xf32>
    %1887 = arith.addf %1806, %1886 : vector<8x200xf32>
    %c0_1012 = arith.constant 0 : index
    %c0_1013 = arith.constant 0 : index
    %c0_1014 = arith.constant 0 : index
    %1888 = vector.load %arg11[%c0_1012, %c0_1013, %c0_1014] : memref<12x8x134xf32, #tpu.memory_space<vmem>>, vector<1x8x134xf32>
    %1889 = vector.shape_cast %1888 : vector<1x8x134xf32> to vector<8x134xf32>
    %c168 = arith.constant 168 : index
    %1890 = memref.load %arg4[%c168] : memref<192xf32, #tpu.memory_space<smem>>
    %1891 = vector.broadcast %1890 : f32 to vector<8x134xf32>
    %1892 = arith.mulf %1889, %1891 : vector<8x134xf32>
    %c1_1015 = arith.constant 1 : index
    %c0_1016 = arith.constant 0 : index
    %c0_1017 = arith.constant 0 : index
    %1893 = vector.load %arg11[%c1_1015, %c0_1016, %c0_1017] : memref<12x8x134xf32, #tpu.memory_space<vmem>>, vector<1x8x134xf32>
    %1894 = vector.shape_cast %1893 : vector<1x8x134xf32> to vector<8x134xf32>
    %c169 = arith.constant 169 : index
    %1895 = memref.load %arg4[%c169] : memref<192xf32, #tpu.memory_space<smem>>
    %1896 = vector.broadcast %1895 : f32 to vector<8x134xf32>
    %1897 = arith.mulf %1894, %1896 : vector<8x134xf32>
    %1898 = arith.addf %1892, %1897 : vector<8x134xf32>
    %c2_1018 = arith.constant 2 : index
    %c0_1019 = arith.constant 0 : index
    %c0_1020 = arith.constant 0 : index
    %1899 = vector.load %arg11[%c2_1018, %c0_1019, %c0_1020] : memref<12x8x134xf32, #tpu.memory_space<vmem>>, vector<1x8x134xf32>
    %1900 = vector.shape_cast %1899 : vector<1x8x134xf32> to vector<8x134xf32>
    %c170 = arith.constant 170 : index
    %1901 = memref.load %arg4[%c170] : memref<192xf32, #tpu.memory_space<smem>>
    %1902 = vector.broadcast %1901 : f32 to vector<8x134xf32>
    %1903 = arith.mulf %1900, %1902 : vector<8x134xf32>
    %1904 = arith.addf %1898, %1903 : vector<8x134xf32>
    %c3_1021 = arith.constant 3 : index
    %c0_1022 = arith.constant 0 : index
    %c0_1023 = arith.constant 0 : index
    %1905 = vector.load %arg11[%c3_1021, %c0_1022, %c0_1023] : memref<12x8x134xf32, #tpu.memory_space<vmem>>, vector<1x8x134xf32>
    %1906 = vector.shape_cast %1905 : vector<1x8x134xf32> to vector<8x134xf32>
    %c171 = arith.constant 171 : index
    %1907 = memref.load %arg4[%c171] : memref<192xf32, #tpu.memory_space<smem>>
    %1908 = vector.broadcast %1907 : f32 to vector<8x134xf32>
    %1909 = arith.mulf %1906, %1908 : vector<8x134xf32>
    %1910 = arith.addf %1904, %1909 : vector<8x134xf32>
    %c4_1024 = arith.constant 4 : index
    %c0_1025 = arith.constant 0 : index
    %c0_1026 = arith.constant 0 : index
    %1911 = vector.load %arg11[%c4_1024, %c0_1025, %c0_1026] : memref<12x8x134xf32, #tpu.memory_space<vmem>>, vector<1x8x134xf32>
    %1912 = vector.shape_cast %1911 : vector<1x8x134xf32> to vector<8x134xf32>
    %c172 = arith.constant 172 : index
    %1913 = memref.load %arg4[%c172] : memref<192xf32, #tpu.memory_space<smem>>
    %1914 = vector.broadcast %1913 : f32 to vector<8x134xf32>
    %1915 = arith.mulf %1912, %1914 : vector<8x134xf32>
    %1916 = arith.addf %1910, %1915 : vector<8x134xf32>
    %c5_1027 = arith.constant 5 : index
    %c0_1028 = arith.constant 0 : index
    %c0_1029 = arith.constant 0 : index
    %1917 = vector.load %arg11[%c5_1027, %c0_1028, %c0_1029] : memref<12x8x134xf32, #tpu.memory_space<vmem>>, vector<1x8x134xf32>
    %1918 = vector.shape_cast %1917 : vector<1x8x134xf32> to vector<8x134xf32>
    %c173 = arith.constant 173 : index
    %1919 = memref.load %arg4[%c173] : memref<192xf32, #tpu.memory_space<smem>>
    %1920 = vector.broadcast %1919 : f32 to vector<8x134xf32>
    %1921 = arith.mulf %1918, %1920 : vector<8x134xf32>
    %1922 = arith.addf %1916, %1921 : vector<8x134xf32>
    %c6_1030 = arith.constant 6 : index
    %c0_1031 = arith.constant 0 : index
    %c0_1032 = arith.constant 0 : index
    %1923 = vector.load %arg11[%c6_1030, %c0_1031, %c0_1032] : memref<12x8x134xf32, #tpu.memory_space<vmem>>, vector<1x8x134xf32>
    %1924 = vector.shape_cast %1923 : vector<1x8x134xf32> to vector<8x134xf32>
    %c174 = arith.constant 174 : index
    %1925 = memref.load %arg4[%c174] : memref<192xf32, #tpu.memory_space<smem>>
    %1926 = vector.broadcast %1925 : f32 to vector<8x134xf32>
    %1927 = arith.mulf %1924, %1926 : vector<8x134xf32>
    %1928 = arith.addf %1922, %1927 : vector<8x134xf32>
    %c7_1033 = arith.constant 7 : index
    %c0_1034 = arith.constant 0 : index
    %c0_1035 = arith.constant 0 : index
    %1929 = vector.load %arg11[%c7_1033, %c0_1034, %c0_1035] : memref<12x8x134xf32, #tpu.memory_space<vmem>>, vector<1x8x134xf32>
    %1930 = vector.shape_cast %1929 : vector<1x8x134xf32> to vector<8x134xf32>
    %c175 = arith.constant 175 : index
    %1931 = memref.load %arg4[%c175] : memref<192xf32, #tpu.memory_space<smem>>
    %1932 = vector.broadcast %1931 : f32 to vector<8x134xf32>
    %1933 = arith.mulf %1930, %1932 : vector<8x134xf32>
    %1934 = arith.addf %1928, %1933 : vector<8x134xf32>
    %c8_1036 = arith.constant 8 : index
    %c0_1037 = arith.constant 0 : index
    %c0_1038 = arith.constant 0 : index
    %1935 = vector.load %arg11[%c8_1036, %c0_1037, %c0_1038] : memref<12x8x134xf32, #tpu.memory_space<vmem>>, vector<1x8x134xf32>
    %1936 = vector.shape_cast %1935 : vector<1x8x134xf32> to vector<8x134xf32>
    %c176 = arith.constant 176 : index
    %1937 = memref.load %arg4[%c176] : memref<192xf32, #tpu.memory_space<smem>>
    %1938 = vector.broadcast %1937 : f32 to vector<8x134xf32>
    %1939 = arith.mulf %1936, %1938 : vector<8x134xf32>
    %1940 = arith.addf %1934, %1939 : vector<8x134xf32>
    %c9_1039 = arith.constant 9 : index
    %c0_1040 = arith.constant 0 : index
    %c0_1041 = arith.constant 0 : index
    %1941 = vector.load %arg11[%c9_1039, %c0_1040, %c0_1041] : memref<12x8x134xf32, #tpu.memory_space<vmem>>, vector<1x8x134xf32>
    %1942 = vector.shape_cast %1941 : vector<1x8x134xf32> to vector<8x134xf32>
    %c177 = arith.constant 177 : index
    %1943 = memref.load %arg4[%c177] : memref<192xf32, #tpu.memory_space<smem>>
    %1944 = vector.broadcast %1943 : f32 to vector<8x134xf32>
    %1945 = arith.mulf %1942, %1944 : vector<8x134xf32>
    %1946 = arith.addf %1940, %1945 : vector<8x134xf32>
    %c10_1042 = arith.constant 10 : index
    %c0_1043 = arith.constant 0 : index
    %c0_1044 = arith.constant 0 : index
    %1947 = vector.load %arg11[%c10_1042, %c0_1043, %c0_1044] : memref<12x8x134xf32, #tpu.memory_space<vmem>>, vector<1x8x134xf32>
    %1948 = vector.shape_cast %1947 : vector<1x8x134xf32> to vector<8x134xf32>
    %c178 = arith.constant 178 : index
    %1949 = memref.load %arg4[%c178] : memref<192xf32, #tpu.memory_space<smem>>
    %1950 = vector.broadcast %1949 : f32 to vector<8x134xf32>
    %1951 = arith.mulf %1948, %1950 : vector<8x134xf32>
    %1952 = arith.addf %1946, %1951 : vector<8x134xf32>
    %c11_1045 = arith.constant 11 : index
    %c0_1046 = arith.constant 0 : index
    %c0_1047 = arith.constant 0 : index
    %1953 = vector.load %arg11[%c11_1045, %c0_1046, %c0_1047] : memref<12x8x134xf32, #tpu.memory_space<vmem>>, vector<1x8x134xf32>
    %1954 = vector.shape_cast %1953 : vector<1x8x134xf32> to vector<8x134xf32>
    %c179 = arith.constant 179 : index
    %1955 = memref.load %arg4[%c179] : memref<192xf32, #tpu.memory_space<smem>>
    %1956 = vector.broadcast %1955 : f32 to vector<8x134xf32>
    %1957 = arith.mulf %1954, %1956 : vector<8x134xf32>
    %1958 = arith.addf %1952, %1957 : vector<8x134xf32>
    %c14_1048 = arith.constant 14 : index
    %1959 = memref.load %arg5[%c14_1048] : memref<16xf32, #tpu.memory_space<smem>>
    %1960 = vector.broadcast %1959 : f32 to vector<8x134xf32>
    %1961 = arith.addf %1958, %1960 : vector<8x134xf32>
    %cst_1049 = arith.constant 0.000000e+00 : f32
    %1962 = vector.broadcast %cst_1049 : f32 to vector<8x134xf32>
    %1963 = arith.maximumf %1961, %1962 : vector<8x134xf32>
    %1964 = arith.truncf %1963 : vector<8x134xf32> to vector<8x134xbf16>
    %c14_1050 = arith.constant 14 : index
    %c0_1051 = arith.constant 0 : index
    %c0_1052 = arith.constant 0 : index
    %1965 = vector.load %arg6[%c14_1050, %c0_1051, %c0_1052] : memref<16x134x200xbf16, #tpu.memory_space<vmem>>, vector<1x134x200xbf16>
    %1966 = vector.shape_cast %1965 : vector<1x134x200xbf16> to vector<134x200xbf16>
    %cst_1053 = arith.constant dense<0.000000e+00> : vector<8x200xf32>
    %1967 = tpu.matmul %1964, %1966, %cst_1053 {dimension_numbers = #tpu.dot_dimension_numbers<[1], [0], [0], [1], [0, 0, 1, 1], [], []>} : vector<8x134xbf16>, vector<134x200xbf16>, vector<8x200xf32> -> vector<8x200xf32>
    %1968 = arith.addf %1887, %1967 : vector<8x200xf32>
    %c0_1054 = arith.constant 0 : index
    %c0_1055 = arith.constant 0 : index
    %c0_1056 = arith.constant 0 : index
    %1969 = vector.load %arg11[%c0_1054, %c0_1055, %c0_1056] : memref<12x8x134xf32, #tpu.memory_space<vmem>>, vector<1x8x134xf32>
    %1970 = vector.shape_cast %1969 : vector<1x8x134xf32> to vector<8x134xf32>
    %c180 = arith.constant 180 : index
    %1971 = memref.load %arg4[%c180] : memref<192xf32, #tpu.memory_space<smem>>
    %1972 = vector.broadcast %1971 : f32 to vector<8x134xf32>
    %1973 = arith.mulf %1970, %1972 : vector<8x134xf32>
    %c1_1057 = arith.constant 1 : index
    %c0_1058 = arith.constant 0 : index
    %c0_1059 = arith.constant 0 : index
    %1974 = vector.load %arg11[%c1_1057, %c0_1058, %c0_1059] : memref<12x8x134xf32, #tpu.memory_space<vmem>>, vector<1x8x134xf32>
    %1975 = vector.shape_cast %1974 : vector<1x8x134xf32> to vector<8x134xf32>
    %c181 = arith.constant 181 : index
    %1976 = memref.load %arg4[%c181] : memref<192xf32, #tpu.memory_space<smem>>
    %1977 = vector.broadcast %1976 : f32 to vector<8x134xf32>
    %1978 = arith.mulf %1975, %1977 : vector<8x134xf32>
    %1979 = arith.addf %1973, %1978 : vector<8x134xf32>
    %c2_1060 = arith.constant 2 : index
    %c0_1061 = arith.constant 0 : index
    %c0_1062 = arith.constant 0 : index
    %1980 = vector.load %arg11[%c2_1060, %c0_1061, %c0_1062] : memref<12x8x134xf32, #tpu.memory_space<vmem>>, vector<1x8x134xf32>
    %1981 = vector.shape_cast %1980 : vector<1x8x134xf32> to vector<8x134xf32>
    %c182 = arith.constant 182 : index
    %1982 = memref.load %arg4[%c182] : memref<192xf32, #tpu.memory_space<smem>>
    %1983 = vector.broadcast %1982 : f32 to vector<8x134xf32>
    %1984 = arith.mulf %1981, %1983 : vector<8x134xf32>
    %1985 = arith.addf %1979, %1984 : vector<8x134xf32>
    %c3_1063 = arith.constant 3 : index
    %c0_1064 = arith.constant 0 : index
    %c0_1065 = arith.constant 0 : index
    %1986 = vector.load %arg11[%c3_1063, %c0_1064, %c0_1065] : memref<12x8x134xf32, #tpu.memory_space<vmem>>, vector<1x8x134xf32>
    %1987 = vector.shape_cast %1986 : vector<1x8x134xf32> to vector<8x134xf32>
    %c183 = arith.constant 183 : index
    %1988 = memref.load %arg4[%c183] : memref<192xf32, #tpu.memory_space<smem>>
    %1989 = vector.broadcast %1988 : f32 to vector<8x134xf32>
    %1990 = arith.mulf %1987, %1989 : vector<8x134xf32>
    %1991 = arith.addf %1985, %1990 : vector<8x134xf32>
    %c4_1066 = arith.constant 4 : index
    %c0_1067 = arith.constant 0 : index
    %c0_1068 = arith.constant 0 : index
    %1992 = vector.load %arg11[%c4_1066, %c0_1067, %c0_1068] : memref<12x8x134xf32, #tpu.memory_space<vmem>>, vector<1x8x134xf32>
    %1993 = vector.shape_cast %1992 : vector<1x8x134xf32> to vector<8x134xf32>
    %c184 = arith.constant 184 : index
    %1994 = memref.load %arg4[%c184] : memref<192xf32, #tpu.memory_space<smem>>
    %1995 = vector.broadcast %1994 : f32 to vector<8x134xf32>
    %1996 = arith.mulf %1993, %1995 : vector<8x134xf32>
    %1997 = arith.addf %1991, %1996 : vector<8x134xf32>
    %c5_1069 = arith.constant 5 : index
    %c0_1070 = arith.constant 0 : index
    %c0_1071 = arith.constant 0 : index
    %1998 = vector.load %arg11[%c5_1069, %c0_1070, %c0_1071] : memref<12x8x134xf32, #tpu.memory_space<vmem>>, vector<1x8x134xf32>
    %1999 = vector.shape_cast %1998 : vector<1x8x134xf32> to vector<8x134xf32>
    %c185 = arith.constant 185 : index
    %2000 = memref.load %arg4[%c185] : memref<192xf32, #tpu.memory_space<smem>>
    %2001 = vector.broadcast %2000 : f32 to vector<8x134xf32>
    %2002 = arith.mulf %1999, %2001 : vector<8x134xf32>
    %2003 = arith.addf %1997, %2002 : vector<8x134xf32>
    %c6_1072 = arith.constant 6 : index
    %c0_1073 = arith.constant 0 : index
    %c0_1074 = arith.constant 0 : index
    %2004 = vector.load %arg11[%c6_1072, %c0_1073, %c0_1074] : memref<12x8x134xf32, #tpu.memory_space<vmem>>, vector<1x8x134xf32>
    %2005 = vector.shape_cast %2004 : vector<1x8x134xf32> to vector<8x134xf32>
    %c186 = arith.constant 186 : index
    %2006 = memref.load %arg4[%c186] : memref<192xf32, #tpu.memory_space<smem>>
    %2007 = vector.broadcast %2006 : f32 to vector<8x134xf32>
    %2008 = arith.mulf %2005, %2007 : vector<8x134xf32>
    %2009 = arith.addf %2003, %2008 : vector<8x134xf32>
    %c7_1075 = arith.constant 7 : index
    %c0_1076 = arith.constant 0 : index
    %c0_1077 = arith.constant 0 : index
    %2010 = vector.load %arg11[%c7_1075, %c0_1076, %c0_1077] : memref<12x8x134xf32, #tpu.memory_space<vmem>>, vector<1x8x134xf32>
    %2011 = vector.shape_cast %2010 : vector<1x8x134xf32> to vector<8x134xf32>
    %c187 = arith.constant 187 : index
    %2012 = memref.load %arg4[%c187] : memref<192xf32, #tpu.memory_space<smem>>
    %2013 = vector.broadcast %2012 : f32 to vector<8x134xf32>
    %2014 = arith.mulf %2011, %2013 : vector<8x134xf32>
    %2015 = arith.addf %2009, %2014 : vector<8x134xf32>
    %c8_1078 = arith.constant 8 : index
    %c0_1079 = arith.constant 0 : index
    %c0_1080 = arith.constant 0 : index
    %2016 = vector.load %arg11[%c8_1078, %c0_1079, %c0_1080] : memref<12x8x134xf32, #tpu.memory_space<vmem>>, vector<1x8x134xf32>
    %2017 = vector.shape_cast %2016 : vector<1x8x134xf32> to vector<8x134xf32>
    %c188 = arith.constant 188 : index
    %2018 = memref.load %arg4[%c188] : memref<192xf32, #tpu.memory_space<smem>>
    %2019 = vector.broadcast %2018 : f32 to vector<8x134xf32>
    %2020 = arith.mulf %2017, %2019 : vector<8x134xf32>
    %2021 = arith.addf %2015, %2020 : vector<8x134xf32>
    %c9_1081 = arith.constant 9 : index
    %c0_1082 = arith.constant 0 : index
    %c0_1083 = arith.constant 0 : index
    %2022 = vector.load %arg11[%c9_1081, %c0_1082, %c0_1083] : memref<12x8x134xf32, #tpu.memory_space<vmem>>, vector<1x8x134xf32>
    %2023 = vector.shape_cast %2022 : vector<1x8x134xf32> to vector<8x134xf32>
    %c189 = arith.constant 189 : index
    %2024 = memref.load %arg4[%c189] : memref<192xf32, #tpu.memory_space<smem>>
    %2025 = vector.broadcast %2024 : f32 to vector<8x134xf32>
    %2026 = arith.mulf %2023, %2025 : vector<8x134xf32>
    %2027 = arith.addf %2021, %2026 : vector<8x134xf32>
    %c10_1084 = arith.constant 10 : index
    %c0_1085 = arith.constant 0 : index
    %c0_1086 = arith.constant 0 : index
    %2028 = vector.load %arg11[%c10_1084, %c0_1085, %c0_1086] : memref<12x8x134xf32, #tpu.memory_space<vmem>>, vector<1x8x134xf32>
    %2029 = vector.shape_cast %2028 : vector<1x8x134xf32> to vector<8x134xf32>
    %c190 = arith.constant 190 : index
    %2030 = memref.load %arg4[%c190] : memref<192xf32, #tpu.memory_space<smem>>
    %2031 = vector.broadcast %2030 : f32 to vector<8x134xf32>
    %2032 = arith.mulf %2029, %2031 : vector<8x134xf32>
    %2033 = arith.addf %2027, %2032 : vector<8x134xf32>
    %c11_1087 = arith.constant 11 : index
    %c0_1088 = arith.constant 0 : index
    %c0_1089 = arith.constant 0 : index
    %2034 = vector.load %arg11[%c11_1087, %c0_1088, %c0_1089] : memref<12x8x134xf32, #tpu.memory_space<vmem>>, vector<1x8x134xf32>
    %2035 = vector.shape_cast %2034 : vector<1x8x134xf32> to vector<8x134xf32>
    %c191 = arith.constant 191 : index
    %2036 = memref.load %arg4[%c191] : memref<192xf32, #tpu.memory_space<smem>>
    %2037 = vector.broadcast %2036 : f32 to vector<8x134xf32>
    %2038 = arith.mulf %2035, %2037 : vector<8x134xf32>
    %2039 = arith.addf %2033, %2038 : vector<8x134xf32>
    %c15_1090 = arith.constant 15 : index
    %2040 = memref.load %arg5[%c15_1090] : memref<16xf32, #tpu.memory_space<smem>>
    %2041 = vector.broadcast %2040 : f32 to vector<8x134xf32>
    %2042 = arith.addf %2039, %2041 : vector<8x134xf32>
    %cst_1091 = arith.constant 0.000000e+00 : f32
    %2043 = vector.broadcast %cst_1091 : f32 to vector<8x134xf32>
    %2044 = arith.maximumf %2042, %2043 : vector<8x134xf32>
    %2045 = arith.truncf %2044 : vector<8x134xf32> to vector<8x134xbf16>
    %c15_1092 = arith.constant 15 : index
    %c0_1093 = arith.constant 0 : index
    %c0_1094 = arith.constant 0 : index
    %2046 = vector.load %arg6[%c15_1092, %c0_1093, %c0_1094] : memref<16x134x200xbf16, #tpu.memory_space<vmem>>, vector<1x134x200xbf16>
    %2047 = vector.shape_cast %2046 : vector<1x134x200xbf16> to vector<134x200xbf16>
    %cst_1095 = arith.constant dense<0.000000e+00> : vector<8x200xf32>
    %2048 = tpu.matmul %2045, %2047, %cst_1095 {dimension_numbers = #tpu.dot_dimension_numbers<[1], [0], [0], [1], [0, 0, 1, 1], [], []>} : vector<8x134xbf16>, vector<134x200xbf16>, vector<8x200xf32> -> vector<8x200xf32>
    %2049 = arith.addf %1968, %2048 : vector<8x200xf32>
    %c0_1096 = arith.constant 0 : index
    %c0_1097 = arith.constant 0 : index
    %2050 = vector.load %arg7[%c0_1096, %c0_1097] : memref<1x200xf32, #tpu.memory_space<vmem>>, vector<1x200xf32>
    %2051 = vector.broadcast %2050 : vector<1x200xf32> to vector<8x200xf32>
    %2052 = arith.addf %2049, %2051 : vector<8x200xf32>
    %cst_1098 = arith.constant 0.000000e+00 : f32
    %2053 = vector.broadcast %cst_1098 : f32 to vector<8x200xf32>
    %2054 = arith.maximumf %2052, %2053 : vector<8x200xf32>
    %c0_1099 = arith.constant 0 : index
    %c0_1100 = arith.constant 0 : index
    %2055 = vector.load %arg8[%c0_1099, %c0_1100] : memref<1x200xf32, #tpu.memory_space<vmem>>, vector<1x200xf32>
    %2056 = vector.broadcast %2055 : vector<1x200xf32> to vector<8x200xf32>
    %2057 = arith.mulf %2054, %2056 : vector<8x200xf32>
    %cst_1101 = arith.constant dense<0.000000e+00> : vector<8xf32>
    %2058 = vector.multi_reduction <add>, %2057, %cst_1101 [1] : vector<8x200xf32> to vector<8xf32>
    %2059 = vector.shape_cast %2058 : vector<8xf32> to vector<8x1xf32>
    %c0_1102 = arith.constant 0 : index
    %2060 = memref.load %arg9[%c0_1102] : memref<1xf32, #tpu.memory_space<smem>>
    %2061 = vector.broadcast %2060 : f32 to vector<8x1xf32>
    %2062 = arith.addf %2059, %2061 : vector<8x1xf32>
    %2063 = math.tanh %2062 : vector<8x1xf32>
    %c0_1103 = arith.constant 0 : index
    %c0_1104 = arith.constant 0 : index
    %2064 = vector.load %arg10[%c0_1103, %c0_1104] : memref<8x1xf32, #tpu.memory_space<vmem>>, vector<8x1xf32>
    tpu.vector_store %arg10[%c0_1103, %c0_1104], %2063 {strides = array<i32>} : memref<8x1xf32, #tpu.memory_space<vmem>>, vector<8x1xf32>,
    return
  }
  func.func @transform_0(%arg0: i32) -> (i32, i32, i32) {
    %c0_i32 = arith.constant 0 : i32
    %c0_i32_0 = arith.constant 0 : i32
    %c0_i32_1 = arith.constant 0 : i32
    return %c0_i32, %arg0, %c0_i32_0 : i32, i32, i32
  }
  func.func @transform_1(%arg0: i32) -> i32 {
    %c0_i32 = arith.constant 0 : i32
    %c0_i32_0 = arith.constant 0 : i32
    return %c0_i32 : i32
  }
  func.func @transform_2(%arg0: i32) -> i32 {
    %c0_i32 = arith.constant 0 : i32
    %c0_i32_0 = arith.constant 0 : i32
    return %c0_i32 : i32
  }
  func.func @transform_3(%arg0: i32) -> i32 {
    %c0_i32 = arith.constant 0 : i32
    %c0_i32_0 = arith.constant 0 : i32
    return %c0_i32 : i32
  }
  func.func @transform_4(%arg0: i32) -> i32 {
    %c0_i32 = arith.constant 0 : i32
    %c0_i32_0 = arith.constant 0 : i32
    return %c0_i32 : i32
  }
  func.func @transform_5(%arg0: i32) -> (i32, i32, i32) {
    %c0_i32 = arith.constant 0 : i32
    %c0_i32_0 = arith.constant 0 : i32
    %c0_i32_1 = arith.constant 0 : i32
    %c0_i32_2 = arith.constant 0 : i32
    return %c0_i32, %c0_i32_0, %c0_i32_1 : i32, i32, i32
  }
  func.func @transform_6(%arg0: i32) -> (i32, i32) {
    %c0_i32 = arith.constant 0 : i32
    %c0_i32_0 = arith.constant 0 : i32
    %c0_i32_1 = arith.constant 0 : i32
    return %c0_i32, %c0_i32_0 : i32, i32
  }
  func.func @transform_7(%arg0: i32) -> (i32, i32) {
    %c0_i32 = arith.constant 0 : i32
    %c0_i32_0 = arith.constant 0 : i32
    %c0_i32_1 = arith.constant 0 : i32
    return %c0_i32, %c0_i32_0 : i32, i32
  }
  func.func @transform_8(%arg0: i32) -> i32 {
    %c0_i32 = arith.constant 0 : i32
    %c0_i32_0 = arith.constant 0 : i32
    return %c0_i32 : i32
  }
  func.func @transform_9(%arg0: i32) -> (i32, i32) {
    %c0_i32 = arith.constant 0 : i32
    %c0_i32_0 = arith.constant 0 : i32
    return %arg0, %c0_i32 : i32, i32
  }
}

</mosaic_0001>

<llo_original>
// kernel: _lambda_.1
$region0: #{_lambda_.1}
  #allocation0 [shape = 'u32[]', space=smem, size = 0x4, offset = 0x4, fixed_abs, tag = 'smem constant byte address 0x4 - core index']
  #allocation1 [shape = 'u32[144,128]{1,0:T(1,128)}', space=vmem, size = 0x12000, scoped, tag = 'internal scratch']
  #allocation2 [shape = 'f32[12,8,134]{2,1,0:T(8,128)}', space=vmem, size = 0x18000, scoped, tag = 'scratch operand']
  #allocation3 [shape = 'f32[1]{0:T(128)S(6)}', space=smem, size = 0x200, scoped, tag = 'scoped memory for _lambda_.1']
  %s0 = inlined_call_operand.vmem [shape: f32[45,16,134], index: 0, kind: input, shape index: {}]
  %s1 = inlined_call_operand.vmem [shape: f32[12], index: 1, kind: input, shape index: {}]
  %s2 = inlined_call_operand.vmem [shape: f32[4], index: 2, kind: input, shape index: {}]
  %s3 = inlined_call_operand.vmem [shape: f32[192], index: 3, kind: input, shape index: {}]
  %s4 = inlined_call_operand.vmem [shape: f32[16], index: 4, kind: input, shape index: {}]
  %s5 = inlined_call_operand.vmem [shape: bf16[16,134,200], index: 5, kind: input, shape index: {}]
  %s6 = inlined_call_operand.vmem [shape: f32[1,200], index: 6, kind: input, shape index: {}]
  %s7 = inlined_call_operand.vmem [shape: f32[1,200], index: 7, kind: input, shape index: {}]
  %s8 = inlined_call_operand.<no memory space> [shape: f32[1], index: 8, kind: input, shape index: {}]
  %s9 = inlined_call_operand.vmem [shape: f32[16,1], index: 9, kind: output, shape index: {}]
  %s10 = sld [smem:[#allocation0]]
  $region108: #{_lambda_.1} parent=0
    _
  %s12 = ssub.s32 1, %s10
  %s13 = scalar_select 0, %s12, %s10
  %14 = sst [smem:[#allocation3]] %s8
  $region1: #{_lambda_.1} parent=0
    #allocation4 [shape = 'u8[737280]{0}', space=vmem, size = 0xb4000, scoped, tag = 'input window, operand 0']
    #allocation5 [shape = 'u8[512]{0}', space=smem, size = 0x200, scoped, tag = 'input window, operand 1, single buffered']
    #allocation6 [shape = 's32[2]{0}', space=sflag, size = 0x8, scoped, tag = 'scoped memory for _lambda_.1']
    #allocation7 [shape = 'u8[512]{0}', space=smem, size = 0x200, scoped, tag = 'input window, operand 2, single buffered']
    #allocation8 [shape = 's32[1]{0}', space=sflag, size = 0x4, scoped, tag = 'scoped memory for _lambda_.1']
    #allocation9 [shape = 'u8[1024]{0}', space=smem, size = 0x400, scoped, tag = 'input window, operand 3, single buffered']
    #allocation10 [shape = 'u8[512]{0}', space=smem, size = 0x200, scoped, tag = 'input window, operand 4, single buffered']
    #allocation11 [shape = 's32[1]{0}', space=sflag, size = 0x4, scoped, tag = 'scoped memory for _lambda_.1']
    %15 = vsyncpa [#allocation6], 0
    %16 = vsyncpa [#allocation8], 0
    %17 = vsyncpa [#allocation11], 0
    loop: start=0, step=1, limit=4
    $region2: #{_lambda_.1} parent=1 // loop_pre_header
      _
    $region3: #{_lambda_.1} parent=1 // loop_header
      %s19 = sphi 0, %s23
      %p20 = scmp.ge.s32.totalorder %s19, 4
      %s29 = sphi 0, %s31
      %s32 = sphi 0, %s29
      %s33 = sphi 0, %s32
      %s49 = sphi 0, %s33
      %s53 = sphi 0, %s53
      %s55 = sphi 0, %s53
      %s56 = sphi 0, %s55
      %s70 = sphi 0, %s56
      %s74 = sphi 0, %s74
      %s76 = sphi 0, %s74
      %s77 = sphi 0, %s76
      %s91 = sphi 0, %s77
      %s95 = sphi 0, %s95
      %s97 = sphi 0, %s95
      %s98 = sphi 0, %s97
      %s112 = sphi 0, %s98
      %s116 = sphi 0, %s116
      %s118 = sphi 0, %s116
      %s119 = sphi 0, %s118
      %s133 = sphi 0, %s119
      %s137 = sphi 0, %s137
      %s139 = sphi 0, %s137
      %s140 = sphi 0, %s139
      %s154 = sphi 0, %s140
      %s158 = sphi 0, %s158
      %s160 = sphi 0, %s158
      %s161 = sphi 0, %s160
      %s175 = sphi 0, %s161
      %s179 = sphi 0, %s179
      %s181 = sphi 0, %s179
      %s182 = sphi 0, %s181
      %s196 = sphi 0, %s182
      %s200 = sphi 0, %s200
      %s202 = sphi 0, %s200
      %s203 = sphi 0, %s202
      %s217 = sphi 0, %s203
      %s223 = sphi 0, %s225
      %s226 = sphi 0, %s223
      %s227 = sphi 0, %s226
      %s243 = sphi 0, %s227
    $region4: #{_lambda_.1} parent=1 // loop_header_branch
      %22 = sbr.rel (%p20) target = $region8
    $region5: #{_lambda_.1} parent=1 // loop_body
      %s24 = ssub.s32 %s19, 1
      %s25 = ssub.s32 %s19, 2
      %s26 = sadd.s32 %s19, 1
      %s27 = ssub.s32 %s19, %s26
      %p28 = scmp.eq.s32.totalorder %s27, 0
      %s30 = sadd.s32 %s29, 1
      %s31 = scalar_select %p28, %s29, %s30
      %p34 = pneg %p28
      %p35 = scmp.eq.s32.totalorder %s19, 1
      %p36 = por %p34, %p35
      %p37 = scmp.ne.s32.totalorder %s29, %s32
      %p38 = scmp.eq.s32.totalorder %s19, 0
      %p39 = por %p37, %p38
      %p40 = scmp.ne.s32.totalorder %s29, %s32
      %p41 = scmp.eq.s32.totalorder %s24, 1
      %p42 = por %p40, %p41
      %p43 = scmp.ne.s32.totalorder %s32, %s33
      %p44 = scmp.eq.s32.totalorder %s24, 0
      %p45 = por %p43, %p44
      %p46 = scmp.ne.s32.totalorder %s32, %s33
      %p47 = scmp.eq.s32.totalorder %s25, 1
      %p48 = por %p46, %p47
      %p50 = scmp.ne.s32.totalorder %s33, %s49
      %p51 = scmp.eq.s32.totalorder %s25, 0
      %p52 = por %p50, %p51
      %s54 = sadd.s32 %s53, 1
      %p57 = scmp.eq.s32.totalorder %s19, 1
      %p58 = scmp.ne.s32.totalorder %s53, %s55
      %p59 = scmp.eq.s32.totalorder %s19, 0
      %p60 = por %p58, %p59
      %p61 = scmp.ne.s32.totalorder %s53, %s55
      %p62 = scmp.eq.s32.totalorder %s24, 1
      %p63 = por %p61, %p62
      %p64 = scmp.ne.s32.totalorder %s55, %s56
      %p65 = scmp.eq.s32.totalorder %s24, 0
      %p66 = por %p64, %p65
      %p67 = scmp.ne.s32.totalorder %s55, %s56
      %p68 = scmp.eq.s32.totalorder %s25, 1
      %p69 = por %p67, %p68
      %p71 = scmp.ne.s32.totalorder %s56, %s70
      %p72 = scmp.eq.s32.totalorder %s25, 0
      %p73 = por %p71, %p72
      %s75 = sadd.s32 %s74, 1
      %p78 = scmp.eq.s32.totalorder %s19, 1
      %p79 = scmp.ne.s32.totalorder %s74, %s76
      %p80 = scmp.eq.s32.totalorder %s19, 0
      %p81 = por %p79, %p80
      %p82 = scmp.ne.s32.totalorder %s74, %s76
      %p83 = scmp.eq.s32.totalorder %s24, 1
      %p84 = por %p82, %p83
      %p85 = scmp.ne.s32.totalorder %s76, %s77
      %p86 = scmp.eq.s32.totalorder %s24, 0
      %p87 = por %p85, %p86
      %p88 = scmp.ne.s32.totalorder %s76, %s77
      %p89 = scmp.eq.s32.totalorder %s25, 1
      %p90 = por %p88, %p89
      %p92 = scmp.ne.s32.totalorder %s77, %s91
      %p93 = scmp.eq.s32.totalorder %s25, 0
      %p94 = por %p92, %p93
      %s96 = sadd.s32 %s95, 1
      %p99 = scmp.eq.s32.totalorder %s19, 1
      %p100 = scmp.ne.s32.totalorder %s95, %s97
      %p101 = scmp.eq.s32.totalorder %s19, 0
      %p102 = por %p100, %p101
      %p103 = scmp.ne.s32.totalorder %s95, %s97
      %p104 = scmp.eq.s32.totalorder %s24, 1
      %p105 = por %p103, %p104
      %p106 = scmp.ne.s32.totalorder %s97, %s98
      %p107 = scmp.eq.s32.totalorder %s24, 0
      %p108 = por %p106, %p107
      %p109 = scmp.ne.s32.totalorder %s97, %s98
      %p110 = scmp.eq.s32.totalorder %s25, 1
      %p111 = por %p109, %p110
      %p113 = scmp.ne.s32.totalorder %s98, %s112
      %p114 = scmp.eq.s32.totalorder %s25, 0
      %p115 = por %p113, %p114
      %s117 = sadd.s32 %s116, 1
      %p120 = scmp.eq.s32.totalorder %s19, 1
      %p121 = scmp.ne.s32.totalorder %s116, %s118
      %p122 = scmp.eq.s32.totalorder %s19, 0
      %p123 = por %p121, %p122
      %p124 = scmp.ne.s32.totalorder %s116, %s118
      %p125 = scmp.eq.s32.totalorder %s24, 1
      %p126 = por %p124, %p125
      %p127 = scmp.ne.s32.totalorder %s118, %s119
      %p128 = scmp.eq.s32.totalorder %s24, 0
      %p129 = por %p127, %p128
      %p130 = scmp.ne.s32.totalorder %s118, %s119
      %p131 = scmp.eq.s32.totalorder %s25, 1
      %p132 = por %p130, %p131
      %p134 = scmp.ne.s32.totalorder %s119, %s133
      %p135 = scmp.eq.s32.totalorder %s25, 0
      %p136 = por %p134, %p135
      %s138 = sadd.s32 %s137, 1
      %p141 = scmp.eq.s32.totalorder %s19, 1
      %p142 = scmp.ne.s32.totalorder %s137, %s139
      %p143 = scmp.eq.s32.totalorder %s19, 0
      %p144 = por %p142, %p143
      %p145 = scmp.ne.s32.totalorder %s137, %s139
      %p146 = scmp.eq.s32.totalorder %s24, 1
      %p147 = por %p145, %p146
      %p148 = scmp.ne.s32.totalorder %s139, %s140
      %p149 = scmp.eq.s32.totalorder %s24, 0
      %p150 = por %p148, %p149
      %p151 = scmp.ne.s32.totalorder %s139, %s140
      %p152 = scmp.eq.s32.totalorder %s25, 1
      %p153 = por %p151, %p152
      %p155 = scmp.ne.s32.totalorder %s140, %s154
      %p156 = scmp.eq.s32.totalorder %s25, 0
      %p157 = por %p155, %p156
      %s159 = sadd.s32 %s158, 1
      %p162 = scmp.eq.s32.totalorder %s19, 1
      %p163 = scmp.ne.s32.totalorder %s158, %s160
      %p164 = scmp.eq.s32.totalorder %s19, 0
      %p165 = por %p163, %p164
      %p166 = scmp.ne.s32.totalorder %s158, %s160
      %p167 = scmp.eq.s32.totalorder %s24, 1
      %p168 = por %p166, %p167
      %p169 = scmp.ne.s32.totalorder %s160, %s161
      %p170 = scmp.eq.s32.totalorder %s24, 0
      %p171 = por %p169, %p170
      %p172 = scmp.ne.s32.totalorder %s160, %s161
      %p173 = scmp.eq.s32.totalorder %s25, 1
      %p174 = por %p172, %p173
      %p176 = scmp.ne.s32.totalorder %s161, %s175
      %p177 = scmp.eq.s32.totalorder %s25, 0
      %p178 = por %p176, %p177
      %s180 = sadd.s32 %s179, 1
      %p183 = scmp.eq.s32.totalorder %s19, 1
      %p184 = scmp.ne.s32.totalorder %s179, %s181
      %p185 = scmp.eq.s32.totalorder %s19, 0
      %p186 = por %p184, %p185
      %p187 = scmp.ne.s32.totalorder %s179, %s181
      %p188 = scmp.eq.s32.totalorder %s24, 1
      %p189 = por %p187, %p188
      %p190 = scmp.ne.s32.totalorder %s181, %s182
      %p191 = scmp.eq.s32.totalorder %s24, 0
      %p192 = por %p190, %p191
      %p193 = scmp.ne.s32.totalorder %s181, %s182
      %p194 = scmp.eq.s32.totalorder %s25, 1
      %p195 = por %p193, %p194
      %p197 = scmp.ne.s32.totalorder %s182, %s196
      %p198 = scmp.eq.s32.totalorder %s25, 0
      %p199 = por %p197, %p198
      %s201 = sadd.s32 %s200, 1
      %p204 = scmp.eq.s32.totalorder %s19, 1
      %p205 = scmp.ne.s32.totalorder %s200, %s202
      %p206 = scmp.eq.s32.totalorder %s19, 0
      %p207 = por %p205, %p206
      %p208 = scmp.ne.s32.totalorder %s200, %s202
      %p209 = scmp.eq.s32.totalorder %s24, 1
      %p210 = por %p208, %p209
      %p211 = scmp.ne.s32.totalorder %s202, %s203
      %p212 = scmp.eq.s32.totalorder %s24, 0
      %p213 = por %p211, %p212
      %p214 = scmp.ne.s32.totalorder %s202, %s203
      %p215 = scmp.eq.s32.totalorder %s25, 1
      %p216 = por %p214, %p215
      %p218 = scmp.ne.s32.totalorder %s203, %s217
      %p219 = scmp.eq.s32.totalorder %s25, 0
      %p220 = por %p218, %p219
      %s221 = ssub.s32 %s19, %s26
      %p222 = scmp.eq.s32.totalorder %s221, 0
      %s224 = sadd.s32 %s223, 1
      %s225 = scalar_select %p222, %s223, %s224
      %p228 = pneg %p222
      %p229 = scmp.eq.s32.totalorder %s19, 1
      %p230 = por %p228, %p229
      %p231 = scmp.ne.s32.totalorder %s223, %s226
      %p232 = scmp.eq.s32.totalorder %s19, 0
      %p233 = por %p231, %p232
      %p234 = scmp.ne.s32.totalorder %s223, %s226
      %p235 = scmp.eq.s32.totalorder %s24, 1
      %p236 = por %p234, %p235
      %p237 = scmp.ne.s32.totalorder %s226, %s227
      %p238 = scmp.eq.s32.totalorder %s24, 0
      %p239 = por %p237, %p238
      %p240 = scmp.ne.s32.totalorder %s226, %s227
      %p241 = scmp.eq.s32.totalorder %s25, 1
      %p242 = por %p240, %p241
      %p244 = scmp.ne.s32.totalorder %s227, %s243
      %p245 = scmp.eq.s32.totalorder %s25, 0
      %p246 = por %p244, %p245
      %p247 = scmp.le.s32.totalorder 1, %s19
      %p248 = scmp.lt.s32.totalorder %s19, 3
      %p249 = pnand %p247, %p248
      %p250 = pneg %p249
      // Predicated region
      $region9: #{_lambda_.1} parent=5 // pred_check
        _
      $region10: #{_lambda_.1} parent=5 // pred_check_branch
        %252 = sbr.rel (%p249) target = $region12
      $region11: #{_lambda_.1} parent=5 // pred_region
        %s253 = ssub.s32 %s19, 1
        // Predicated region
        $region13: #{_lambda_.1} parent=11 // pred_check
          %p254 = pneg %p66
        $region14: #{_lambda_.1} parent=11 // pred_check_branch
          %256 = sbr.rel (%p254) target = $region16
        $region15: #{_lambda_.1} parent=11 // pred_region
          %s258 = ssub.s32 16, 16
          %259 = vsyncadd [#allocation6], %s258
          %s261 = sshll.u32 %s1, 4
          %s262 = int_to_ptr.vmem [resolvable:$true] %s261
          %264 = dma.vmem_to_smem %s262, 16, [#allocation5], [#allocation6]
        $region16: #{_lambda_.1} parent=11 // pred_fallthru
          _
        // Predicated region
        $region17: #{_lambda_.1} parent=11 // pred_check
          %p265 = pneg %p87
        $region18: #{_lambda_.1} parent=11 // pred_check_branch
          %267 = sbr.rel (%p265) target = $region20
        $region19: #{_lambda_.1} parent=11 // pred_region
          %s269 = ssub.s32 16, 16
          %270 = vsyncadd [#allocation8], %s269
          %s272 = sshll.u32 %s2, 4
          %s273 = int_to_ptr.vmem [resolvable:$true] %s272
          %275 = dma.vmem_to_smem %s273, 16, [#allocation7], [#allocation8]
        $region20: #{_lambda_.1} parent=11 // pred_fallthru
          _
        // Predicated region
        $region21: #{_lambda_.1} parent=11 // pred_check
          %p276 = pneg %p108
        $region22: #{_lambda_.1} parent=11 // pred_check_branch
          %278 = sbr.rel (%p276) target = $region24
        $region23: #{_lambda_.1} parent=11 // pred_region
          %s280 = ssub.s32 32, 32
          %281 = vsyncadd [#allocation8], %s280
          %s283 = sshll.u32 %s3, 4
          %s284 = int_to_ptr.vmem [resolvable:$true] %s283
          %286 = dma.vmem_to_smem %s284, 32, [#allocation9], [#allocation8]
        $region24: #{_lambda_.1} parent=11 // pred_fallthru
          _
        // Predicated region
        $region25: #{_lambda_.1} parent=11 // pred_check
          %p287 = pneg %p129
        $region26: #{_lambda_.1} parent=11 // pred_check_branch
          %289 = sbr.rel (%p287) target = $region28
        $region27: #{_lambda_.1} parent=11 // pred_region
          %s291 = ssub.s32 16, 16
          %292 = vsyncadd [#allocation11], %s291
          %s294 = sshll.u32 %s4, 4
          %s295 = int_to_ptr.vmem [resolvable:$true] %s294
          %297 = dma.vmem_to_smem %s295, 16, [#allocation10], [#allocation11]
        $region28: #{_lambda_.1} parent=11 // pred_fallthru
          _
        // Predicated region
        $region29: #{_lambda_.1} parent=11 // pred_check
          %p298 = pneg %p150
        $region30: #{_lambda_.1} parent=11 // pred_check_branch
          %300 = sbr.rel (%p298) target = $region32
        $region31: #{_lambda_.1} parent=11 // pred_region
          _
        $region32: #{_lambda_.1} parent=11 // pred_fallthru
          _
        // Predicated region
        $region33: #{_lambda_.1} parent=11 // pred_check
          %p301 = pneg %p171
        $region34: #{_lambda_.1} parent=11 // pred_check_branch
          %303 = sbr.rel (%p301) target = $region36
        $region35: #{_lambda_.1} parent=11 // pred_region
          _
        $region36: #{_lambda_.1} parent=11 // pred_fallthru
          _
        // Predicated region
        $region37: #{_lambda_.1} parent=11 // pred_check
          %p304 = pneg %p192
        $region38: #{_lambda_.1} parent=11 // pred_check_branch
          %306 = sbr.rel (%p304) target = $region40
        $region39: #{_lambda_.1} parent=11 // pred_region
          _
        $region40: #{_lambda_.1} parent=11 // pred_fallthru
          _
        // Predicated region
        $region41: #{_lambda_.1} parent=11 // pred_check
          %p307 = pneg %p213
        $region42: #{_lambda_.1} parent=11 // pred_check_branch
          %309 = sbr.rel (%p307) target = $region44
        $region43: #{_lambda_.1} parent=11 // pred_region
          _
        $region44: #{_lambda_.1} parent=11 // pred_fallthru
          _
      $region12: #{_lambda_.1} parent=5 // pred_fallthru
        _
      %p310 = scmp.lt.s32.totalorder %s19, 2
      // Predicated region
      $region45: #{_lambda_.1} parent=5 // pred_check
        %p311 = pneg %p310
      $region46: #{_lambda_.1} parent=5 // pred_check_branch
        %313 = sbr.rel (%p311) target = $region48
      $region47: #{_lambda_.1} parent=5 // pred_region
        // Predicated region
        $region49: #{_lambda_.1} parent=47 // pred_check
          %p314 = pneg %p39
        $region50: #{_lambda_.1} parent=47 // pred_check_branch
          %316 = sbr.rel (%p314) target = $region52
        $region51: #{_lambda_.1} parent=47 // pred_region
          %s317 = sand.u32 %s29, 1
          %s318 = sand.u32 %s29, 1
          %s319 = smul.addr %s318, 720
          %s320 = scalar_lea.vmem [#allocation4], %s319
          %s321 = smul.addr %s19, 2
          %s322 = smul.addr %s321, 8
          %s323 = scalar_lea.vmem %s0, %s322
          // Predicated region
          $region53: #{_lambda_.1} parent=51 // pred_check
            _
          $region54: #{_lambda_.1} parent=51 // pred_check_branch
            %325 = sbr.rel (0) target = $region56
          $region55: #{_lambda_.1} parent=51 // pred_region
            // Predicated region
            $region57: #{_lambda_.1} parent=55 // pred_check
              _
            $region58: #{_lambda_.1} parent=55 // pred_check_branch
              %327 = sbr.rel (0) target = $region60
            $region59: #{_lambda_.1} parent=55 // pred_region
              loop: start=0, step=1, limit=1
              $region61: #{_lambda_.1} parent=59 // loop_pre_header
                _
              $region62: #{_lambda_.1} parent=59 // loop_header
                %s329 = sphi 0, %s333
                %p330 = scmp.ge.s32.totalorder %s329, 1
                %s334 = sphi %s323, %s323
                %s335 = sphi %s320, %s320
              $region63: #{_lambda_.1} parent=59 // loop_header_branch
                %332 = sbr.rel (%p330) target = $region67
              $region64: #{_lambda_.1} parent=59 // loop_body
                %v336 = vld [vmem:[%s334] sm:$0xff]
                %337 = vst [vmem:[%s335] sm:$0xff] %v336
                %v338 = vld [vmem:[%s334 + $0x8] sm:$0xff]
                %339 = vst [vmem:[%s335 + $0x8] sm:$0xff] %v338
                %v340 = vld [vmem:[%s334 + $0x20] sm:$0xff]
                %341 = vst [vmem:[%s335 + $0x10] sm:$0xff] %v340
                %v342 = vld [vmem:[%s334 + $0x28] sm:$0xff]
                %343 = vst [vmem:[%s335 + $0x18] sm:$0xff] %v342
                %v344 = vld [vmem:[%s334 + $0x40] sm:$0xff]
                %345 = vst [vmem:[%s335 + $0x20] sm:$0xff] %v344
                %v346 = vld [vmem:[%s334 + $0x48] sm:$0xff]
                %347 = vst [vmem:[%s335 + $0x28] sm:$0xff] %v346
                %v348 = vld [vmem:[%s334 + $0x60] sm:$0xff]
                %349 = vst [vmem:[%s335 + $0x30] sm:$0xff] %v348
                %v350 = vld [vmem:[%s334 + $0x68] sm:$0xff]
                %351 = vst [vmem:[%s335 + $0x38] sm:$0xff] %v350
                %v352 = vld [vmem:[%s334 + $0x80] sm:$0xff]
                %353 = vst [vmem:[%s335 + $0x40] sm:$0xff] %v352
                %v354 = vld [vmem:[%s334 + $0x88] sm:$0xff]
                %355 = vst [vmem:[%s335 + $0x48] sm:$0xff] %v354
                %v356 = vld [vmem:[%s334 + $0xa0] sm:$0xff]
                %357 = vst [vmem:[%s335 + $0x50] sm:$0xff] %v356
                %v358 = vld [vmem:[%s334 + $0xa8] sm:$0xff]
                %359 = vst [vmem:[%s335 + $0x58] sm:$0xff] %v358
                %v360 = vld [vmem:[%s334 + $0xc0] sm:$0xff]
                %361 = vst [vmem:[%s335 + $0x60] sm:$0xff] %v360
                %v362 = vld [vmem:[%s334 + $0xc8] sm:$0xff]
                %363 = vst [vmem:[%s335 + $0x68] sm:$0xff] %v362
                %v364 = vld [vmem:[%s334 + $0xe0] sm:$0xff]
                %365 = vst [vmem:[%s335 + $0x70] sm:$0xff] %v364
                %v366 = vld [vmem:[%s334 + $0xe8] sm:$0xff]
                %367 = vst [vmem:[%s335 + $0x78] sm:$0xff] %v366
                %v368 = vld [vmem:[%s334 + $0x100] sm:$0xff]
                %369 = vst [vmem:[%s335 + $0x80] sm:$0xff] %v368
                %v370 = vld [vmem:[%s334 + $0x108] sm:$0xff]
                %371 = vst [vmem:[%s335 + $0x88] sm:$0xff] %v370
                %v372 = vld [vmem:[%s334 + $0x120] sm:$0xff]
                %373 = vst [vmem:[%s335 + $0x90] sm:$0xff] %v372
                %v374 = vld [vmem:[%s334 + $0x128] sm:$0xff]
                %375 = vst [vmem:[%s335 + $0x98] sm:$0xff] %v374
                %v376 = vld [vmem:[%s334 + $0x140] sm:$0xff]
                %377 = vst [vmem:[%s335 + $0xa0] sm:$0xff] %v376
                %v378 = vld [vmem:[%s334 + $0x148] sm:$0xff]
                %379 = vst [vmem:[%s335 + $0xa8] sm:$0xff] %v378
                %v380 = vld [vmem:[%s334 + $0x160] sm:$0xff]
                %381 = vst [vmem:[%s335 + $0xb0] sm:$0xff] %v380
                %v382 = vld [vmem:[%s334 + $0x168] sm:$0xff]
                %383 = vst [vmem:[%s335 + $0xb8] sm:$0xff] %v382
                %v384 = vld [vmem:[%s334 + $0x180] sm:$0xff]
                %385 = vst [vmem:[%s335 + $0xc0] sm:$0xff] %v384
                %v386 = vld [vmem:[%s334 + $0x188] sm:$0xff]
                %387 = vst [vmem:[%s335 + $0xc8] sm:$0xff] %v386
                %v388 = vld [vmem:[%s334 + $0x1a0] sm:$0xff]
                %389 = vst [vmem:[%s335 + $0xd0] sm:$0xff] %v388
                %v390 = vld [vmem:[%s334 + $0x1a8] sm:$0xff]
                %391 = vst [vmem:[%s335 + $0xd8] sm:$0xff] %v390
                %v392 = vld [vmem:[%s334 + $0x1c0] sm:$0xff]
                %393 = vst [vmem:[%s335 + $0xe0] sm:$0xff] %v392
                %v394 = vld [vmem:[%s334 + $0x1c8] sm:$0xff]
                %395 = vst [vmem:[%s335 + $0xe8] sm:$0xff] %v394
                %v396 = vld [vmem:[%s334 + $0x1e0] sm:$0xff]
                %397 = vst [vmem:[%s335 + $0xf0] sm:$0xff] %v396
                %v398 = vld [vmem:[%s334 + $0x1e8] sm:$0xff]
                %399 = vst [vmem:[%s335 + $0xf8] sm:$0xff] %v398
                %v400 = vld [vmem:[%s334 + $0x200] sm:$0xff]
                %401 = vst [vmem:[%s335 + $0x100] sm:$0xff] %v400
                %v402 = vld [vmem:[%s334 + $0x208] sm:$0xff]
                %403 = vst [vmem:[%s335 + $0x108] sm:$0xff] %v402
                %v404 = vld [vmem:[%s334 + $0x220] sm:$0xff]
                %405 = vst [vmem:[%s335 + $0x110] sm:$0xff] %v404
                %v406 = vld [vmem:[%s334 + $0x228] sm:$0xff]
                %407 = vst [vmem:[%s335 + $0x118] sm:$0xff] %v406
                %v408 = vld [vmem:[%s334 + $0x240] sm:$0xff]
                %409 = vst [vmem:[%s335 + $0x120] sm:$0xff] %v408
                %v410 = vld [vmem:[%s334 + $0x248] sm:$0xff]
                %411 = vst [vmem:[%s335 + $0x128] sm:$0xff] %v410
                %v412 = vld [vmem:[%s334 + $0x260] sm:$0xff]
                %413 = vst [vmem:[%s335 + $0x130] sm:$0xff] %v412
                %v414 = vld [vmem:[%s334 + $0x268] sm:$0xff]
                %415 = vst [vmem:[%s335 + $0x138] sm:$0xff] %v414
                %v416 = vld [vmem:[%s334 + $0x280] sm:$0xff]
                %417 = vst [vmem:[%s335 + $0x140] sm:$0xff] %v416
                %v418 = vld [vmem:[%s334 + $0x288] sm:$0xff]
                %419 = vst [vmem:[%s335 + $0x148] sm:$0xff] %v418
                %v420 = vld [vmem:[%s334 + $0x2a0] sm:$0xff]
                %421 = vst [vmem:[%s335 + $0x150] sm:$0xff] %v420
                %v422 = vld [vmem:[%s334 + $0x2a8] sm:$0xff]
                %423 = vst [vmem:[%s335 + $0x158] sm:$0xff] %v422
                %v424 = vld [vmem:[%s334 + $0x2c0] sm:$0xff]
                %425 = vst [vmem:[%s335 + $0x160] sm:$0xff] %v424
                %v426 = vld [vmem:[%s334 + $0x2c8] sm:$0xff]
                %427 = vst [vmem:[%s335 + $0x168] sm:$0xff] %v426
                %v428 = vld [vmem:[%s334 + $0x2e0] sm:$0xff]
                %429 = vst [vmem:[%s335 + $0x170] sm:$0xff] %v428
                %v430 = vld [vmem:[%s334 + $0x2e8] sm:$0xff]
                %431 = vst [vmem:[%s335 + $0x178] sm:$0xff] %v430
                %v432 = vld [vmem:[%s334 + $0x300] sm:$0xff]
                %433 = vst [vmem:[%s335 + $0x180] sm:$0xff] %v432
                %v434 = vld [vmem:[%s334 + $0x308] sm:$0xff]
                %435 = vst [vmem:[%s335 + $0x188] sm:$0xff] %v434
                %v436 = vld [vmem:[%s334 + $0x320] sm:$0xff]
                %437 = vst [vmem:[%s335 + $0x190] sm:$0xff] %v436
                %v438 = vld [vmem:[%s334 + $0x328] sm:$0xff]
                %439 = vst [vmem:[%s335 + $0x198] sm:$0xff] %v438
                %v440 = vld [vmem:[%s334 + $0x340] sm:$0xff]
                %441 = vst [vmem:[%s335 + $0x1a0] sm:$0xff] %v440
                %v442 = vld [vmem:[%s334 + $0x348] sm:$0xff]
                %443 = vst [vmem:[%s335 + $0x1a8] sm:$0xff] %v442
                %v444 = vld [vmem:[%s334 + $0x360] sm:$0xff]
                %445 = vst [vmem:[%s335 + $0x1b0] sm:$0xff] %v444
                %v446 = vld [vmem:[%s334 + $0x368] sm:$0xff]
                %447 = vst [vmem:[%s335 + $0x1b8] sm:$0xff] %v446
                %v448 = vld [vmem:[%s334 + $0x380] sm:$0xff]
                %449 = vst [vmem:[%s335 + $0x1c0] sm:$0xff] %v448
                %v450 = vld [vmem:[%s334 + $0x388] sm:$0xff]
                %451 = vst [vmem:[%s335 + $0x1c8] sm:$0xff] %v450
                %v452 = vld [vmem:[%s334 + $0x3a0] sm:$0xff]
                %453 = vst [vmem:[%s335 + $0x1d0] sm:$0xff] %v452
                %v454 = vld [vmem:[%s334 + $0x3a8] sm:$0xff]
                %455 = vst [vmem:[%s335 + $0x1d8] sm:$0xff] %v454
                %v456 = vld [vmem:[%s334 + $0x3c0] sm:$0xff]
                %457 = vst [vmem:[%s335 + $0x1e0] sm:$0xff] %v456
                %v458 = vld [vmem:[%s334 + $0x3c8] sm:$0xff]
                %459 = vst [vmem:[%s335 + $0x1e8] sm:$0xff] %v458
                %v460 = vld [vmem:[%s334 + $0x3e0] sm:$0xff]
                %461 = vst [vmem:[%s335 + $0x1f0] sm:$0xff] %v460
                %v462 = vld [vmem:[%s334 + $0x3e8] sm:$0xff]
                %463 = vst [vmem:[%s335 + $0x1f8] sm:$0xff] %v462
                %v464 = vld [vmem:[%s334 + $0x400] sm:$0xff]
                %465 = vst [vmem:[%s335 + $0x200] sm:$0xff] %v464
                %v466 = vld [vmem:[%s334 + $0x408] sm:$0xff]
                %467 = vst [vmem:[%s335 + $0x208] sm:$0xff] %v466
                %v468 = vld [vmem:[%s334 + $0x420] sm:$0xff]
                %469 = vst [vmem:[%s335 + $0x210] sm:$0xff] %v468
                %v470 = vld [vmem:[%s334 + $0x428] sm:$0xff]
                %471 = vst [vmem:[%s335 + $0x218] sm:$0xff] %v470
                %v472 = vld [vmem:[%s334 + $0x440] sm:$0xff]
                %473 = vst [vmem:[%s335 + $0x220] sm:$0xff] %v472
                %v474 = vld [vmem:[%s334 + $0x448] sm:$0xff]
                %475 = vst [vmem:[%s335 + $0x228] sm:$0xff] %v474
                %v476 = vld [vmem:[%s334 + $0x460] sm:$0xff]
                %477 = vst [vmem:[%s335 + $0x230] sm:$0xff] %v476
                %v478 = vld [vmem:[%s334 + $0x468] sm:$0xff]
                %479 = vst [vmem:[%s335 + $0x238] sm:$0xff] %v478
                %v480 = vld [vmem:[%s334 + $0x480] sm:$0xff]
                %481 = vst [vmem:[%s335 + $0x240] sm:$0xff] %v480
                %v482 = vld [vmem:[%s334 + $0x488] sm:$0xff]
                %483 = vst [vmem:[%s335 + $0x248] sm:$0xff] %v482
                %v484 = vld [vmem:[%s334 + $0x4a0] sm:$0xff]
                %485 = vst [vmem:[%s335 + $0x250] sm:$0xff] %v484
                %v486 = vld [vmem:[%s334 + $0x4a8] sm:$0xff]
                %487 = vst [vmem:[%s335 + $0x258] sm:$0xff] %v486
                %v488 = vld [vmem:[%s334 + $0x4c0] sm:$0xff]
                %489 = vst [vmem:[%s335 + $0x260] sm:$0xff] %v488
                %v490 = vld [vmem:[%s334 + $0x4c8] sm:$0xff]
                %491 = vst [vmem:[%s335 + $0x268] sm:$0xff] %v490
                %v492 = vld [vmem:[%s334 + $0x4e0] sm:$0xff]
                %493 = vst [vmem:[%s335 + $0x270] sm:$0xff] %v492
                %v494 = vld [vmem:[%s334 + $0x4e8] sm:$0xff]
                %495 = vst [vmem:[%s335 + $0x278] sm:$0xff] %v494
                %v496 = vld [vmem:[%s334 + $0x500] sm:$0xff]
                %497 = vst [vmem:[%s335 + $0x280] sm:$0xff] %v496
                %v498 = vld [vmem:[%s334 + $0x508] sm:$0xff]
                %499 = vst [vmem:[%s335 + $0x288] sm:$0xff] %v498
                %v500 = vld [vmem:[%s334 + $0x520] sm:$0xff]
                %501 = vst [vmem:[%s335 + $0x290] sm:$0xff] %v500
                %v502 = vld [vmem:[%s334 + $0x528] sm:$0xff]
                %503 = vst [vmem:[%s335 + $0x298] sm:$0xff] %v502
                %v504 = vld [vmem:[%s334 + $0x540] sm:$0xff]
                %505 = vst [vmem:[%s335 + $0x2a0] sm:$0xff] %v504
                %v506 = vld [vmem:[%s334 + $0x548] sm:$0xff]
                %507 = vst [vmem:[%s335 + $0x2a8] sm:$0xff] %v506
                %v508 = vld [vmem:[%s334 + $0x560] sm:$0xff]
                %509 = vst [vmem:[%s335 + $0x2b0] sm:$0xff] %v508
                %v510 = vld [vmem:[%s334 + $0x568] sm:$0xff]
                %511 = vst [vmem:[%s335 + $0x2b8] sm:$0xff] %v510
                %v512 = vld [vmem:[%s334 + $0x580] sm:$0xff]
                %513 = vst [vmem:[%s335 + $0x2c0] sm:$0xff] %v512
                %v514 = vld [vmem:[%s334 + $0x588] sm:$0xff]
                %515 = vst [vmem:[%s335 + $0x2c8] sm:$0xff] %v514
              $region65: #{_lambda_.1} parent=59 // loop_footer
                %s333 = sadd.s32 1, %s329
              $region66: #{_lambda_.1} parent=59 // loop_footer_branch
                %328 = sbr.rel target = $region62
              $region67: #{_lambda_.1} parent=59 // loop_exit
                _
            $region60: #{_lambda_.1} parent=55 // pred_fallthru
              _
            // Predicated region
            $region68: #{_lambda_.1} parent=55 // pred_check
              _
            $region69: #{_lambda_.1} parent=55 // pred_check_branch
              %517 = sbr.rel target = $region71
            $region70: #{_lambda_.1} parent=55 // pred_region
              _
            $region71: #{_lambda_.1} parent=55 // pred_fallthru
              _
          $region56: #{_lambda_.1} parent=51 // pred_fallthru
            _
          %518 = vnop
        $region52: #{_lambda_.1} parent=47 // pred_fallthru
          _
      $region48: #{_lambda_.1} parent=5 // pred_fallthru
        _
      %p519 = scmp.le.s32.totalorder 1, %s19
      %p520 = scmp.lt.s32.totalorder %s19, 3
      %p521 = pnand %p519, %p520
      %p522 = pneg %p521
      // Predicated region
      $region72: #{_lambda_.1} parent=5 // pred_check
        _
      $region73: #{_lambda_.1} parent=5 // pred_check_branch
        %524 = sbr.rel (%p521) target = $region75
      $region74: #{_lambda_.1} parent=5 // pred_region
        %s525 = ssub.s32 %s19, 1
        %s526 = sand.u32 %s32, 1
        %s527 = sand.u32 %s32, 1
        %s528 = smul.addr %s527, 720
        %s529 = scalar_lea.vmem [#allocation4], %s528
        // Predicated region
        $region76: #{_lambda_.1} parent=74 // pred_check
          %p530 = pneg %p45
        $region77: #{_lambda_.1} parent=74 // pred_check_branch
          %532 = sbr.rel (%p530) target = $region79
        $region78: #{_lambda_.1} parent=74 // pred_region
          _
        $region79: #{_lambda_.1} parent=74 // pred_fallthru
          _
        // Predicated region
        $region80: #{_lambda_.1} parent=74 // pred_check
          %p533 = pneg %p66
        $region81: #{_lambda_.1} parent=74 // pred_check_branch
          %535 = sbr.rel (%p533) target = $region83
        $region82: #{_lambda_.1} parent=74 // pred_region
          %536 = dma.done [#allocation6], 16
        $region83: #{_lambda_.1} parent=74 // pred_fallthru
          _
        // Predicated region
        $region84: #{_lambda_.1} parent=74 // pred_check
          %p537 = pneg %p87
        $region85: #{_lambda_.1} parent=74 // pred_check_branch
          %539 = sbr.rel (%p537) target = $region87
        $region86: #{_lambda_.1} parent=74 // pred_region
          %540 = dma.done [#allocation8], 16
        $region87: #{_lambda_.1} parent=74 // pred_fallthru
          _
        // Predicated region
        $region88: #{_lambda_.1} parent=74 // pred_check
          %p541 = pneg %p108
        $region89: #{_lambda_.1} parent=74 // pred_check_branch
          %543 = sbr.rel (%p541) target = $region91
        $region90: #{_lambda_.1} parent=74 // pred_region
          %544 = dma.done [#allocation8], 32
        $region91: #{_lambda_.1} parent=74 // pred_fallthru
          _
        // Predicated region
        $region92: #{_lambda_.1} parent=74 // pred_check
          %p545 = pneg %p129
        $region93: #{_lambda_.1} parent=74 // pred_check_branch
          %547 = sbr.rel (%p545) target = $region95
        $region94: #{_lambda_.1} parent=74 // pred_region
          %548 = dma.done [#allocation11], 16
        $region95: #{_lambda_.1} parent=74 // pred_fallthru
          _
        %549 = sfence
        %s550 = sand.u32 %s32, 1
        %s551 = sand.u32 %s32, 1
        %s552 = smul.addr %s551, 720
        %s553 = scalar_lea.vmem [#allocation4], %s552
        %p554 = pneg %p45
        %p555 = pneg %p42
        %p556 = pneg %p66
        %p557 = pneg %p63
        %p558 = pneg %p87
        %p559 = pneg %p84
        %p560 = pneg %p108
        %p561 = pneg %p105
        %p562 = pneg %p129
        %p563 = pneg %p126
        %p564 = pneg %p150
        %p565 = pneg %p147
        %p566 = pneg %p171
        %p567 = pneg %p168
        %p568 = pneg %p192
        %p569 = pneg %p189
        %p570 = pneg %p213
        %p571 = pneg %p210
        %p572 = pneg %p239
        %p573 = pneg %p236
        %p574 = scmp.lt.s32.totalorder %s24, 1
        %s575 = scalar_select %p574, %s24, 1
        %s576 = smul.addr %s575, 8
        %s577 = scalar_lea.vmem %s9, %s576
        %p578 = scmp.lt.s32.totalorder %s24, 1
        %s579 = scalar_select %p578, %s24, 1
        %s580 = smul.addr %s579, 8
        %s581 = scalar_lea.vmem %s9, %s580
        %v583 = vlaneseq
        %v584 = vand.u32 %v583, 127
        %v585 = vadd.s32 %v584, 128
        %vm586 = vcmp.eq.s32.totalorder %v584, 0
        %vm587 = vcmp.eq.s32.totalorder %v585, 0
        %vm588 = vcmp.eq.s32.totalorder %v584, 133
        %vm589 = vcmp.eq.s32.totalorder %v585, 133
        %s590 = sld [smem:[#allocation5]]
        %s591 = sld [smem:[#allocation5 + $0x1]]
        %s592 = sld [smem:[#allocation5 + $0x2]]
        %s593 = sld [smem:[#allocation5 + $0x3]]
        %s594 = sld [smem:[#allocation5 + $0x4]]
        %s595 = sld [smem:[#allocation5 + $0x5]]
        %s596 = sld [smem:[#allocation5 + $0x6]]
        %s597 = sld [smem:[#allocation5 + $0x7]]
        %s598 = sld [smem:[#allocation5 + $0x8]]
        %s599 = sld [smem:[#allocation5 + $0x9]]
        %s600 = sld [smem:[#allocation5 + $0xa]]
        %s601 = sld [smem:[#allocation5 + $0xb]]
        %s602 = sld [smem:[#allocation7]]
        %s603 = sld [smem:[#allocation7 + $0x1]]
        %s604 = sld [smem:[#allocation7 + $0x2]]
        %s605 = sld [smem:[#allocation7 + $0x3]]
        %v606 = vld [vmem:[%s529] sm:$0xff]
        %v607 = vld [vmem:[%s529 + $0x8] sm:$0xff]
        %v608 = vstv %s590
        %v609 = vmul.f32 %v606, %v608
        %v610 = vmul.f32 %v607, %v608
        %s611 = scalar_lea.vmem %s529, 16 [#allocation4]
        %v612 = vld [vmem:[%s611] sm:$0xff]
        %v613 = vld [vmem:[%s611 + $0x8] sm:$0xff]
        %v614 = vstv %s591
        %v615 = vmul.f32 %v612, %v614
        %v616 = vmul.f32 %v613, %v614
        %v617 = vadd.f32 %v609, %v615
        %v618 = vadd.f32 %v610, %v616
        %s619 = scalar_lea.vmem %s529, 32 [#allocation4]
        %v620 = vld [vmem:[%s619] sm:$0xff]
        %v621 = vld [vmem:[%s619 + $0x8] sm:$0xff]
        %v622 = vstv %s592
        %v623 = vmul.f32 %v620, %v622
        %v624 = vmul.f32 %v621, %v622
        %v625 = vadd.f32 %v617, %v623
        %v626 = vadd.f32 %v618, %v624
        %v627 = vstv %s602
        %v628 = vadd.f32 %v625, %v627
        %v629 = vadd.f32 %v626, %v627
        %v630 = vmax.f32 %v628, 0.0
        %v631 = vmax.f32 %v629, 0.0
        %s632 = scalar_lea.vmem %s529, 80 [#allocation4]
        %v633 = vld [vmem:[%s632] sm:$0xff]
        %v634 = vld [vmem:[%s632 + $0x8] sm:$0xff]
        %v635 = vmul.f32 %v633, %v608
        %v636 = vmul.f32 %v634, %v608
        %s637 = scalar_lea.vmem %s529, 96 [#allocation4]
        %v638 = vld [vmem:[%s637] sm:$0xff]
        %v639 = vld [vmem:[%s637 + $0x8] sm:$0xff]
        %v640 = vmul.f32 %v638, %v614
        %v641 = vmul.f32 %v639, %v614
        %v642 = vadd.f32 %v635, %v640
        %v643 = vadd.f32 %v636, %v641
        %s644 = scalar_lea.vmem %s529, 112 [#allocation4]
        %v645 = vld [vmem:[%s644] sm:$0xff]
        %v646 = vld [vmem:[%s644 + $0x8] sm:$0xff]
        %v647 = vmul.f32 %v645, %v622
        %v648 = vmul.f32 %v646, %v622
        %v649 = vadd.f32 %v642, %v647
        %v650 = vadd.f32 %v643, %v648
        %v651 = vadd.f32 %v649, %v627
        %v652 = vadd.f32 %v650, %v627
        %v653 = vmax.f32 %v651, 0.0
        %v654 = vmax.f32 %v652, 0.0
        %v655 = vmax.f32 %v630, %v653
        %v656 = vmax.f32 %v631, %v654
        %s657 = scalar_lea.vmem %s529, 160 [#allocation4]
        %v658 = vld [vmem:[%s657] sm:$0xff]
        %v659 = vld [vmem:[%s657 + $0x8] sm:$0xff]
        %v660 = vmul.f32 %v658, %v608
        %v661 = vmul.f32 %v659, %v608
        %s662 = scalar_lea.vmem %s529, 176 [#allocation4]
        %v663 = vld [vmem:[%s662] sm:$0xff]
        %v664 = vld [vmem:[%s662 + $0x8] sm:$0xff]
        %v665 = vmul.f32 %v663, %v614
        %v666 = vmul.f32 %v664, %v614
        %v667 = vadd.f32 %v660, %v665
        %v668 = vadd.f32 %v661, %v666
        %s669 = scalar_lea.vmem %s529, 192 [#allocation4]
        %v670 = vld [vmem:[%s669] sm:$0xff]
        %v671 = vld [vmem:[%s669 + $0x8] sm:$0xff]
        %v672 = vmul.f32 %v670, %v622
        %v673 = vmul.f32 %v671, %v622
        %v674 = vadd.f32 %v667, %v672
        %v675 = vadd.f32 %v668, %v673
        %v676 = vadd.f32 %v674, %v627
        %v677 = vadd.f32 %v675, %v627
        %v678 = vmax.f32 %v676, 0.0
        %v679 = vmax.f32 %v677, 0.0
        %v680 = vmax.f32 %v655, %v678
        %v681 = vmax.f32 %v656, %v679
        %v682 = vsel %vm586, 0.0, %v680
        %v683 = vsel %vm587, 0.0, %v681
        %684 = vst [vmem:[#allocation2] sm:$0xff] %v682
        %vm685 = vcmask 48128
        %686 = vst.msk [vmem:[#allocation2 + $0x8] sm:$0xff] %vm685, %v683
        %v687 = vld [vmem:[%s529] sm:$0xff]
        %v688 = vld [vmem:[%s529 + $0x8] sm:$0xff]
        %v689 = vstv %s593
        %v690 = vmul.f32 %v687, %v689
        %v691 = vmul.f32 %v688, %v689
        %v692 = vld [vmem:[%s611] sm:$0xff]
        %v693 = vld [vmem:[%s611 + $0x8] sm:$0xff]
        %v694 = vstv %s594
        %v695 = vmul.f32 %v692, %v694
        %v696 = vmul.f32 %v693, %v694
        %v697 = vadd.f32 %v690, %v695
        %v698 = vadd.f32 %v691, %v696
        %v699 = vld [vmem:[%s619] sm:$0xff]
        %v700 = vld [vmem:[%s619 + $0x8] sm:$0xff]
        %v701 = vstv %s595
        %v702 = vmul.f32 %v699, %v701
        %v703 = vmul.f32 %v700, %v701
        %v704 = vadd.f32 %v697, %v702
        %v705 = vadd.f32 %v698, %v703
        %v706 = vstv %s603
        %v707 = vadd.f32 %v704, %v706
        %v708 = vadd.f32 %v705, %v706
        %v709 = vmax.f32 %v707, 0.0
        %v710 = vmax.f32 %v708, 0.0
        %v711 = vld [vmem:[%s632] sm:$0xff]
        %v712 = vld [vmem:[%s632 + $0x8] sm:$0xff]
        %v713 = vmul.f32 %v711, %v689
        %v714 = vmul.f32 %v712, %v689
        %v715 = vld [vmem:[%s637] sm:$0xff]
        %v716 = vld [vmem:[%s637 + $0x8] sm:$0xff]
        %v717 = vmul.f32 %v715, %v694
        %v718 = vmul.f32 %v716, %v694
        %v719 = vadd.f32 %v713, %v717
        %v720 = vadd.f32 %v714, %v718
        %v721 = vld [vmem:[%s644] sm:$0xff]
        %v722 = vld [vmem:[%s644 + $0x8] sm:$0xff]
        %v723 = vmul.f32 %v721, %v701
        %v724 = vmul.f32 %v722, %v701
        %v725 = vadd.f32 %v719, %v723
        %v726 = vadd.f32 %v720, %v724
        %v727 = vadd.f32 %v725, %v706
        %v728 = vadd.f32 %v726, %v706
        %v729 = vmax.f32 %v727, 0.0
        %v730 = vmax.f32 %v728, 0.0
        %v731 = vmax.f32 %v709, %v729
        %v732 = vmax.f32 %v710, %v730
        %v733 = vld [vmem:[%s657] sm:$0xff]
        %v734 = vld [vmem:[%s657 + $0x8] sm:$0xff]
        %v735 = vmul.f32 %v733, %v689
        %v736 = vmul.f32 %v734, %v689
        %v737 = vld [vmem:[%s662] sm:$0xff]
        %v738 = vld [vmem:[%s662 + $0x8] sm:$0xff]
        %v739 = vmul.f32 %v737, %v694
        %v740 = vmul.f32 %v738, %v694
        %v741 = vadd.f32 %v735, %v739
        %v742 = vadd.f32 %v736, %v740
        %v743 = vld [vmem:[%s669] sm:$0xff]
        %v744 = vld [vmem:[%s669 + $0x8] sm:$0xff]
        %v745 = vmul.f32 %v743, %v701
        %v746 = vmul.f32 %v744, %v701
        %v747 = vadd.f32 %v741, %v745
        %v748 = vadd.f32 %v742, %v746
        %v749 = vadd.f32 %v747, %v706
        %v750 = vadd.f32 %v748, %v706
        %v751 = vmax.f32 %v749, 0.0
        %v752 = vmax.f32 %v750, 0.0
        %v753 = vmax.f32 %v731, %v751
        %v754 = vmax.f32 %v732, %v752
        %v755 = vsel %vm586, 0.0, %v753
        %v756 = vsel %vm587, 0.0, %v754
        %s757 = scalar_lea.vmem [#allocation2], 16
        %758 = vst [vmem:[%s757] sm:$0xff] %v755
        %759 = vst.msk [vmem:[%s757 + $0x8] sm:$0xff] %vm685, %v756
        %v760 = vld [vmem:[%s529] sm:$0xff]
        %v761 = vld [vmem:[%s529 + $0x8] sm:$0xff]
        %v762 = vstv %s596
        %v763 = vmul.f32 %v760, %v762
        %v764 = vmul.f32 %v761, %v762
        %v765 = vld [vmem:[%s611] sm:$0xff]
        %v766 = vld [vmem:[%s611 + $0x8] sm:$0xff]
        %v767 = vstv %s597
        %v768 = vmul.f32 %v765, %v767
        %v769 = vmul.f32 %v766, %v767
        %v770 = vadd.f32 %v763, %v768
        %v771 = vadd.f32 %v764, %v769
        %v772 = vld [vmem:[%s619] sm:$0xff]
        %v773 = vld [vmem:[%s619 + $0x8] sm:$0xff]
        %v774 = vstv %s598
        %v775 = vmul.f32 %v772, %v774
        %v776 = vmul.f32 %v773, %v774
        %v777 = vadd.f32 %v770, %v775
        %v778 = vadd.f32 %v771, %v776
        %v779 = vstv %s604
        %v780 = vadd.f32 %v777, %v779
        %v781 = vadd.f32 %v778, %v779
        %v782 = vmax.f32 %v780, 0.0
        %v783 = vmax.f32 %v781, 0.0
        %v784 = vld [vmem:[%s632] sm:$0xff]
        %v785 = vld [vmem:[%s632 + $0x8] sm:$0xff]
        %v786 = vmul.f32 %v784, %v762
        %v787 = vmul.f32 %v785, %v762
        %v788 = vld [vmem:[%s637] sm:$0xff]
        %v789 = vld [vmem:[%s637 + $0x8] sm:$0xff]
        %v790 = vmul.f32 %v788, %v767
        %v791 = vmul.f32 %v789, %v767
        %v792 = vadd.f32 %v786, %v790
        %v793 = vadd.f32 %v787, %v791
        %v794 = vld [vmem:[%s644] sm:$0xff]
        %v795 = vld [vmem:[%s644 + $0x8] sm:$0xff]
        %v796 = vmul.f32 %v794, %v774
        %v797 = vmul.f32 %v795, %v774
        %v798 = vadd.f32 %v792, %v796
        %v799 = vadd.f32 %v793, %v797
        %v800 = vadd.f32 %v798, %v779
        %v801 = vadd.f32 %v799, %v779
        %v802 = vmax.f32 %v800, 0.0
        %v803 = vmax.f32 %v801, 0.0
        %v804 = vmax.f32 %v782, %v802
        %v805 = vmax.f32 %v783, %v803
        %v806 = vld [vmem:[%s657] sm:$0xff]
        %v807 = vld [vmem:[%s657 + $0x8] sm:$0xff]
        %v808 = vmul.f32 %v806, %v762
        %v809 = vmul.f32 %v807, %v762
        %v810 = vld [vmem:[%s662] sm:$0xff]
        %v811 = vld [vmem:[%s662 + $0x8] sm:$0xff]
        %v812 = vmul.f32 %v810, %v767
        %v813 = vmul.f32 %v811, %v767
        %v814 = vadd.f32 %v808, %v812
        %v815 = vadd.f32 %v809, %v813
        %v816 = vld [vmem:[%s669] sm:$0xff]
        %v817 = vld [vmem:[%s669 + $0x8] sm:$0xff]
        %v818 = vmul.f32 %v816, %v774
        %v819 = vmul.f32 %v817, %v774
        %v820 = vadd.f32 %v814, %v818
        %v821 = vadd.f32 %v815, %v819
        %v822 = vadd.f32 %v820, %v779
        %v823 = vadd.f32 %v821, %v779
        %v824 = vmax.f32 %v822, 0.0
        %v825 = vmax.f32 %v823, 0.0
        %v826 = vmax.f32 %v804, %v824
        %v827 = vmax.f32 %v805, %v825
        %v828 = vsel %vm586, 0.0, %v826
        %v829 = vsel %vm587, 0.0, %v827
        %s830 = scalar_lea.vmem [#allocation2], 32
        %831 = vst [vmem:[%s830] sm:$0xff] %v828
        %832 = vst.msk [vmem:[%s830 + $0x8] sm:$0xff] %vm685, %v829
        %v833 = vld [vmem:[%s529] sm:$0xff]
        %v834 = vld [vmem:[%s529 + $0x8] sm:$0xff]
        %v835 = vstv %s599
        %v836 = vmul.f32 %v833, %v835
        %v837 = vmul.f32 %v834, %v835
        %v838 = vld [vmem:[%s611] sm:$0xff]
        %v839 = vld [vmem:[%s611 + $0x8] sm:$0xff]
        %v840 = vstv %s600
        %v841 = vmul.f32 %v838, %v840
        %v842 = vmul.f32 %v839, %v840
        %v843 = vadd.f32 %v836, %v841
        %v844 = vadd.f32 %v837, %v842
        %v845 = vld [vmem:[%s619] sm:$0xff]
        %v846 = vld [vmem:[%s619 + $0x8] sm:$0xff]
        %v847 = vstv %s601
        %v848 = vmul.f32 %v845, %v847
        %v849 = vmul.f32 %v846, %v847
        %v850 = vadd.f32 %v843, %v848
        %v851 = vadd.f32 %v844, %v849
        %v852 = vstv %s605
        %v853 = vadd.f32 %v850, %v852
        %v854 = vadd.f32 %v851, %v852
        %v855 = vmax.f32 %v853, 0.0
        %v856 = vmax.f32 %v854, 0.0
        %v857 = vld [vmem:[%s632] sm:$0xff]
        %v858 = vld [vmem:[%s632 + $0x8] sm:$0xff]
        %v859 = vmul.f32 %v857, %v835
        %v860 = vmul.f32 %v858, %v835
        %v861 = vld [vmem:[%s637] sm:$0xff]
        %v862 = vld [vmem:[%s637 + $0x8] sm:$0xff]
        %v863 = vmul.f32 %v861, %v840
        %v864 = vmul.f32 %v862, %v840
        %v865 = vadd.f32 %v859, %v863
        %v866 = vadd.f32 %v860, %v864
        %v867 = vld [vmem:[%s644] sm:$0xff]
        %v868 = vld [vmem:[%s644 + $0x8] sm:$0xff]
        %v869 = vmul.f32 %v867, %v847
        %v870 = vmul.f32 %v868, %v847
        %v871 = vadd.f32 %v865, %v869
        %v872 = vadd.f32 %v866, %v870
        %v873 = vadd.f32 %v871, %v852
        %v874 = vadd.f32 %v872, %v852
        %v875 = vmax.f32 %v873, 0.0
        %v876 = vmax.f32 %v874, 0.0
        %v877 = vmax.f32 %v855, %v875
        %v878 = vmax.f32 %v856, %v876
        %v879 = vld [vmem:[%s657] sm:$0xff]
        %v880 = vld [vmem:[%s657 + $0x8] sm:$0xff]
        %v881 = vmul.f32 %v879, %v835
        %v882 = vmul.f32 %v880, %v835
        %v883 = vld [vmem:[%s662] sm:$0xff]
        %v884 = vld [vmem:[%s662 + $0x8] sm:$0xff]
        %v885 = vmul.f32 %v883, %v840
        %v886 = vmul.f32 %v884, %v840
        %v887 = vadd.f32 %v881, %v885
        %v888 = vadd.f32 %v882, %v886
        %v889 = vld [vmem:[%s669] sm:$0xff]
        %v890 = vld [vmem:[%s669 + $0x8] sm:$0xff]
        %v891 = vmul.f32 %v889, %v847
        %v892 = vmul.f32 %v890, %v847
        %v893 = vadd.f32 %v887, %v891
        %v894 = vadd.f32 %v888, %v892
        %v895 = vadd.f32 %v893, %v852
        %v896 = vadd.f32 %v894, %v852
        %v897 = vmax.f32 %v895, 0.0
        %v898 = vmax.f32 %v896, 0.0
        %v899 = vmax.f32 %v877, %v897
        %v900 = vmax.f32 %v878, %v898
        %v901 = vsel %vm586, 0.0, %v899
        %v902 = vsel %vm587, 0.0, %v900
        %s903 = scalar_lea.vmem [#allocation2], 48
        %904 = vst [vmem:[%s903] sm:$0xff] %v901
        %905 = vst.msk [vmem:[%s903 + $0x8] sm:$0xff] %vm685, %v902
        %s906 = scalar_lea.vmem %s529, 240 [#allocation4]
        %v907 = vld [vmem:[%s906] sm:$0xff]
        %v908 = vld [vmem:[%s906 + $0x8] sm:$0xff]
        %v909 = vmul.f32 %v907, %v608
        %v910 = vmul.f32 %v908, %v608
        %s911 = scalar_lea.vmem %s529, 256 [#allocation4]
        %v912 = vld [vmem:[%s911] sm:$0xff]
        %v913 = vld [vmem:[%s911 + $0x8] sm:$0xff]
        %v914 = vmul.f32 %v912, %v614
        %v915 = vmul.f32 %v913, %v614
        %v916 = vadd.f32 %v909, %v914
        %v917 = vadd.f32 %v910, %v915
        %s918 = scalar_lea.vmem %s529, 272 [#allocation4]
        %v919 = vld [vmem:[%s918] sm:$0xff]
        %v920 = vld [vmem:[%s918 + $0x8] sm:$0xff]
        %v921 = vmul.f32 %v919, %v622
        %v922 = vmul.f32 %v920, %v622
        %v923 = vadd.f32 %v916, %v921
        %v924 = vadd.f32 %v917, %v922
        %v925 = vadd.f32 %v923, %v627
        %v926 = vadd.f32 %v924, %v627
        %v927 = vmax.f32 %v925, 0.0
        %v928 = vmax.f32 %v926, 0.0
        %v929 = vsel %vm586, 0.0, %v927
        %v930 = vsel %vm587, 0.0, %v928
        %s931 = scalar_lea.vmem %s529, 320 [#allocation4]
        %v932 = vld [vmem:[%s931] sm:$0xff]
        %v933 = vld [vmem:[%s931 + $0x8] sm:$0xff]
        %v934 = vmul.f32 %v932, %v608
        %v935 = vmul.f32 %v933, %v608
        %s936 = scalar_lea.vmem %s529, 336 [#allocation4]
        %v937 = vld [vmem:[%s936] sm:$0xff]
        %v938 = vld [vmem:[%s936 + $0x8] sm:$0xff]
        %v939 = vmul.f32 %v937, %v614
        %v940 = vmul.f32 %v938, %v614
        %v941 = vadd.f32 %v934, %v939
        %v942 = vadd.f32 %v935, %v940
        %s943 = scalar_lea.vmem %s529, 352 [#allocation4]
        %v944 = vld [vmem:[%s943] sm:$0xff]
        %v945 = vld [vmem:[%s943 + $0x8] sm:$0xff]
        %v946 = vmul.f32 %v944, %v622
        %v947 = vmul.f32 %v945, %v622
        %v948 = vadd.f32 %v941, %v946
        %v949 = vadd.f32 %v942, %v947
        %v950 = vadd.f32 %v948, %v627
        %v951 = vadd.f32 %v949, %v627
        %v952 = vmax.f32 %v950, 0.0
        %v953 = vmax.f32 %v951, 0.0
        %v954 = vmax.f32 %v929, %v952
        %v955 = vmax.f32 %v930, %v953
        %s956 = scalar_lea.vmem %s529, 400 [#allocation4]
        %v957 = vld [vmem:[%s956] sm:$0xff]
        %v958 = vld [vmem:[%s956 + $0x8] sm:$0xff]
        %v959 = vmul.f32 %v957, %v608
        %v960 = vmul.f32 %v958, %v608
        %s961 = scalar_lea.vmem %s529, 416 [#allocation4]
        %v962 = vld [vmem:[%s961] sm:$0xff]
        %v963 = vld [vmem:[%s961 + $0x8] sm:$0xff]
        %v964 = vmul.f32 %v962, %v614
        %v965 = vmul.f32 %v963, %v614
        %v966 = vadd.f32 %v959, %v964
        %v967 = vadd.f32 %v960, %v965
        %s968 = scalar_lea.vmem %s529, 432 [#allocation4]
        %v969 = vld [vmem:[%s968] sm:$0xff]
        %v970 = vld [vmem:[%s968 + $0x8] sm:$0xff]
        %v971 = vmul.f32 %v969, %v622
        %v972 = vmul.f32 %v970, %v622
        %v973 = vadd.f32 %v966, %v971
        %v974 = vadd.f32 %v967, %v972
        %v975 = vadd.f32 %v973, %v627
        %v976 = vadd.f32 %v974, %v627
        %v977 = vmax.f32 %v975, 0.0
        %v978 = vmax.f32 %v976, 0.0
        %v979 = vmax.f32 %v954, %v977
        %v980 = vmax.f32 %v955, %v978
        %s981 = scalar_lea.vmem [#allocation2], 64
        %982 = vst [vmem:[%s981] sm:$0xff] %v979
        %983 = vst.msk [vmem:[%s981 + $0x8] sm:$0xff] %vm685, %v980
        %v984 = vld [vmem:[%s906] sm:$0xff]
        %v985 = vld [vmem:[%s906 + $0x8] sm:$0xff]
        %v986 = vmul.f32 %v984, %v689
        %v987 = vmul.f32 %v985, %v689
        %v988 = vld [vmem:[%s911] sm:$0xff]
        %v989 = vld [vmem:[%s911 + $0x8] sm:$0xff]
        %v990 = vmul.f32 %v988, %v694
        %v991 = vmul.f32 %v989, %v694
        %v992 = vadd.f32 %v986, %v990
        %v993 = vadd.f32 %v987, %v991
        %v994 = vld [vmem:[%s918] sm:$0xff]
        %v995 = vld [vmem:[%s918 + $0x8] sm:$0xff]
        %v996 = vmul.f32 %v994, %v701
        %v997 = vmul.f32 %v995, %v701
        %v998 = vadd.f32 %v992, %v996
        %v999 = vadd.f32 %v993, %v997
        %v1000 = vadd.f32 %v998, %v706
        %v1001 = vadd.f32 %v999, %v706
        %v1002 = vmax.f32 %v1000, 0.0
        %v1003 = vmax.f32 %v1001, 0.0
        %v1004 = vsel %vm586, 0.0, %v1002
        %v1005 = vsel %vm587, 0.0, %v1003
        %v1006 = vld [vmem:[%s931] sm:$0xff]
        %v1007 = vld [vmem:[%s931 + $0x8] sm:$0xff]
        %v1008 = vmul.f32 %v1006, %v689
        %v1009 = vmul.f32 %v1007, %v689
        %v1010 = vld [vmem:[%s936] sm:$0xff]
        %v1011 = vld [vmem:[%s936 + $0x8] sm:$0xff]
        %v1012 = vmul.f32 %v1010, %v694
        %v1013 = vmul.f32 %v1011, %v694
        %v1014 = vadd.f32 %v1008, %v1012
        %v1015 = vadd.f32 %v1009, %v1013
        %v1016 = vld [vmem:[%s943] sm:$0xff]
        %v1017 = vld [vmem:[%s943 + $0x8] sm:$0xff]
        %v1018 = vmul.f32 %v1016, %v701
        %v1019 = vmul.f32 %v1017, %v701
        %v1020 = vadd.f32 %v1014, %v1018
        %v1021 = vadd.f32 %v1015, %v1019
        %v1022 = vadd.f32 %v1020, %v706
        %v1023 = vadd.f32 %v1021, %v706
        %v1024 = vmax.f32 %v1022, 0.0
        %v1025 = vmax.f32 %v1023, 0.0
        %v1026 = vmax.f32 %v1004, %v1024
        %v1027 = vmax.f32 %v1005, %v1025
        %v1028 = vld [vmem:[%s956] sm:$0xff]
        %v1029 = vld [vmem:[%s956 + $0x8] sm:$0xff]
        %v1030 = vmul.f32 %v1028, %v689
        %v1031 = vmul.f32 %v1029, %v689
        %v1032 = vld [vmem:[%s961] sm:$0xff]
        %v1033 = vld [vmem:[%s961 + $0x8] sm:$0xff]
        %v1034 = vmul.f32 %v1032, %v694
        %v1035 = vmul.f32 %v1033, %v694
        %v1036 = vadd.f32 %v1030, %v1034
        %v1037 = vadd.f32 %v1031, %v1035
        %v1038 = vld [vmem:[%s968] sm:$0xff]
        %v1039 = vld [vmem:[%s968 + $0x8] sm:$0xff]
        %v1040 = vmul.f32 %v1038, %v701
        %v1041 = vmul.f32 %v1039, %v701
        %v1042 = vadd.f32 %v1036, %v1040
        %v1043 = vadd.f32 %v1037, %v1041
        %v1044 = vadd.f32 %v1042, %v706
        %v1045 = vadd.f32 %v1043, %v706
        %v1046 = vmax.f32 %v1044, 0.0
        %v1047 = vmax.f32 %v1045, 0.0
        %v1048 = vmax.f32 %v1026, %v1046
        %v1049 = vmax.f32 %v1027, %v1047
        %s1050 = scalar_lea.vmem [#allocation2], 80
        %1051 = vst [vmem:[%s1050] sm:$0xff] %v1048
        %1052 = vst.msk [vmem:[%s1050 + $0x8] sm:$0xff] %vm685, %v1049
        %v1053 = vld [vmem:[%s906] sm:$0xff]
        %v1054 = vld [vmem:[%s906 + $0x8] sm:$0xff]
        %v1055 = vmul.f32 %v1053, %v762
        %v1056 = vmul.f32 %v1054, %v762
        %v1057 = vld [vmem:[%s911] sm:$0xff]
        %v1058 = vld [vmem:[%s911 + $0x8] sm:$0xff]
        %v1059 = vmul.f32 %v1057, %v767
        %v1060 = vmul.f32 %v1058, %v767
        %v1061 = vadd.f32 %v1055, %v1059
        %v1062 = vadd.f32 %v1056, %v1060
        %v1063 = vld [vmem:[%s918] sm:$0xff]
        %v1064 = vld [vmem:[%s918 + $0x8] sm:$0xff]
        %v1065 = vmul.f32 %v1063, %v774
        %v1066 = vmul.f32 %v1064, %v774
        %v1067 = vadd.f32 %v1061, %v1065
        %v1068 = vadd.f32 %v1062, %v1066
        %v1069 = vadd.f32 %v1067, %v779
        %v1070 = vadd.f32 %v1068, %v779
        %v1071 = vmax.f32 %v1069, 0.0
        %v1072 = vmax.f32 %v1070, 0.0
        %v1073 = vsel %vm586, 0.0, %v1071
        %v1074 = vsel %vm587, 0.0, %v1072
        %v1075 = vld [vmem:[%s931] sm:$0xff]
        %v1076 = vld [vmem:[%s931 + $0x8] sm:$0xff]
        %v1077 = vmul.f32 %v1075, %v762
        %v1078 = vmul.f32 %v1076, %v762
        %v1079 = vld [vmem:[%s936] sm:$0xff]
        %v1080 = vld [vmem:[%s936 + $0x8] sm:$0xff]
        %v1081 = vmul.f32 %v1079, %v767
        %v1082 = vmul.f32 %v1080, %v767
        %v1083 = vadd.f32 %v1077, %v1081
        %v1084 = vadd.f32 %v1078, %v1082
        %v1085 = vld [vmem:[%s943] sm:$0xff]
        %v1086 = vld [vmem:[%s943 + $0x8] sm:$0xff]
        %v1087 = vmul.f32 %v1085, %v774
        %v1088 = vmul.f32 %v1086, %v774
        %v1089 = vadd.f32 %v1083, %v1087
        %v1090 = vadd.f32 %v1084, %v1088
        %v1091 = vadd.f32 %v1089, %v779
        %v1092 = vadd.f32 %v1090, %v779
        %v1093 = vmax.f32 %v1091, 0.0
        %v1094 = vmax.f32 %v1092, 0.0
        %v1095 = vmax.f32 %v1073, %v1093
        %v1096 = vmax.f32 %v1074, %v1094
        %v1097 = vld [vmem:[%s956] sm:$0xff]
        %v1098 = vld [vmem:[%s956 + $0x8] sm:$0xff]
        %v1099 = vmul.f32 %v1097, %v762
        %v1100 = vmul.f32 %v1098, %v762
        %v1101 = vld [vmem:[%s961] sm:$0xff]
        %v1102 = vld [vmem:[%s961 + $0x8] sm:$0xff]
        %v1103 = vmul.f32 %v1101, %v767
        %v1104 = vmul.f32 %v1102, %v767
        %v1105 = vadd.f32 %v1099, %v1103
        %v1106 = vadd.f32 %v1100, %v1104
        %v1107 = vld [vmem:[%s968] sm:$0xff]
        %v1108 = vld [vmem:[%s968 + $0x8] sm:$0xff]
        %v1109 = vmul.f32 %v1107, %v774
        %v1110 = vmul.f32 %v1108, %v774
        %v1111 = vadd.f32 %v1105, %v1109
        %v1112 = vadd.f32 %v1106, %v1110
        %v1113 = vadd.f32 %v1111, %v779
        %v1114 = vadd.f32 %v1112, %v779
        %v1115 = vmax.f32 %v1113, 0.0
        %v1116 = vmax.f32 %v1114, 0.0
        %v1117 = vmax.f32 %v1095, %v1115
        %v1118 = vmax.f32 %v1096, %v1116
        %s1119 = scalar_lea.vmem [#allocation2], 96
        %1120 = vst [vmem:[%s1119] sm:$0xff] %v1117
        %1121 = vst.msk [vmem:[%s1119 + $0x8] sm:$0xff] %vm685, %v1118
        %v1122 = vld [vmem:[%s906] sm:$0xff]
        %v1123 = vld [vmem:[%s906 + $0x8] sm:$0xff]
        %v1124 = vmul.f32 %v1122, %v835
        %v1125 = vmul.f32 %v1123, %v835
        %v1126 = vld [vmem:[%s911] sm:$0xff]
        %v1127 = vld [vmem:[%s911 + $0x8] sm:$0xff]
        %v1128 = vmul.f32 %v1126, %v840
        %v1129 = vmul.f32 %v1127, %v840
        %v1130 = vadd.f32 %v1124, %v1128
        %v1131 = vadd.f32 %v1125, %v1129
        %v1132 = vld [vmem:[%s918] sm:$0xff]
        %v1133 = vld [vmem:[%s918 + $0x8] sm:$0xff]
        %v1134 = vmul.f32 %v1132, %v847
        %v1135 = vmul.f32 %v1133, %v847
        %v1136 = vadd.f32 %v1130, %v1134
        %v1137 = vadd.f32 %v1131, %v1135
        %v1138 = vadd.f32 %v1136, %v852
        %v1139 = vadd.f32 %v1137, %v852
        %v1140 = vmax.f32 %v1138, 0.0
        %v1141 = vmax.f32 %v1139, 0.0
        %v1142 = vsel %vm586, 0.0, %v1140
        %v1143 = vsel %vm587, 0.0, %v1141
        %v1144 = vld [vmem:[%s931] sm:$0xff]
        %v1145 = vld [vmem:[%s931 + $0x8] sm:$0xff]
        %v1146 = vmul.f32 %v1144, %v835
        %v1147 = vmul.f32 %v1145, %v835
        %v1148 = vld [vmem:[%s936] sm:$0xff]
        %v1149 = vld [vmem:[%s936 + $0x8] sm:$0xff]
        %v1150 = vmul.f32 %v1148, %v840
        %v1151 = vmul.f32 %v1149, %v840
        %v1152 = vadd.f32 %v1146, %v1150
        %v1153 = vadd.f32 %v1147, %v1151
        %v1154 = vld [vmem:[%s943] sm:$0xff]
        %v1155 = vld [vmem:[%s943 + $0x8] sm:$0xff]
        %v1156 = vmul.f32 %v1154, %v847
        %v1157 = vmul.f32 %v1155, %v847
        %v1158 = vadd.f32 %v1152, %v1156
        %v1159 = vadd.f32 %v1153, %v1157
        %v1160 = vadd.f32 %v1158, %v852
        %v1161 = vadd.f32 %v1159, %v852
        %v1162 = vmax.f32 %v1160, 0.0
        %v1163 = vmax.f32 %v1161, 0.0
        %v1164 = vmax.f32 %v1142, %v1162
        %v1165 = vmax.f32 %v1143, %v1163
        %v1166 = vld [vmem:[%s956] sm:$0xff]
        %v1167 = vld [vmem:[%s956 + $0x8] sm:$0xff]
        %v1168 = vmul.f32 %v1166, %v835
        %v1169 = vmul.f32 %v1167, %v835
        %v1170 = vld [vmem:[%s961] sm:$0xff]
        %v1171 = vld [vmem:[%s961 + $0x8] sm:$0xff]
        %v1172 = vmul.f32 %v1170, %v840
        %v1173 = vmul.f32 %v1171, %v840
        %v1174 = vadd.f32 %v1168, %v1172
        %v1175 = vadd.f32 %v1169, %v1173
        %v1176 = vld [vmem:[%s968] sm:$0xff]
        %v1177 = vld [vmem:[%s968 + $0x8] sm:$0xff]
        %v1178 = vmul.f32 %v1176, %v847
        %v1179 = vmul.f32 %v1177, %v847
        %v1180 = vadd.f32 %v1174, %v1178
        %v1181 = vadd.f32 %v1175, %v1179
        %v1182 = vadd.f32 %v1180, %v852
        %v1183 = vadd.f32 %v1181, %v852
        %v1184 = vmax.f32 %v1182, 0.0
        %v1185 = vmax.f32 %v1183, 0.0
        %v1186 = vmax.f32 %v1164, %v1184
        %v1187 = vmax.f32 %v1165, %v1185
        %s1188 = scalar_lea.vmem [#allocation2], 112
        %1189 = vst [vmem:[%s1188] sm:$0xff] %v1186
        %1190 = vst.msk [vmem:[%s1188 + $0x8] sm:$0xff] %vm685, %v1187
        %s1191 = scalar_lea.vmem %s529, 480 [#allocation4]
        %v1192 = vld [vmem:[%s1191] sm:$0xff]
        %v1193 = vld [vmem:[%s1191 + $0x8] sm:$0xff]
        %v1194 = vmul.f32 %v1192, %v608
        %v1195 = vmul.f32 %v1193, %v608
        %s1196 = scalar_lea.vmem %s529, 496 [#allocation4]
        %v1197 = vld [vmem:[%s1196] sm:$0xff]
        %v1198 = vld [vmem:[%s1196 + $0x8] sm:$0xff]
        %v1199 = vmul.f32 %v1197, %v614
        %v1200 = vmul.f32 %v1198, %v614
        %v1201 = vadd.f32 %v1194, %v1199
        %v1202 = vadd.f32 %v1195, %v1200
        %s1203 = scalar_lea.vmem %s529, 512 [#allocation4]
        %v1204 = vld [vmem:[%s1203] sm:$0xff]
        %v1205 = vld [vmem:[%s1203 + $0x8] sm:$0xff]
        %v1206 = vmul.f32 %v1204, %v622
        %v1207 = vmul.f32 %v1205, %v622
        %v1208 = vadd.f32 %v1201, %v1206
        %v1209 = vadd.f32 %v1202, %v1207
        %v1210 = vadd.f32 %v1208, %v627
        %v1211 = vadd.f32 %v1209, %v627
        %v1212 = vmax.f32 %v1210, 0.0
        %v1213 = vmax.f32 %v1211, 0.0
        %s1214 = scalar_lea.vmem %s529, 560 [#allocation4]
        %v1215 = vld [vmem:[%s1214] sm:$0xff]
        %v1216 = vld [vmem:[%s1214 + $0x8] sm:$0xff]
        %v1217 = vmul.f32 %v1215, %v608
        %v1218 = vmul.f32 %v1216, %v608
        %s1219 = scalar_lea.vmem %s529, 576 [#allocation4]
        %v1220 = vld [vmem:[%s1219] sm:$0xff]
        %v1221 = vld [vmem:[%s1219 + $0x8] sm:$0xff]
        %v1222 = vmul.f32 %v1220, %v614
        %v1223 = vmul.f32 %v1221, %v614
        %v1224 = vadd.f32 %v1217, %v1222
        %v1225 = vadd.f32 %v1218, %v1223
        %s1226 = scalar_lea.vmem %s529, 592 [#allocation4]
        %v1227 = vld [vmem:[%s1226] sm:$0xff]
        %v1228 = vld [vmem:[%s1226 + $0x8] sm:$0xff]
        %v1229 = vmul.f32 %v1227, %v622
        %v1230 = vmul.f32 %v1228, %v622
        %v1231 = vadd.f32 %v1224, %v1229
        %v1232 = vadd.f32 %v1225, %v1230
        %v1233 = vadd.f32 %v1231, %v627
        %v1234 = vadd.f32 %v1232, %v627
        %v1235 = vmax.f32 %v1233, 0.0
        %v1236 = vmax.f32 %v1234, 0.0
        %v1237 = vmax.f32 %v1212, %v1235
        %v1238 = vmax.f32 %v1213, %v1236
        %s1239 = scalar_lea.vmem %s529, 640 [#allocation4]
        %v1240 = vld [vmem:[%s1239] sm:$0xff]
        %v1241 = vld [vmem:[%s1239 + $0x8] sm:$0xff]
        %v1242 = vmul.f32 %v1240, %v608
        %v1243 = vmul.f32 %v1241, %v608
        %s1244 = scalar_lea.vmem %s529, 656 [#allocation4]
        %v1245 = vld [vmem:[%s1244] sm:$0xff]
        %v1246 = vld [vmem:[%s1244 + $0x8] sm:$0xff]
        %v1247 = vmul.f32 %v1245, %v614
        %v1248 = vmul.f32 %v1246, %v614
        %v1249 = vadd.f32 %v1242, %v1247
        %v1250 = vadd.f32 %v1243, %v1248
        %s1251 = scalar_lea.vmem %s529, 672 [#allocation4]
        %v1252 = vld [vmem:[%s1251] sm:$0xff]
        %v1253 = vld [vmem:[%s1251 + $0x8] sm:$0xff]
        %v1254 = vmul.f32 %v1252, %v622
        %v1255 = vmul.f32 %v1253, %v622
        %v1256 = vadd.f32 %v1249, %v1254
        %v1257 = vadd.f32 %v1250, %v1255
        %v1258 = vadd.f32 %v1256, %v627
        %v1259 = vadd.f32 %v1257, %v627
        %v1260 = vmax.f32 %v1258, 0.0
        %v1261 = vmax.f32 %v1259, 0.0
        %v1262 = vmax.f32 %v1237, %v1260
        %v1263 = vmax.f32 %v1238, %v1261
        %v1264 = vsel %vm588, 0.0, %v1262
        %v1265 = vsel %vm589, 0.0, %v1263
        %s1266 = scalar_lea.vmem [#allocation2], 128
        %1267 = vst [vmem:[%s1266] sm:$0xff] %v1264
        %1268 = vst.msk [vmem:[%s1266 + $0x8] sm:$0xff] %vm685, %v1265
        %v1269 = vld [vmem:[%s1191] sm:$0xff]
        %v1270 = vld [vmem:[%s1191 + $0x8] sm:$0xff]
        %v1271 = vmul.f32 %v1269, %v689
        %v1272 = vmul.f32 %v1270, %v689
        %v1273 = vld [vmem:[%s1196] sm:$0xff]
        %v1274 = vld [vmem:[%s1196 + $0x8] sm:$0xff]
        %v1275 = vmul.f32 %v1273, %v694
        %v1276 = vmul.f32 %v1274, %v694
        %v1277 = vadd.f32 %v1271, %v1275
        %v1278 = vadd.f32 %v1272, %v1276
        %v1279 = vld [vmem:[%s1203] sm:$0xff]
        %v1280 = vld [vmem:[%s1203 + $0x8] sm:$0xff]
        %v1281 = vmul.f32 %v1279, %v701
        %v1282 = vmul.f32 %v1280, %v701
        %v1283 = vadd.f32 %v1277, %v1281
        %v1284 = vadd.f32 %v1278, %v1282
        %v1285 = vadd.f32 %v1283, %v706
        %v1286 = vadd.f32 %v1284, %v706
        %v1287 = vmax.f32 %v1285, 0.0
        %v1288 = vmax.f32 %v1286, 0.0
        %v1289 = vld [vmem:[%s1214] sm:$0xff]
        %v1290 = vld [vmem:[%s1214 + $0x8] sm:$0xff]
        %v1291 = vmul.f32 %v1289, %v689
        %v1292 = vmul.f32 %v1290, %v689
        %v1293 = vld [vmem:[%s1219] sm:$0xff]
        %v1294 = vld [vmem:[%s1219 + $0x8] sm:$0xff]
        %v1295 = vmul.f32 %v1293, %v694
        %v1296 = vmul.f32 %v1294, %v694
        %v1297 = vadd.f32 %v1291, %v1295
        %v1298 = vadd.f32 %v1292, %v1296
        %v1299 = vld [vmem:[%s1226] sm:$0xff]
        %v1300 = vld [vmem:[%s1226 + $0x8] sm:$0xff]
        %v1301 = vmul.f32 %v1299, %v701
        %v1302 = vmul.f32 %v1300, %v701
        %v1303 = vadd.f32 %v1297, %v1301
        %v1304 = vadd.f32 %v1298, %v1302
        %v1305 = vadd.f32 %v1303, %v706
        %v1306 = vadd.f32 %v1304, %v706
        %v1307 = vmax.f32 %v1305, 0.0
        %v1308 = vmax.f32 %v1306, 0.0
        %v1309 = vmax.f32 %v1287, %v1307
        %v1310 = vmax.f32 %v1288, %v1308
        %v1311 = vld [vmem:[%s1239] sm:$0xff]
        %v1312 = vld [vmem:[%s1239 + $0x8] sm:$0xff]
        %v1313 = vmul.f32 %v1311, %v689
        %v1314 = vmul.f32 %v1312, %v689
        %v1315 = vld [vmem:[%s1244] sm:$0xff]
        %v1316 = vld [vmem:[%s1244 + $0x8] sm:$0xff]
        %v1317 = vmul.f32 %v1315, %v694
        %v1318 = vmul.f32 %v1316, %v694
        %v1319 = vadd.f32 %v1313, %v1317
        %v1320 = vadd.f32 %v1314, %v1318
        %v1321 = vld [vmem:[%s1251] sm:$0xff]
        %v1322 = vld [vmem:[%s1251 + $0x8] sm:$0xff]
        %v1323 = vmul.f32 %v1321, %v701
        %v1324 = vmul.f32 %v1322, %v701
        %v1325 = vadd.f32 %v1319, %v1323
        %v1326 = vadd.f32 %v1320, %v1324
        %v1327 = vadd.f32 %v1325, %v706
        %v1328 = vadd.f32 %v1326, %v706
        %v1329 = vmax.f32 %v1327, 0.0
        %v1330 = vmax.f32 %v1328, 0.0
        %v1331 = vmax.f32 %v1309, %v1329
        %v1332 = vmax.f32 %v1310, %v1330
        %v1333 = vsel %vm588, 0.0, %v1331
        %v1334 = vsel %vm589, 0.0, %v1332
        %s1335 = scalar_lea.vmem [#allocation2], 144
        %1336 = vst [vmem:[%s1335] sm:$0xff] %v1333
        %1337 = vst.msk [vmem:[%s1335 + $0x8] sm:$0xff] %vm685, %v1334
        %v1338 = vld [vmem:[%s1191] sm:$0xff]
        %v1339 = vld [vmem:[%s1191 + $0x8] sm:$0xff]
        %v1340 = vmul.f32 %v1338, %v762
        %v1341 = vmul.f32 %v1339, %v762
        %v1342 = vld [vmem:[%s1196] sm:$0xff]
        %v1343 = vld [vmem:[%s1196 + $0x8] sm:$0xff]
        %v1344 = vmul.f32 %v1342, %v767
        %v1345 = vmul.f32 %v1343, %v767
        %v1346 = vadd.f32 %v1340, %v1344
        %v1347 = vadd.f32 %v1341, %v1345
        %v1348 = vld [vmem:[%s1203] sm:$0xff]
        %v1349 = vld [vmem:[%s1203 + $0x8] sm:$0xff]
        %v1350 = vmul.f32 %v1348, %v774
        %v1351 = vmul.f32 %v1349, %v774
        %v1352 = vadd.f32 %v1346, %v1350
        %v1353 = vadd.f32 %v1347, %v1351
        %v1354 = vadd.f32 %v1352, %v779
        %v1355 = vadd.f32 %v1353, %v779
        %v1356 = vmax.f32 %v1354, 0.0
        %v1357 = vmax.f32 %v1355, 0.0
        %v1358 = vld [vmem:[%s1214] sm:$0xff]
        %v1359 = vld [vmem:[%s1214 + $0x8] sm:$0xff]
        %v1360 = vmul.f32 %v1358, %v762
        %v1361 = vmul.f32 %v1359, %v762
        %v1362 = vld [vmem:[%s1219] sm:$0xff]
        %v1363 = vld [vmem:[%s1219 + $0x8] sm:$0xff]
        %v1364 = vmul.f32 %v1362, %v767
        %v1365 = vmul.f32 %v1363, %v767
        %v1366 = vadd.f32 %v1360, %v1364
        %v1367 = vadd.f32 %v1361, %v1365
        %v1368 = vld [vmem:[%s1226] sm:$0xff]
        %v1369 = vld [vmem:[%s1226 + $0x8] sm:$0xff]
        %v1370 = vmul.f32 %v1368, %v774
        %v1371 = vmul.f32 %v1369, %v774
        %v1372 = vadd.f32 %v1366, %v1370
        %v1373 = vadd.f32 %v1367, %v1371
        %v1374 = vadd.f32 %v1372, %v779
        %v1375 = vadd.f32 %v1373, %v779
        %v1376 = vmax.f32 %v1374, 0.0
        %v1377 = vmax.f32 %v1375, 0.0
        %v1378 = vmax.f32 %v1356, %v1376
        %v1379 = vmax.f32 %v1357, %v1377
        %v1380 = vld [vmem:[%s1239] sm:$0xff]
        %v1381 = vld [vmem:[%s1239 + $0x8] sm:$0xff]
        %v1382 = vmul.f32 %v1380, %v762
        %v1383 = vmul.f32 %v1381, %v762
        %v1384 = vld [vmem:[%s1244] sm:$0xff]
        %v1385 = vld [vmem:[%s1244 + $0x8] sm:$0xff]
        %v1386 = vmul.f32 %v1384, %v767
        %v1387 = vmul.f32 %v1385, %v767
        %v1388 = vadd.f32 %v1382, %v1386
        %v1389 = vadd.f32 %v1383, %v1387
        %v1390 = vld [vmem:[%s1251] sm:$0xff]
        %v1391 = vld [vmem:[%s1251 + $0x8] sm:$0xff]
        %v1392 = vmul.f32 %v1390, %v774
        %v1393 = vmul.f32 %v1391, %v774
        %v1394 = vadd.f32 %v1388, %v1392
        %v1395 = vadd.f32 %v1389, %v1393
        %v1396 = vadd.f32 %v1394, %v779
        %v1397 = vadd.f32 %v1395, %v779
        %v1398 = vmax.f32 %v1396, 0.0
        %v1399 = vmax.f32 %v1397, 0.0
        %v1400 = vmax.f32 %v1378, %v1398
        %v1401 = vmax.f32 %v1379, %v1399
        %v1402 = vsel %vm588, 0.0, %v1400
        %v1403 = vsel %vm589, 0.0, %v1401
        %s1404 = scalar_lea.vmem [#allocation2], 160
        %1405 = vst [vmem:[%s1404] sm:$0xff] %v1402
        %1406 = vst.msk [vmem:[%s1404 + $0x8] sm:$0xff] %vm685, %v1403
        %v1407 = vld [vmem:[%s1191] sm:$0xff]
        %v1408 = vld [vmem:[%s1191 + $0x8] sm:$0xff]
        %v1409 = vmul.f32 %v1407, %v835
        %v1410 = vmul.f32 %v1408, %v835
        %v1411 = vld [vmem:[%s1196] sm:$0xff]
        %v1412 = vld [vmem:[%s1196 + $0x8] sm:$0xff]
        %v1413 = vmul.f32 %v1411, %v840
        %v1414 = vmul.f32 %v1412, %v840
        %v1415 = vadd.f32 %v1409, %v1413
        %v1416 = vadd.f32 %v1410, %v1414
        %v1417 = vld [vmem:[%s1203] sm:$0xff]
        %v1418 = vld [vmem:[%s1203 + $0x8] sm:$0xff]
        %v1419 = vmul.f32 %v1417, %v847
        %v1420 = vmul.f32 %v1418, %v847
        %v1421 = vadd.f32 %v1415, %v1419
        %v1422 = vadd.f32 %v1416, %v1420
        %v1423 = vadd.f32 %v1421, %v852
        %v1424 = vadd.f32 %v1422, %v852
        %v1425 = vmax.f32 %v1423, 0.0
        %v1426 = vmax.f32 %v1424, 0.0
        %v1427 = vld [vmem:[%s1214] sm:$0xff]
        %v1428 = vld [vmem:[%s1214 + $0x8] sm:$0xff]
        %v1429 = vmul.f32 %v1427, %v835
        %v1430 = vmul.f32 %v1428, %v835
        %v1431 = vld [vmem:[%s1219] sm:$0xff]
        %v1432 = vld [vmem:[%s1219 + $0x8] sm:$0xff]
        %v1433 = vmul.f32 %v1431, %v840
        %v1434 = vmul.f32 %v1432, %v840
        %v1435 = vadd.f32 %v1429, %v1433
        %v1436 = vadd.f32 %v1430, %v1434
        %v1437 = vld [vmem:[%s1226] sm:$0xff]
        %v1438 = vld [vmem:[%s1226 + $0x8] sm:$0xff]
        %v1439 = vmul.f32 %v1437, %v847
        %v1440 = vmul.f32 %v1438, %v847
        %v1441 = vadd.f32 %v1435, %v1439
        %v1442 = vadd.f32 %v1436, %v1440
        %v1443 = vadd.f32 %v1441, %v852
        %v1444 = vadd.f32 %v1442, %v852
        %v1445 = vmax.f32 %v1443, 0.0
        %v1446 = vmax.f32 %v1444, 0.0
        %v1447 = vmax.f32 %v1425, %v1445
        %v1448 = vmax.f32 %v1426, %v1446
        %v1449 = vld [vmem:[%s1239] sm:$0xff]
        %v1450 = vld [vmem:[%s1239 + $0x8] sm:$0xff]
        %v1451 = vmul.f32 %v1449, %v835
        %v1452 = vmul.f32 %v1450, %v835
        %v1453 = vld [vmem:[%s1244] sm:$0xff]
        %v1454 = vld [vmem:[%s1244 + $0x8] sm:$0xff]
        %v1455 = vmul.f32 %v1453, %v840
        %v1456 = vmul.f32 %v1454, %v840
        %v1457 = vadd.f32 %v1451, %v1455
        %v1458 = vadd.f32 %v1452, %v1456
        %v1459 = vld [vmem:[%s1251] sm:$0xff]
        %v1460 = vld [vmem:[%s1251 + $0x8] sm:$0xff]
        %v1461 = vmul.f32 %v1459, %v847
        %v1462 = vmul.f32 %v1460, %v847
        %v1463 = vadd.f32 %v1457, %v1461
        %v1464 = vadd.f32 %v1458, %v1462
        %v1465 = vadd.f32 %v1463, %v852
        %v1466 = vadd.f32 %v1464, %v852
        %v1467 = vmax.f32 %v1465, 0.0
        %v1468 = vmax.f32 %v1466, 0.0
        %v1469 = vmax.f32 %v1447, %v1467
        %v1470 = vmax.f32 %v1448, %v1468
        %v1471 = vsel %vm588, 0.0, %v1469
        %v1472 = vsel %vm589, 0.0, %v1470
        %s1473 = scalar_lea.vmem [#allocation2], 176
        %1474 = vst [vmem:[%s1473] sm:$0xff] %v1471
        %1475 = vst.msk [vmem:[%s1473 + $0x8] sm:$0xff] %vm685, %v1472
        %v1476 = vld [vmem:[#allocation2] sm:$0xff]
        %v1477 = vld [vmem:[#allocation2 + $0x8] sm:$0xff]
        %s1478 = sld [smem:[#allocation9]]
        %v1479 = vstv %s1478
        %v1480 = vmul.f32 %v1476, %v1479
        %v1481 = vmul.f32 %v1477, %v1479
        %v1482 = vld [vmem:[%s757] sm:$0xff]
        %v1483 = vld [vmem:[%s757 + $0x8] sm:$0xff]
        %s1484 = sld [smem:[#allocation9 + $0x1]]
        %v1485 = vstv %s1484
        %v1486 = vmul.f32 %v1482, %v1485
        %v1487 = vmul.f32 %v1483, %v1485
        %v1488 = vadd.f32 %v1480, %v1486
        %v1489 = vadd.f32 %v1481, %v1487
        %v1490 = vld [vmem:[%s830] sm:$0xff]
        %v1491 = vld [vmem:[%s830 + $0x8] sm:$0xff]
        %s1492 = sld [smem:[#allocation9 + $0x2]]
        %v1493 = vstv %s1492
        %v1494 = vmul.f32 %v1490, %v1493
        %v1495 = vmul.f32 %v1491, %v1493
        %v1496 = vadd.f32 %v1488, %v1494
        %v1497 = vadd.f32 %v1489, %v1495
        %v1498 = vld [vmem:[%s903] sm:$0xff]
        %v1499 = vld [vmem:[%s903 + $0x8] sm:$0xff]
        %s1500 = sld [smem:[#allocation9 + $0x3]]
        %v1501 = vstv %s1500
        %v1502 = vmul.f32 %v1498, %v1501
        %v1503 = vmul.f32 %v1499, %v1501
        %v1504 = vadd.f32 %v1496, %v1502
        %v1505 = vadd.f32 %v1497, %v1503
        %v1506 = vld [vmem:[%s981] sm:$0xff]
        %v1507 = vld [vmem:[%s981 + $0x8] sm:$0xff]
        %s1508 = sld [smem:[#allocation9 + $0x4]]
        %v1509 = vstv %s1508
        %v1510 = vmul.f32 %v1506, %v1509
        %v1511 = vmul.f32 %v1507, %v1509
        %v1512 = vadd.f32 %v1504, %v1510
        %v1513 = vadd.f32 %v1505, %v1511
        %v1514 = vld [vmem:[%s1050] sm:$0xff]
        %v1515 = vld [vmem:[%s1050 + $0x8] sm:$0xff]
        %s1516 = sld [smem:[#allocation9 + $0x5]]
        %v1517 = vstv %s1516
        %v1518 = vmul.f32 %v1514, %v1517
        %v1519 = vmul.f32 %v1515, %v1517
        %v1520 = vadd.f32 %v1512, %v1518
        %v1521 = vadd.f32 %v1513, %v1519
        %v1522 = vld [vmem:[%s1119] sm:$0xff]
        %v1523 = vld [vmem:[%s1119 + $0x8] sm:$0xff]
        %s1524 = sld [smem:[#allocation9 + $0x6]]
        %v1525 = vstv %s1524
        %v1526 = vmul.f32 %v1522, %v1525
        %v1527 = vmul.f32 %v1523, %v1525
        %v1528 = vadd.f32 %v1520, %v1526
        %v1529 = vadd.f32 %v1521, %v1527
        %v1530 = vld [vmem:[%s1188] sm:$0xff]
        %v1531 = vld [vmem:[%s1188 + $0x8] sm:$0xff]
        %s1532 = sld [smem:[#allocation9 + $0x7]]
        %v1533 = vstv %s1532
        %v1534 = vmul.f32 %v1530, %v1533
        %v1535 = vmul.f32 %v1531, %v1533
        %v1536 = vadd.f32 %v1528, %v1534
        %v1537 = vadd.f32 %v1529, %v1535
        %v1538 = vld [vmem:[%s1266] sm:$0xff]
        %v1539 = vld [vmem:[%s1266 + $0x8] sm:$0xff]
        %s1540 = sld [smem:[#allocation9 + $0x8]]
        %v1541 = vstv %s1540
        %v1542 = vmul.f32 %v1538, %v1541
        %v1543 = vmul.f32 %v1539, %v1541
        %v1544 = vadd.f32 %v1536, %v1542
        %v1545 = vadd.f32 %v1537, %v1543
        %v1546 = vld [vmem:[%s1335] sm:$0xff]
        %v1547 = vld [vmem:[%s1335 + $0x8] sm:$0xff]
        %s1548 = sld [smem:[#allocation9 + $0x9]]
        %v1549 = vstv %s1548
        %v1550 = vmul.f32 %v1546, %v1549
        %v1551 = vmul.f32 %v1547, %v1549
        %v1552 = vadd.f32 %v1544, %v1550
        %v1553 = vadd.f32 %v1545, %v1551
        %v1554 = vld [vmem:[%s1404] sm:$0xff]
        %v1555 = vld [vmem:[%s1404 + $0x8] sm:$0xff]
        %s1556 = sld [smem:[#allocation9 + $0xa]]
        %v1557 = vstv %s1556
        %v1558 = vmul.f32 %v1554, %v1557
        %v1559 = vmul.f32 %v1555, %v1557
        %v1560 = vadd.f32 %v1552, %v1558
        %v1561 = vadd.f32 %v1553, %v1559
        %v1562 = vld [vmem:[%s1473] sm:$0xff]
        %v1563 = vld [vmem:[%s1473 + $0x8] sm:$0xff]
        %s1564 = sld [smem:[#allocation9 + $0xb]]
        %v1565 = vstv %s1564
        %v1566 = vmul.f32 %v1562, %v1565
        %v1567 = vmul.f32 %v1563, %v1565
        %v1568 = vadd.f32 %v1560, %v1566
        %v1569 = vadd.f32 %v1561, %v1567
        %s1570 = sld [smem:[#allocation10]]
        %v1571 = vstv %s1570
        %v1572 = vadd.f32 %v1568, %v1571
        %v1573 = vadd.f32 %v1569, %v1571
        %v1574 = vmax.f32 %v1572, 0.0
        %v1575 = vmax.f32 %v1573, 0.0
        %v1576 = vpack.c.bf16 %v1574, %v1574
        %v1577 = vpack.c.bf16 %v1575, %v1575
        %v1578 = vld [vmem:[%s5] sm:$0xff]
        %v1579 = vld [vmem:[%s5 + $0x8] sm:$0xff]
        %v1580 = vld [vmem:[%s5 + $0x10] sm:$0xff]
        %v1581 = vld [vmem:[%s5 + $0x18] sm:$0xff]
        %v1582 = vld [vmem:[%s5 + $0x20] sm:$0xff]
        %v1583 = vld [vmem:[%s5 + $0x28] sm:$0xff]
        %v1584 = vld [vmem:[%s5 + $0x30] sm:$0xff]
        %v1585 = vld [vmem:[%s5 + $0x38] sm:$0xff]
        %v1586 = vld [vmem:[%s5 + $0x40] sm:$0xff]
        %v1587 = vld [vmem:[%s5 + $0x48] sm:$0xff]
        %v1588 = vld [vmem:[%s5 + $0x50] sm:$0xff]
        %v1589 = vld [vmem:[%s5 + $0x58] sm:$0xff]
        %v1590 = vld [vmem:[%s5 + $0x60] sm:$0xff]
        %v1591 = vld [vmem:[%s5 + $0x68] sm:$0xff]
        %v1592 = vld [vmem:[%s5 + $0x70] sm:$0xff]
        %v1593 = vld [vmem:[%s5 + $0x78] sm:$0xff]
        %v1594 = vld [vmem:[%s5 + $0x80] sm:$0x77]
        %s1595 = sld [smem:[#allocation9 + $0xc]]
        %v1596 = vstv %s1595
        %v1597 = vmul.f32 %v1476, %v1596
        %v1598 = vmul.f32 %v1477, %v1596
        %s1599 = sld [smem:[#allocation9 + $0xd]]
        %v1600 = vstv %s1599
        %v1601 = vmul.f32 %v1482, %v1600
        %v1602 = vmul.f32 %v1483, %v1600
        %v1603 = vadd.f32 %v1597, %v1601
        %v1604 = vadd.f32 %v1598, %v1602
        %s1605 = sld [smem:[#allocation9 + $0xe]]
        %v1606 = vstv %s1605
        %v1607 = vmul.f32 %v1490, %v1606
        %v1608 = vmul.f32 %v1491, %v1606
        %v1609 = vadd.f32 %v1603, %v1607
        %v1610 = vadd.f32 %v1604, %v1608
        %s1611 = sld [smem:[#allocation9 + $0xf]]
        %v1612 = vstv %s1611
        %v1613 = vmul.f32 %v1498, %v1612
        %v1614 = vmul.f32 %v1499, %v1612
        %v1615 = vadd.f32 %v1609, %v1613
        %v1616 = vadd.f32 %v1610, %v1614
        %s1617 = sld [smem:[#allocation9 + $0x10]]
        %v1618 = vstv %s1617
        %v1619 = vmul.f32 %v1506, %v1618
        %v1620 = vmul.f32 %v1507, %v1618
        %v1621 = vadd.f32 %v1615, %v1619
        %v1622 = vadd.f32 %v1616, %v1620
        %s1623 = sld [smem:[#allocation9 + $0x11]]
        %v1624 = vstv %s1623
        %v1625 = vmul.f32 %v1514, %v1624
        %v1626 = vmul.f32 %v1515, %v1624
        %v1627 = vadd.f32 %v1621, %v1625
        %v1628 = vadd.f32 %v1622, %v1626
        %s1629 = sld [smem:[#allocation9 + $0x12]]
        %v1630 = vstv %s1629
        %v1631 = vmul.f32 %v1522, %v1630
        %v1632 = vmul.f32 %v1523, %v1630
        %v1633 = vadd.f32 %v1627, %v1631
        %v1634 = vadd.f32 %v1628, %v1632
        %s1635 = sld [smem:[#allocation9 + $0x13]]
        %v1636 = vstv %s1635
        %v1637 = vmul.f32 %v1530, %v1636
        %v1638 = vmul.f32 %v1531, %v1636
        %v1639 = vadd.f32 %v1633, %v1637
        %v1640 = vadd.f32 %v1634, %v1638
        %s1641 = sld [smem:[#allocation9 + $0x14]]
        %v1642 = vstv %s1641
        %v1643 = vmul.f32 %v1538, %v1642
        %v1644 = vmul.f32 %v1539, %v1642
        %v1645 = vadd.f32 %v1639, %v1643
        %v1646 = vadd.f32 %v1640, %v1644
        %s1647 = sld [smem:[#allocation9 + $0x15]]
        %v1648 = vstv %s1647
        %v1649 = vmul.f32 %v1546, %v1648
        %v1650 = vmul.f32 %v1547, %v1648
        %v1651 = vadd.f32 %v1645, %v1649
        %v1652 = vadd.f32 %v1646, %v1650
        %s1653 = sld [smem:[#allocation9 + $0x16]]
        %v1654 = vstv %s1653
        %v1655 = vmul.f32 %v1554, %v1654
        %v1656 = vmul.f32 %v1555, %v1654
        %v1657 = vadd.f32 %v1651, %v1655
        %v1658 = vadd.f32 %v1652, %v1656
        %s1659 = sld [smem:[#allocation9 + $0x17]]
        %v1660 = vstv %s1659
        %v1661 = vmul.f32 %v1562, %v1660
        %v1662 = vmul.f32 %v1563, %v1660
        %v1663 = vadd.f32 %v1657, %v1661
        %v1664 = vadd.f32 %v1658, %v1662
        %s1665 = sld [smem:[#allocation10 + $0x1]]
        %v1666 = vstv %s1665
        %v1667 = vadd.f32 %v1663, %v1666
        %v1668 = vadd.f32 %v1664, %v1666
        %v1669 = vmax.f32 %v1667, 0.0
        %v1670 = vmax.f32 %v1668, 0.0
        %v1671 = vpack.c.bf16 %v1669, %v1669
        %v1672 = vpack.c.bf16 %v1670, %v1670
        %s1673 = scalar_lea.vmem %s5, 136
        %v1674 = vld [vmem:[%s1673] sm:$0xff]
        %v1675 = vld [vmem:[%s1673 + $0x8] sm:$0xff]
        %v1676 = vld [vmem:[%s1673 + $0x10] sm:$0xff]
        %v1677 = vld [vmem:[%s1673 + $0x18] sm:$0xff]
        %v1678 = vld [vmem:[%s1673 + $0x20] sm:$0xff]
        %v1679 = vld [vmem:[%s1673 + $0x28] sm:$0xff]
        %v1680 = vld [vmem:[%s1673 + $0x30] sm:$0xff]
        %v1681 = vld [vmem:[%s1673 + $0x38] sm:$0xff]
        %v1682 = vld [vmem:[%s1673 + $0x40] sm:$0xff]
        %v1683 = vld [vmem:[%s1673 + $0x48] sm:$0xff]
        %v1684 = vld [vmem:[%s1673 + $0x50] sm:$0xff]
        %v1685 = vld [vmem:[%s1673 + $0x58] sm:$0xff]
        %v1686 = vld [vmem:[%s1673 + $0x60] sm:$0xff]
        %v1687 = vld [vmem:[%s1673 + $0x68] sm:$0xff]
        %v1688 = vld [vmem:[%s1673 + $0x70] sm:$0xff]
        %v1689 = vld [vmem:[%s1673 + $0x78] sm:$0xff]
        %v1690 = vld [vmem:[%s1673 + $0x80] sm:$0x77]
        %v1708 = vunpack.c.l.b16 %v1674
        %v1709 = vunpack.c.h.b16 %v1674
        %v1710 = vunpack.c.l.b16 %v1675
        %v1711 = vunpack.c.h.b16 %v1675
        %v1712 = vunpack.c.l.b16 %v1676
        %v1713 = vunpack.c.h.b16 %v1676
        %v1714 = vunpack.c.l.b16 %v1677
        %v1715 = vunpack.c.h.b16 %v1677
        %v1716 = vunpack.c.l.b16 %v1678
        %v1717 = vunpack.c.h.b16 %v1678
        %v1718 = vunpack.c.l.b16 %v1679
        %v1719 = vunpack.c.h.b16 %v1679
        %v1720 = vunpack.c.l.b16 %v1680
        %v1721 = vunpack.c.h.b16 %v1680
        %v1722 = vunpack.c.l.b16 %v1681
        %v1723 = vunpack.c.h.b16 %v1681
        %v1724 = vunpack.c.l.b16 %v1682
        %v1725 = vunpack.c.h.b16 %v1682
        %v1726 = vunpack.c.l.b16 %v1683
        %v1727 = vunpack.c.h.b16 %v1683
        %v1728 = vunpack.c.l.b16 %v1684
        %v1729 = vunpack.c.h.b16 %v1684
        %v1730 = vunpack.c.l.b16 %v1685
        %v1731 = vunpack.c.h.b16 %v1685
        %v1732 = vunpack.c.l.b16 %v1686
        %v1733 = vunpack.c.h.b16 %v1686
        %v1734 = vunpack.c.l.b16 %v1687
        %v1735 = vunpack.c.h.b16 %v1687
        %v1736 = vunpack.c.l.b16 %v1688
        %v1737 = vunpack.c.h.b16 %v1688
        %v1738 = vunpack.c.l.b16 %v1689
        %v1739 = vunpack.c.h.b16 %v1689
        %v1740 = vunpack.c.l.b16 %v1690
        %v1741 = vunpack.c.h.b16 %v1690
        %v1742 = vpack.c.b16 %v1710, %v1708
        %v1743 = vpack.c.b16 %v1711, %v1709
        %v1744 = vpack.c.b16 %v1714, %v1712
        %v1745 = vpack.c.b16 %v1715, %v1713
        %v1746 = vpack.c.b16 %v1718, %v1716
        %v1747 = vpack.c.b16 %v1719, %v1717
        %v1748 = vpack.c.b16 %v1722, %v1720
        %v1749 = vpack.c.b16 %v1723, %v1721
        %v1750 = vpack.c.b16 %v1726, %v1724
        %v1751 = vpack.c.b16 %v1727, %v1725
        %v1752 = vpack.c.b16 %v1730, %v1728
        %v1753 = vpack.c.b16 %v1731, %v1729
        %v1754 = vpack.c.b16 %v1734, %v1732
        %v1755 = vpack.c.b16 %v1735, %v1733
        %v1756 = vpack.c.b16 %v1738, %v1736
        %v1757 = vpack.c.b16 %v1739, %v1737
        %v1758 = vpack.c.b16 %v1740, %v1740
        %v1759 = vpack.c.b16 %v1741, %v1741
        %v1777 = vsel %vm685, %v1672, 0
        %vm1779 = vcmask 1042432
        %v1781 = vsel %vm1779, %v1758, 0
        %v1784 = vsel %vm1779, %v1759, 0
        %1786 = vmatprep.subr.bf16.mxu0 %v1757
        %1787 = vmatpush1.bf16.msra.mxu0 %v1756
        %1788 = vmatprep.subr.bf16.mxu0 %v1755
        %1789 = vmatpush1.bf16.msra.mxu0 %v1754
        %1790 = vmatprep.subr.bf16.mxu0 %v1753
        %1791 = vmatpush1.bf16.msra.mxu0 %v1752
        %1792 = vmatprep.subr.bf16.mxu0 %v1751
        %1793 = vmatpush1.bf16.msra.mxu0 %v1750
        %1794 = vmatprep.subr.bf16.mxu0 %v1749
        %1795 = vmatpush1.bf16.msra.mxu0 %v1748
        %1796 = vmatprep.subr.bf16.mxu0 %v1747
        %1797 = vmatpush1.bf16.msra.mxu0 %v1746
        %1798 = vmatprep.subr.bf16.mxu0 %v1745
        %1799 = vmatpush1.bf16.msra.mxu0 %v1744
        %1800 = vmatprep.subr.bf16.mxu0 %v1743
        %1801 = vmatpush1.bf16.msra.mxu0 %v1742
        %1802 = vmatprep.subr.bf16.mxu0 0
        %1803 = vmatpush2.bf16.msra.mxu0 0
        %1804 = vmatprep.subr.bf16.mxu0 0
        %1805 = vmatpush2.bf16.msra.mxu0 0
        %1806 = vmatprep.subr.bf16.mxu0 0
        %1807 = vmatpush2.bf16.msra.mxu0 0
        %1808 = vmatprep.subr.bf16.mxu0 0
        %1809 = vmatpush2.bf16.msra.mxu0 0
        %1810 = vmatprep.subr.bf16.mxu0 0
        %1811 = vmatpush2.bf16.msra.mxu0 0
        %1812 = vmatprep.subr.bf16.mxu0 0
        %1813 = vmatpush2.bf16.msra.mxu0 0
        %1814 = vmatprep.subr.bf16.mxu0 0
        %1815 = vmatpush2.bf16.msra.mxu0 0
        %1816 = vmatprep.subr.bf16.mxu0 %v1784
        %1817 = vmatpush2.bf16.msra.mxu0 %v1781
        %1818 = vmatprep.mubr.bf16.mxu0 %v1777
        %1819 = vmatmul.mubr.bf16.gmra.mxu0 %v1671
        %v1820 = vpop.f32.mrf.mxu0
        %v1821 = vadd.f32 0.0, %v1820
        %v1822 = vpop.f32.mrf.mxu0
        %v1823 = vadd.f32 0.0, %v1822
        %v1824 = vpop.f32.mrf.mxu0
        %v1825 = vpop.f32.mrf.mxu0
        %1826 = vdwg.mxu0
        %v1844 = vunpack.c.l.b16 %v1578
        %v1845 = vunpack.c.h.b16 %v1578
        %v1846 = vunpack.c.l.b16 %v1579
        %v1847 = vunpack.c.h.b16 %v1579
        %v1848 = vunpack.c.l.b16 %v1580
        %v1849 = vunpack.c.h.b16 %v1580
        %v1850 = vunpack.c.l.b16 %v1581
        %v1851 = vunpack.c.h.b16 %v1581
        %v1852 = vunpack.c.l.b16 %v1582
        %v1853 = vunpack.c.h.b16 %v1582
        %v1854 = vunpack.c.l.b16 %v1583
        %v1855 = vunpack.c.h.b16 %v1583
        %v1856 = vunpack.c.l.b16 %v1584
        %v1857 = vunpack.c.h.b16 %v1584
        %v1858 = vunpack.c.l.b16 %v1585
        %v1859 = vunpack.c.h.b16 %v1585
        %v1860 = vunpack.c.l.b16 %v1586
        %v1861 = vunpack.c.h.b16 %v1586
        %v1862 = vunpack.c.l.b16 %v1587
        %v1863 = vunpack.c.h.b16 %v1587
        %v1864 = vunpack.c.l.b16 %v1588
        %v1865 = vunpack.c.h.b16 %v1588
        %v1866 = vunpack.c.l.b16 %v1589
        %v1867 = vunpack.c.h.b16 %v1589
        %v1868 = vunpack.c.l.b16 %v1590
        %v1869 = vunpack.c.h.b16 %v1590
        %v1870 = vunpack.c.l.b16 %v1591
        %v1871 = vunpack.c.h.b16 %v1591
        %v1872 = vunpack.c.l.b16 %v1592
        %v1873 = vunpack.c.h.b16 %v1592
        %v1874 = vunpack.c.l.b16 %v1593
        %v1875 = vunpack.c.h.b16 %v1593
        %v1876 = vunpack.c.l.b16 %v1594
        %v1877 = vunpack.c.h.b16 %v1594
        %v1878 = vpack.c.b16 %v1846, %v1844
        %v1879 = vpack.c.b16 %v1847, %v1845
        %v1880 = vpack.c.b16 %v1850, %v1848
        %v1881 = vpack.c.b16 %v1851, %v1849
        %v1882 = vpack.c.b16 %v1854, %v1852
        %v1883 = vpack.c.b16 %v1855, %v1853
        %v1884 = vpack.c.b16 %v1858, %v1856
        %v1885 = vpack.c.b16 %v1859, %v1857
        %v1886 = vpack.c.b16 %v1862, %v1860
        %v1887 = vpack.c.b16 %v1863, %v1861
        %v1888 = vpack.c.b16 %v1866, %v1864
        %v1889 = vpack.c.b16 %v1867, %v1865
        %v1890 = vpack.c.b16 %v1870, %v1868
        %v1891 = vpack.c.b16 %v1871, %v1869
        %v1892 = vpack.c.b16 %v1874, %v1872
        %v1893 = vpack.c.b16 %v1875, %v1873
        %v1894 = vpack.c.b16 %v1876, %v1876
        %v1895 = vpack.c.b16 %v1877, %v1877
        %v1913 = vsel %vm685, %v1577, 0
        %v1916 = vsel %vm1779, %v1894, 0
        %v1919 = vsel %vm1779, %v1895, 0
        %1921 = vmatprep.subr.bf16.mxu0 %v1893
        %1922 = vmatpush1.bf16.msra.mxu0 %v1892
        %1923 = vmatprep.subr.bf16.mxu0 %v1891
        %1924 = vmatpush1.bf16.msra.mxu0 %v1890
        %1925 = vmatprep.subr.bf16.mxu0 %v1889
        %1926 = vmatpush1.bf16.msra.mxu0 %v1888
        %1927 = vmatprep.subr.bf16.mxu0 %v1887
        %1928 = vmatpush1.bf16.msra.mxu0 %v1886
        %1929 = vmatprep.subr.bf16.mxu0 %v1885
        %1930 = vmatpush1.bf16.msra.mxu0 %v1884
        %1931 = vmatprep.subr.bf16.mxu0 %v1883
        %1932 = vmatpush1.bf16.msra.mxu0 %v1882
        %1933 = vmatprep.subr.bf16.mxu0 %v1881
        %1934 = vmatpush1.bf16.msra.mxu0 %v1880
        %1935 = vmatprep.subr.bf16.mxu0 %v1879
        %1936 = vmatpush1.bf16.msra.mxu0 %v1878
        %1937 = vmatprep.subr.bf16.mxu0 0
        %1938 = vmatpush2.bf16.msra.mxu0 0
        %1939 = vmatprep.subr.bf16.mxu0 0
        %1940 = vmatpush2.bf16.msra.mxu0 0
        %1941 = vmatprep.subr.bf16.mxu0 0
        %1942 = vmatpush2.bf16.msra.mxu0 0
        %1943 = vmatprep.subr.bf16.mxu0 0
        %1944 = vmatpush2.bf16.msra.mxu0 0
        %1945 = vmatprep.subr.bf16.mxu0 0
        %1946 = vmatpush2.bf16.msra.mxu0 0
        %1947 = vmatprep.subr.bf16.mxu0 0
        %1948 = vmatpush2.bf16.msra.mxu0 0
        %1949 = vmatprep.subr.bf16.mxu0 0
        %1950 = vmatpush2.bf16.msra.mxu0 0
        %1951 = vmatprep.subr.bf16.mxu0 %v1919
        %1952 = vmatpush2.bf16.msra.mxu0 %v1916
        %1953 = vmatprep.mubr.bf16.mxu0 %v1913
        %1954 = vmatmul.mubr.bf16.gmra.mxu0 %v1576
        %v1955 = vpop.f32.mrf.mxu0
        %v1956 = vadd.f32 %v1821, %v1955
        %v1957 = vpop.f32.mrf.mxu0
        %v1958 = vadd.f32 %v1823, %v1957
        %v1959 = vpop.f32.mrf.mxu0
        %v1960 = vpop.f32.mrf.mxu0
        %1961 = vdwg.mxu0
        %s1962 = sld [smem:[#allocation9 + $0x18]]
        %v1963 = vstv %s1962
        %v1964 = vmul.f32 %v1476, %v1963
        %v1965 = vmul.f32 %v1477, %v1963
        %s1966 = sld [smem:[#allocation9 + $0x19]]
        %v1967 = vstv %s1966
        %v1968 = vmul.f32 %v1482, %v1967
        %v1969 = vmul.f32 %v1483, %v1967
        %v1970 = vadd.f32 %v1964, %v1968
        %v1971 = vadd.f32 %v1965, %v1969
        %s1972 = sld [smem:[#allocation9 + $0x1a]]
        %v1973 = vstv %s1972
        %v1974 = vmul.f32 %v1490, %v1973
        %v1975 = vmul.f32 %v1491, %v1973
        %v1976 = vadd.f32 %v1970, %v1974
        %v1977 = vadd.f32 %v1971, %v1975
        %s1978 = sld [smem:[#allocation9 + $0x1b]]
        %v1979 = vstv %s1978
        %v1980 = vmul.f32 %v1498, %v1979
        %v1981 = vmul.f32 %v1499, %v1979
        %v1982 = vadd.f32 %v1976, %v1980
        %v1983 = vadd.f32 %v1977, %v1981
        %s1984 = sld [smem:[#allocation9 + $0x1c]]
        %v1985 = vstv %s1984
        %v1986 = vmul.f32 %v1506, %v1985
        %v1987 = vmul.f32 %v1507, %v1985
        %v1988 = vadd.f32 %v1982, %v1986
        %v1989 = vadd.f32 %v1983, %v1987
        %s1990 = sld [smem:[#allocation9 + $0x1d]]
        %v1991 = vstv %s1990
        %v1992 = vmul.f32 %v1514, %v1991
        %v1993 = vmul.f32 %v1515, %v1991
        %v1994 = vadd.f32 %v1988, %v1992
        %v1995 = vadd.f32 %v1989, %v1993
        %s1996 = sld [smem:[#allocation9 + $0x1e]]
        %v1997 = vstv %s1996
        %v1998 = vmul.f32 %v1522, %v1997
        %v1999 = vmul.f32 %v1523, %v1997
        %v2000 = vadd.f32 %v1994, %v1998
        %v2001 = vadd.f32 %v1995, %v1999
        %s2002 = sld [smem:[#allocation9 + $0x1f]]
        %v2003 = vstv %s2002
        %v2004 = vmul.f32 %v1530, %v2003
        %v2005 = vmul.f32 %v1531, %v2003
        %v2006 = vadd.f32 %v2000, %v2004
        %v2007 = vadd.f32 %v2001, %v2005
        %s2008 = sld [smem:[#allocation9 + $0x20]]
        %v2009 = vstv %s2008
        %v2010 = vmul.f32 %v1538, %v2009
        %v2011 = vmul.f32 %v1539, %v2009
        %v2012 = vadd.f32 %v2006, %v2010
        %v2013 = vadd.f32 %v2007, %v2011
        %s2014 = sld [smem:[#allocation9 + $0x21]]
        %v2015 = vstv %s2014
        %v2016 = vmul.f32 %v1546, %v2015
        %v2017 = vmul.f32 %v1547, %v2015
        %v2018 = vadd.f32 %v2012, %v2016
        %v2019 = vadd.f32 %v2013, %v2017
        %s2020 = sld [smem:[#allocation9 + $0x22]]
        %v2021 = vstv %s2020
        %v2022 = vmul.f32 %v1554, %v2021
        %v2023 = vmul.f32 %v1555, %v2021
        %v2024 = vadd.f32 %v2018, %v2022
        %v2025 = vadd.f32 %v2019, %v2023
        %s2026 = sld [smem:[#allocation9 + $0x23]]
        %v2027 = vstv %s2026
        %v2028 = vmul.f32 %v1562, %v2027
        %v2029 = vmul.f32 %v1563, %v2027
        %v2030 = vadd.f32 %v2024, %v2028
        %v2031 = vadd.f32 %v2025, %v2029
        %s2032 = sld [smem:[#allocation10 + $0x2]]
        %v2033 = vstv %s2032
        %v2034 = vadd.f32 %v2030, %v2033
        %v2035 = vadd.f32 %v2031, %v2033
        %v2036 = vmax.f32 %v2034, 0.0
        %v2037 = vmax.f32 %v2035, 0.0
        %v2038 = vpack.c.bf16 %v2036, %v2036
        %v2039 = vpack.c.bf16 %v2037, %v2037
        %s2040 = scalar_lea.vmem %s5, 272
        %v2041 = vld [vmem:[%s2040] sm:$0xff]
        %v2042 = vld [vmem:[%s2040 + $0x8] sm:$0xff]
        %v2043 = vld [vmem:[%s2040 + $0x10] sm:$0xff]
        %v2044 = vld [vmem:[%s2040 + $0x18] sm:$0xff]
        %v2045 = vld [vmem:[%s2040 + $0x20] sm:$0xff]
        %v2046 = vld [vmem:[%s2040 + $0x28] sm:$0xff]
        %v2047 = vld [vmem:[%s2040 + $0x30] sm:$0xff]
        %v2048 = vld [vmem:[%s2040 + $0x38] sm:$0xff]
        %v2049 = vld [vmem:[%s2040 + $0x40] sm:$0xff]
        %v2050 = vld [vmem:[%s2040 + $0x48] sm:$0xff]
        %v2051 = vld [vmem:[%s2040 + $0x50] sm:$0xff]
        %v2052 = vld [vmem:[%s2040 + $0x58] sm:$0xff]
        %v2053 = vld [vmem:[%s2040 + $0x60] sm:$0xff]
        %v2054 = vld [vmem:[%s2040 + $0x68] sm:$0xff]
        %v2055 = vld [vmem:[%s2040 + $0x70] sm:$0xff]
        %v2056 = vld [vmem:[%s2040 + $0x78] sm:$0xff]
        %v2057 = vld [vmem:[%s2040 + $0x80] sm:$0x77]
        %v2075 = vunpack.c.l.b16 %v2041
        %v2076 = vunpack.c.h.b16 %v2041
        %v2077 = vunpack.c.l.b16 %v2042
        %v2078 = vunpack.c.h.b16 %v2042
        %v2079 = vunpack.c.l.b16 %v2043
        %v2080 = vunpack.c.h.b16 %v2043
        %v2081 = vunpack.c.l.b16 %v2044
        %v2082 = vunpack.c.h.b16 %v2044
        %v2083 = vunpack.c.l.b16 %v2045
        %v2084 = vunpack.c.h.b16 %v2045
        %v2085 = vunpack.c.l.b16 %v2046
        %v2086 = vunpack.c.h.b16 %v2046
        %v2087 = vunpack.c.l.b16 %v2047
        %v2088 = vunpack.c.h.b16 %v2047
        %v2089 = vunpack.c.l.b16 %v2048
        %v2090 = vunpack.c.h.b16 %v2048
        %v2091 = vunpack.c.l.b16 %v2049
        %v2092 = vunpack.c.h.b16 %v2049
        %v2093 = vunpack.c.l.b16 %v2050
        %v2094 = vunpack.c.h.b16 %v2050
        %v2095 = vunpack.c.l.b16 %v2051
        %v2096 = vunpack.c.h.b16 %v2051
        %v2097 = vunpack.c.l.b16 %v2052
        %v2098 = vunpack.c.h.b16 %v2052
        %v2099 = vunpack.c.l.b16 %v2053
        %v2100 = vunpack.c.h.b16 %v2053
        %v2101 = vunpack.c.l.b16 %v2054
        %v2102 = vunpack.c.h.b16 %v2054
        %v2103 = vunpack.c.l.b16 %v2055
        %v2104 = vunpack.c.h.b16 %v2055
        %v2105 = vunpack.c.l.b16 %v2056
        %v2106 = vunpack.c.h.b16 %v2056
        %v2107 = vunpack.c.l.b16 %v2057
        %v2108 = vunpack.c.h.b16 %v2057
        %v2109 = vpack.c.b16 %v2077, %v2075
        %v2110 = vpack.c.b16 %v2078, %v2076
        %v2111 = vpack.c.b16 %v2081, %v2079
        %v2112 = vpack.c.b16 %v2082, %v2080
        %v2113 = vpack.c.b16 %v2085, %v2083
        %v2114 = vpack.c.b16 %v2086, %v2084
        %v2115 = vpack.c.b16 %v2089, %v2087
        %v2116 = vpack.c.b16 %v2090, %v2088
        %v2117 = vpack.c.b16 %v2093, %v2091
        %v2118 = vpack.c.b16 %v2094, %v2092
        %v2119 = vpack.c.b16 %v2097, %v2095
        %v2120 = vpack.c.b16 %v2098, %v2096
        %v2121 = vpack.c.b16 %v2101, %v2099
        %v2122 = vpack.c.b16 %v2102, %v2100
        %v2123 = vpack.c.b16 %v2105, %v2103
        %v2124 = vpack.c.b16 %v2106, %v2104
        %v2125 = vpack.c.b16 %v2107, %v2107
        %v2126 = vpack.c.b16 %v2108, %v2108
        %v2144 = vsel %vm685, %v2039, 0
        %v2147 = vsel %vm1779, %v2125, 0
        %v2150 = vsel %vm1779, %v2126, 0
        %2152 = vmatprep.subr.bf16.mxu0 %v2124
        %2153 = vmatpush1.bf16.msra.mxu0 %v2123
        %2154 = vmatprep.subr.bf16.mxu0 %v2122
        %2155 = vmatpush1.bf16.msra.mxu0 %v2121
        %2156 = vmatprep.subr.bf16.mxu0 %v2120
        %2157 = vmatpush1.bf16.msra.mxu0 %v2119
        %2158 = vmatprep.subr.bf16.mxu0 %v2118
        %2159 = vmatpush1.bf16.msra.mxu0 %v2117
        %2160 = vmatprep.subr.bf16.mxu0 %v2116
        %2161 = vmatpush1.bf16.msra.mxu0 %v2115
        %2162 = vmatprep.subr.bf16.mxu0 %v2114
        %2163 = vmatpush1.bf16.msra.mxu0 %v2113
        %2164 = vmatprep.subr.bf16.mxu0 %v2112
        %2165 = vmatpush1.bf16.msra.mxu0 %v2111
        %2166 = vmatprep.subr.bf16.mxu0 %v2110
        %2167 = vmatpush1.bf16.msra.mxu0 %v2109
        %2168 = vmatprep.subr.bf16.mxu0 0
        %2169 = vmatpush2.bf16.msra.mxu0 0
        %2170 = vmatprep.subr.bf16.mxu0 0
        %2171 = vmatpush2.bf16.msra.mxu0 0
        %2172 = vmatprep.subr.bf16.mxu0 0
        %2173 = vmatpush2.bf16.msra.mxu0 0
        %2174 = vmatprep.subr.bf16.mxu0 0
        %2175 = vmatpush2.bf16.msra.mxu0 0
        %2176 = vmatprep.subr.bf16.mxu0 0
        %2177 = vmatpush2.bf16.msra.mxu0 0
        %2178 = vmatprep.subr.bf16.mxu0 0
        %2179 = vmatpush2.bf16.msra.mxu0 0
        %2180 = vmatprep.subr.bf16.mxu0 0
        %2181 = vmatpush2.bf16.msra.mxu0 0
        %2182 = vmatprep.subr.bf16.mxu0 %v2150
        %2183 = vmatpush2.bf16.msra.mxu0 %v2147
        %2184 = vmatprep.mubr.bf16.mxu0 %v2144
        %2185 = vmatmul.mubr.bf16.gmra.mxu0 %v2038
        %v2186 = vpop.f32.mrf.mxu0
        %v2187 = vadd.f32 0.0, %v2186
        %v2188 = vpop.f32.mrf.mxu0
        %v2189 = vadd.f32 0.0, %v2188
        %v2190 = vpop.f32.mrf.mxu0
        %v2191 = vpop.f32.mrf.mxu0
        %2192 = vdwg.mxu0
        %v2193 = vadd.f32 %v1956, %v2187
        %v2194 = vadd.f32 %v1958, %v2189
        %s2195 = sld [smem:[#allocation9 + $0x24]]
        %v2196 = vstv %s2195
        %v2197 = vmul.f32 %v1476, %v2196
        %v2198 = vmul.f32 %v1477, %v2196
        %s2199 = sld [smem:[#allocation9 + $0x25]]
        %v2200 = vstv %s2199
        %v2201 = vmul.f32 %v1482, %v2200
        %v2202 = vmul.f32 %v1483, %v2200
        %v2203 = vadd.f32 %v2197, %v2201
        %v2204 = vadd.f32 %v2198, %v2202
        %s2205 = sld [smem:[#allocation9 + $0x26]]
        %v2206 = vstv %s2205
        %v2207 = vmul.f32 %v1490, %v2206
        %v2208 = vmul.f32 %v1491, %v2206
        %v2209 = vadd.f32 %v2203, %v2207
        %v2210 = vadd.f32 %v2204, %v2208
        %s2211 = sld [smem:[#allocation9 + $0x27]]
        %v2212 = vstv %s2211
        %v2213 = vmul.f32 %v1498, %v2212
        %v2214 = vmul.f32 %v1499, %v2212
        %v2215 = vadd.f32 %v2209, %v2213
        %v2216 = vadd.f32 %v2210, %v2214
        %s2217 = sld [smem:[#allocation9 + $0x28]]
        %v2218 = vstv %s2217
        %v2219 = vmul.f32 %v1506, %v2218
        %v2220 = vmul.f32 %v1507, %v2218
        %v2221 = vadd.f32 %v2215, %v2219
        %v2222 = vadd.f32 %v2216, %v2220
        %s2223 = sld [smem:[#allocation9 + $0x29]]
        %v2224 = vstv %s2223
        %v2225 = vmul.f32 %v1514, %v2224
        %v2226 = vmul.f32 %v1515, %v2224
        %v2227 = vadd.f32 %v2221, %v2225
        %v2228 = vadd.f32 %v2222, %v2226
        %s2229 = sld [smem:[#allocation9 + $0x2a]]
        %v2230 = vstv %s2229
        %v2231 = vmul.f32 %v1522, %v2230
        %v2232 = vmul.f32 %v1523, %v2230
        %v2233 = vadd.f32 %v2227, %v2231
        %v2234 = vadd.f32 %v2228, %v2232
        %s2235 = sld [smem:[#allocation9 + $0x2b]]
        %v2236 = vstv %s2235
        %v2237 = vmul.f32 %v1530, %v2236
        %v2238 = vmul.f32 %v1531, %v2236
        %v2239 = vadd.f32 %v2233, %v2237
        %v2240 = vadd.f32 %v2234, %v2238
        %s2241 = sld [smem:[#allocation9 + $0x2c]]
        %v2242 = vstv %s2241
        %v2243 = vmul.f32 %v1538, %v2242
        %v2244 = vmul.f32 %v1539, %v2242
        %v2245 = vadd.f32 %v2239, %v2243
        %v2246 = vadd.f32 %v2240, %v2244
        %s2247 = sld [smem:[#allocation9 + $0x2d]]
        %v2248 = vstv %s2247
        %v2249 = vmul.f32 %v1546, %v2248
        %v2250 = vmul.f32 %v1547, %v2248
        %v2251 = vadd.f32 %v2245, %v2249
        %v2252 = vadd.f32 %v2246, %v2250
        %s2253 = sld [smem:[#allocation9 + $0x2e]]
        %v2254 = vstv %s2253
        %v2255 = vmul.f32 %v1554, %v2254
        %v2256 = vmul.f32 %v1555, %v2254
        %v2257 = vadd.f32 %v2251, %v2255
        %v2258 = vadd.f32 %v2252, %v2256
        %s2259 = sld [smem:[#allocation9 + $0x2f]]
        %v2260 = vstv %s2259
        %v2261 = vmul.f32 %v1562, %v2260
        %v2262 = vmul.f32 %v1563, %v2260
        %v2263 = vadd.f32 %v2257, %v2261
        %v2264 = vadd.f32 %v2258, %v2262
        %s2265 = sld [smem:[#allocation10 + $0x3]]
        %v2266 = vstv %s2265
        %v2267 = vadd.f32 %v2263, %v2266
        %v2268 = vadd.f32 %v2264, %v2266
        %v2269 = vmax.f32 %v2267, 0.0
        %v2270 = vmax.f32 %v2268, 0.0
        %v2271 = vpack.c.bf16 %v2269, %v2269
        %v2272 = vpack.c.bf16 %v2270, %v2270
        %s2273 = scalar_lea.vmem %s5, 408
        %v2274 = vld [vmem:[%s2273] sm:$0xff]
        %v2275 = vld [vmem:[%s2273 + $0x8] sm:$0xff]
        %v2276 = vld [vmem:[%s2273 + $0x10] sm:$0xff]
        %v2277 = vld [vmem:[%s2273 + $0x18] sm:$0xff]
        %v2278 = vld [vmem:[%s2273 + $0x20] sm:$0xff]
        %v2279 = vld [vmem:[%s2273 + $0x28] sm:$0xff]
        %v2280 = vld [vmem:[%s2273 + $0x30] sm:$0xff]
        %v2281 = vld [vmem:[%s2273 + $0x38] sm:$0xff]
        %v2282 = vld [vmem:[%s2273 + $0x40] sm:$0xff]
        %v2283 = vld [vmem:[%s2273 + $0x48] sm:$0xff]
        %v2284 = vld [vmem:[%s2273 + $0x50] sm:$0xff]
        %v2285 = vld [vmem:[%s2273 + $0x58] sm:$0xff]
        %v2286 = vld [vmem:[%s2273 + $0x60] sm:$0xff]
        %v2287 = vld [vmem:[%s2273 + $0x68] sm:$0xff]
        %v2288 = vld [vmem:[%s2273 + $0x70] sm:$0xff]
        %v2289 = vld [vmem:[%s2273 + $0x78] sm:$0xff]
        %v2290 = vld [vmem:[%s2273 + $0x80] sm:$0x77]
        %v2308 = vunpack.c.l.b16 %v2274
        %v2309 = vunpack.c.h.b16 %v2274
        %v2310 = vunpack.c.l.b16 %v2275
        %v2311 = vunpack.c.h.b16 %v2275
        %v2312 = vunpack.c.l.b16 %v2276
        %v2313 = vunpack.c.h.b16 %v2276
        %v2314 = vunpack.c.l.b16 %v2277
        %v2315 = vunpack.c.h.b16 %v2277
        %v2316 = vunpack.c.l.b16 %v2278
        %v2317 = vunpack.c.h.b16 %v2278
        %v2318 = vunpack.c.l.b16 %v2279
        %v2319 = vunpack.c.h.b16 %v2279
        %v2320 = vunpack.c.l.b16 %v2280
        %v2321 = vunpack.c.h.b16 %v2280
        %v2322 = vunpack.c.l.b16 %v2281
        %v2323 = vunpack.c.h.b16 %v2281
        %v2324 = vunpack.c.l.b16 %v2282
        %v2325 = vunpack.c.h.b16 %v2282
        %v2326 = vunpack.c.l.b16 %v2283
        %v2327 = vunpack.c.h.b16 %v2283
        %v2328 = vunpack.c.l.b16 %v2284
        %v2329 = vunpack.c.h.b16 %v2284
        %v2330 = vunpack.c.l.b16 %v2285
        %v2331 = vunpack.c.h.b16 %v2285
        %v2332 = vunpack.c.l.b16 %v2286
        %v2333 = vunpack.c.h.b16 %v2286
        %v2334 = vunpack.c.l.b16 %v2287
        %v2335 = vunpack.c.h.b16 %v2287
        %v2336 = vunpack.c.l.b16 %v2288
        %v2337 = vunpack.c.h.b16 %v2288
        %v2338 = vunpack.c.l.b16 %v2289
        %v2339 = vunpack.c.h.b16 %v2289
        %v2340 = vunpack.c.l.b16 %v2290
        %v2341 = vunpack.c.h.b16 %v2290
        %v2342 = vpack.c.b16 %v2310, %v2308
        %v2343 = vpack.c.b16 %v2311, %v2309
        %v2344 = vpack.c.b16 %v2314, %v2312
        %v2345 = vpack.c.b16 %v2315, %v2313
        %v2346 = vpack.c.b16 %v2318, %v2316
        %v2347 = vpack.c.b16 %v2319, %v2317
        %v2348 = vpack.c.b16 %v2322, %v2320
        %v2349 = vpack.c.b16 %v2323, %v2321
        %v2350 = vpack.c.b16 %v2326, %v2324
        %v2351 = vpack.c.b16 %v2327, %v2325
        %v2352 = vpack.c.b16 %v2330, %v2328
        %v2353 = vpack.c.b16 %v2331, %v2329
        %v2354 = vpack.c.b16 %v2334, %v2332
        %v2355 = vpack.c.b16 %v2335, %v2333
        %v2356 = vpack.c.b16 %v2338, %v2336
        %v2357 = vpack.c.b16 %v2339, %v2337
        %v2358 = vpack.c.b16 %v2340, %v2340
        %v2359 = vpack.c.b16 %v2341, %v2341
        %v2377 = vsel %vm685, %v2272, 0
        %v2380 = vsel %vm1779, %v2358, 0
        %v2383 = vsel %vm1779, %v2359, 0
        %2385 = vmatprep.subr.bf16.mxu0 %v2357
        %2386 = vmatpush1.bf16.msra.mxu0 %v2356
        %2387 = vmatprep.subr.bf16.mxu0 %v2355
        %2388 = vmatpush1.bf16.msra.mxu0 %v2354
        %2389 = vmatprep.subr.bf16.mxu0 %v2353
        %2390 = vmatpush1.bf16.msra.mxu0 %v2352
        %2391 = vmatprep.subr.bf16.mxu0 %v2351
        %2392 = vmatpush1.bf16.msra.mxu0 %v2350
        %2393 = vmatprep.subr.bf16.mxu0 %v2349
        %2394 = vmatpush1.bf16.msra.mxu0 %v2348
        %2395 = vmatprep.subr.bf16.mxu0 %v2347
        %2396 = vmatpush1.bf16.msra.mxu0 %v2346
        %2397 = vmatprep.subr.bf16.mxu0 %v2345
        %2398 = vmatpush1.bf16.msra.mxu0 %v2344
        %2399 = vmatprep.subr.bf16.mxu0 %v2343
        %2400 = vmatpush1.bf16.msra.mxu0 %v2342
        %2401 = vmatprep.subr.bf16.mxu0 0
        %2402 = vmatpush2.bf16.msra.mxu0 0
        %2403 = vmatprep.subr.bf16.mxu0 0
        %2404 = vmatpush2.bf16.msra.mxu0 0
        %2405 = vmatprep.subr.bf16.mxu0 0
        %2406 = vmatpush2.bf16.msra.mxu0 0
        %2407 = vmatprep.subr.bf16.mxu0 0
        %2408 = vmatpush2.bf16.msra.mxu0 0
        %2409 = vmatprep.subr.bf16.mxu0 0
        %2410 = vmatpush2.bf16.msra.mxu0 0
        %2411 = vmatprep.subr.bf16.mxu0 0
        %2412 = vmatpush2.bf16.msra.mxu0 0
        %2413 = vmatprep.subr.bf16.mxu0 0
        %2414 = vmatpush2.bf16.msra.mxu0 0
        %2415 = vmatprep.subr.bf16.mxu0 %v2383
        %2416 = vmatpush2.bf16.msra.mxu0 %v2380
        %2417 = vmatprep.mubr.bf16.mxu0 %v2377
        %2418 = vmatmul.mubr.bf16.gmra.mxu0 %v2271
        %v2419 = vpop.f32.mrf.mxu0
        %v2420 = vadd.f32 0.0, %v2419
        %v2421 = vpop.f32.mrf.mxu0
        %v2422 = vadd.f32 0.0, %v2421
        %v2423 = vpop.f32.mrf.mxu0
        %v2424 = vpop.f32.mrf.mxu0
        %2425 = vdwg.mxu0
        %v2426 = vadd.f32 %v2193, %v2420
        %v2427 = vadd.f32 %v2194, %v2422
        %s2428 = sld [smem:[#allocation9 + $0x30]]
        %v2429 = vstv %s2428
        %v2430 = vmul.f32 %v1476, %v2429
        %v2431 = vmul.f32 %v1477, %v2429
        %s2432 = sld [smem:[#allocation9 + $0x31]]
        %v2433 = vstv %s2432
        %v2434 = vmul.f32 %v1482, %v2433
        %v2435 = vmul.f32 %v1483, %v2433
        %v2436 = vadd.f32 %v2430, %v2434
        %v2437 = vadd.f32 %v2431, %v2435
        %s2438 = sld [smem:[#allocation9 + $0x32]]
        %v2439 = vstv %s2438
        %v2440 = vmul.f32 %v1490, %v2439
        %v2441 = vmul.f32 %v1491, %v2439
        %v2442 = vadd.f32 %v2436, %v2440
        %v2443 = vadd.f32 %v2437, %v2441
        %s2444 = sld [smem:[#allocation9 + $0x33]]
        %v2445 = vstv %s2444
        %v2446 = vmul.f32 %v1498, %v2445
        %v2447 = vmul.f32 %v1499, %v2445
        %v2448 = vadd.f32 %v2442, %v2446
        %v2449 = vadd.f32 %v2443, %v2447
        %s2450 = sld [smem:[#allocation9 + $0x34]]
        %v2451 = vstv %s2450
        %v2452 = vmul.f32 %v1506, %v2451
        %v2453 = vmul.f32 %v1507, %v2451
        %v2454 = vadd.f32 %v2448, %v2452
        %v2455 = vadd.f32 %v2449, %v2453
        %s2456 = sld [smem:[#allocation9 + $0x35]]
        %v2457 = vstv %s2456
        %v2458 = vmul.f32 %v1514, %v2457
        %v2459 = vmul.f32 %v1515, %v2457
        %v2460 = vadd.f32 %v2454, %v2458
        %v2461 = vadd.f32 %v2455, %v2459
        %s2462 = sld [smem:[#allocation9 + $0x36]]
        %v2463 = vstv %s2462
        %v2464 = vmul.f32 %v1522, %v2463
        %v2465 = vmul.f32 %v1523, %v2463
        %v2466 = vadd.f32 %v2460, %v2464
        %v2467 = vadd.f32 %v2461, %v2465
        %s2468 = sld [smem:[#allocation9 + $0x37]]
        %v2469 = vstv %s2468
        %v2470 = vmul.f32 %v1530, %v2469
        %v2471 = vmul.f32 %v1531, %v2469
        %v2472 = vadd.f32 %v2466, %v2470
        %v2473 = vadd.f32 %v2467, %v2471
        %s2474 = sld [smem:[#allocation9 + $0x38]]
        %v2475 = vstv %s2474
        %v2476 = vmul.f32 %v1538, %v2475
        %v2477 = vmul.f32 %v1539, %v2475
        %v2478 = vadd.f32 %v2472, %v2476
        %v2479 = vadd.f32 %v2473, %v2477
        %s2480 = sld [smem:[#allocation9 + $0x39]]
        %v2481 = vstv %s2480
        %v2482 = vmul.f32 %v1546, %v2481
        %v2483 = vmul.f32 %v1547, %v2481
        %v2484 = vadd.f32 %v2478, %v2482
        %v2485 = vadd.f32 %v2479, %v2483
        %s2486 = sld [smem:[#allocation9 + $0x3a]]
        %v2487 = vstv %s2486
        %v2488 = vmul.f32 %v1554, %v2487
        %v2489 = vmul.f32 %v1555, %v2487
        %v2490 = vadd.f32 %v2484, %v2488
        %v2491 = vadd.f32 %v2485, %v2489
        %s2492 = sld [smem:[#allocation9 + $0x3b]]
        %v2493 = vstv %s2492
        %v2494 = vmul.f32 %v1562, %v2493
        %v2495 = vmul.f32 %v1563, %v2493
        %v2496 = vadd.f32 %v2490, %v2494
        %v2497 = vadd.f32 %v2491, %v2495
        %s2498 = sld [smem:[#allocation10 + $0x4]]
        %v2499 = vstv %s2498
        %v2500 = vadd.f32 %v2496, %v2499
        %v2501 = vadd.f32 %v2497, %v2499
        %v2502 = vmax.f32 %v2500, 0.0
        %v2503 = vmax.f32 %v2501, 0.0
        %v2504 = vpack.c.bf16 %v2502, %v2502
        %v2505 = vpack.c.bf16 %v2503, %v2503
        %s2506 = scalar_lea.vmem %s5, 544
        %v2507 = vld [vmem:[%s2506] sm:$0xff]
        %v2508 = vld [vmem:[%s2506 + $0x8] sm:$0xff]
        %v2509 = vld [vmem:[%s2506 + $0x10] sm:$0xff]
        %v2510 = vld [vmem:[%s2506 + $0x18] sm:$0xff]
        %v2511 = vld [vmem:[%s2506 + $0x20] sm:$0xff]
        %v2512 = vld [vmem:[%s2506 + $0x28] sm:$0xff]
        %v2513 = vld [vmem:[%s2506 + $0x30] sm:$0xff]
        %v2514 = vld [vmem:[%s2506 + $0x38] sm:$0xff]
        %v2515 = vld [vmem:[%s2506 + $0x40] sm:$0xff]
        %v2516 = vld [vmem:[%s2506 + $0x48] sm:$0xff]
        %v2517 = vld [vmem:[%s2506 + $0x50] sm:$0xff]
        %v2518 = vld [vmem:[%s2506 + $0x58] sm:$0xff]
        %v2519 = vld [vmem:[%s2506 + $0x60] sm:$0xff]
        %v2520 = vld [vmem:[%s2506 + $0x68] sm:$0xff]
        %v2521 = vld [vmem:[%s2506 + $0x70] sm:$0xff]
        %v2522 = vld [vmem:[%s2506 + $0x78] sm:$0xff]
        %v2523 = vld [vmem:[%s2506 + $0x80] sm:$0x77]
        %v2541 = vunpack.c.l.b16 %v2507
        %v2542 = vunpack.c.h.b16 %v2507
        %v2543 = vunpack.c.l.b16 %v2508
        %v2544 = vunpack.c.h.b16 %v2508
        %v2545 = vunpack.c.l.b16 %v2509
        %v2546 = vunpack.c.h.b16 %v2509
        %v2547 = vunpack.c.l.b16 %v2510
        %v2548 = vunpack.c.h.b16 %v2510
        %v2549 = vunpack.c.l.b16 %v2511
        %v2550 = vunpack.c.h.b16 %v2511
        %v2551 = vunpack.c.l.b16 %v2512
        %v2552 = vunpack.c.h.b16 %v2512
        %v2553 = vunpack.c.l.b16 %v2513
        %v2554 = vunpack.c.h.b16 %v2513
        %v2555 = vunpack.c.l.b16 %v2514
        %v2556 = vunpack.c.h.b16 %v2514
        %v2557 = vunpack.c.l.b16 %v2515
        %v2558 = vunpack.c.h.b16 %v2515
        %v2559 = vunpack.c.l.b16 %v2516
        %v2560 = vunpack.c.h.b16 %v2516
        %v2561 = vunpack.c.l.b16 %v2517
        %v2562 = vunpack.c.h.b16 %v2517
        %v2563 = vunpack.c.l.b16 %v2518
        %v2564 = vunpack.c.h.b16 %v2518
        %v2565 = vunpack.c.l.b16 %v2519
        %v2566 = vunpack.c.h.b16 %v2519
        %v2567 = vunpack.c.l.b16 %v2520
        %v2568 = vunpack.c.h.b16 %v2520
        %v2569 = vunpack.c.l.b16 %v2521
        %v2570 = vunpack.c.h.b16 %v2521
        %v2571 = vunpack.c.l.b16 %v2522
        %v2572 = vunpack.c.h.b16 %v2522
        %v2573 = vunpack.c.l.b16 %v2523
        %v2574 = vunpack.c.h.b16 %v2523
        %v2575 = vpack.c.b16 %v2543, %v2541
        %v2576 = vpack.c.b16 %v2544, %v2542
        %v2577 = vpack.c.b16 %v2547, %v2545
        %v2578 = vpack.c.b16 %v2548, %v2546
        %v2579 = vpack.c.b16 %v2551, %v2549
        %v2580 = vpack.c.b16 %v2552, %v2550
        %v2581 = vpack.c.b16 %v2555, %v2553
        %v2582 = vpack.c.b16 %v2556, %v2554
        %v2583 = vpack.c.b16 %v2559, %v2557
        %v2584 = vpack.c.b16 %v2560, %v2558
        %v2585 = vpack.c.b16 %v2563, %v2561
        %v2586 = vpack.c.b16 %v2564, %v2562
        %v2587 = vpack.c.b16 %v2567, %v2565
        %v2588 = vpack.c.b16 %v2568, %v2566
        %v2589 = vpack.c.b16 %v2571, %v2569
        %v2590 = vpack.c.b16 %v2572, %v2570
        %v2591 = vpack.c.b16 %v2573, %v2573
        %v2592 = vpack.c.b16 %v2574, %v2574
        %v2610 = vsel %vm685, %v2505, 0
        %v2613 = vsel %vm1779, %v2591, 0
        %v2616 = vsel %vm1779, %v2592, 0
        %2618 = vmatprep.subr.bf16.mxu0 %v2590
        %2619 = vmatpush1.bf16.msra.mxu0 %v2589
        %2620 = vmatprep.subr.bf16.mxu0 %v2588
        %2621 = vmatpush1.bf16.msra.mxu0 %v2587
        %2622 = vmatprep.subr.bf16.mxu0 %v2586
        %2623 = vmatpush1.bf16.msra.mxu0 %v2585
        %2624 = vmatprep.subr.bf16.mxu0 %v2584
        %2625 = vmatpush1.bf16.msra.mxu0 %v2583
        %2626 = vmatprep.subr.bf16.mxu0 %v2582
        %2627 = vmatpush1.bf16.msra.mxu0 %v2581
        %2628 = vmatprep.subr.bf16.mxu0 %v2580
        %2629 = vmatpush1.bf16.msra.mxu0 %v2579
        %2630 = vmatprep.subr.bf16.mxu0 %v2578
        %2631 = vmatpush1.bf16.msra.mxu0 %v2577
        %2632 = vmatprep.subr.bf16.mxu0 %v2576
        %2633 = vmatpush1.bf16.msra.mxu0 %v2575
        %2634 = vmatprep.subr.bf16.mxu0 0
        %2635 = vmatpush2.bf16.msra.mxu0 0
        %2636 = vmatprep.subr.bf16.mxu0 0
        %2637 = vmatpush2.bf16.msra.mxu0 0
        %2638 = vmatprep.subr.bf16.mxu0 0
        %2639 = vmatpush2.bf16.msra.mxu0 0
        %2640 = vmatprep.subr.bf16.mxu0 0
        %2641 = vmatpush2.bf16.msra.mxu0 0
        %2642 = vmatprep.subr.bf16.mxu0 0
        %2643 = vmatpush2.bf16.msra.mxu0 0
        %2644 = vmatprep.subr.bf16.mxu0 0
        %2645 = vmatpush2.bf16.msra.mxu0 0
        %2646 = vmatprep.subr.bf16.mxu0 0
        %2647 = vmatpush2.bf16.msra.mxu0 0
        %2648 = vmatprep.subr.bf16.mxu0 %v2616
        %2649 = vmatpush2.bf16.msra.mxu0 %v2613
        %2650 = vmatprep.mubr.bf16.mxu0 %v2610
        %2651 = vmatmul.mubr.bf16.gmra.mxu0 %v2504
        %v2652 = vpop.f32.mrf.mxu0
        %v2653 = vadd.f32 0.0, %v2652
        %v2654 = vpop.f32.mrf.mxu0
        %v2655 = vadd.f32 0.0, %v2654
        %v2656 = vpop.f32.mrf.mxu0
        %v2657 = vpop.f32.mrf.mxu0
        %2658 = vdwg.mxu0
        %v2659 = vadd.f32 %v2426, %v2653
        %v2660 = vadd.f32 %v2427, %v2655
        %s2661 = sld [smem:[#allocation9 + $0x3c]]
        %v2662 = vstv %s2661
        %v2663 = vmul.f32 %v1476, %v2662
        %v2664 = vmul.f32 %v1477, %v2662
        %s2665 = sld [smem:[#allocation9 + $0x3d]]
        %v2666 = vstv %s2665
        %v2667 = vmul.f32 %v1482, %v2666
        %v2668 = vmul.f32 %v1483, %v2666
        %v2669 = vadd.f32 %v2663, %v2667
        %v2670 = vadd.f32 %v2664, %v2668
        %s2671 = sld [smem:[#allocation9 + $0x3e]]
        %v2672 = vstv %s2671
        %v2673 = vmul.f32 %v1490, %v2672
        %v2674 = vmul.f32 %v1491, %v2672
        %v2675 = vadd.f32 %v2669, %v2673
        %v2676 = vadd.f32 %v2670, %v2674
        %s2677 = sld [smem:[#allocation9 + $0x3f]]
        %v2678 = vstv %s2677
        %v2679 = vmul.f32 %v1498, %v2678
        %v2680 = vmul.f32 %v1499, %v2678
        %v2681 = vadd.f32 %v2675, %v2679
        %v2682 = vadd.f32 %v2676, %v2680
        %s2683 = sld [smem:[#allocation9 + $0x40]]
        %v2684 = vstv %s2683
        %v2685 = vmul.f32 %v1506, %v2684
        %v2686 = vmul.f32 %v1507, %v2684
        %v2687 = vadd.f32 %v2681, %v2685
        %v2688 = vadd.f32 %v2682, %v2686
        %s2689 = sld [smem:[#allocation9 + $0x41]]
        %v2690 = vstv %s2689
        %v2691 = vmul.f32 %v1514, %v2690
        %v2692 = vmul.f32 %v1515, %v2690
        %v2693 = vadd.f32 %v2687, %v2691
        %v2694 = vadd.f32 %v2688, %v2692
        %s2695 = sld [smem:[#allocation9 + $0x42]]
        %v2696 = vstv %s2695
        %v2697 = vmul.f32 %v1522, %v2696
        %v2698 = vmul.f32 %v1523, %v2696
        %v2699 = vadd.f32 %v2693, %v2697
        %v2700 = vadd.f32 %v2694, %v2698
        %s2701 = sld [smem:[#allocation9 + $0x43]]
        %v2702 = vstv %s2701
        %v2703 = vmul.f32 %v1530, %v2702
        %v2704 = vmul.f32 %v1531, %v2702
        %v2705 = vadd.f32 %v2699, %v2703
        %v2706 = vadd.f32 %v2700, %v2704
        %s2707 = sld [smem:[#allocation9 + $0x44]]
        %v2708 = vstv %s2707
        %v2709 = vmul.f32 %v1538, %v2708
        %v2710 = vmul.f32 %v1539, %v2708
        %v2711 = vadd.f32 %v2705, %v2709
        %v2712 = vadd.f32 %v2706, %v2710
        %s2713 = sld [smem:[#allocation9 + $0x45]]
        %v2714 = vstv %s2713
        %v2715 = vmul.f32 %v1546, %v2714
        %v2716 = vmul.f32 %v1547, %v2714
        %v2717 = vadd.f32 %v2711, %v2715
        %v2718 = vadd.f32 %v2712, %v2716
        %s2719 = sld [smem:[#allocation9 + $0x46]]
        %v2720 = vstv %s2719
        %v2721 = vmul.f32 %v1554, %v2720
        %v2722 = vmul.f32 %v1555, %v2720
        %v2723 = vadd.f32 %v2717, %v2721
        %v2724 = vadd.f32 %v2718, %v2722
        %s2725 = sld [smem:[#allocation9 + $0x47]]
        %v2726 = vstv %s2725
        %v2727 = vmul.f32 %v1562, %v2726
        %v2728 = vmul.f32 %v1563, %v2726
        %v2729 = vadd.f32 %v2723, %v2727
        %v2730 = vadd.f32 %v2724, %v2728
        %s2731 = sld [smem:[#allocation10 + $0x5]]
        %v2732 = vstv %s2731
        %v2733 = vadd.f32 %v2729, %v2732
        %v2734 = vadd.f32 %v2730, %v2732
        %v2735 = vmax.f32 %v2733, 0.0
        %v2736 = vmax.f32 %v2734, 0.0
        %v2737 = vpack.c.bf16 %v2735, %v2735
        %v2738 = vpack.c.bf16 %v2736, %v2736
        %s2739 = scalar_lea.vmem %s5, 680
        %v2740 = vld [vmem:[%s2739] sm:$0xff]
        %v2741 = vld [vmem:[%s2739 + $0x8] sm:$0xff]
        %v2742 = vld [vmem:[%s2739 + $0x10] sm:$0xff]
        %v2743 = vld [vmem:[%s2739 + $0x18] sm:$0xff]
        %v2744 = vld [vmem:[%s2739 + $0x20] sm:$0xff]
        %v2745 = vld [vmem:[%s2739 + $0x28] sm:$0xff]
        %v2746 = vld [vmem:[%s2739 + $0x30] sm:$0xff]
        %v2747 = vld [vmem:[%s2739 + $0x38] sm:$0xff]
        %v2748 = vld [vmem:[%s2739 + $0x40] sm:$0xff]
        %v2749 = vld [vmem:[%s2739 + $0x48] sm:$0xff]
        %v2750 = vld [vmem:[%s2739 + $0x50] sm:$0xff]
        %v2751 = vld [vmem:[%s2739 + $0x58] sm:$0xff]
        %v2752 = vld [vmem:[%s2739 + $0x60] sm:$0xff]
        %v2753 = vld [vmem:[%s2739 + $0x68] sm:$0xff]
        %v2754 = vld [vmem:[%s2739 + $0x70] sm:$0xff]
        %v2755 = vld [vmem:[%s2739 + $0x78] sm:$0xff]
        %v2756 = vld [vmem:[%s2739 + $0x80] sm:$0x77]
        %v2774 = vunpack.c.l.b16 %v2740
        %v2775 = vunpack.c.h.b16 %v2740
        %v2776 = vunpack.c.l.b16 %v2741
        %v2777 = vunpack.c.h.b16 %v2741
        %v2778 = vunpack.c.l.b16 %v2742
        %v2779 = vunpack.c.h.b16 %v2742
        %v2780 = vunpack.c.l.b16 %v2743
        %v2781 = vunpack.c.h.b16 %v2743
        %v2782 = vunpack.c.l.b16 %v2744
        %v2783 = vunpack.c.h.b16 %v2744
        %v2784 = vunpack.c.l.b16 %v2745
        %v2785 = vunpack.c.h.b16 %v2745
        %v2786 = vunpack.c.l.b16 %v2746
        %v2787 = vunpack.c.h.b16 %v2746
        %v2788 = vunpack.c.l.b16 %v2747
        %v2789 = vunpack.c.h.b16 %v2747
        %v2790 = vunpack.c.l.b16 %v2748
        %v2791 = vunpack.c.h.b16 %v2748
        %v2792 = vunpack.c.l.b16 %v2749
        %v2793 = vunpack.c.h.b16 %v2749
        %v2794 = vunpack.c.l.b16 %v2750
        %v2795 = vunpack.c.h.b16 %v2750
        %v2796 = vunpack.c.l.b16 %v2751
        %v2797 = vunpack.c.h.b16 %v2751
        %v2798 = vunpack.c.l.b16 %v2752
        %v2799 = vunpack.c.h.b16 %v2752
        %v2800 = vunpack.c.l.b16 %v2753
        %v2801 = vunpack.c.h.b16 %v2753
        %v2802 = vunpack.c.l.b16 %v2754
        %v2803 = vunpack.c.h.b16 %v2754
        %v2804 = vunpack.c.l.b16 %v2755
        %v2805 = vunpack.c.h.b16 %v2755
        %v2806 = vunpack.c.l.b16 %v2756
        %v2807 = vunpack.c.h.b16 %v2756
        %v2808 = vpack.c.b16 %v2776, %v2774
        %v2809 = vpack.c.b16 %v2777, %v2775
        %v2810 = vpack.c.b16 %v2780, %v2778
        %v2811 = vpack.c.b16 %v2781, %v2779
        %v2812 = vpack.c.b16 %v2784, %v2782
        %v2813 = vpack.c.b16 %v2785, %v2783
        %v2814 = vpack.c.b16 %v2788, %v2786
        %v2815 = vpack.c.b16 %v2789, %v2787
        %v2816 = vpack.c.b16 %v2792, %v2790
        %v2817 = vpack.c.b16 %v2793, %v2791
        %v2818 = vpack.c.b16 %v2796, %v2794
        %v2819 = vpack.c.b16 %v2797, %v2795
        %v2820 = vpack.c.b16 %v2800, %v2798
        %v2821 = vpack.c.b16 %v2801, %v2799
        %v2822 = vpack.c.b16 %v2804, %v2802
        %v2823 = vpack.c.b16 %v2805, %v2803
        %v2824 = vpack.c.b16 %v2806, %v2806
        %v2825 = vpack.c.b16 %v2807, %v2807
        %v2843 = vsel %vm685, %v2738, 0
        %v2846 = vsel %vm1779, %v2824, 0
        %v2849 = vsel %vm1779, %v2825, 0
        %2851 = vmatprep.subr.bf16.mxu0 %v2823
        %2852 = vmatpush1.bf16.msra.mxu0 %v2822
        %2853 = vmatprep.subr.bf16.mxu0 %v2821
        %2854 = vmatpush1.bf16.msra.mxu0 %v2820
        %2855 = vmatprep.subr.bf16.mxu0 %v2819
        %2856 = vmatpush1.bf16.msra.mxu0 %v2818
        %2857 = vmatprep.subr.bf16.mxu0 %v2817
        %2858 = vmatpush1.bf16.msra.mxu0 %v2816
        %2859 = vmatprep.subr.bf16.mxu0 %v2815
        %2860 = vmatpush1.bf16.msra.mxu0 %v2814
        %2861 = vmatprep.subr.bf16.mxu0 %v2813
        %2862 = vmatpush1.bf16.msra.mxu0 %v2812
        %2863 = vmatprep.subr.bf16.mxu0 %v2811
        %2864 = vmatpush1.bf16.msra.mxu0 %v2810
        %2865 = vmatprep.subr.bf16.mxu0 %v2809
        %2866 = vmatpush1.bf16.msra.mxu0 %v2808
        %2867 = vmatprep.subr.bf16.mxu0 0
        %2868 = vmatpush2.bf16.msra.mxu0 0
        %2869 = vmatprep.subr.bf16.mxu0 0
        %2870 = vmatpush2.bf16.msra.mxu0 0
        %2871 = vmatprep.subr.bf16.mxu0 0
        %2872 = vmatpush2.bf16.msra.mxu0 0
        %2873 = vmatprep.subr.bf16.mxu0 0
        %2874 = vmatpush2.bf16.msra.mxu0 0
        %2875 = vmatprep.subr.bf16.mxu0 0
        %2876 = vmatpush2.bf16.msra.mxu0 0
        %2877 = vmatprep.subr.bf16.mxu0 0
        %2878 = vmatpush2.bf16.msra.mxu0 0
        %2879 = vmatprep.subr.bf16.mxu0 0
        %2880 = vmatpush2.bf16.msra.mxu0 0
        %2881 = vmatprep.subr.bf16.mxu0 %v2849
        %2882 = vmatpush2.bf16.msra.mxu0 %v2846
        %2883 = vmatprep.mubr.bf16.mxu0 %v2843
        %2884 = vmatmul.mubr.bf16.gmra.mxu0 %v2737
        %v2885 = vpop.f32.mrf.mxu0
        %v2886 = vadd.f32 0.0, %v2885
        %v2887 = vpop.f32.mrf.mxu0
        %v2888 = vadd.f32 0.0, %v2887
        %v2889 = vpop.f32.mrf.mxu0
        %v2890 = vpop.f32.mrf.mxu0
        %2891 = vdwg.mxu0
        %v2892 = vadd.f32 %v2659, %v2886
        %v2893 = vadd.f32 %v2660, %v2888
        %s2894 = sld [smem:[#allocation9 + $0x48]]
        %v2895 = vstv %s2894
        %v2896 = vmul.f32 %v1476, %v2895
        %v2897 = vmul.f32 %v1477, %v2895
        %s2898 = sld [smem:[#allocation9 + $0x49]]
        %v2899 = vstv %s2898
        %v2900 = vmul.f32 %v1482, %v2899
        %v2901 = vmul.f32 %v1483, %v2899
        %v2902 = vadd.f32 %v2896, %v2900
        %v2903 = vadd.f32 %v2897, %v2901
        %s2904 = sld [smem:[#allocation9 + $0x4a]]
        %v2905 = vstv %s2904
        %v2906 = vmul.f32 %v1490, %v2905
        %v2907 = vmul.f32 %v1491, %v2905
        %v2908 = vadd.f32 %v2902, %v2906
        %v2909 = vadd.f32 %v2903, %v2907
        %s2910 = sld [smem:[#allocation9 + $0x4b]]
        %v2911 = vstv %s2910
        %v2912 = vmul.f32 %v1498, %v2911
        %v2913 = vmul.f32 %v1499, %v2911
        %v2914 = vadd.f32 %v2908, %v2912
        %v2915 = vadd.f32 %v2909, %v2913
        %s2916 = sld [smem:[#allocation9 + $0x4c]]
        %v2917 = vstv %s2916
        %v2918 = vmul.f32 %v1506, %v2917
        %v2919 = vmul.f32 %v1507, %v2917
        %v2920 = vadd.f32 %v2914, %v2918
        %v2921 = vadd.f32 %v2915, %v2919
        %s2922 = sld [smem:[#allocation9 + $0x4d]]
        %v2923 = vstv %s2922
        %v2924 = vmul.f32 %v1514, %v2923
        %v2925 = vmul.f32 %v1515, %v2923
        %v2926 = vadd.f32 %v2920, %v2924
        %v2927 = vadd.f32 %v2921, %v2925
        %s2928 = sld [smem:[#allocation9 + $0x4e]]
        %v2929 = vstv %s2928
        %v2930 = vmul.f32 %v1522, %v2929
        %v2931 = vmul.f32 %v1523, %v2929
        %v2932 = vadd.f32 %v2926, %v2930
        %v2933 = vadd.f32 %v2927, %v2931
        %s2934 = sld [smem:[#allocation9 + $0x4f]]
        %v2935 = vstv %s2934
        %v2936 = vmul.f32 %v1530, %v2935
        %v2937 = vmul.f32 %v1531, %v2935
        %v2938 = vadd.f32 %v2932, %v2936
        %v2939 = vadd.f32 %v2933, %v2937
        %s2940 = sld [smem:[#allocation9 + $0x50]]
        %v2941 = vstv %s2940
        %v2942 = vmul.f32 %v1538, %v2941
        %v2943 = vmul.f32 %v1539, %v2941
        %v2944 = vadd.f32 %v2938, %v2942
        %v2945 = vadd.f32 %v2939, %v2943
        %s2946 = sld [smem:[#allocation9 + $0x51]]
        %v2947 = vstv %s2946
        %v2948 = vmul.f32 %v1546, %v2947
        %v2949 = vmul.f32 %v1547, %v2947
        %v2950 = vadd.f32 %v2944, %v2948
        %v2951 = vadd.f32 %v2945, %v2949
        %s2952 = sld [smem:[#allocation9 + $0x52]]
        %v2953 = vstv %s2952
        %v2954 = vmul.f32 %v1554, %v2953
        %v2955 = vmul.f32 %v1555, %v2953
        %v2956 = vadd.f32 %v2950, %v2954
        %v2957 = vadd.f32 %v2951, %v2955
        %s2958 = sld [smem:[#allocation9 + $0x53]]
        %v2959 = vstv %s2958
        %v2960 = vmul.f32 %v1562, %v2959
        %v2961 = vmul.f32 %v1563, %v2959
        %v2962 = vadd.f32 %v2956, %v2960
        %v2963 = vadd.f32 %v2957, %v2961
        %s2964 = sld [smem:[#allocation10 + $0x6]]
        %v2965 = vstv %s2964
        %v2966 = vadd.f32 %v2962, %v2965
        %v2967 = vadd.f32 %v2963, %v2965
        %v2968 = vmax.f32 %v2966, 0.0
        %v2969 = vmax.f32 %v2967, 0.0
        %v2970 = vpack.c.bf16 %v2968, %v2968
        %v2971 = vpack.c.bf16 %v2969, %v2969
        %s2972 = scalar_lea.vmem %s5, 816
        %v2973 = vld [vmem:[%s2972] sm:$0xff]
        %v2974 = vld [vmem:[%s2972 + $0x8] sm:$0xff]
        %v2975 = vld [vmem:[%s2972 + $0x10] sm:$0xff]
        %v2976 = vld [vmem:[%s2972 + $0x18] sm:$0xff]
        %v2977 = vld [vmem:[%s2972 + $0x20] sm:$0xff]
        %v2978 = vld [vmem:[%s2972 + $0x28] sm:$0xff]
        %v2979 = vld [vmem:[%s2972 + $0x30] sm:$0xff]
        %v2980 = vld [vmem:[%s2972 + $0x38] sm:$0xff]
        %v2981 = vld [vmem:[%s2972 + $0x40] sm:$0xff]
        %v2982 = vld [vmem:[%s2972 + $0x48] sm:$0xff]
        %v2983 = vld [vmem:[%s2972 + $0x50] sm:$0xff]
        %v2984 = vld [vmem:[%s2972 + $0x58] sm:$0xff]
        %v2985 = vld [vmem:[%s2972 + $0x60] sm:$0xff]
        %v2986 = vld [vmem:[%s2972 + $0x68] sm:$0xff]
        %v2987 = vld [vmem:[%s2972 + $0x70] sm:$0xff]
        %v2988 = vld [vmem:[%s2972 + $0x78] sm:$0xff]
        %v2989 = vld [vmem:[%s2972 + $0x80] sm:$0x77]
        %v3007 = vunpack.c.l.b16 %v2973
        %v3008 = vunpack.c.h.b16 %v2973
        %v3009 = vunpack.c.l.b16 %v2974
        %v3010 = vunpack.c.h.b16 %v2974
        %v3011 = vunpack.c.l.b16 %v2975
        %v3012 = vunpack.c.h.b16 %v2975
        %v3013 = vunpack.c.l.b16 %v2976
        %v3014 = vunpack.c.h.b16 %v2976
        %v3015 = vunpack.c.l.b16 %v2977
        %v3016 = vunpack.c.h.b16 %v2977
        %v3017 = vunpack.c.l.b16 %v2978
        %v3018 = vunpack.c.h.b16 %v2978
        %v3019 = vunpack.c.l.b16 %v2979
        %v3020 = vunpack.c.h.b16 %v2979
        %v3021 = vunpack.c.l.b16 %v2980
        %v3022 = vunpack.c.h.b16 %v2980
        %v3023 = vunpack.c.l.b16 %v2981
        %v3024 = vunpack.c.h.b16 %v2981
        %v3025 = vunpack.c.l.b16 %v2982
        %v3026 = vunpack.c.h.b16 %v2982
        %v3027 = vunpack.c.l.b16 %v2983
        %v3028 = vunpack.c.h.b16 %v2983
        %v3029 = vunpack.c.l.b16 %v2984
        %v3030 = vunpack.c.h.b16 %v2984
        %v3031 = vunpack.c.l.b16 %v2985
        %v3032 = vunpack.c.h.b16 %v2985
        %v3033 = vunpack.c.l.b16 %v2986
        %v3034 = vunpack.c.h.b16 %v2986
        %v3035 = vunpack.c.l.b16 %v2987
        %v3036 = vunpack.c.h.b16 %v2987
        %v3037 = vunpack.c.l.b16 %v2988
        %v3038 = vunpack.c.h.b16 %v2988
        %v3039 = vunpack.c.l.b16 %v2989
        %v3040 = vunpack.c.h.b16 %v2989
        %v3041 = vpack.c.b16 %v3009, %v3007
        %v3042 = vpack.c.b16 %v3010, %v3008
        %v3043 = vpack.c.b16 %v3013, %v3011
        %v3044 = vpack.c.b16 %v3014, %v3012
        %v3045 = vpack.c.b16 %v3017, %v3015
        %v3046 = vpack.c.b16 %v3018, %v3016
        %v3047 = vpack.c.b16 %v3021, %v3019
        %v3048 = vpack.c.b16 %v3022, %v3020
        %v3049 = vpack.c.b16 %v3025, %v3023
        %v3050 = vpack.c.b16 %v3026, %v3024
        %v3051 = vpack.c.b16 %v3029, %v3027
        %v3052 = vpack.c.b16 %v3030, %v3028
        %v3053 = vpack.c.b16 %v3033, %v3031
        %v3054 = vpack.c.b16 %v3034, %v3032
        %v3055 = vpack.c.b16 %v3037, %v3035
        %v3056 = vpack.c.b16 %v3038, %v3036
        %v3057 = vpack.c.b16 %v3039, %v3039
        %v3058 = vpack.c.b16 %v3040, %v3040
        %v3076 = vsel %vm685, %v2971, 0
        %v3079 = vsel %vm1779, %v3057, 0
        %v3082 = vsel %vm1779, %v3058, 0
        %3084 = vmatprep.subr.bf16.mxu0 %v3056
        %3085 = vmatpush1.bf16.msra.mxu0 %v3055
        %3086 = vmatprep.subr.bf16.mxu0 %v3054
        %3087 = vmatpush1.bf16.msra.mxu0 %v3053
        %3088 = vmatprep.subr.bf16.mxu0 %v3052
        %3089 = vmatpush1.bf16.msra.mxu0 %v3051
        %3090 = vmatprep.subr.bf16.mxu0 %v3050
        %3091 = vmatpush1.bf16.msra.mxu0 %v3049
        %3092 = vmatprep.subr.bf16.mxu0 %v3048
        %3093 = vmatpush1.bf16.msra.mxu0 %v3047
        %3094 = vmatprep.subr.bf16.mxu0 %v3046
        %3095 = vmatpush1.bf16.msra.mxu0 %v3045
        %3096 = vmatprep.subr.bf16.mxu0 %v3044
        %3097 = vmatpush1.bf16.msra.mxu0 %v3043
        %3098 = vmatprep.subr.bf16.mxu0 %v3042
        %3099 = vmatpush1.bf16.msra.mxu0 %v3041
        %3100 = vmatprep.subr.bf16.mxu0 0
        %3101 = vmatpush2.bf16.msra.mxu0 0
        %3102 = vmatprep.subr.bf16.mxu0 0
        %3103 = vmatpush2.bf16.msra.mxu0 0
        %3104 = vmatprep.subr.bf16.mxu0 0
        %3105 = vmatpush2.bf16.msra.mxu0 0
        %3106 = vmatprep.subr.bf16.mxu0 0
        %3107 = vmatpush2.bf16.msra.mxu0 0
        %3108 = vmatprep.subr.bf16.mxu0 0
        %3109 = vmatpush2.bf16.msra.mxu0 0
        %3110 = vmatprep.subr.bf16.mxu0 0
        %3111 = vmatpush2.bf16.msra.mxu0 0
        %3112 = vmatprep.subr.bf16.mxu0 0
        %3113 = vmatpush2.bf16.msra.mxu0 0
        %3114 = vmatprep.subr.bf16.mxu0 %v3082
        %3115 = vmatpush2.bf16.msra.mxu0 %v3079
        %3116 = vmatprep.mubr.bf16.mxu0 %v3076
        %3117 = vmatmul.mubr.bf16.gmra.mxu0 %v2970
        %v3118 = vpop.f32.mrf.mxu0
        %v3119 = vadd.f32 0.0, %v3118
        %v3120 = vpop.f32.mrf.mxu0
        %v3121 = vadd.f32 0.0, %v3120
        %v3122 = vpop.f32.mrf.mxu0
        %v3123 = vpop.f32.mrf.mxu0
        %3124 = vdwg.mxu0
        %v3125 = vadd.f32 %v2892, %v3119
        %v3126 = vadd.f32 %v2893, %v3121
        %s3127 = sld [smem:[#allocation9 + $0x54]]
        %v3128 = vstv %s3127
        %v3129 = vmul.f32 %v1476, %v3128
        %v3130 = vmul.f32 %v1477, %v3128
        %s3131 = sld [smem:[#allocation9 + $0x55]]
        %v3132 = vstv %s3131
        %v3133 = vmul.f32 %v1482, %v3132
        %v3134 = vmul.f32 %v1483, %v3132
        %v3135 = vadd.f32 %v3129, %v3133
        %v3136 = vadd.f32 %v3130, %v3134
        %s3137 = sld [smem:[#allocation9 + $0x56]]
        %v3138 = vstv %s3137
        %v3139 = vmul.f32 %v1490, %v3138
        %v3140 = vmul.f32 %v1491, %v3138
        %v3141 = vadd.f32 %v3135, %v3139
        %v3142 = vadd.f32 %v3136, %v3140
        %s3143 = sld [smem:[#allocation9 + $0x57]]
        %v3144 = vstv %s3143
        %v3145 = vmul.f32 %v1498, %v3144
        %v3146 = vmul.f32 %v1499, %v3144
        %v3147 = vadd.f32 %v3141, %v3145
        %v3148 = vadd.f32 %v3142, %v3146
        %s3149 = sld [smem:[#allocation9 + $0x58]]
        %v3150 = vstv %s3149
        %v3151 = vmul.f32 %v1506, %v3150
        %v3152 = vmul.f32 %v1507, %v3150
        %v3153 = vadd.f32 %v3147, %v3151
        %v3154 = vadd.f32 %v3148, %v3152
        %s3155 = sld [smem:[#allocation9 + $0x59]]
        %v3156 = vstv %s3155
        %v3157 = vmul.f32 %v1514, %v3156
        %v3158 = vmul.f32 %v1515, %v3156
        %v3159 = vadd.f32 %v3153, %v3157
        %v3160 = vadd.f32 %v3154, %v3158
        %s3161 = sld [smem:[#allocation9 + $0x5a]]
        %v3162 = vstv %s3161
        %v3163 = vmul.f32 %v1522, %v3162
        %v3164 = vmul.f32 %v1523, %v3162
        %v3165 = vadd.f32 %v3159, %v3163
        %v3166 = vadd.f32 %v3160, %v3164
        %s3167 = sld [smem:[#allocation9 + $0x5b]]
        %v3168 = vstv %s3167
        %v3169 = vmul.f32 %v1530, %v3168
        %v3170 = vmul.f32 %v1531, %v3168
        %v3171 = vadd.f32 %v3165, %v3169
        %v3172 = vadd.f32 %v3166, %v3170
        %s3173 = sld [smem:[#allocation9 + $0x5c]]
        %v3174 = vstv %s3173
        %v3175 = vmul.f32 %v1538, %v3174
        %v3176 = vmul.f32 %v1539, %v3174
        %v3177 = vadd.f32 %v3171, %v3175
        %v3178 = vadd.f32 %v3172, %v3176
        %s3179 = sld [smem:[#allocation9 + $0x5d]]
        %v3180 = vstv %s3179
        %v3181 = vmul.f32 %v1546, %v3180
        %v3182 = vmul.f32 %v1547, %v3180
        %v3183 = vadd.f32 %v3177, %v3181
        %v3184 = vadd.f32 %v3178, %v3182
        %s3185 = sld [smem:[#allocation9 + $0x5e]]
        %v3186 = vstv %s3185
        %v3187 = vmul.f32 %v1554, %v3186
        %v3188 = vmul.f32 %v1555, %v3186
        %v3189 = vadd.f32 %v3183, %v3187
        %v3190 = vadd.f32 %v3184, %v3188
        %s3191 = sld [smem:[#allocation9 + $0x5f]]
        %v3192 = vstv %s3191
        %v3193 = vmul.f32 %v1562, %v3192
        %v3194 = vmul.f32 %v1563, %v3192
        %v3195 = vadd.f32 %v3189, %v3193
        %v3196 = vadd.f32 %v3190, %v3194
        %s3197 = sld [smem:[#allocation10 + $0x7]]
        %v3198 = vstv %s3197
        %v3199 = vadd.f32 %v3195, %v3198
        %v3200 = vadd.f32 %v3196, %v3198
        %v3201 = vmax.f32 %v3199, 0.0
        %v3202 = vmax.f32 %v3200, 0.0
        %v3203 = vpack.c.bf16 %v3201, %v3201
        %v3204 = vpack.c.bf16 %v3202, %v3202
        %s3205 = scalar_lea.vmem %s5, 952
        %v3206 = vld [vmem:[%s3205] sm:$0xff]
        %v3207 = vld [vmem:[%s3205 + $0x8] sm:$0xff]
        %v3208 = vld [vmem:[%s3205 + $0x10] sm:$0xff]
        %v3209 = vld [vmem:[%s3205 + $0x18] sm:$0xff]
        %v3210 = vld [vmem:[%s3205 + $0x20] sm:$0xff]
        %v3211 = vld [vmem:[%s3205 + $0x28] sm:$0xff]
        %v3212 = vld [vmem:[%s3205 + $0x30] sm:$0xff]
        %v3213 = vld [vmem:[%s3205 + $0x38] sm:$0xff]
        %v3214 = vld [vmem:[%s3205 + $0x40] sm:$0xff]
        %v3215 = vld [vmem:[%s3205 + $0x48] sm:$0xff]
        %v3216 = vld [vmem:[%s3205 + $0x50] sm:$0xff]
        %v3217 = vld [vmem:[%s3205 + $0x58] sm:$0xff]
        %v3218 = vld [vmem:[%s3205 + $0x60] sm:$0xff]
        %v3219 = vld [vmem:[%s3205 + $0x68] sm:$0xff]
        %v3220 = vld [vmem:[%s3205 + $0x70] sm:$0xff]
        %v3221 = vld [vmem:[%s3205 + $0x78] sm:$0xff]
        %v3222 = vld [vmem:[%s3205 + $0x80] sm:$0x77]
        %v3240 = vunpack.c.l.b16 %v3206
        %v3241 = vunpack.c.h.b16 %v3206
        %v3242 = vunpack.c.l.b16 %v3207
        %v3243 = vunpack.c.h.b16 %v3207
        %v3244 = vunpack.c.l.b16 %v3208
        %v3245 = vunpack.c.h.b16 %v3208
        %v3246 = vunpack.c.l.b16 %v3209
        %v3247 = vunpack.c.h.b16 %v3209
        %v3248 = vunpack.c.l.b16 %v3210
        %v3249 = vunpack.c.h.b16 %v3210
        %v3250 = vunpack.c.l.b16 %v3211
        %v3251 = vunpack.c.h.b16 %v3211
        %v3252 = vunpack.c.l.b16 %v3212
        %v3253 = vunpack.c.h.b16 %v3212
        %v3254 = vunpack.c.l.b16 %v3213
        %v3255 = vunpack.c.h.b16 %v3213
        %v3256 = vunpack.c.l.b16 %v3214
        %v3257 = vunpack.c.h.b16 %v3214
        %v3258 = vunpack.c.l.b16 %v3215
        %v3259 = vunpack.c.h.b16 %v3215
        %v3260 = vunpack.c.l.b16 %v3216
        %v3261 = vunpack.c.h.b16 %v3216
        %v3262 = vunpack.c.l.b16 %v3217
        %v3263 = vunpack.c.h.b16 %v3217
        %v3264 = vunpack.c.l.b16 %v3218
        %v3265 = vunpack.c.h.b16 %v3218
        %v3266 = vunpack.c.l.b16 %v3219
        %v3267 = vunpack.c.h.b16 %v3219
        %v3268 = vunpack.c.l.b16 %v3220
        %v3269 = vunpack.c.h.b16 %v3220
        %v3270 = vunpack.c.l.b16 %v3221
        %v3271 = vunpack.c.h.b16 %v3221
        %v3272 = vunpack.c.l.b16 %v3222
        %v3273 = vunpack.c.h.b16 %v3222
        %v3274 = vpack.c.b16 %v3242, %v3240
        %v3275 = vpack.c.b16 %v3243, %v3241
        %v3276 = vpack.c.b16 %v3246, %v3244
        %v3277 = vpack.c.b16 %v3247, %v3245
        %v3278 = vpack.c.b16 %v3250, %v3248
        %v3279 = vpack.c.b16 %v3251, %v3249
        %v3280 = vpack.c.b16 %v3254, %v3252
        %v3281 = vpack.c.b16 %v3255, %v3253
        %v3282 = vpack.c.b16 %v3258, %v3256
        %v3283 = vpack.c.b16 %v3259, %v3257
        %v3284 = vpack.c.b16 %v3262, %v3260
        %v3285 = vpack.c.b16 %v3263, %v3261
        %v3286 = vpack.c.b16 %v3266, %v3264
        %v3287 = vpack.c.b16 %v3267, %v3265
        %v3288 = vpack.c.b16 %v3270, %v3268
        %v3289 = vpack.c.b16 %v3271, %v3269
        %v3290 = vpack.c.b16 %v3272, %v3272
        %v3291 = vpack.c.b16 %v3273, %v3273
        %v3309 = vsel %vm685, %v3204, 0
        %v3312 = vsel %vm1779, %v3290, 0
        %v3315 = vsel %vm1779, %v3291, 0
        %3317 = vmatprep.subr.bf16.mxu0 %v3289
        %3318 = vmatpush1.bf16.msra.mxu0 %v3288
        %3319 = vmatprep.subr.bf16.mxu0 %v3287
        %3320 = vmatpush1.bf16.msra.mxu0 %v3286
        %3321 = vmatprep.subr.bf16.mxu0 %v3285
        %3322 = vmatpush1.bf16.msra.mxu0 %v3284
        %3323 = vmatprep.subr.bf16.mxu0 %v3283
        %3324 = vmatpush1.bf16.msra.mxu0 %v3282
        %3325 = vmatprep.subr.bf16.mxu0 %v3281
        %3326 = vmatpush1.bf16.msra.mxu0 %v3280
        %3327 = vmatprep.subr.bf16.mxu0 %v3279
        %3328 = vmatpush1.bf16.msra.mxu0 %v3278
        %3329 = vmatprep.subr.bf16.mxu0 %v3277
        %3330 = vmatpush1.bf16.msra.mxu0 %v3276
        %3331 = vmatprep.subr.bf16.mxu0 %v3275
        %3332 = vmatpush1.bf16.msra.mxu0 %v3274
        %3333 = vmatprep.subr.bf16.mxu0 0
        %3334 = vmatpush2.bf16.msra.mxu0 0
        %3335 = vmatprep.subr.bf16.mxu0 0
        %3336 = vmatpush2.bf16.msra.mxu0 0
        %3337 = vmatprep.subr.bf16.mxu0 0
        %3338 = vmatpush2.bf16.msra.mxu0 0
        %3339 = vmatprep.subr.bf16.mxu0 0
        %3340 = vmatpush2.bf16.msra.mxu0 0
        %3341 = vmatprep.subr.bf16.mxu0 0
        %3342 = vmatpush2.bf16.msra.mxu0 0
        %3343 = vmatprep.subr.bf16.mxu0 0
        %3344 = vmatpush2.bf16.msra.mxu0 0
        %3345 = vmatprep.subr.bf16.mxu0 0
        %3346 = vmatpush2.bf16.msra.mxu0 0
        %3347 = vmatprep.subr.bf16.mxu0 %v3315
        %3348 = vmatpush2.bf16.msra.mxu0 %v3312
        %3349 = vmatprep.mubr.bf16.mxu0 %v3309
        %3350 = vmatmul.mubr.bf16.gmra.mxu0 %v3203
        %v3351 = vpop.f32.mrf.mxu0
        %v3352 = vadd.f32 0.0, %v3351
        %v3353 = vpop.f32.mrf.mxu0
        %v3354 = vadd.f32 0.0, %v3353
        %v3355 = vpop.f32.mrf.mxu0
        %v3356 = vpop.f32.mrf.mxu0
        %3357 = vdwg.mxu0
        %v3358 = vadd.f32 %v3125, %v3352
        %v3359 = vadd.f32 %v3126, %v3354
        %s3360 = sld [smem:[#allocation9 + $0x60]]
        %v3361 = vstv %s3360
        %v3362 = vmul.f32 %v1476, %v3361
        %v3363 = vmul.f32 %v1477, %v3361
        %s3364 = sld [smem:[#allocation9 + $0x61]]
        %v3365 = vstv %s3364
        %v3366 = vmul.f32 %v1482, %v3365
        %v3367 = vmul.f32 %v1483, %v3365
        %v3368 = vadd.f32 %v3362, %v3366
        %v3369 = vadd.f32 %v3363, %v3367
        %s3370 = sld [smem:[#allocation9 + $0x62]]
        %v3371 = vstv %s3370
        %v3372 = vmul.f32 %v1490, %v3371
        %v3373 = vmul.f32 %v1491, %v3371
        %v3374 = vadd.f32 %v3368, %v3372
        %v3375 = vadd.f32 %v3369, %v3373
        %s3376 = sld [smem:[#allocation9 + $0x63]]
        %v3377 = vstv %s3376
        %v3378 = vmul.f32 %v1498, %v3377
        %v3379 = vmul.f32 %v1499, %v3377
        %v3380 = vadd.f32 %v3374, %v3378
        %v3381 = vadd.f32 %v3375, %v3379
        %s3382 = sld [smem:[#allocation9 + $0x64]]
        %v3383 = vstv %s3382
        %v3384 = vmul.f32 %v1506, %v3383
        %v3385 = vmul.f32 %v1507, %v3383
        %v3386 = vadd.f32 %v3380, %v3384
        %v3387 = vadd.f32 %v3381, %v3385
        %s3388 = sld [smem:[#allocation9 + $0x65]]
        %v3389 = vstv %s3388
        %v3390 = vmul.f32 %v1514, %v3389
        %v3391 = vmul.f32 %v1515, %v3389
        %v3392 = vadd.f32 %v3386, %v3390
        %v3393 = vadd.f32 %v3387, %v3391
        %s3394 = sld [smem:[#allocation9 + $0x66]]
        %v3395 = vstv %s3394
        %v3396 = vmul.f32 %v1522, %v3395
        %v3397 = vmul.f32 %v1523, %v3395
        %v3398 = vadd.f32 %v3392, %v3396
        %v3399 = vadd.f32 %v3393, %v3397
        %s3400 = sld [smem:[#allocation9 + $0x67]]
        %v3401 = vstv %s3400
        %v3402 = vmul.f32 %v1530, %v3401
        %v3403 = vmul.f32 %v1531, %v3401
        %v3404 = vadd.f32 %v3398, %v3402
        %v3405 = vadd.f32 %v3399, %v3403
        %s3406 = sld [smem:[#allocation9 + $0x68]]
        %v3407 = vstv %s3406
        %v3408 = vmul.f32 %v1538, %v3407
        %v3409 = vmul.f32 %v1539, %v3407
        %v3410 = vadd.f32 %v3404, %v3408
        %v3411 = vadd.f32 %v3405, %v3409
        %s3412 = sld [smem:[#allocation9 + $0x69]]
        %v3413 = vstv %s3412
        %v3414 = vmul.f32 %v1546, %v3413
        %v3415 = vmul.f32 %v1547, %v3413
        %v3416 = vadd.f32 %v3410, %v3414
        %v3417 = vadd.f32 %v3411, %v3415
        %s3418 = sld [smem:[#allocation9 + $0x6a]]
        %v3419 = vstv %s3418
        %v3420 = vmul.f32 %v1554, %v3419
        %v3421 = vmul.f32 %v1555, %v3419
        %v3422 = vadd.f32 %v3416, %v3420
        %v3423 = vadd.f32 %v3417, %v3421
        %s3424 = sld [smem:[#allocation9 + $0x6b]]
        %v3425 = vstv %s3424
        %v3426 = vmul.f32 %v1562, %v3425
        %v3427 = vmul.f32 %v1563, %v3425
        %v3428 = vadd.f32 %v3422, %v3426
        %v3429 = vadd.f32 %v3423, %v3427
        %s3430 = sld [smem:[#allocation10 + $0x8]]
        %v3431 = vstv %s3430
        %v3432 = vadd.f32 %v3428, %v3431
        %v3433 = vadd.f32 %v3429, %v3431
        %v3434 = vmax.f32 %v3432, 0.0
        %v3435 = vmax.f32 %v3433, 0.0
        %v3436 = vpack.c.bf16 %v3434, %v3434
        %v3437 = vpack.c.bf16 %v3435, %v3435
        %s3438 = scalar_lea.vmem %s5, 1088
        %v3439 = vld [vmem:[%s3438] sm:$0xff]
        %v3440 = vld [vmem:[%s3438 + $0x8] sm:$0xff]
        %v3441 = vld [vmem:[%s3438 + $0x10] sm:$0xff]
        %v3442 = vld [vmem:[%s3438 + $0x18] sm:$0xff]
        %v3443 = vld [vmem:[%s3438 + $0x20] sm:$0xff]
        %v3444 = vld [vmem:[%s3438 + $0x28] sm:$0xff]
        %v3445 = vld [vmem:[%s3438 + $0x30] sm:$0xff]
        %v3446 = vld [vmem:[%s3438 + $0x38] sm:$0xff]
        %v3447 = vld [vmem:[%s3438 + $0x40] sm:$0xff]
        %v3448 = vld [vmem:[%s3438 + $0x48] sm:$0xff]
        %v3449 = vld [vmem:[%s3438 + $0x50] sm:$0xff]
        %v3450 = vld [vmem:[%s3438 + $0x58] sm:$0xff]
        %v3451 = vld [vmem:[%s3438 + $0x60] sm:$0xff]
        %v3452 = vld [vmem:[%s3438 + $0x68] sm:$0xff]
        %v3453 = vld [vmem:[%s3438 + $0x70] sm:$0xff]
        %v3454 = vld [vmem:[%s3438 + $0x78] sm:$0xff]
        %v3455 = vld [vmem:[%s3438 + $0x80] sm:$0x77]
        %v3473 = vunpack.c.l.b16 %v3439
        %v3474 = vunpack.c.h.b16 %v3439
        %v3475 = vunpack.c.l.b16 %v3440
        %v3476 = vunpack.c.h.b16 %v3440
        %v3477 = vunpack.c.l.b16 %v3441
        %v3478 = vunpack.c.h.b16 %v3441
        %v3479 = vunpack.c.l.b16 %v3442
        %v3480 = vunpack.c.h.b16 %v3442
        %v3481 = vunpack.c.l.b16 %v3443
        %v3482 = vunpack.c.h.b16 %v3443
        %v3483 = vunpack.c.l.b16 %v3444
        %v3484 = vunpack.c.h.b16 %v3444
        %v3485 = vunpack.c.l.b16 %v3445
        %v3486 = vunpack.c.h.b16 %v3445
        %v3487 = vunpack.c.l.b16 %v3446
        %v3488 = vunpack.c.h.b16 %v3446
        %v3489 = vunpack.c.l.b16 %v3447
        %v3490 = vunpack.c.h.b16 %v3447
        %v3491 = vunpack.c.l.b16 %v3448
        %v3492 = vunpack.c.h.b16 %v3448
        %v3493 = vunpack.c.l.b16 %v3449
        %v3494 = vunpack.c.h.b16 %v3449
        %v3495 = vunpack.c.l.b16 %v3450
        %v3496 = vunpack.c.h.b16 %v3450
        %v3497 = vunpack.c.l.b16 %v3451
        %v3498 = vunpack.c.h.b16 %v3451
        %v3499 = vunpack.c.l.b16 %v3452
        %v3500 = vunpack.c.h.b16 %v3452
        %v3501 = vunpack.c.l.b16 %v3453
        %v3502 = vunpack.c.h.b16 %v3453
        %v3503 = vunpack.c.l.b16 %v3454
        %v3504 = vunpack.c.h.b16 %v3454
        %v3505 = vunpack.c.l.b16 %v3455
        %v3506 = vunpack.c.h.b16 %v3455
        %v3507 = vpack.c.b16 %v3475, %v3473
        %v3508 = vpack.c.b16 %v3476, %v3474
        %v3509 = vpack.c.b16 %v3479, %v3477
        %v3510 = vpack.c.b16 %v3480, %v3478
        %v3511 = vpack.c.b16 %v3483, %v3481
        %v3512 = vpack.c.b16 %v3484, %v3482
        %v3513 = vpack.c.b16 %v3487, %v3485
        %v3514 = vpack.c.b16 %v3488, %v3486
        %v3515 = vpack.c.b16 %v3491, %v3489
        %v3516 = vpack.c.b16 %v3492, %v3490
        %v3517 = vpack.c.b16 %v3495, %v3493
        %v3518 = vpack.c.b16 %v3496, %v3494
        %v3519 = vpack.c.b16 %v3499, %v3497
        %v3520 = vpack.c.b16 %v3500, %v3498
        %v3521 = vpack.c.b16 %v3503, %v3501
        %v3522 = vpack.c.b16 %v3504, %v3502
        %v3523 = vpack.c.b16 %v3505, %v3505
        %v3524 = vpack.c.b16 %v3506, %v3506
        %v3542 = vsel %vm685, %v3437, 0
        %v3545 = vsel %vm1779, %v3523, 0
        %v3548 = vsel %vm1779, %v3524, 0
        %3550 = vmatprep.subr.bf16.mxu0 %v3522
        %3551 = vmatpush1.bf16.msra.mxu0 %v3521
        %3552 = vmatprep.subr.bf16.mxu0 %v3520
        %3553 = vmatpush1.bf16.msra.mxu0 %v3519
        %3554 = vmatprep.subr.bf16.mxu0 %v3518
        %3555 = vmatpush1.bf16.msra.mxu0 %v3517
        %3556 = vmatprep.subr.bf16.mxu0 %v3516
        %3557 = vmatpush1.bf16.msra.mxu0 %v3515
        %3558 = vmatprep.subr.bf16.mxu0 %v3514
        %3559 = vmatpush1.bf16.msra.mxu0 %v3513
        %3560 = vmatprep.subr.bf16.mxu0 %v3512
        %3561 = vmatpush1.bf16.msra.mxu0 %v3511
        %3562 = vmatprep.subr.bf16.mxu0 %v3510
        %3563 = vmatpush1.bf16.msra.mxu0 %v3509
        %3564 = vmatprep.subr.bf16.mxu0 %v3508
        %3565 = vmatpush1.bf16.msra.mxu0 %v3507
        %3566 = vmatprep.subr.bf16.mxu0 0
        %3567 = vmatpush2.bf16.msra.mxu0 0
        %3568 = vmatprep.subr.bf16.mxu0 0
        %3569 = vmatpush2.bf16.msra.mxu0 0
        %3570 = vmatprep.subr.bf16.mxu0 0
        %3571 = vmatpush2.bf16.msra.mxu0 0
        %3572 = vmatprep.subr.bf16.mxu0 0
        %3573 = vmatpush2.bf16.msra.mxu0 0
        %3574 = vmatprep.subr.bf16.mxu0 0
        %3575 = vmatpush2.bf16.msra.mxu0 0
        %3576 = vmatprep.subr.bf16.mxu0 0
        %3577 = vmatpush2.bf16.msra.mxu0 0
        %3578 = vmatprep.subr.bf16.mxu0 0
        %3579 = vmatpush2.bf16.msra.mxu0 0
        %3580 = vmatprep.subr.bf16.mxu0 %v3548
        %3581 = vmatpush2.bf16.msra.mxu0 %v3545
        %3582 = vmatprep.mubr.bf16.mxu0 %v3542
        %3583 = vmatmul.mubr.bf16.gmra.mxu0 %v3436
        %v3584 = vpop.f32.mrf.mxu0
        %v3585 = vadd.f32 0.0, %v3584
        %v3586 = vpop.f32.mrf.mxu0
        %v3587 = vadd.f32 0.0, %v3586
        %v3588 = vpop.f32.mrf.mxu0
        %v3589 = vpop.f32.mrf.mxu0
        %3590 = vdwg.mxu0
        %v3591 = vadd.f32 %v3358, %v3585
        %v3592 = vadd.f32 %v3359, %v3587
        %s3593 = sld [smem:[#allocation9 + $0x6c]]
        %v3594 = vstv %s3593
        %v3595 = vmul.f32 %v1476, %v3594
        %v3596 = vmul.f32 %v1477, %v3594
        %s3597 = sld [smem:[#allocation9 + $0x6d]]
        %v3598 = vstv %s3597
        %v3599 = vmul.f32 %v1482, %v3598
        %v3600 = vmul.f32 %v1483, %v3598
        %v3601 = vadd.f32 %v3595, %v3599
        %v3602 = vadd.f32 %v3596, %v3600
        %s3603 = sld [smem:[#allocation9 + $0x6e]]
        %v3604 = vstv %s3603
        %v3605 = vmul.f32 %v1490, %v3604
        %v3606 = vmul.f32 %v1491, %v3604
        %v3607 = vadd.f32 %v3601, %v3605
        %v3608 = vadd.f32 %v3602, %v3606
        %s3609 = sld [smem:[#allocation9 + $0x6f]]
        %v3610 = vstv %s3609
        %v3611 = vmul.f32 %v1498, %v3610
        %v3612 = vmul.f32 %v1499, %v3610
        %v3613 = vadd.f32 %v3607, %v3611
        %v3614 = vadd.f32 %v3608, %v3612
        %s3615 = sld [smem:[#allocation9 + $0x70]]
        %v3616 = vstv %s3615
        %v3617 = vmul.f32 %v1506, %v3616
        %v3618 = vmul.f32 %v1507, %v3616
        %v3619 = vadd.f32 %v3613, %v3617
        %v3620 = vadd.f32 %v3614, %v3618
        %s3621 = sld [smem:[#allocation9 + $0x71]]
        %v3622 = vstv %s3621
        %v3623 = vmul.f32 %v1514, %v3622
        %v3624 = vmul.f32 %v1515, %v3622
        %v3625 = vadd.f32 %v3619, %v3623
        %v3626 = vadd.f32 %v3620, %v3624
        %s3627 = sld [smem:[#allocation9 + $0x72]]
        %v3628 = vstv %s3627
        %v3629 = vmul.f32 %v1522, %v3628
        %v3630 = vmul.f32 %v1523, %v3628
        %v3631 = vadd.f32 %v3625, %v3629
        %v3632 = vadd.f32 %v3626, %v3630
        %s3633 = sld [smem:[#allocation9 + $0x73]]
        %v3634 = vstv %s3633
        %v3635 = vmul.f32 %v1530, %v3634
        %v3636 = vmul.f32 %v1531, %v3634
        %v3637 = vadd.f32 %v3631, %v3635
        %v3638 = vadd.f32 %v3632, %v3636
        %s3639 = sld [smem:[#allocation9 + $0x74]]
        %v3640 = vstv %s3639
        %v3641 = vmul.f32 %v1538, %v3640
        %v3642 = vmul.f32 %v1539, %v3640
        %v3643 = vadd.f32 %v3637, %v3641
        %v3644 = vadd.f32 %v3638, %v3642
        %s3645 = sld [smem:[#allocation9 + $0x75]]
        %v3646 = vstv %s3645
        %v3647 = vmul.f32 %v1546, %v3646
        %v3648 = vmul.f32 %v1547, %v3646
        %v3649 = vadd.f32 %v3643, %v3647
        %v3650 = vadd.f32 %v3644, %v3648
        %s3651 = sld [smem:[#allocation9 + $0x76]]
        %v3652 = vstv %s3651
        %v3653 = vmul.f32 %v1554, %v3652
        %v3654 = vmul.f32 %v1555, %v3652
        %v3655 = vadd.f32 %v3649, %v3653
        %v3656 = vadd.f32 %v3650, %v3654
        %s3657 = sld [smem:[#allocation9 + $0x77]]
        %v3658 = vstv %s3657
        %v3659 = vmul.f32 %v1562, %v3658
        %v3660 = vmul.f32 %v1563, %v3658
        %v3661 = vadd.f32 %v3655, %v3659
        %v3662 = vadd.f32 %v3656, %v3660
        %s3663 = sld [smem:[#allocation10 + $0x9]]
        %v3664 = vstv %s3663
        %v3665 = vadd.f32 %v3661, %v3664
        %v3666 = vadd.f32 %v3662, %v3664
        %v3667 = vmax.f32 %v3665, 0.0
        %v3668 = vmax.f32 %v3666, 0.0
        %v3669 = vpack.c.bf16 %v3667, %v3667
        %v3670 = vpack.c.bf16 %v3668, %v3668
        %s3671 = scalar_lea.vmem %s5, 1224
        %v3672 = vld [vmem:[%s3671] sm:$0xff]
        %v3673 = vld [vmem:[%s3671 + $0x8] sm:$0xff]
        %v3674 = vld [vmem:[%s3671 + $0x10] sm:$0xff]
        %v3675 = vld [vmem:[%s3671 + $0x18] sm:$0xff]
        %v3676 = vld [vmem:[%s3671 + $0x20] sm:$0xff]
        %v3677 = vld [vmem:[%s3671 + $0x28] sm:$0xff]
        %v3678 = vld [vmem:[%s3671 + $0x30] sm:$0xff]
        %v3679 = vld [vmem:[%s3671 + $0x38] sm:$0xff]
        %v3680 = vld [vmem:[%s3671 + $0x40] sm:$0xff]
        %v3681 = vld [vmem:[%s3671 + $0x48] sm:$0xff]
        %v3682 = vld [vmem:[%s3671 + $0x50] sm:$0xff]
        %v3683 = vld [vmem:[%s3671 + $0x58] sm:$0xff]
        %v3684 = vld [vmem:[%s3671 + $0x60] sm:$0xff]
        %v3685 = vld [vmem:[%s3671 + $0x68] sm:$0xff]
        %v3686 = vld [vmem:[%s3671 + $0x70] sm:$0xff]
        %v3687 = vld [vmem:[%s3671 + $0x78] sm:$0xff]
        %v3688 = vld [vmem:[%s3671 + $0x80] sm:$0x77]
        %v3706 = vunpack.c.l.b16 %v3672
        %v3707 = vunpack.c.h.b16 %v3672
        %v3708 = vunpack.c.l.b16 %v3673
        %v3709 = vunpack.c.h.b16 %v3673
        %v3710 = vunpack.c.l.b16 %v3674
        %v3711 = vunpack.c.h.b16 %v3674
        %v3712 = vunpack.c.l.b16 %v3675
        %v3713 = vunpack.c.h.b16 %v3675
        %v3714 = vunpack.c.l.b16 %v3676
        %v3715 = vunpack.c.h.b16 %v3676
        %v3716 = vunpack.c.l.b16 %v3677
        %v3717 = vunpack.c.h.b16 %v3677
        %v3718 = vunpack.c.l.b16 %v3678
        %v3719 = vunpack.c.h.b16 %v3678
        %v3720 = vunpack.c.l.b16 %v3679
        %v3721 = vunpack.c.h.b16 %v3679
        %v3722 = vunpack.c.l.b16 %v3680
        %v3723 = vunpack.c.h.b16 %v3680
        %v3724 = vunpack.c.l.b16 %v3681
        %v3725 = vunpack.c.h.b16 %v3681
        %v3726 = vunpack.c.l.b16 %v3682
        %v3727 = vunpack.c.h.b16 %v3682
        %v3728 = vunpack.c.l.b16 %v3683
        %v3729 = vunpack.c.h.b16 %v3683
        %v3730 = vunpack.c.l.b16 %v3684
        %v3731 = vunpack.c.h.b16 %v3684
        %v3732 = vunpack.c.l.b16 %v3685
        %v3733 = vunpack.c.h.b16 %v3685
        %v3734 = vunpack.c.l.b16 %v3686
        %v3735 = vunpack.c.h.b16 %v3686
        %v3736 = vunpack.c.l.b16 %v3687
        %v3737 = vunpack.c.h.b16 %v3687
        %v3738 = vunpack.c.l.b16 %v3688
        %v3739 = vunpack.c.h.b16 %v3688
        %v3740 = vpack.c.b16 %v3708, %v3706
        %v3741 = vpack.c.b16 %v3709, %v3707
        %v3742 = vpack.c.b16 %v3712, %v3710
        %v3743 = vpack.c.b16 %v3713, %v3711
        %v3744 = vpack.c.b16 %v3716, %v3714
        %v3745 = vpack.c.b16 %v3717, %v3715
        %v3746 = vpack.c.b16 %v3720, %v3718
        %v3747 = vpack.c.b16 %v3721, %v3719
        %v3748 = vpack.c.b16 %v3724, %v3722
        %v3749 = vpack.c.b16 %v3725, %v3723
        %v3750 = vpack.c.b16 %v3728, %v3726
        %v3751 = vpack.c.b16 %v3729, %v3727
        %v3752 = vpack.c.b16 %v3732, %v3730
        %v3753 = vpack.c.b16 %v3733, %v3731
        %v3754 = vpack.c.b16 %v3736, %v3734
        %v3755 = vpack.c.b16 %v3737, %v3735
        %v3756 = vpack.c.b16 %v3738, %v3738
        %v3757 = vpack.c.b16 %v3739, %v3739
        %v3775 = vsel %vm685, %v3670, 0
        %v3778 = vsel %vm1779, %v3756, 0
        %v3781 = vsel %vm1779, %v3757, 0
        %3783 = vmatprep.subr.bf16.mxu0 %v3755
        %3784 = vmatpush1.bf16.msra.mxu0 %v3754
        %3785 = vmatprep.subr.bf16.mxu0 %v3753
        %3786 = vmatpush1.bf16.msra.mxu0 %v3752
        %3787 = vmatprep.subr.bf16.mxu0 %v3751
        %3788 = vmatpush1.bf16.msra.mxu0 %v3750
        %3789 = vmatprep.subr.bf16.mxu0 %v3749
        %3790 = vmatpush1.bf16.msra.mxu0 %v3748
        %3791 = vmatprep.subr.bf16.mxu0 %v3747
        %3792 = vmatpush1.bf16.msra.mxu0 %v3746
        %3793 = vmatprep.subr.bf16.mxu0 %v3745
        %3794 = vmatpush1.bf16.msra.mxu0 %v3744
        %3795 = vmatprep.subr.bf16.mxu0 %v3743
        %3796 = vmatpush1.bf16.msra.mxu0 %v3742
        %3797 = vmatprep.subr.bf16.mxu0 %v3741
        %3798 = vmatpush1.bf16.msra.mxu0 %v3740
        %3799 = vmatprep.subr.bf16.mxu0 0
        %3800 = vmatpush2.bf16.msra.mxu0 0
        %3801 = vmatprep.subr.bf16.mxu0 0
        %3802 = vmatpush2.bf16.msra.mxu0 0
        %3803 = vmatprep.subr.bf16.mxu0 0
        %3804 = vmatpush2.bf16.msra.mxu0 0
        %3805 = vmatprep.subr.bf16.mxu0 0
        %3806 = vmatpush2.bf16.msra.mxu0 0
        %3807 = vmatprep.subr.bf16.mxu0 0
        %3808 = vmatpush2.bf16.msra.mxu0 0
        %3809 = vmatprep.subr.bf16.mxu0 0
        %3810 = vmatpush2.bf16.msra.mxu0 0
        %3811 = vmatprep.subr.bf16.mxu0 0
        %3812 = vmatpush2.bf16.msra.mxu0 0
        %3813 = vmatprep.subr.bf16.mxu0 %v3781
        %3814 = vmatpush2.bf16.msra.mxu0 %v3778
        %3815 = vmatprep.mubr.bf16.mxu0 %v3775
        %3816 = vmatmul.mubr.bf16.gmra.mxu0 %v3669
        %v3817 = vpop.f32.mrf.mxu0
        %v3818 = vadd.f32 0.0, %v3817
        %v3819 = vpop.f32.mrf.mxu0
        %v3820 = vadd.f32 0.0, %v3819
        %v3821 = vpop.f32.mrf.mxu0
        %v3822 = vpop.f32.mrf.mxu0
        %3823 = vdwg.mxu0
        %v3824 = vadd.f32 %v3591, %v3818
        %v3825 = vadd.f32 %v3592, %v3820
        %s3826 = sld [smem:[#allocation9 + $0x78]]
        %v3827 = vstv %s3826
        %v3828 = vmul.f32 %v1476, %v3827
        %v3829 = vmul.f32 %v1477, %v3827
        %s3830 = sld [smem:[#allocation9 + $0x79]]
        %v3831 = vstv %s3830
        %v3832 = vmul.f32 %v1482, %v3831
        %v3833 = vmul.f32 %v1483, %v3831
        %v3834 = vadd.f32 %v3828, %v3832
        %v3835 = vadd.f32 %v3829, %v3833
        %s3836 = sld [smem:[#allocation9 + $0x7a]]
        %v3837 = vstv %s3836
        %v3838 = vmul.f32 %v1490, %v3837
        %v3839 = vmul.f32 %v1491, %v3837
        %v3840 = vadd.f32 %v3834, %v3838
        %v3841 = vadd.f32 %v3835, %v3839
        %s3842 = sld [smem:[#allocation9 + $0x7b]]
        %v3843 = vstv %s3842
        %v3844 = vmul.f32 %v1498, %v3843
        %v3845 = vmul.f32 %v1499, %v3843
        %v3846 = vadd.f32 %v3840, %v3844
        %v3847 = vadd.f32 %v3841, %v3845
        %s3848 = sld [smem:[#allocation9 + $0x7c]]
        %v3849 = vstv %s3848
        %v3850 = vmul.f32 %v1506, %v3849
        %v3851 = vmul.f32 %v1507, %v3849
        %v3852 = vadd.f32 %v3846, %v3850
        %v3853 = vadd.f32 %v3847, %v3851
        %s3854 = sld [smem:[#allocation9 + $0x7d]]
        %v3855 = vstv %s3854
        %v3856 = vmul.f32 %v1514, %v3855
        %v3857 = vmul.f32 %v1515, %v3855
        %v3858 = vadd.f32 %v3852, %v3856
        %v3859 = vadd.f32 %v3853, %v3857
        %s3860 = sld [smem:[#allocation9 + $0x7e]]
        %v3861 = vstv %s3860
        %v3862 = vmul.f32 %v1522, %v3861
        %v3863 = vmul.f32 %v1523, %v3861
        %v3864 = vadd.f32 %v3858, %v3862
        %v3865 = vadd.f32 %v3859, %v3863
        %s3866 = sld [smem:[#allocation9 + $0x7f]]
        %v3867 = vstv %s3866
        %v3868 = vmul.f32 %v1530, %v3867
        %v3869 = vmul.f32 %v1531, %v3867
        %v3870 = vadd.f32 %v3864, %v3868
        %v3871 = vadd.f32 %v3865, %v3869
        %s3872 = sld [smem:[#allocation9 + $0x80]]
        %v3873 = vstv %s3872
        %v3874 = vmul.f32 %v1538, %v3873
        %v3875 = vmul.f32 %v1539, %v3873
        %v3876 = vadd.f32 %v3870, %v3874
        %v3877 = vadd.f32 %v3871, %v3875
        %s3878 = sld [smem:[#allocation9 + $0x81]]
        %v3879 = vstv %s3878
        %v3880 = vmul.f32 %v1546, %v3879
        %v3881 = vmul.f32 %v1547, %v3879
        %v3882 = vadd.f32 %v3876, %v3880
        %v3883 = vadd.f32 %v3877, %v3881
        %s3884 = sld [smem:[#allocation9 + $0x82]]
        %v3885 = vstv %s3884
        %v3886 = vmul.f32 %v1554, %v3885
        %v3887 = vmul.f32 %v1555, %v3885
        %v3888 = vadd.f32 %v3882, %v3886
        %v3889 = vadd.f32 %v3883, %v3887
        %s3890 = sld [smem:[#allocation9 + $0x83]]
        %v3891 = vstv %s3890
        %v3892 = vmul.f32 %v1562, %v3891
        %v3893 = vmul.f32 %v1563, %v3891
        %v3894 = vadd.f32 %v3888, %v3892
        %v3895 = vadd.f32 %v3889, %v3893
        %s3896 = sld [smem:[#allocation10 + $0xa]]
        %v3897 = vstv %s3896
        %v3898 = vadd.f32 %v3894, %v3897
        %v3899 = vadd.f32 %v3895, %v3897
        %v3900 = vmax.f32 %v3898, 0.0
        %v3901 = vmax.f32 %v3899, 0.0
        %v3902 = vpack.c.bf16 %v3900, %v3900
        %v3903 = vpack.c.bf16 %v3901, %v3901
        %s3904 = scalar_lea.vmem %s5, 1360
        %v3905 = vld [vmem:[%s3904] sm:$0xff]
        %v3906 = vld [vmem:[%s3904 + $0x8] sm:$0xff]
        %v3907 = vld [vmem:[%s3904 + $0x10] sm:$0xff]
        %v3908 = vld [vmem:[%s3904 + $0x18] sm:$0xff]
        %v3909 = vld [vmem:[%s3904 + $0x20] sm:$0xff]
        %v3910 = vld [vmem:[%s3904 + $0x28] sm:$0xff]
        %v3911 = vld [vmem:[%s3904 + $0x30] sm:$0xff]
        %v3912 = vld [vmem:[%s3904 + $0x38] sm:$0xff]
        %v3913 = vld [vmem:[%s3904 + $0x40] sm:$0xff]
        %v3914 = vld [vmem:[%s3904 + $0x48] sm:$0xff]
        %v3915 = vld [vmem:[%s3904 + $0x50] sm:$0xff]
        %v3916 = vld [vmem:[%s3904 + $0x58] sm:$0xff]
        %v3917 = vld [vmem:[%s3904 + $0x60] sm:$0xff]
        %v3918 = vld [vmem:[%s3904 + $0x68] sm:$0xff]
        %v3919 = vld [vmem:[%s3904 + $0x70] sm:$0xff]
        %v3920 = vld [vmem:[%s3904 + $0x78] sm:$0xff]
        %v3921 = vld [vmem:[%s3904 + $0x80] sm:$0x77]
        %v3939 = vunpack.c.l.b16 %v3905
        %v3940 = vunpack.c.h.b16 %v3905
        %v3941 = vunpack.c.l.b16 %v3906
        %v3942 = vunpack.c.h.b16 %v3906
        %v3943 = vunpack.c.l.b16 %v3907
        %v3944 = vunpack.c.h.b16 %v3907
        %v3945 = vunpack.c.l.b16 %v3908
        %v3946 = vunpack.c.h.b16 %v3908
        %v3947 = vunpack.c.l.b16 %v3909
        %v3948 = vunpack.c.h.b16 %v3909
        %v3949 = vunpack.c.l.b16 %v3910
        %v3950 = vunpack.c.h.b16 %v3910
        %v3951 = vunpack.c.l.b16 %v3911
        %v3952 = vunpack.c.h.b16 %v3911
        %v3953 = vunpack.c.l.b16 %v3912
        %v3954 = vunpack.c.h.b16 %v3912
        %v3955 = vunpack.c.l.b16 %v3913
        %v3956 = vunpack.c.h.b16 %v3913
        %v3957 = vunpack.c.l.b16 %v3914
        %v3958 = vunpack.c.h.b16 %v3914
        %v3959 = vunpack.c.l.b16 %v3915
        %v3960 = vunpack.c.h.b16 %v3915
        %v3961 = vunpack.c.l.b16 %v3916
        %v3962 = vunpack.c.h.b16 %v3916
        %v3963 = vunpack.c.l.b16 %v3917
        %v3964 = vunpack.c.h.b16 %v3917
        %v3965 = vunpack.c.l.b16 %v3918
        %v3966 = vunpack.c.h.b16 %v3918
        %v3967 = vunpack.c.l.b16 %v3919
        %v3968 = vunpack.c.h.b16 %v3919
        %v3969 = vunpack.c.l.b16 %v3920
        %v3970 = vunpack.c.h.b16 %v3920
        %v3971 = vunpack.c.l.b16 %v3921
        %v3972 = vunpack.c.h.b16 %v3921
        %v3973 = vpack.c.b16 %v3941, %v3939
        %v3974 = vpack.c.b16 %v3942, %v3940
        %v3975 = vpack.c.b16 %v3945, %v3943
        %v3976 = vpack.c.b16 %v3946, %v3944
        %v3977 = vpack.c.b16 %v3949, %v3947
        %v3978 = vpack.c.b16 %v3950, %v3948
        %v3979 = vpack.c.b16 %v3953, %v3951
        %v3980 = vpack.c.b16 %v3954, %v3952
        %v3981 = vpack.c.b16 %v3957, %v3955
        %v3982 = vpack.c.b16 %v3958, %v3956
        %v3983 = vpack.c.b16 %v3961, %v3959
        %v3984 = vpack.c.b16 %v3962, %v3960
        %v3985 = vpack.c.b16 %v3965, %v3963
        %v3986 = vpack.c.b16 %v3966, %v3964
        %v3987 = vpack.c.b16 %v3969, %v3967
        %v3988 = vpack.c.b16 %v3970, %v3968
        %v3989 = vpack.c.b16 %v3971, %v3971
        %v3990 = vpack.c.b16 %v3972, %v3972
        %v4008 = vsel %vm685, %v3903, 0
        %v4011 = vsel %vm1779, %v3989, 0
        %v4014 = vsel %vm1779, %v3990, 0
        %4016 = vmatprep.subr.bf16.mxu0 %v3988
        %4017 = vmatpush1.bf16.msra.mxu0 %v3987
        %4018 = vmatprep.subr.bf16.mxu0 %v3986
        %4019 = vmatpush1.bf16.msra.mxu0 %v3985
        %4020 = vmatprep.subr.bf16.mxu0 %v3984
        %4021 = vmatpush1.bf16.msra.mxu0 %v3983
        %4022 = vmatprep.subr.bf16.mxu0 %v3982
        %4023 = vmatpush1.bf16.msra.mxu0 %v3981
        %4024 = vmatprep.subr.bf16.mxu0 %v3980
        %4025 = vmatpush1.bf16.msra.mxu0 %v3979
        %4026 = vmatprep.subr.bf16.mxu0 %v3978
        %4027 = vmatpush1.bf16.msra.mxu0 %v3977
        %4028 = vmatprep.subr.bf16.mxu0 %v3976
        %4029 = vmatpush1.bf16.msra.mxu0 %v3975
        %4030 = vmatprep.subr.bf16.mxu0 %v3974
        %4031 = vmatpush1.bf16.msra.mxu0 %v3973
        %4032 = vmatprep.subr.bf16.mxu0 0
        %4033 = vmatpush2.bf16.msra.mxu0 0
        %4034 = vmatprep.subr.bf16.mxu0 0
        %4035 = vmatpush2.bf16.msra.mxu0 0
        %4036 = vmatprep.subr.bf16.mxu0 0
        %4037 = vmatpush2.bf16.msra.mxu0 0
        %4038 = vmatprep.subr.bf16.mxu0 0
        %4039 = vmatpush2.bf16.msra.mxu0 0
        %4040 = vmatprep.subr.bf16.mxu0 0
        %4041 = vmatpush2.bf16.msra.mxu0 0
        %4042 = vmatprep.subr.bf16.mxu0 0
        %4043 = vmatpush2.bf16.msra.mxu0 0
        %4044 = vmatprep.subr.bf16.mxu0 0
        %4045 = vmatpush2.bf16.msra.mxu0 0
        %4046 = vmatprep.subr.bf16.mxu0 %v4014
        %4047 = vmatpush2.bf16.msra.mxu0 %v4011
        %4048 = vmatprep.mubr.bf16.mxu0 %v4008
        %4049 = vmatmul.mubr.bf16.gmra.mxu0 %v3902
        %v4050 = vpop.f32.mrf.mxu0
        %v4051 = vadd.f32 0.0, %v4050
        %v4052 = vpop.f32.mrf.mxu0
        %v4053 = vadd.f32 0.0, %v4052
        %v4054 = vpop.f32.mrf.mxu0
        %v4055 = vpop.f32.mrf.mxu0
        %4056 = vdwg.mxu0
        %v4057 = vadd.f32 %v3824, %v4051
        %v4058 = vadd.f32 %v3825, %v4053
        %s4059 = sld [smem:[#allocation9 + $0x84]]
        %v4060 = vstv %s4059
        %v4061 = vmul.f32 %v1476, %v4060
        %v4062 = vmul.f32 %v1477, %v4060
        %s4063 = sld [smem:[#allocation9 + $0x85]]
        %v4064 = vstv %s4063
        %v4065 = vmul.f32 %v1482, %v4064
        %v4066 = vmul.f32 %v1483, %v4064
        %v4067 = vadd.f32 %v4061, %v4065
        %v4068 = vadd.f32 %v4062, %v4066
        %s4069 = sld [smem:[#allocation9 + $0x86]]
        %v4070 = vstv %s4069
        %v4071 = vmul.f32 %v1490, %v4070
        %v4072 = vmul.f32 %v1491, %v4070
        %v4073 = vadd.f32 %v4067, %v4071
        %v4074 = vadd.f32 %v4068, %v4072
        %s4075 = sld [smem:[#allocation9 + $0x87]]
        %v4076 = vstv %s4075
        %v4077 = vmul.f32 %v1498, %v4076
        %v4078 = vmul.f32 %v1499, %v4076
        %v4079 = vadd.f32 %v4073, %v4077
        %v4080 = vadd.f32 %v4074, %v4078
        %s4081 = sld [smem:[#allocation9 + $0x88]]
        %v4082 = vstv %s4081
        %v4083 = vmul.f32 %v1506, %v4082
        %v4084 = vmul.f32 %v1507, %v4082
        %v4085 = vadd.f32 %v4079, %v4083
        %v4086 = vadd.f32 %v4080, %v4084
        %s4087 = sld [smem:[#allocation9 + $0x89]]
        %v4088 = vstv %s4087
        %v4089 = vmul.f32 %v1514, %v4088
        %v4090 = vmul.f32 %v1515, %v4088
        %v4091 = vadd.f32 %v4085, %v4089
        %v4092 = vadd.f32 %v4086, %v4090
        %s4093 = sld [smem:[#allocation9 + $0x8a]]
        %v4094 = vstv %s4093
        %v4095 = vmul.f32 %v1522, %v4094
        %v4096 = vmul.f32 %v1523, %v4094
        %v4097 = vadd.f32 %v4091, %v4095
        %v4098 = vadd.f32 %v4092, %v4096
        %s4099 = sld [smem:[#allocation9 + $0x8b]]
        %v4100 = vstv %s4099
        %v4101 = vmul.f32 %v1530, %v4100
        %v4102 = vmul.f32 %v1531, %v4100
        %v4103 = vadd.f32 %v4097, %v4101
        %v4104 = vadd.f32 %v4098, %v4102
        %s4105 = sld [smem:[#allocation9 + $0x8c]]
        %v4106 = vstv %s4105
        %v4107 = vmul.f32 %v1538, %v4106
        %v4108 = vmul.f32 %v1539, %v4106
        %v4109 = vadd.f32 %v4103, %v4107
        %v4110 = vadd.f32 %v4104, %v4108
        %s4111 = sld [smem:[#allocation9 + $0x8d]]
        %v4112 = vstv %s4111
        %v4113 = vmul.f32 %v1546, %v4112
        %v4114 = vmul.f32 %v1547, %v4112
        %v4115 = vadd.f32 %v4109, %v4113
        %v4116 = vadd.f32 %v4110, %v4114
        %s4117 = sld [smem:[#allocation9 + $0x8e]]
        %v4118 = vstv %s4117
        %v4119 = vmul.f32 %v1554, %v4118
        %v4120 = vmul.f32 %v1555, %v4118
        %v4121 = vadd.f32 %v4115, %v4119
        %v4122 = vadd.f32 %v4116, %v4120
        %s4123 = sld [smem:[#allocation9 + $0x8f]]
        %v4124 = vstv %s4123
        %v4125 = vmul.f32 %v1562, %v4124
        %v4126 = vmul.f32 %v1563, %v4124
        %v4127 = vadd.f32 %v4121, %v4125
        %v4128 = vadd.f32 %v4122, %v4126
        %s4129 = sld [smem:[#allocation10 + $0xb]]
        %v4130 = vstv %s4129
        %v4131 = vadd.f32 %v4127, %v4130
        %v4132 = vadd.f32 %v4128, %v4130
        %v4133 = vmax.f32 %v4131, 0.0
        %v4134 = vmax.f32 %v4132, 0.0
        %v4135 = vpack.c.bf16 %v4133, %v4133
        %v4136 = vpack.c.bf16 %v4134, %v4134
        %s4137 = scalar_lea.vmem %s5, 1496
        %v4138 = vld [vmem:[%s4137] sm:$0xff]
        %v4139 = vld [vmem:[%s4137 + $0x8] sm:$0xff]
        %v4140 = vld [vmem:[%s4137 + $0x10] sm:$0xff]
        %v4141 = vld [vmem:[%s4137 + $0x18] sm:$0xff]
        %v4142 = vld [vmem:[%s4137 + $0x20] sm:$0xff]
        %v4143 = vld [vmem:[%s4137 + $0x28] sm:$0xff]
        %v4144 = vld [vmem:[%s4137 + $0x30] sm:$0xff]
        %v4145 = vld [vmem:[%s4137 + $0x38] sm:$0xff]
        %v4146 = vld [vmem:[%s4137 + $0x40] sm:$0xff]
        %v4147 = vld [vmem:[%s4137 + $0x48] sm:$0xff]
        %v4148 = vld [vmem:[%s4137 + $0x50] sm:$0xff]
        %v4149 = vld [vmem:[%s4137 + $0x58] sm:$0xff]
        %v4150 = vld [vmem:[%s4137 + $0x60] sm:$0xff]
        %v4151 = vld [vmem:[%s4137 + $0x68] sm:$0xff]
        %v4152 = vld [vmem:[%s4137 + $0x70] sm:$0xff]
        %v4153 = vld [vmem:[%s4137 + $0x78] sm:$0xff]
        %v4154 = vld [vmem:[%s4137 + $0x80] sm:$0x77]
        %v4172 = vunpack.c.l.b16 %v4138
        %v4173 = vunpack.c.h.b16 %v4138
        %v4174 = vunpack.c.l.b16 %v4139
        %v4175 = vunpack.c.h.b16 %v4139
        %v4176 = vunpack.c.l.b16 %v4140
        %v4177 = vunpack.c.h.b16 %v4140
        %v4178 = vunpack.c.l.b16 %v4141
        %v4179 = vunpack.c.h.b16 %v4141
        %v4180 = vunpack.c.l.b16 %v4142
        %v4181 = vunpack.c.h.b16 %v4142
        %v4182 = vunpack.c.l.b16 %v4143
        %v4183 = vunpack.c.h.b16 %v4143
        %v4184 = vunpack.c.l.b16 %v4144
        %v4185 = vunpack.c.h.b16 %v4144
        %v4186 = vunpack.c.l.b16 %v4145
        %v4187 = vunpack.c.h.b16 %v4145
        %v4188 = vunpack.c.l.b16 %v4146
        %v4189 = vunpack.c.h.b16 %v4146
        %v4190 = vunpack.c.l.b16 %v4147
        %v4191 = vunpack.c.h.b16 %v4147
        %v4192 = vunpack.c.l.b16 %v4148
        %v4193 = vunpack.c.h.b16 %v4148
        %v4194 = vunpack.c.l.b16 %v4149
        %v4195 = vunpack.c.h.b16 %v4149
        %v4196 = vunpack.c.l.b16 %v4150
        %v4197 = vunpack.c.h.b16 %v4150
        %v4198 = vunpack.c.l.b16 %v4151
        %v4199 = vunpack.c.h.b16 %v4151
        %v4200 = vunpack.c.l.b16 %v4152
        %v4201 = vunpack.c.h.b16 %v4152
        %v4202 = vunpack.c.l.b16 %v4153
        %v4203 = vunpack.c.h.b16 %v4153
        %v4204 = vunpack.c.l.b16 %v4154
        %v4205 = vunpack.c.h.b16 %v4154
        %v4206 = vpack.c.b16 %v4174, %v4172
        %v4207 = vpack.c.b16 %v4175, %v4173
        %v4208 = vpack.c.b16 %v4178, %v4176
        %v4209 = vpack.c.b16 %v4179, %v4177
        %v4210 = vpack.c.b16 %v4182, %v4180
        %v4211 = vpack.c.b16 %v4183, %v4181
        %v4212 = vpack.c.b16 %v4186, %v4184
        %v4213 = vpack.c.b16 %v4187, %v4185
        %v4214 = vpack.c.b16 %v4190, %v4188
        %v4215 = vpack.c.b16 %v4191, %v4189
        %v4216 = vpack.c.b16 %v4194, %v4192
        %v4217 = vpack.c.b16 %v4195, %v4193
        %v4218 = vpack.c.b16 %v4198, %v4196
        %v4219 = vpack.c.b16 %v4199, %v4197
        %v4220 = vpack.c.b16 %v4202, %v4200
        %v4221 = vpack.c.b16 %v4203, %v4201
        %v4222 = vpack.c.b16 %v4204, %v4204
        %v4223 = vpack.c.b16 %v4205, %v4205
        %v4241 = vsel %vm685, %v4136, 0
        %v4244 = vsel %vm1779, %v4222, 0
        %v4247 = vsel %vm1779, %v4223, 0
        %4249 = vmatprep.subr.bf16.mxu0 %v4221
        %4250 = vmatpush1.bf16.msra.mxu0 %v4220
        %4251 = vmatprep.subr.bf16.mxu0 %v4219
        %4252 = vmatpush1.bf16.msra.mxu0 %v4218
        %4253 = vmatprep.subr.bf16.mxu0 %v4217
        %4254 = vmatpush1.bf16.msra.mxu0 %v4216
        %4255 = vmatprep.subr.bf16.mxu0 %v4215
        %4256 = vmatpush1.bf16.msra.mxu0 %v4214
        %4257 = vmatprep.subr.bf16.mxu0 %v4213
        %4258 = vmatpush1.bf16.msra.mxu0 %v4212
        %4259 = vmatprep.subr.bf16.mxu0 %v4211
        %4260 = vmatpush1.bf16.msra.mxu0 %v4210
        %4261 = vmatprep.subr.bf16.mxu0 %v4209
        %4262 = vmatpush1.bf16.msra.mxu0 %v4208
        %4263 = vmatprep.subr.bf16.mxu0 %v4207
        %4264 = vmatpush1.bf16.msra.mxu0 %v4206
        %4265 = vmatprep.subr.bf16.mxu0 0
        %4266 = vmatpush2.bf16.msra.mxu0 0
        %4267 = vmatprep.subr.bf16.mxu0 0
        %4268 = vmatpush2.bf16.msra.mxu0 0
        %4269 = vmatprep.subr.bf16.mxu0 0
        %4270 = vmatpush2.bf16.msra.mxu0 0
        %4271 = vmatprep.subr.bf16.mxu0 0
        %4272 = vmatpush2.bf16.msra.mxu0 0
        %4273 = vmatprep.subr.bf16.mxu0 0
        %4274 = vmatpush2.bf16.msra.mxu0 0
        %4275 = vmatprep.subr.bf16.mxu0 0
        %4276 = vmatpush2.bf16.msra.mxu0 0
        %4277 = vmatprep.subr.bf16.mxu0 0
        %4278 = vmatpush2.bf16.msra.mxu0 0
        %4279 = vmatprep.subr.bf16.mxu0 %v4247
        %4280 = vmatpush2.bf16.msra.mxu0 %v4244
        %4281 = vmatprep.mubr.bf16.mxu0 %v4241
        %4282 = vmatmul.mubr.bf16.gmra.mxu0 %v4135
        %v4283 = vpop.f32.mrf.mxu0
        %v4284 = vadd.f32 0.0, %v4283
        %v4285 = vpop.f32.mrf.mxu0
        %v4286 = vadd.f32 0.0, %v4285
        %v4287 = vpop.f32.mrf.mxu0
        %v4288 = vpop.f32.mrf.mxu0
        %4289 = vdwg.mxu0
        %v4290 = vadd.f32 %v4057, %v4284
        %v4291 = vadd.f32 %v4058, %v4286
        %s4292 = sld [smem:[#allocation9 + $0x90]]
        %v4293 = vstv %s4292
        %v4294 = vmul.f32 %v1476, %v4293
        %v4295 = vmul.f32 %v1477, %v4293
        %s4296 = sld [smem:[#allocation9 + $0x91]]
        %v4297 = vstv %s4296
        %v4298 = vmul.f32 %v1482, %v4297
        %v4299 = vmul.f32 %v1483, %v4297
        %v4300 = vadd.f32 %v4294, %v4298
        %v4301 = vadd.f32 %v4295, %v4299
        %s4302 = sld [smem:[#allocation9 + $0x92]]
        %v4303 = vstv %s4302
        %v4304 = vmul.f32 %v1490, %v4303
        %v4305 = vmul.f32 %v1491, %v4303
        %v4306 = vadd.f32 %v4300, %v4304
        %v4307 = vadd.f32 %v4301, %v4305
        %s4308 = sld [smem:[#allocation9 + $0x93]]
        %v4309 = vstv %s4308
        %v4310 = vmul.f32 %v1498, %v4309
        %v4311 = vmul.f32 %v1499, %v4309
        %v4312 = vadd.f32 %v4306, %v4310
        %v4313 = vadd.f32 %v4307, %v4311
        %s4314 = sld [smem:[#allocation9 + $0x94]]
        %v4315 = vstv %s4314
        %v4316 = vmul.f32 %v1506, %v4315
        %v4317 = vmul.f32 %v1507, %v4315
        %v4318 = vadd.f32 %v4312, %v4316
        %v4319 = vadd.f32 %v4313, %v4317
        %s4320 = sld [smem:[#allocation9 + $0x95]]
        %v4321 = vstv %s4320
        %v4322 = vmul.f32 %v1514, %v4321
        %v4323 = vmul.f32 %v1515, %v4321
        %v4324 = vadd.f32 %v4318, %v4322
        %v4325 = vadd.f32 %v4319, %v4323
        %s4326 = sld [smem:[#allocation9 + $0x96]]
        %v4327 = vstv %s4326
        %v4328 = vmul.f32 %v1522, %v4327
        %v4329 = vmul.f32 %v1523, %v4327
        %v4330 = vadd.f32 %v4324, %v4328
        %v4331 = vadd.f32 %v4325, %v4329
        %s4332 = sld [smem:[#allocation9 + $0x97]]
        %v4333 = vstv %s4332
        %v4334 = vmul.f32 %v1530, %v4333
        %v4335 = vmul.f32 %v1531, %v4333
        %v4336 = vadd.f32 %v4330, %v4334
        %v4337 = vadd.f32 %v4331, %v4335
        %s4338 = sld [smem:[#allocation9 + $0x98]]
        %v4339 = vstv %s4338
        %v4340 = vmul.f32 %v1538, %v4339
        %v4341 = vmul.f32 %v1539, %v4339
        %v4342 = vadd.f32 %v4336, %v4340
        %v4343 = vadd.f32 %v4337, %v4341
        %s4344 = sld [smem:[#allocation9 + $0x99]]
        %v4345 = vstv %s4344
        %v4346 = vmul.f32 %v1546, %v4345
        %v4347 = vmul.f32 %v1547, %v4345
        %v4348 = vadd.f32 %v4342, %v4346
        %v4349 = vadd.f32 %v4343, %v4347
        %s4350 = sld [smem:[#allocation9 + $0x9a]]
        %v4351 = vstv %s4350
        %v4352 = vmul.f32 %v1554, %v4351
        %v4353 = vmul.f32 %v1555, %v4351
        %v4354 = vadd.f32 %v4348, %v4352
        %v4355 = vadd.f32 %v4349, %v4353
        %s4356 = sld [smem:[#allocation9 + $0x9b]]
        %v4357 = vstv %s4356
        %v4358 = vmul.f32 %v1562, %v4357
        %v4359 = vmul.f32 %v1563, %v4357
        %v4360 = vadd.f32 %v4354, %v4358
        %v4361 = vadd.f32 %v4355, %v4359
        %s4362 = sld [smem:[#allocation10 + $0xc]]
        %v4363 = vstv %s4362
        %v4364 = vadd.f32 %v4360, %v4363
        %v4365 = vadd.f32 %v4361, %v4363
        %v4366 = vmax.f32 %v4364, 0.0
        %v4367 = vmax.f32 %v4365, 0.0
        %v4368 = vpack.c.bf16 %v4366, %v4366
        %v4369 = vpack.c.bf16 %v4367, %v4367
        %s4370 = scalar_lea.vmem %s5, 1632
        %v4371 = vld [vmem:[%s4370] sm:$0xff]
        %v4372 = vld [vmem:[%s4370 + $0x8] sm:$0xff]
        %v4373 = vld [vmem:[%s4370 + $0x10] sm:$0xff]
        %v4374 = vld [vmem:[%s4370 + $0x18] sm:$0xff]
        %v4375 = vld [vmem:[%s4370 + $0x20] sm:$0xff]
        %v4376 = vld [vmem:[%s4370 + $0x28] sm:$0xff]
        %v4377 = vld [vmem:[%s4370 + $0x30] sm:$0xff]
        %v4378 = vld [vmem:[%s4370 + $0x38] sm:$0xff]
        %v4379 = vld [vmem:[%s4370 + $0x40] sm:$0xff]
        %v4380 = vld [vmem:[%s4370 + $0x48] sm:$0xff]
        %v4381 = vld [vmem:[%s4370 + $0x50] sm:$0xff]
        %v4382 = vld [vmem:[%s4370 + $0x58] sm:$0xff]
        %v4383 = vld [vmem:[%s4370 + $0x60] sm:$0xff]
        %v4384 = vld [vmem:[%s4370 + $0x68] sm:$0xff]
        %v4385 = vld [vmem:[%s4370 + $0x70] sm:$0xff]
        %v4386 = vld [vmem:[%s4370 + $0x78] sm:$0xff]
        %v4387 = vld [vmem:[%s4370 + $0x80] sm:$0x77]
        %v4405 = vunpack.c.l.b16 %v4371
        %v4406 = vunpack.c.h.b16 %v4371
        %v4407 = vunpack.c.l.b16 %v4372
        %v4408 = vunpack.c.h.b16 %v4372
        %v4409 = vunpack.c.l.b16 %v4373
        %v4410 = vunpack.c.h.b16 %v4373
        %v4411 = vunpack.c.l.b16 %v4374
        %v4412 = vunpack.c.h.b16 %v4374
        %v4413 = vunpack.c.l.b16 %v4375
        %v4414 = vunpack.c.h.b16 %v4375
        %v4415 = vunpack.c.l.b16 %v4376
        %v4416 = vunpack.c.h.b16 %v4376
        %v4417 = vunpack.c.l.b16 %v4377
        %v4418 = vunpack.c.h.b16 %v4377
        %v4419 = vunpack.c.l.b16 %v4378
        %v4420 = vunpack.c.h.b16 %v4378
        %v4421 = vunpack.c.l.b16 %v4379
        %v4422 = vunpack.c.h.b16 %v4379
        %v4423 = vunpack.c.l.b16 %v4380
        %v4424 = vunpack.c.h.b16 %v4380
        %v4425 = vunpack.c.l.b16 %v4381
        %v4426 = vunpack.c.h.b16 %v4381
        %v4427 = vunpack.c.l.b16 %v4382
        %v4428 = vunpack.c.h.b16 %v4382
        %v4429 = vunpack.c.l.b16 %v4383
        %v4430 = vunpack.c.h.b16 %v4383
        %v4431 = vunpack.c.l.b16 %v4384
        %v4432 = vunpack.c.h.b16 %v4384
        %v4433 = vunpack.c.l.b16 %v4385
        %v4434 = vunpack.c.h.b16 %v4385
        %v4435 = vunpack.c.l.b16 %v4386
        %v4436 = vunpack.c.h.b16 %v4386
        %v4437 = vunpack.c.l.b16 %v4387
        %v4438 = vunpack.c.h.b16 %v4387
        %v4439 = vpack.c.b16 %v4407, %v4405
        %v4440 = vpack.c.b16 %v4408, %v4406
        %v4441 = vpack.c.b16 %v4411, %v4409
        %v4442 = vpack.c.b16 %v4412, %v4410
        %v4443 = vpack.c.b16 %v4415, %v4413
        %v4444 = vpack.c.b16 %v4416, %v4414
        %v4445 = vpack.c.b16 %v4419, %v4417
        %v4446 = vpack.c.b16 %v4420, %v4418
        %v4447 = vpack.c.b16 %v4423, %v4421
        %v4448 = vpack.c.b16 %v4424, %v4422
        %v4449 = vpack.c.b16 %v4427, %v4425
        %v4450 = vpack.c.b16 %v4428, %v4426
        %v4451 = vpack.c.b16 %v4431, %v4429
        %v4452 = vpack.c.b16 %v4432, %v4430
        %v4453 = vpack.c.b16 %v4435, %v4433
        %v4454 = vpack.c.b16 %v4436, %v4434
        %v4455 = vpack.c.b16 %v4437, %v4437
        %v4456 = vpack.c.b16 %v4438, %v4438
        %v4474 = vsel %vm685, %v4369, 0
        %v4477 = vsel %vm1779, %v4455, 0
        %v4480 = vsel %vm1779, %v4456, 0
        %4482 = vmatprep.subr.bf16.mxu0 %v4454
        %4483 = vmatpush1.bf16.msra.mxu0 %v4453
        %4484 = vmatprep.subr.bf16.mxu0 %v4452
        %4485 = vmatpush1.bf16.msra.mxu0 %v4451
        %4486 = vmatprep.subr.bf16.mxu0 %v4450
        %4487 = vmatpush1.bf16.msra.mxu0 %v4449
        %4488 = vmatprep.subr.bf16.mxu0 %v4448
        %4489 = vmatpush1.bf16.msra.mxu0 %v4447
        %4490 = vmatprep.subr.bf16.mxu0 %v4446
        %4491 = vmatpush1.bf16.msra.mxu0 %v4445
        %4492 = vmatprep.subr.bf16.mxu0 %v4444
        %4493 = vmatpush1.bf16.msra.mxu0 %v4443
        %4494 = vmatprep.subr.bf16.mxu0 %v4442
        %4495 = vmatpush1.bf16.msra.mxu0 %v4441
        %4496 = vmatprep.subr.bf16.mxu0 %v4440
        %4497 = vmatpush1.bf16.msra.mxu0 %v4439
        %4498 = vmatprep.subr.bf16.mxu0 0
        %4499 = vmatpush2.bf16.msra.mxu0 0
        %4500 = vmatprep.subr.bf16.mxu0 0
        %4501 = vmatpush2.bf16.msra.mxu0 0
        %4502 = vmatprep.subr.bf16.mxu0 0
        %4503 = vmatpush2.bf16.msra.mxu0 0
        %4504 = vmatprep.subr.bf16.mxu0 0
        %4505 = vmatpush2.bf16.msra.mxu0 0
        %4506 = vmatprep.subr.bf16.mxu0 0
        %4507 = vmatpush2.bf16.msra.mxu0 0
        %4508 = vmatprep.subr.bf16.mxu0 0
        %4509 = vmatpush2.bf16.msra.mxu0 0
        %4510 = vmatprep.subr.bf16.mxu0 0
        %4511 = vmatpush2.bf16.msra.mxu0 0
        %4512 = vmatprep.subr.bf16.mxu0 %v4480
        %4513 = vmatpush2.bf16.msra.mxu0 %v4477
        %4514 = vmatprep.mubr.bf16.mxu0 %v4474
        %4515 = vmatmul.mubr.bf16.gmra.mxu0 %v4368
        %v4516 = vpop.f32.mrf.mxu0
        %v4517 = vadd.f32 0.0, %v4516
        %v4518 = vpop.f32.mrf.mxu0
        %v4519 = vadd.f32 0.0, %v4518
        %v4520 = vpop.f32.mrf.mxu0
        %v4521 = vpop.f32.mrf.mxu0
        %4522 = vdwg.mxu0
        %v4523 = vadd.f32 %v4290, %v4517
        %v4524 = vadd.f32 %v4291, %v4519
        %s4525 = sld [smem:[#allocation9 + $0x9c]]
        %v4526 = vstv %s4525
        %v4527 = vmul.f32 %v1476, %v4526
        %v4528 = vmul.f32 %v1477, %v4526
        %s4529 = sld [smem:[#allocation9 + $0x9d]]
        %v4530 = vstv %s4529
        %v4531 = vmul.f32 %v1482, %v4530
        %v4532 = vmul.f32 %v1483, %v4530
        %v4533 = vadd.f32 %v4527, %v4531
        %v4534 = vadd.f32 %v4528, %v4532
        %s4535 = sld [smem:[#allocation9 + $0x9e]]
        %v4536 = vstv %s4535
        %v4537 = vmul.f32 %v1490, %v4536
        %v4538 = vmul.f32 %v1491, %v4536
        %v4539 = vadd.f32 %v4533, %v4537
        %v4540 = vadd.f32 %v4534, %v4538
        %s4541 = sld [smem:[#allocation9 + $0x9f]]
        %v4542 = vstv %s4541
        %v4543 = vmul.f32 %v1498, %v4542
        %v4544 = vmul.f32 %v1499, %v4542
        %v4545 = vadd.f32 %v4539, %v4543
        %v4546 = vadd.f32 %v4540, %v4544
        %s4547 = sld [smem:[#allocation9 + $0xa0]]
        %v4548 = vstv %s4547
        %v4549 = vmul.f32 %v1506, %v4548
        %v4550 = vmul.f32 %v1507, %v4548
        %v4551 = vadd.f32 %v4545, %v4549
        %v4552 = vadd.f32 %v4546, %v4550
        %s4553 = sld [smem:[#allocation9 + $0xa1]]
        %v4554 = vstv %s4553
        %v4555 = vmul.f32 %v1514, %v4554
        %v4556 = vmul.f32 %v1515, %v4554
        %v4557 = vadd.f32 %v4551, %v4555
        %v4558 = vadd.f32 %v4552, %v4556
        %s4559 = sld [smem:[#allocation9 + $0xa2]]
        %v4560 = vstv %s4559
        %v4561 = vmul.f32 %v1522, %v4560
        %v4562 = vmul.f32 %v1523, %v4560
        %v4563 = vadd.f32 %v4557, %v4561
        %v4564 = vadd.f32 %v4558, %v4562
        %s4565 = sld [smem:[#allocation9 + $0xa3]]
        %v4566 = vstv %s4565
        %v4567 = vmul.f32 %v1530, %v4566
        %v4568 = vmul.f32 %v1531, %v4566
        %v4569 = vadd.f32 %v4563, %v4567
        %v4570 = vadd.f32 %v4564, %v4568
        %s4571 = sld [smem:[#allocation9 + $0xa4]]
        %v4572 = vstv %s4571
        %v4573 = vmul.f32 %v1538, %v4572
        %v4574 = vmul.f32 %v1539, %v4572
        %v4575 = vadd.f32 %v4569, %v4573
        %v4576 = vadd.f32 %v4570, %v4574
        %s4577 = sld [smem:[#allocation9 + $0xa5]]
        %v4578 = vstv %s4577
        %v4579 = vmul.f32 %v1546, %v4578
        %v4580 = vmul.f32 %v1547, %v4578
        %v4581 = vadd.f32 %v4575, %v4579
        %v4582 = vadd.f32 %v4576, %v4580
        %s4583 = sld [smem:[#allocation9 + $0xa6]]
        %v4584 = vstv %s4583
        %v4585 = vmul.f32 %v1554, %v4584
        %v4586 = vmul.f32 %v1555, %v4584
        %v4587 = vadd.f32 %v4581, %v4585
        %v4588 = vadd.f32 %v4582, %v4586
        %s4589 = sld [smem:[#allocation9 + $0xa7]]
        %v4590 = vstv %s4589
        %v4591 = vmul.f32 %v1562, %v4590
        %v4592 = vmul.f32 %v1563, %v4590
        %v4593 = vadd.f32 %v4587, %v4591
        %v4594 = vadd.f32 %v4588, %v4592
        %s4595 = sld [smem:[#allocation10 + $0xd]]
        %v4596 = vstv %s4595
        %v4597 = vadd.f32 %v4593, %v4596
        %v4598 = vadd.f32 %v4594, %v4596
        %v4599 = vmax.f32 %v4597, 0.0
        %v4600 = vmax.f32 %v4598, 0.0
        %v4601 = vpack.c.bf16 %v4599, %v4599
        %v4602 = vpack.c.bf16 %v4600, %v4600
        %s4603 = scalar_lea.vmem %s5, 1768
        %v4604 = vld [vmem:[%s4603] sm:$0xff]
        %v4605 = vld [vmem:[%s4603 + $0x8] sm:$0xff]
        %v4606 = vld [vmem:[%s4603 + $0x10] sm:$0xff]
        %v4607 = vld [vmem:[%s4603 + $0x18] sm:$0xff]
        %v4608 = vld [vmem:[%s4603 + $0x20] sm:$0xff]
        %v4609 = vld [vmem:[%s4603 + $0x28] sm:$0xff]
        %v4610 = vld [vmem:[%s4603 + $0x30] sm:$0xff]
        %v4611 = vld [vmem:[%s4603 + $0x38] sm:$0xff]
        %v4612 = vld [vmem:[%s4603 + $0x40] sm:$0xff]
        %v4613 = vld [vmem:[%s4603 + $0x48] sm:$0xff]
        %v4614 = vld [vmem:[%s4603 + $0x50] sm:$0xff]
        %v4615 = vld [vmem:[%s4603 + $0x58] sm:$0xff]
        %v4616 = vld [vmem:[%s4603 + $0x60] sm:$0xff]
        %v4617 = vld [vmem:[%s4603 + $0x68] sm:$0xff]
        %v4618 = vld [vmem:[%s4603 + $0x70] sm:$0xff]
        %v4619 = vld [vmem:[%s4603 + $0x78] sm:$0xff]
        %v4620 = vld [vmem:[%s4603 + $0x80] sm:$0x77]
        %v4638 = vunpack.c.l.b16 %v4604
        %v4639 = vunpack.c.h.b16 %v4604
        %v4640 = vunpack.c.l.b16 %v4605
        %v4641 = vunpack.c.h.b16 %v4605
        %v4642 = vunpack.c.l.b16 %v4606
        %v4643 = vunpack.c.h.b16 %v4606
        %v4644 = vunpack.c.l.b16 %v4607
        %v4645 = vunpack.c.h.b16 %v4607
        %v4646 = vunpack.c.l.b16 %v4608
        %v4647 = vunpack.c.h.b16 %v4608
        %v4648 = vunpack.c.l.b16 %v4609
        %v4649 = vunpack.c.h.b16 %v4609
        %v4650 = vunpack.c.l.b16 %v4610
        %v4651 = vunpack.c.h.b16 %v4610
        %v4652 = vunpack.c.l.b16 %v4611
        %v4653 = vunpack.c.h.b16 %v4611
        %v4654 = vunpack.c.l.b16 %v4612
        %v4655 = vunpack.c.h.b16 %v4612
        %v4656 = vunpack.c.l.b16 %v4613
        %v4657 = vunpack.c.h.b16 %v4613
        %v4658 = vunpack.c.l.b16 %v4614
        %v4659 = vunpack.c.h.b16 %v4614
        %v4660 = vunpack.c.l.b16 %v4615
        %v4661 = vunpack.c.h.b16 %v4615
        %v4662 = vunpack.c.l.b16 %v4616
        %v4663 = vunpack.c.h.b16 %v4616
        %v4664 = vunpack.c.l.b16 %v4617
        %v4665 = vunpack.c.h.b16 %v4617
        %v4666 = vunpack.c.l.b16 %v4618
        %v4667 = vunpack.c.h.b16 %v4618
        %v4668 = vunpack.c.l.b16 %v4619
        %v4669 = vunpack.c.h.b16 %v4619
        %v4670 = vunpack.c.l.b16 %v4620
        %v4671 = vunpack.c.h.b16 %v4620
        %v4672 = vpack.c.b16 %v4640, %v4638
        %v4673 = vpack.c.b16 %v4641, %v4639
        %v4674 = vpack.c.b16 %v4644, %v4642
        %v4675 = vpack.c.b16 %v4645, %v4643
        %v4676 = vpack.c.b16 %v4648, %v4646
        %v4677 = vpack.c.b16 %v4649, %v4647
        %v4678 = vpack.c.b16 %v4652, %v4650
        %v4679 = vpack.c.b16 %v4653, %v4651
        %v4680 = vpack.c.b16 %v4656, %v4654
        %v4681 = vpack.c.b16 %v4657, %v4655
        %v4682 = vpack.c.b16 %v4660, %v4658
        %v4683 = vpack.c.b16 %v4661, %v4659
        %v4684 = vpack.c.b16 %v4664, %v4662
        %v4685 = vpack.c.b16 %v4665, %v4663
        %v4686 = vpack.c.b16 %v4668, %v4666
        %v4687 = vpack.c.b16 %v4669, %v4667
        %v4688 = vpack.c.b16 %v4670, %v4670
        %v4689 = vpack.c.b16 %v4671, %v4671
        %v4707 = vsel %vm685, %v4602, 0
        %v4710 = vsel %vm1779, %v4688, 0
        %v4713 = vsel %vm1779, %v4689, 0
        %4715 = vmatprep.subr.bf16.mxu0 %v4687
        %4716 = vmatpush1.bf16.msra.mxu0 %v4686
        %4717 = vmatprep.subr.bf16.mxu0 %v4685
        %4718 = vmatpush1.bf16.msra.mxu0 %v4684
        %4719 = vmatprep.subr.bf16.mxu0 %v4683
        %4720 = vmatpush1.bf16.msra.mxu0 %v4682
        %4721 = vmatprep.subr.bf16.mxu0 %v4681
        %4722 = vmatpush1.bf16.msra.mxu0 %v4680
        %4723 = vmatprep.subr.bf16.mxu0 %v4679
        %4724 = vmatpush1.bf16.msra.mxu0 %v4678
        %4725 = vmatprep.subr.bf16.mxu0 %v4677
        %4726 = vmatpush1.bf16.msra.mxu0 %v4676
        %4727 = vmatprep.subr.bf16.mxu0 %v4675
        %4728 = vmatpush1.bf16.msra.mxu0 %v4674
        %4729 = vmatprep.subr.bf16.mxu0 %v4673
        %4730 = vmatpush1.bf16.msra.mxu0 %v4672
        %4731 = vmatprep.subr.bf16.mxu0 0
        %4732 = vmatpush2.bf16.msra.mxu0 0
        %4733 = vmatprep.subr.bf16.mxu0 0
        %4734 = vmatpush2.bf16.msra.mxu0 0
        %4735 = vmatprep.subr.bf16.mxu0 0
        %4736 = vmatpush2.bf16.msra.mxu0 0
        %4737 = vmatprep.subr.bf16.mxu0 0
        %4738 = vmatpush2.bf16.msra.mxu0 0
        %4739 = vmatprep.subr.bf16.mxu0 0
        %4740 = vmatpush2.bf16.msra.mxu0 0
        %4741 = vmatprep.subr.bf16.mxu0 0
        %4742 = vmatpush2.bf16.msra.mxu0 0
        %4743 = vmatprep.subr.bf16.mxu0 0
        %4744 = vmatpush2.bf16.msra.mxu0 0
        %4745 = vmatprep.subr.bf16.mxu0 %v4713
        %4746 = vmatpush2.bf16.msra.mxu0 %v4710
        %4747 = vmatprep.mubr.bf16.mxu0 %v4707
        %4748 = vmatmul.mubr.bf16.gmra.mxu0 %v4601
        %v4749 = vpop.f32.mrf.mxu0
        %v4750 = vadd.f32 0.0, %v4749
        %v4751 = vpop.f32.mrf.mxu0
        %v4752 = vadd.f32 0.0, %v4751
        %v4753 = vpop.f32.mrf.mxu0
        %v4754 = vpop.f32.mrf.mxu0
        %4755 = vdwg.mxu0
        %v4756 = vadd.f32 %v4523, %v4750
        %v4757 = vadd.f32 %v4524, %v4752
        %s4758 = sld [smem:[#allocation9 + $0xa8]]
        %v4759 = vstv %s4758
        %v4760 = vmul.f32 %v1476, %v4759
        %v4761 = vmul.f32 %v1477, %v4759
        %s4762 = sld [smem:[#allocation9 + $0xa9]]
        %v4763 = vstv %s4762
        %v4764 = vmul.f32 %v1482, %v4763
        %v4765 = vmul.f32 %v1483, %v4763
        %v4766 = vadd.f32 %v4760, %v4764
        %v4767 = vadd.f32 %v4761, %v4765
        %s4768 = sld [smem:[#allocation9 + $0xaa]]
        %v4769 = vstv %s4768
        %v4770 = vmul.f32 %v1490, %v4769
        %v4771 = vmul.f32 %v1491, %v4769
        %v4772 = vadd.f32 %v4766, %v4770
        %v4773 = vadd.f32 %v4767, %v4771
        %s4774 = sld [smem:[#allocation9 + $0xab]]
        %v4775 = vstv %s4774
        %v4776 = vmul.f32 %v1498, %v4775
        %v4777 = vmul.f32 %v1499, %v4775
        %v4778 = vadd.f32 %v4772, %v4776
        %v4779 = vadd.f32 %v4773, %v4777
        %s4780 = sld [smem:[#allocation9 + $0xac]]
        %v4781 = vstv %s4780
        %v4782 = vmul.f32 %v1506, %v4781
        %v4783 = vmul.f32 %v1507, %v4781
        %v4784 = vadd.f32 %v4778, %v4782
        %v4785 = vadd.f32 %v4779, %v4783
        %s4786 = sld [smem:[#allocation9 + $0xad]]
        %v4787 = vstv %s4786
        %v4788 = vmul.f32 %v1514, %v4787
        %v4789 = vmul.f32 %v1515, %v4787
        %v4790 = vadd.f32 %v4784, %v4788
        %v4791 = vadd.f32 %v4785, %v4789
        %s4792 = sld [smem:[#allocation9 + $0xae]]
        %v4793 = vstv %s4792
        %v4794 = vmul.f32 %v1522, %v4793
        %v4795 = vmul.f32 %v1523, %v4793
        %v4796 = vadd.f32 %v4790, %v4794
        %v4797 = vadd.f32 %v4791, %v4795
        %s4798 = sld [smem:[#allocation9 + $0xaf]]
        %v4799 = vstv %s4798
        %v4800 = vmul.f32 %v1530, %v4799
        %v4801 = vmul.f32 %v1531, %v4799
        %v4802 = vadd.f32 %v4796, %v4800
        %v4803 = vadd.f32 %v4797, %v4801
        %s4804 = sld [smem:[#allocation9 + $0xb0]]
        %v4805 = vstv %s4804
        %v4806 = vmul.f32 %v1538, %v4805
        %v4807 = vmul.f32 %v1539, %v4805
        %v4808 = vadd.f32 %v4802, %v4806
        %v4809 = vadd.f32 %v4803, %v4807
        %s4810 = sld [smem:[#allocation9 + $0xb1]]
        %v4811 = vstv %s4810
        %v4812 = vmul.f32 %v1546, %v4811
        %v4813 = vmul.f32 %v1547, %v4811
        %v4814 = vadd.f32 %v4808, %v4812
        %v4815 = vadd.f32 %v4809, %v4813
        %s4816 = sld [smem:[#allocation9 + $0xb2]]
        %v4817 = vstv %s4816
        %v4818 = vmul.f32 %v1554, %v4817
        %v4819 = vmul.f32 %v1555, %v4817
        %v4820 = vadd.f32 %v4814, %v4818
        %v4821 = vadd.f32 %v4815, %v4819
        %s4822 = sld [smem:[#allocation9 + $0xb3]]
        %v4823 = vstv %s4822
        %v4824 = vmul.f32 %v1562, %v4823
        %v4825 = vmul.f32 %v1563, %v4823
        %v4826 = vadd.f32 %v4820, %v4824
        %v4827 = vadd.f32 %v4821, %v4825
        %s4828 = sld [smem:[#allocation10 + $0xe]]
        %v4829 = vstv %s4828
        %v4830 = vadd.f32 %v4826, %v4829
        %v4831 = vadd.f32 %v4827, %v4829
        %v4832 = vmax.f32 %v4830, 0.0
        %v4833 = vmax.f32 %v4831, 0.0
        %v4834 = vpack.c.bf16 %v4832, %v4832
        %v4835 = vpack.c.bf16 %v4833, %v4833
        %s4836 = scalar_lea.vmem %s5, 1904
        %v4837 = vld [vmem:[%s4836] sm:$0xff]
        %v4838 = vld [vmem:[%s4836 + $0x8] sm:$0xff]
        %v4839 = vld [vmem:[%s4836 + $0x10] sm:$0xff]
        %v4840 = vld [vmem:[%s4836 + $0x18] sm:$0xff]
        %v4841 = vld [vmem:[%s4836 + $0x20] sm:$0xff]
        %v4842 = vld [vmem:[%s4836 + $0x28] sm:$0xff]
        %v4843 = vld [vmem:[%s4836 + $0x30] sm:$0xff]
        %v4844 = vld [vmem:[%s4836 + $0x38] sm:$0xff]
        %v4845 = vld [vmem:[%s4836 + $0x40] sm:$0xff]
        %v4846 = vld [vmem:[%s4836 + $0x48] sm:$0xff]
        %v4847 = vld [vmem:[%s4836 + $0x50] sm:$0xff]
        %v4848 = vld [vmem:[%s4836 + $0x58] sm:$0xff]
        %v4849 = vld [vmem:[%s4836 + $0x60] sm:$0xff]
        %v4850 = vld [vmem:[%s4836 + $0x68] sm:$0xff]
        %v4851 = vld [vmem:[%s4836 + $0x70] sm:$0xff]
        %v4852 = vld [vmem:[%s4836 + $0x78] sm:$0xff]
        %v4853 = vld [vmem:[%s4836 + $0x80] sm:$0x77]
        %v4871 = vunpack.c.l.b16 %v4837
        %v4872 = vunpack.c.h.b16 %v4837
        %v4873 = vunpack.c.l.b16 %v4838
        %v4874 = vunpack.c.h.b16 %v4838
        %v4875 = vunpack.c.l.b16 %v4839
        %v4876 = vunpack.c.h.b16 %v4839
        %v4877 = vunpack.c.l.b16 %v4840
        %v4878 = vunpack.c.h.b16 %v4840
        %v4879 = vunpack.c.l.b16 %v4841
        %v4880 = vunpack.c.h.b16 %v4841
        %v4881 = vunpack.c.l.b16 %v4842
        %v4882 = vunpack.c.h.b16 %v4842
        %v4883 = vunpack.c.l.b16 %v4843
        %v4884 = vunpack.c.h.b16 %v4843
        %v4885 = vunpack.c.l.b16 %v4844
        %v4886 = vunpack.c.h.b16 %v4844
        %v4887 = vunpack.c.l.b16 %v4845
        %v4888 = vunpack.c.h.b16 %v4845
        %v4889 = vunpack.c.l.b16 %v4846
        %v4890 = vunpack.c.h.b16 %v4846
        %v4891 = vunpack.c.l.b16 %v4847
        %v4892 = vunpack.c.h.b16 %v4847
        %v4893 = vunpack.c.l.b16 %v4848
        %v4894 = vunpack.c.h.b16 %v4848
        %v4895 = vunpack.c.l.b16 %v4849
        %v4896 = vunpack.c.h.b16 %v4849
        %v4897 = vunpack.c.l.b16 %v4850
        %v4898 = vunpack.c.h.b16 %v4850
        %v4899 = vunpack.c.l.b16 %v4851
        %v4900 = vunpack.c.h.b16 %v4851
        %v4901 = vunpack.c.l.b16 %v4852
        %v4902 = vunpack.c.h.b16 %v4852
        %v4903 = vunpack.c.l.b16 %v4853
        %v4904 = vunpack.c.h.b16 %v4853
        %v4905 = vpack.c.b16 %v4873, %v4871
        %v4906 = vpack.c.b16 %v4874, %v4872
        %v4907 = vpack.c.b16 %v4877, %v4875
        %v4908 = vpack.c.b16 %v4878, %v4876
        %v4909 = vpack.c.b16 %v4881, %v4879
        %v4910 = vpack.c.b16 %v4882, %v4880
        %v4911 = vpack.c.b16 %v4885, %v4883
        %v4912 = vpack.c.b16 %v4886, %v4884
        %v4913 = vpack.c.b16 %v4889, %v4887
        %v4914 = vpack.c.b16 %v4890, %v4888
        %v4915 = vpack.c.b16 %v4893, %v4891
        %v4916 = vpack.c.b16 %v4894, %v4892
        %v4917 = vpack.c.b16 %v4897, %v4895
        %v4918 = vpack.c.b16 %v4898, %v4896
        %v4919 = vpack.c.b16 %v4901, %v4899
        %v4920 = vpack.c.b16 %v4902, %v4900
        %v4921 = vpack.c.b16 %v4903, %v4903
        %v4922 = vpack.c.b16 %v4904, %v4904
        %v4940 = vsel %vm685, %v4835, 0
        %v4943 = vsel %vm1779, %v4921, 0
        %v4946 = vsel %vm1779, %v4922, 0
        %4948 = vmatprep.subr.bf16.mxu0 %v4920
        %4949 = vmatpush1.bf16.msra.mxu0 %v4919
        %4950 = vmatprep.subr.bf16.mxu0 %v4918
        %4951 = vmatpush1.bf16.msra.mxu0 %v4917
        %4952 = vmatprep.subr.bf16.mxu0 %v4916
        %4953 = vmatpush1.bf16.msra.mxu0 %v4915
        %4954 = vmatprep.subr.bf16.mxu0 %v4914
        %4955 = vmatpush1.bf16.msra.mxu0 %v4913
        %4956 = vmatprep.subr.bf16.mxu0 %v4912
        %4957 = vmatpush1.bf16.msra.mxu0 %v4911
        %4958 = vmatprep.subr.bf16.mxu0 %v4910
        %4959 = vmatpush1.bf16.msra.mxu0 %v4909
        %4960 = vmatprep.subr.bf16.mxu0 %v4908
        %4961 = vmatpush1.bf16.msra.mxu0 %v4907
        %4962 = vmatprep.subr.bf16.mxu0 %v4906
        %4963 = vmatpush1.bf16.msra.mxu0 %v4905
        %4964 = vmatprep.subr.bf16.mxu0 0
        %4965 = vmatpush2.bf16.msra.mxu0 0
        %4966 = vmatprep.subr.bf16.mxu0 0
        %4967 = vmatpush2.bf16.msra.mxu0 0
        %4968 = vmatprep.subr.bf16.mxu0 0
        %4969 = vmatpush2.bf16.msra.mxu0 0
        %4970 = vmatprep.subr.bf16.mxu0 0
        %4971 = vmatpush2.bf16.msra.mxu0 0
        %4972 = vmatprep.subr.bf16.mxu0 0
        %4973 = vmatpush2.bf16.msra.mxu0 0
        %4974 = vmatprep.subr.bf16.mxu0 0
        %4975 = vmatpush2.bf16.msra.mxu0 0
        %4976 = vmatprep.subr.bf16.mxu0 0
        %4977 = vmatpush2.bf16.msra.mxu0 0
        %4978 = vmatprep.subr.bf16.mxu0 %v4946
        %4979 = vmatpush2.bf16.msra.mxu0 %v4943
        %4980 = vmatprep.mubr.bf16.mxu0 %v4940
        %4981 = vmatmul.mubr.bf16.gmra.mxu0 %v4834
        %v4982 = vpop.f32.mrf.mxu0
        %v4983 = vadd.f32 0.0, %v4982
        %v4984 = vpop.f32.mrf.mxu0
        %v4985 = vadd.f32 0.0, %v4984
        %v4986 = vpop.f32.mrf.mxu0
        %v4987 = vpop.f32.mrf.mxu0
        %4988 = vdwg.mxu0
        %v4989 = vadd.f32 %v4756, %v4983
        %v4990 = vadd.f32 %v4757, %v4985
        %s4991 = sld [smem:[#allocation9 + $0xb4]]
        %v4992 = vstv %s4991
        %v4993 = vmul.f32 %v1476, %v4992
        %v4994 = vmul.f32 %v1477, %v4992
        %s4995 = sld [smem:[#allocation9 + $0xb5]]
        %v4996 = vstv %s4995
        %v4997 = vmul.f32 %v1482, %v4996
        %v4998 = vmul.f32 %v1483, %v4996
        %v4999 = vadd.f32 %v4993, %v4997
        %v5000 = vadd.f32 %v4994, %v4998
        %s5001 = sld [smem:[#allocation9 + $0xb6]]
        %v5002 = vstv %s5001
        %v5003 = vmul.f32 %v1490, %v5002
        %v5004 = vmul.f32 %v1491, %v5002
        %v5005 = vadd.f32 %v4999, %v5003
        %v5006 = vadd.f32 %v5000, %v5004
        %s5007 = sld [smem:[#allocation9 + $0xb7]]
        %v5008 = vstv %s5007
        %v5009 = vmul.f32 %v1498, %v5008
        %v5010 = vmul.f32 %v1499, %v5008
        %v5011 = vadd.f32 %v5005, %v5009
        %v5012 = vadd.f32 %v5006, %v5010
        %s5013 = sld [smem:[#allocation9 + $0xb8]]
        %v5014 = vstv %s5013
        %v5015 = vmul.f32 %v1506, %v5014
        %v5016 = vmul.f32 %v1507, %v5014
        %v5017 = vadd.f32 %v5011, %v5015
        %v5018 = vadd.f32 %v5012, %v5016
        %s5019 = sld [smem:[#allocation9 + $0xb9]]
        %v5020 = vstv %s5019
        %v5021 = vmul.f32 %v1514, %v5020
        %v5022 = vmul.f32 %v1515, %v5020
        %v5023 = vadd.f32 %v5017, %v5021
        %v5024 = vadd.f32 %v5018, %v5022
        %s5025 = sld [smem:[#allocation9 + $0xba]]
        %v5026 = vstv %s5025
        %v5027 = vmul.f32 %v1522, %v5026
        %v5028 = vmul.f32 %v1523, %v5026
        %v5029 = vadd.f32 %v5023, %v5027
        %v5030 = vadd.f32 %v5024, %v5028
        %s5031 = sld [smem:[#allocation9 + $0xbb]]
        %v5032 = vstv %s5031
        %v5033 = vmul.f32 %v1530, %v5032
        %v5034 = vmul.f32 %v1531, %v5032
        %v5035 = vadd.f32 %v5029, %v5033
        %v5036 = vadd.f32 %v5030, %v5034
        %s5037 = sld [smem:[#allocation9 + $0xbc]]
        %v5038 = vstv %s5037
        %v5039 = vmul.f32 %v1538, %v5038
        %v5040 = vmul.f32 %v1539, %v5038
        %v5041 = vadd.f32 %v5035, %v5039
        %v5042 = vadd.f32 %v5036, %v5040
        %s5043 = sld [smem:[#allocation9 + $0xbd]]
        %v5044 = vstv %s5043
        %v5045 = vmul.f32 %v1546, %v5044
        %v5046 = vmul.f32 %v1547, %v5044
        %v5047 = vadd.f32 %v5041, %v5045
        %v5048 = vadd.f32 %v5042, %v5046
        %s5049 = sld [smem:[#allocation9 + $0xbe]]
        %v5050 = vstv %s5049
        %v5051 = vmul.f32 %v1554, %v5050
        %v5052 = vmul.f32 %v1555, %v5050
        %v5053 = vadd.f32 %v5047, %v5051
        %v5054 = vadd.f32 %v5048, %v5052
        %s5055 = sld [smem:[#allocation9 + $0xbf]]
        %v5056 = vstv %s5055
        %v5057 = vmul.f32 %v1562, %v5056
        %v5058 = vmul.f32 %v1563, %v5056
        %v5059 = vadd.f32 %v5053, %v5057
        %v5060 = vadd.f32 %v5054, %v5058
        %s5061 = sld [smem:[#allocation10 + $0xf]]
        %v5062 = vstv %s5061
        %v5063 = vadd.f32 %v5059, %v5062
        %v5064 = vadd.f32 %v5060, %v5062
        %v5065 = vmax.f32 %v5063, 0.0
        %v5066 = vmax.f32 %v5064, 0.0
        %v5067 = vpack.c.bf16 %v5065, %v5065
        %v5068 = vpack.c.bf16 %v5066, %v5066
        %s5069 = scalar_lea.vmem %s5, 2040
        %v5070 = vld [vmem:[%s5069] sm:$0xff]
        %v5071 = vld [vmem:[%s5069 + $0x8] sm:$0xff]
        %v5072 = vld [vmem:[%s5069 + $0x10] sm:$0xff]
        %v5073 = vld [vmem:[%s5069 + $0x18] sm:$0xff]
        %v5074 = vld [vmem:[%s5069 + $0x20] sm:$0xff]
        %v5075 = vld [vmem:[%s5069 + $0x28] sm:$0xff]
        %v5076 = vld [vmem:[%s5069 + $0x30] sm:$0xff]
        %v5077 = vld [vmem:[%s5069 + $0x38] sm:$0xff]
        %v5078 = vld [vmem:[%s5069 + $0x40] sm:$0xff]
        %v5079 = vld [vmem:[%s5069 + $0x48] sm:$0xff]
        %v5080 = vld [vmem:[%s5069 + $0x50] sm:$0xff]
        %v5081 = vld [vmem:[%s5069 + $0x58] sm:$0xff]
        %v5082 = vld [vmem:[%s5069 + $0x60] sm:$0xff]
        %v5083 = vld [vmem:[%s5069 + $0x68] sm:$0xff]
        %v5084 = vld [vmem:[%s5069 + $0x70] sm:$0xff]
        %v5085 = vld [vmem:[%s5069 + $0x78] sm:$0xff]
        %v5086 = vld [vmem:[%s5069 + $0x80] sm:$0x77]
        %v5104 = vunpack.c.l.b16 %v5070
        %v5105 = vunpack.c.h.b16 %v5070
        %v5106 = vunpack.c.l.b16 %v5071
        %v5107 = vunpack.c.h.b16 %v5071
        %v5108 = vunpack.c.l.b16 %v5072
        %v5109 = vunpack.c.h.b16 %v5072
        %v5110 = vunpack.c.l.b16 %v5073
        %v5111 = vunpack.c.h.b16 %v5073
        %v5112 = vunpack.c.l.b16 %v5074
        %v5113 = vunpack.c.h.b16 %v5074
        %v5114 = vunpack.c.l.b16 %v5075
        %v5115 = vunpack.c.h.b16 %v5075
        %v5116 = vunpack.c.l.b16 %v5076
        %v5117 = vunpack.c.h.b16 %v5076
        %v5118 = vunpack.c.l.b16 %v5077
        %v5119 = vunpack.c.h.b16 %v5077
        %v5120 = vunpack.c.l.b16 %v5078
        %v5121 = vunpack.c.h.b16 %v5078
        %v5122 = vunpack.c.l.b16 %v5079
        %v5123 = vunpack.c.h.b16 %v5079
        %v5124 = vunpack.c.l.b16 %v5080
        %v5125 = vunpack.c.h.b16 %v5080
        %v5126 = vunpack.c.l.b16 %v5081
        %v5127 = vunpack.c.h.b16 %v5081
        %v5128 = vunpack.c.l.b16 %v5082
        %v5129 = vunpack.c.h.b16 %v5082
        %v5130 = vunpack.c.l.b16 %v5083
        %v5131 = vunpack.c.h.b16 %v5083
        %v5132 = vunpack.c.l.b16 %v5084
        %v5133 = vunpack.c.h.b16 %v5084
        %v5134 = vunpack.c.l.b16 %v5085
        %v5135 = vunpack.c.h.b16 %v5085
        %v5136 = vunpack.c.l.b16 %v5086
        %v5137 = vunpack.c.h.b16 %v5086
        %v5138 = vpack.c.b16 %v5106, %v5104
        %v5139 = vpack.c.b16 %v5107, %v5105
        %v5140 = vpack.c.b16 %v5110, %v5108
        %v5141 = vpack.c.b16 %v5111, %v5109
        %v5142 = vpack.c.b16 %v5114, %v5112
        %v5143 = vpack.c.b16 %v5115, %v5113
        %v5144 = vpack.c.b16 %v5118, %v5116
        %v5145 = vpack.c.b16 %v5119, %v5117
        %v5146 = vpack.c.b16 %v5122, %v5120
        %v5147 = vpack.c.b16 %v5123, %v5121
        %v5148 = vpack.c.b16 %v5126, %v5124
        %v5149 = vpack.c.b16 %v5127, %v5125
        %v5150 = vpack.c.b16 %v5130, %v5128
        %v5151 = vpack.c.b16 %v5131, %v5129
        %v5152 = vpack.c.b16 %v5134, %v5132
        %v5153 = vpack.c.b16 %v5135, %v5133
        %v5154 = vpack.c.b16 %v5136, %v5136
        %v5155 = vpack.c.b16 %v5137, %v5137
        %v5173 = vsel %vm685, %v5068, 0
        %v5176 = vsel %vm1779, %v5154, 0
        %v5179 = vsel %vm1779, %v5155, 0
        %5181 = vmatprep.subr.bf16.mxu0 %v5153
        %5182 = vmatpush1.bf16.msra.mxu0 %v5152
        %5183 = vmatprep.subr.bf16.mxu0 %v5151
        %5184 = vmatpush1.bf16.msra.mxu0 %v5150
        %5185 = vmatprep.subr.bf16.mxu0 %v5149
        %5186 = vmatpush1.bf16.msra.mxu0 %v5148
        %5187 = vmatprep.subr.bf16.mxu0 %v5147
        %5188 = vmatpush1.bf16.msra.mxu0 %v5146
        %5189 = vmatprep.subr.bf16.mxu0 %v5145
        %5190 = vmatpush1.bf16.msra.mxu0 %v5144
        %5191 = vmatprep.subr.bf16.mxu0 %v5143
        %5192 = vmatpush1.bf16.msra.mxu0 %v5142
        %5193 = vmatprep.subr.bf16.mxu0 %v5141
        %5194 = vmatpush1.bf16.msra.mxu0 %v5140
        %5195 = vmatprep.subr.bf16.mxu0 %v5139
        %5196 = vmatpush1.bf16.msra.mxu0 %v5138
        %5197 = vmatprep.subr.bf16.mxu0 0
        %5198 = vmatpush2.bf16.msra.mxu0 0
        %5199 = vmatprep.subr.bf16.mxu0 0
        %5200 = vmatpush2.bf16.msra.mxu0 0
        %5201 = vmatprep.subr.bf16.mxu0 0
        %5202 = vmatpush2.bf16.msra.mxu0 0
        %5203 = vmatprep.subr.bf16.mxu0 0
        %5204 = vmatpush2.bf16.msra.mxu0 0
        %5205 = vmatprep.subr.bf16.mxu0 0
        %5206 = vmatpush2.bf16.msra.mxu0 0
        %5207 = vmatprep.subr.bf16.mxu0 0
        %5208 = vmatpush2.bf16.msra.mxu0 0
        %5209 = vmatprep.subr.bf16.mxu0 0
        %5210 = vmatpush2.bf16.msra.mxu0 0
        %5211 = vmatprep.subr.bf16.mxu0 %v5179
        %5212 = vmatpush2.bf16.msra.mxu0 %v5176
        %5213 = vmatprep.mubr.bf16.mxu0 %v5173
        %5214 = vmatmul.mubr.bf16.gmra.mxu0 %v5067
        %v5215 = vpop.f32.mrf.mxu0
        %v5216 = vadd.f32 0.0, %v5215
        %v5217 = vpop.f32.mrf.mxu0
        %v5218 = vadd.f32 0.0, %v5217
        %v5219 = vpop.f32.mrf.mxu0
        %v5220 = vpop.f32.mrf.mxu0
        %5221 = vdwg.mxu0
        %v5222 = vadd.f32 %v4989, %v5216
        %v5223 = vadd.f32 %v4990, %v5218
        %v5224 = vld [vmem:[%s6] sm:$0x3]
        %v5226 = vlaneseq
        %v5227 = vshrl.u32 %v5226, 7
        %v5228 = vsub.s32 0, %v5227
        %v5229 = vrot.slane %v5224, %v5228
        %v5230 = vlaneseq
        %v5231 = vshrl.u32 %v5230, 7
        %v5232 = vsub.s32 1, %v5231
        %v5233 = vrot.slane %v5224, %v5232
        %v5236 = vadd.f32 %v5222, %v5229
        %v5237 = vadd.f32 %v5223, %v5233
        %v5238 = vmax.f32 %v5236, 0.0
        %v5239 = vmax.f32 %v5237, 0.0
        %v5240 = vld [vmem:[%s7] sm:$0x3]
        %v5242 = vlaneseq
        %v5243 = vshrl.u32 %v5242, 7
        %v5244 = vsub.s32 0, %v5243
        %v5245 = vrot.slane %v5240, %v5244
        %v5246 = vlaneseq
        %v5247 = vshrl.u32 %v5246, 7
        %v5248 = vsub.s32 1, %v5247
        %v5249 = vrot.slane %v5240, %v5248
        %v5252 = vmul.f32 %v5238, %v5245
        %v5253 = vmul.f32 %v5239, %v5249
        %vm5254 = vcmask 588800
        %v5255 = vsel %vm5254, %v5253, 0.0
        %v5256 = vadd.f32 %v5252, %v5255
        %5257 = vadd.xlane.f32.xlu0 %v5256
        %v5258 = vpop.xlane.xlu0 %5257
        %s5259 = sld [smem:[#allocation3]]
        %v5260 = vstv %s5259
        %v5261 = vadd.f32 %v5258, %v5260
        %v5262 = vtanh.pop %v5261
        %vm5263 = vcmask 7168
        %5264 = vst.msk [vmem:[%s581] sm:$0xff] %vm5263, %v5262
        %p5265 = scmp.lt.s32.totalorder %s24, 1
        %s5266 = scalar_select %p5265, %s24, 1
        %s5267 = smul.addr %s5266, 8
        %s5268 = scalar_lea.vmem %s9, %s5267
        // Predicated region
        $region96: #{_lambda_.1} parent=74 // pred_check
          %p5269 = pneg %p236
        $region97: #{_lambda_.1} parent=74 // pred_check_branch
          %5271 = sbr.rel (%p5269) target = $region99
        $region98: #{_lambda_.1} parent=74 // pred_region
          _
        $region99: #{_lambda_.1} parent=74 // pred_fallthru
          _
      $region75: #{_lambda_.1} parent=5 // pred_fallthru
        _
      %p5272 = scmp.le.s32.totalorder 2, %s19
      // Predicated region
      $region100: #{_lambda_.1} parent=5 // pred_check
        %p5273 = pneg %p5272
      $region101: #{_lambda_.1} parent=5 // pred_check_branch
        %5275 = sbr.rel (%p5273) target = $region103
      $region102: #{_lambda_.1} parent=5 // pred_region
        %s5276 = ssub.s32 %s19, 2
        // Predicated region
        $region104: #{_lambda_.1} parent=102 // pred_check
          %p5277 = pneg %p242
        $region105: #{_lambda_.1} parent=102 // pred_check_branch
          %5279 = sbr.rel (%p5277) target = $region107
        $region106: #{_lambda_.1} parent=102 // pred_region
          %p5280 = scmp.lt.s32.totalorder %s25, 1
          %s5281 = scalar_select %p5280, %s25, 1
          %s5282 = smul.addr %s5281, 8
          %s5283 = scalar_lea.vmem %s9, %s5282
        $region107: #{_lambda_.1} parent=102 // pred_fallthru
          _
      $region103: #{_lambda_.1} parent=5 // pred_fallthru
        _
    $region6: #{_lambda_.1} parent=1 // loop_footer
      %s23 = sadd.s32 1, %s19
    $region7: #{_lambda_.1} parent=1 // loop_footer_branch
      %18 = sbr.rel target = $region3
    $region8: #{_lambda_.1} parent=1 // loop_exit
      _
    %5284 = vsyncpa [#allocation6], 1
    %s5285 = scalar_lea.sflag [#allocation6], 1
    %5286 = vsyncpa %s5285, 1
    %5287 = vsyncpa [#allocation8], 1
    %5288 = vsyncpa [#allocation11], 1

</llo_original>
